<compile_context>
chip_gen: v6e
topology: v6e:2x2x1
jax: 0.10.0
libtpu: 0.0.40
codegen_flags: <defaults>
</compile_context>

<pallas_src>
import math
import functools

import jax
import jax.numpy as jnp
from jax import lax
from jax.experimental import pallas as pl
from jax.experimental.pallas import tpu as pltpu


# ---------------------------------------------------------------------------
# Fused kernel: up-conv (k=2,s=2) + depth-to-space + conv3x3+ReLU + conv3x3+ReLU
# for one (batch, row-tile) grid point.
# Row bookkeeping (image rows, r0 = t*TH):
#   skip / up values built for rows [r0-2, r0+TH+2)   (2-row halo each side)
#   conv1 computed for rows        [r0-1, r0+TH+1)    (1-row halo for conv2)
#   conv2 / output rows            [r0,   r0+TH)
# Rows outside [0, Hp) are zeroed (that IS the padding=1 of the convs).
# ---------------------------------------------------------------------------
def _up_block_kernel(x_top, x_mid, x_bot, s_top, s_mid, s_bot,
                     w_up, b_up, w1s, w1u, b1, w2, b2, o_ref,
                     *, TH, Hp, Wp, W, Cin, Cout):
    t = pl.program_id(1)
    TH2 = TH // 2
    R = TH2 + 2                     # input-x rows needed (1-row halo each side)
    dt = o_ref.dtype
    r0 = t * TH                     # first output row of this tile

    # ---------------- ConvTranspose2d(k=2, s=2), fused in-kernel ----------------
    # x rows [r0/2 - 1, r0/2 + TH/2]  ->  up rows [r0-2, r0+TH+2)
    x_all = jnp.concatenate([x_top[0], x_mid[0], x_bot[0]], axis=0)        # (R, W, Cin)
    xm = x_all.reshape(R * W, Cin)
    y = jnp.dot(xm, w_up[...], preferred_element_type=jnp.float32) + b_up[...]
    y = y.astype(dt)                                                       # (R*W, 4*Cout)
    # columns are ordered (di, dj, c) -> peel the four 2x2 phases apart (lane slices)
    u00 = y[:, 0 * Cout:1 * Cout].reshape(R, W, Cout)   # output (2i+0, 2j+0)
    u01 = y[:, 1 * Cout:2 * Cout].reshape(R, W, Cout)   # output (2i+0, 2j+1)
    u10 = y[:, 2 * Cout:3 * Cout].reshape(R, W, Cout)   # output (2i+1, 2j+0)
    u11 = y[:, 3 * Cout:4 * Cout].reshape(R, W, Cout)   # output (2i+1, 2j+1)
    # depth-to-space entirely in VMEM: interleave columns (dj), then rows (di)
    ev = jnp.concatenate([u00[:, :, None, :], u01[:, :, None, :]],
                         axis=2).reshape(R, Wp, Cout)                      # rows 2i
    od = jnp.concatenate([u10[:, :, None, :], u11[:, :, None, :]],
                         axis=2).reshape(R, Wp, Cout)                      # rows 2i+1
    up = jnp.concatenate([ev[:, None], od[:, None]],
                         axis=1).reshape(2 * R, Wp, Cout)                  # (TH+4, Wp, Cout)

    # Rows of `up`/`skip` index image rows [r0-2, r0+TH+2); zero rows outside the
    # image (this implements padding=1 of conv1 and kills the clamped halo loads).
    rows = r0 - 2 + lax.broadcasted_iota(jnp.int32, (TH + 4, 1, 1), 0)
    in_img = jnp.logical_and(rows >= 0, rows < Hp)
    up = jnp.where(in_img, up, jnp.zeros_like(up))

    skip = jnp.concatenate([s_top[0], s_mid[0], s_bot[0]], axis=0)         # (TH+4, Wp, Cout)
    skip = jnp.where(in_img, skip, jnp.zeros_like(skip))

    # im2col along W: pack the three kx taps into channels -> K = 3*C matmuls.
    def im2col_w(v, c):
        z = jnp.zeros((v.shape[0], 1, c), v.dtype)
        vp = jnp.concatenate([z, v, z], axis=1)            # zero cols = padding=1 in W
        return jnp.concatenate([vp[:, 0:Wp, :], vp[:, 1:Wp + 1, :], vp[:, 2:Wp + 2, :]],
                               axis=-1)                    # (rows, Wp, 3c)

    # ---------------- conv1 (3x3, pad=1) + ReLU on rows [r0-1, r0+TH+1) ----------
    tap_s = im2col_w(skip, Cout)                           # (TH+4, Wp, 3*Cout)
    tap_u = im2col_w(up, Cout)
    n1 = TH + 2
    acc1 = jnp.zeros((n1 * Wp, Cout), jnp.float32)
    for ky in range(3):                                    # 6 MXU matmuls, K = 3*Cout
        acc1 = acc1 + jnp.dot(tap_s[ky:ky + n1].reshape(n1 * Wp, 3 * Cout), w1s[ky],
                              preferred_element_type=jnp.float32)
        acc1 = acc1 + jnp.dot(tap_u[ky:ky + n1].reshape(n1 * Wp, 3 * Cout), w1u[ky],
                              preferred_element_type=jnp.float32)
    mid = jnp.maximum(acc1 + b1[...], 0.0).reshape(n1, Wp, Cout)
    # mid rows index image rows [r0-1, r0+TH+1); zero out-of-image rows (conv2's padding)
    mrows = r0 - 1 + lax.broadcasted_iota(jnp.int32, (n1, 1, 1), 0)
    mid = jnp.where(jnp.logical_and(mrows >= 0, mrows < Hp),
                    mid, jnp.zeros_like(mid)).astype(dt)

    # ---------------- conv2 (3x3, pad=1) + ReLU on rows [r0, r0+TH) --------------
    tap_m = im2col_w(mid, Cout)                            # (TH+2, Wp, 3*Cout)
    acc2 = jnp.zeros((TH * Wp, Cout), jnp.float32)
    for ky in range(3):                                    # 3 MXU matmuls, K = 3*Cout
        acc2 = acc2 + jnp.dot(tap_m[ky:ky + TH].reshape(TH * Wp, 3 * Cout), w2[ky],
                              preferred_element_type=jnp.float32)
    out = jnp.maximum(acc2 + b2[...], 0.0)
    o_ref[0] = out.reshape(TH, Wp, Cout).astype(dt)


# ---------------------------------------------------------------------------
# Host wrapper. Inputs/weights use the PyTorch layouts:
#   x:    (B, Cin, H, W)          skip: (B, Cout, 2H, 2W)
#   w_up: (Cin, Cout, 2, 2)       b_up: (Cout,)          (ConvTranspose2d)
#   w1:   (Cout, 2*Cout, 3, 3)    b1:   (Cout,)          (Conv2d, input = cat(skip, up))
#   w2:   (Cout, Cout, 3, 3)      b2:   (Cout,)          (Conv2d)
# Returns (B, Cout, 2H, 2W) in NCHW, matching the PyTorch module.
# ---------------------------------------------------------------------------
def up_block_forward(x, skip, w_up, b_up, w1, b1, w2, b2, *, tile_rows=None):
    B, Cin, H, W = x.shape
    Cout = w_up.shape[1]
    Hp, Wp = 2 * H, 2 * W
    assert skip.shape == (B, Cout, Hp, Wp)
    dt = x.dtype

    # Layout plumbing on the host: NCHW -> NHWC so channels sit on the lane axis.
    x_nhwc = jnp.transpose(x, (0, 2, 3, 1))                       # (B, H, W, Cin)
    skip_nhwc = jnp.transpose(skip, (0, 2, 3, 1))                 # (B, Hp, Wp, Cout)

    # ConvTranspose weight (Cin, Cout, 2, 2) -> (Cin, 4*Cout), cols ordered (di, dj, c).
    w_up_mat = jnp.transpose(w_up, (0, 2, 3, 1)).reshape(Cin, 4 * Cout).astype(dt)
    b_up_tiled = jnp.tile(b_up, 4).reshape(1, 4 * Cout).astype(jnp.float32)

    # Conv weights: split conv1 into skip/up halves (torch.cat puts skip first) and
    # repack each 3x3 conv as 3 matmul weights of shape (3*C_in, C_out), rows ordered
    # (kx, c) to match the in-kernel im2col channel packing.
    def pack3(w):  # (O, I, 3, 3) -> (3, 3*I, O)
        o, i = w.shape[0], w.shape[1]
        return jnp.transpose(w, (2, 3, 1, 0)).reshape(3, 3 * i, o).astype(dt)

    w1s = pack3(w1[:, :Cout])          # skip half of conv1
    w1u = pack3(w1[:, Cout:])          # up half of conv1
    w2p = pack3(w2)
    b1r = b1.reshape(1, Cout).astype(jnp.float32)
    b2r = b2.reshape(1, Cout).astype(jnp.float32)

    # Row-tile size (output rows per grid step). Must be even and divide Hp.
    if tile_rows is None:
        tile_rows = 2
        for cand in (16, 8, 4, 2):
            if cand <= Hp and Hp % cand == 0:
                tile_rows = cand
                break
    TH = int(tile_rows)
    assert TH % 2 == 0 and Hp % TH == 0, "tile_rows must be even and divide 2*H"
    TH2 = TH // 2
    T = Hp // TH

    kernel = functools.partial(_up_block_kernel, TH=TH, Hp=Hp, Wp=Wp, W=W,
                               Cin=Cin, Cout=Cout)

    out_nhwc = pl.pallas_call(
        kernel,
        out_shape=jax.ShapeDtypeStruct((B, Hp, Wp, Cout), dt),
        grid_spec=pltpu.PrefetchScalarGridSpec(
            num_scalar_prefetch=0,
            grid=(B, T),
            in_specs=[
                # x: 1-row halo above, TH/2 main rows, 1-row halo below (clamped at edges)
                pl.BlockSpec((1, 1, W, Cin),
                             lambda b, t: (b, jnp.maximum(t * TH2 - 1, 0), 0, 0)),
                pl.BlockSpec((1, TH2, W, Cin), lambda b, t: (b, t, 0, 0)),
                pl.BlockSpec((1, 1, W, Cin),
                             lambda b, t: (b, jnp.minimum((t + 1) * TH2, H - 1), 0, 0)),
                # skip: 2-row halo above, TH main rows, 2-row halo below (clamped)
                pl.BlockSpec((1, 2, Wp, Cout),
                             lambda b, t: (b, jnp.maximum(t * TH2 - 1, 0), 0, 0)),
                pl.BlockSpec((1, TH, Wp, Cout), lambda b, t: (b, t, 0, 0)),
                pl.BlockSpec((1, 2, Wp, Cout),
                             lambda b, t: (b, jnp.minimum((t + 1) * TH2, Hp // 2 - 1), 0, 0)),
                # weights / biases: constant index_map -> stay resident in VMEM
                pl.BlockSpec((Cin, 4 * Cout), lambda b, t: (0, 0)),
                pl.BlockSpec((1, 4 * Cout), lambda b, t: (0, 0)),
                pl.BlockSpec((3, 3 * Cout, Cout), lambda b, t: (0, 0, 0)),
                pl.BlockSpec((3, 3 * Cout, Cout), lambda b, t: (0, 0, 0)),
                pl.BlockSpec((1, Cout), lambda b, t: (0, 0)),
                pl.BlockSpec((3, 3 * Cout, Cout), lambda b, t: (0, 0, 0)),
                pl.BlockSpec((1, Cout), lambda b, t: (0, 0)),
            ],
            out_specs=pl.BlockSpec((1, TH, Wp, Cout), lambda b, t: (b, t, 0, 0)),
        ),
        compiler_params=pltpu.CompilerParams(
            dimension_semantics=("parallel", "parallel"),
            vmem_limit_bytes=48 * 1024 * 1024,
        ),
    )(x_nhwc, x_nhwc, x_nhwc, skip_nhwc, skip_nhwc, skip_nhwc,
      w_up_mat, b_up_tiled, w1s, w1u, b1r, w2p, b2r)

    # TODO(synk): for Cout < 128 a lane-dense (B, Hp, Wp*Cout) output slab would avoid
    # masked stores; kept the natural NHWC layout here for simplicity.
    return jnp.transpose(out_nhwc, (0, 3, 1, 2))                  # back to NCHW


# ---------------------------------------------------------------------------
# Pure-JAX reference mirroring the PyTorch forward exactly.
# ---------------------------------------------------------------------------
def _ref_conv_transpose2x2(x, w, b):
    B, Cin, H, W = x.shape
    Cout = w.shape[1]
    y = jnp.einsum('bchw,codk->bohdwk', x, w)          # (B, Cout, H, 2, W, 2)
    y = y.reshape(B, Cout, 2 * H, 2 * W)
    return y + b[None, :, None, None]


def _ref_conv3x3(x, w, b):
    y = lax.conv_general_dilated(x, w, window_strides=(1, 1),
                                 padding=((1, 1), (1, 1)),
                                 dimension_numbers=('NCHW', 'OIHW', 'NCHW'))
    return y + b[None, :, None, None]


def _reference(x, skip, w_up, b_up, w1, b1, w2, b2):
    up = _ref_conv_transpose2x2(x, w_up, b_up)
    cat = jnp.concatenate([skip, up], axis=1)
    h = jax.nn.relu(_ref_conv3x3(cat, w1, b1))
    return jax.nn.relu(_ref_conv3x3(h, w2, b2))


if __name__ == "__main__":
    # Small shapes consistent with the module: x (B, in_ch, H, W), skip (B, out_ch, 2H, 2W).
    B, Cin, Cout, H, W = 2, 8, 4, 8, 8

    key = jax.random.PRNGKey(0)
    k = jax.random.split(key, 8)

    x = jax.random.normal(k[0], (B, Cin, H, W), dtype=jnp.float32)
    skip = jax.random.normal(k[1], (B, Cout, 2 * H, 2 * W), dtype=jnp.float32)

    # Deterministic PyTorch-style uniform init bounds.
    bnd_up = 1.0 / math.sqrt(Cin * 2 * 2)
    w_up = jax.random.uniform(k[2], (Cin, Cout, 2, 2), jnp.float32, -bnd_up, bnd_up)
    b_up = jax.random.uniform(k[3], (Cout,), jnp.float32, -bnd_up, bnd_up)

    bnd1 = 1.0 / math.sqrt(2 * Cout * 3 * 3)
    w1 = jax.random.uniform(k[4], (Cout, 2 * Cout, 3, 3), jnp.float32, -bnd1, bnd1)
    b1 = jax.random.uniform(k[5], (Cout,), jnp.float32, -bnd1, bnd1)

    bnd2 = 1.0 / math.sqrt(Cout * 3 * 3)
    w2 = jax.random.uniform(k[6], (Cout, Cout, 3, 3), jnp.float32, -bnd2, bnd2)
    b2 = jax.random.uniform(k[7], (Cout,), jnp.float32, -bnd2, bnd2)

    ref = _reference(x, skip, w_up, b_up, w1, b1, w2, b2)

    # Run twice: default tiling (single row-tile here) and a forced multi-tile config
    # that exercises the halo / boundary-mask paths.
    for tr in (None, 4):
        out = up_block_forward(x, skip, w_up, b_up, w1, b1, w2, b2, tile_rows=tr)
        out = jax.block_until_ready(out)
        assert out.shape == (B, Cout, 2 * H, 2 * W)
        err = jnp.max(jnp.abs(out - ref))
        assert jnp.allclose(out, ref, atol=1e-4, rtol=1e-4), \
            f"mismatch vs reference (tile_rows={tr}), max abs err = {err}"

    print("KERNEL_OK")
</pallas_src>

<mosaic_0001>
module attributes {stable_mosaic.version = 11 : i64} {
  func.func @_up_block_kernel(%arg0: i32, %arg1: i32, %arg2: memref<1x1x8x8xf32, #tpu.memory_space<vmem>>, %arg3: memref<1x8x8x8xf32, #tpu.memory_space<vmem>>, %arg4: memref<1x1x8x8xf32, #tpu.memory_space<vmem>>, %arg5: memref<1x2x16x4xf32, #tpu.memory_space<vmem>>, %arg6: memref<1x16x16x4xf32, #tpu.memory_space<vmem>>, %arg7: memref<1x2x16x4xf32, #tpu.memory_space<vmem>>, %arg8: memref<8x16xf32, #tpu.memory_space<vmem>>, %arg9: memref<1x16xf32, #tpu.memory_space<vmem>>, %arg10: memref<3x12x4xf32, #tpu.memory_space<vmem>>, %arg11: memref<3x12x4xf32, #tpu.memory_space<vmem>>, %arg12: memref<1x4xf32, #tpu.memory_space<vmem>>, %arg13: memref<3x12x4xf32, #tpu.memory_space<vmem>>, %arg14: memref<1x4xf32, #tpu.memory_space<vmem>>, %arg15: memref<1x16x16x4xf32, #tpu.memory_space<vmem>>) attributes {dimension_semantics = [#tpu.dimension_semantics<parallel>, #tpu.dimension_semantics<parallel>], iteration_bounds = array<i64: 2, 1>, scalar_prefetch = 0 : i64, scratch_operands = 0 : i64, tpu.core_type = #tpu.core_type<tc>, window_params = [{transform_indices = @transform_0, window_bounds = array<i64: 1, 1, 8, 8>}, {transform_indices = @transform_1, window_bounds = array<i64: 1, 8, 8, 8>}, {transform_indices = @transform_2, window_bounds = array<i64: 1, 1, 8, 8>}, {transform_indices = @transform_3, window_bounds = array<i64: 1, 2, 16, 4>}, {transform_indices = @transform_4, window_bounds = array<i64: 1, 16, 16, 4>}, {transform_indices = @transform_5, window_bounds = array<i64: 1, 2, 16, 4>}, {pipeline_mode = #tpu.pipeline_mode<synchronous>, transform_indices = @transform_6, window_bounds = array<i64: 8, 16>}, {pipeline_mode = #tpu.pipeline_mode<synchronous>, transform_indices = @transform_7, window_bounds = array<i64: 1, 16>}, {pipeline_mode = #tpu.pipeline_mode<synchronous>, transform_indices = @transform_8, window_bounds = array<i64: 3, 12, 4>}, {pipeline_mode = #tpu.pipeline_mode<synchronous>, transform_indices = @transform_9, window_bounds = array<i64: 3, 12, 4>}, {pipeline_mode = #tpu.pipeline_mode<synchronous>, transform_indices = @transform_10, window_bounds = array<i64: 1, 4>}, {pipeline_mode = #tpu.pipeline_mode<synchronous>, transform_indices = @transform_11, window_bounds = array<i64: 3, 12, 4>}, {pipeline_mode = #tpu.pipeline_mode<synchronous>, transform_indices = @transform_12, window_bounds = array<i64: 1, 4>}, {transform_indices = @transform_13, window_bounds = array<i64: 1, 16, 16, 4>}]} {
    %c16_i32 = arith.constant 16 : i32
    %0 = arith.muli %arg1, %c16_i32 : i32
    %c0 = arith.constant 0 : index
    %c0_0 = arith.constant 0 : index
    %c0_1 = arith.constant 0 : index
    %c0_2 = arith.constant 0 : index
    %1 = vector.load %arg2[%c0, %c0_0, %c0_1, %c0_2] : memref<1x1x8x8xf32, #tpu.memory_space<vmem>>, vector<1x1x8x8xf32>
    %2 = vector.shape_cast %1 : vector<1x1x8x8xf32> to vector<1x8x8xf32>
    %c0_3 = arith.constant 0 : index
    %c0_4 = arith.constant 0 : index
    %c0_5 = arith.constant 0 : index
    %c0_6 = arith.constant 0 : index
    %3 = vector.load %arg3[%c0_3, %c0_4, %c0_5, %c0_6] : memref<1x8x8x8xf32, #tpu.memory_space<vmem>>, vector<1x8x8x8xf32>
    %4 = vector.shape_cast %3 : vector<1x8x8x8xf32> to vector<8x8x8xf32>
    %c0_7 = arith.constant 0 : index
    %c0_8 = arith.constant 0 : index
    %c0_9 = arith.constant 0 : index
    %c0_10 = arith.constant 0 : index
    %5 = vector.load %arg4[%c0_7, %c0_8, %c0_9, %c0_10] : memref<1x1x8x8xf32, #tpu.memory_space<vmem>>, vector<1x1x8x8xf32>
    %6 = vector.shape_cast %5 : vector<1x1x8x8xf32> to vector<1x8x8xf32>
    %7 = tpu.concatenate %2, %4, %6 in 0 : vector<1x8x8xf32>, vector<8x8x8xf32>, vector<1x8x8xf32> -> vector<10x8x8xf32>
    %8 = vector.shape_cast %7 : vector<10x8x8xf32> to vector<80x8xf32>
    %c0_11 = arith.constant 0 : index
    %c0_12 = arith.constant 0 : index
    %9 = vector.load %arg8[%c0_11, %c0_12] : memref<8x16xf32, #tpu.memory_space<vmem>>, vector<8x16xf32>
    %cst = arith.constant dense<0.000000e+00> : vector<80x16xf32>
    %10 = tpu.matmul %8, %9, %cst {dimension_numbers = #tpu.dot_dimension_numbers<[1], [0], [0], [1], [0, 0, 1, 1], [], []>} : vector<80x8xf32>, vector<8x16xf32>, vector<80x16xf32> -> vector<80x16xf32>
    %c0_13 = arith.constant 0 : index
    %c0_14 = arith.constant 0 : index
    %11 = vector.load %arg9[%c0_13, %c0_14] : memref<1x16xf32, #tpu.memory_space<vmem>>, vector<1x16xf32>
    %12 = vector.broadcast %11 : vector<1x16xf32> to vector<80x16xf32>
    %13 = arith.addf %10, %12 : vector<80x16xf32>
    %14 = vector.extract_strided_slice %13 {offsets = [0, 0], sizes = [80, 4], strides = [1, 1]} : vector<80x16xf32> to vector<80x4xf32>
    %15 = vector.shape_cast %14 : vector<80x4xf32> to vector<10x8x4xf32>
    %16 = vector.extract_strided_slice %13 {offsets = [0, 4], sizes = [80, 4], strides = [1, 1]} : vector<80x16xf32> to vector<80x4xf32>
    %17 = vector.shape_cast %16 : vector<80x4xf32> to vector<10x8x4xf32>
    %18 = vector.extract_strided_slice %13 {offsets = [0, 8], sizes = [80, 4], strides = [1, 1]} : vector<80x16xf32> to vector<80x4xf32>
    %19 = vector.shape_cast %18 : vector<80x4xf32> to vector<10x8x4xf32>
    %20 = vector.extract_strided_slice %13 {offsets = [0, 12], sizes = [80, 4], strides = [1, 1]} : vector<80x16xf32> to vector<80x4xf32>
    %21 = vector.shape_cast %20 : vector<80x4xf32> to vector<10x8x4xf32>
    %22 = vector.shape_cast %15 : vector<10x8x4xf32> to vector<10x8x1x4xf32>
    %23 = vector.shape_cast %17 : vector<10x8x4xf32> to vector<10x8x1x4xf32>
    %24 = tpu.concatenate %22, %23 in 2 : vector<10x8x1x4xf32>, vector<10x8x1x4xf32> -> vector<10x8x2x4xf32>
    %25 = vector.shape_cast %24 : vector<10x8x2x4xf32> to vector<10x16x4xf32>
    %26 = vector.shape_cast %19 : vector<10x8x4xf32> to vector<10x8x1x4xf32>
    %27 = vector.shape_cast %21 : vector<10x8x4xf32> to vector<10x8x1x4xf32>
    %28 = tpu.concatenate %26, %27 in 2 : vector<10x8x1x4xf32>, vector<10x8x1x4xf32> -> vector<10x8x2x4xf32>
    %29 = vector.shape_cast %28 : vector<10x8x2x4xf32> to vector<10x16x4xf32>
    %30 = vector.shape_cast %25 : vector<10x16x4xf32> to vector<10x1x16x4xf32>
    %31 = vector.shape_cast %29 : vector<10x16x4xf32> to vector<10x1x16x4xf32>
    %32 = tpu.concatenate %30, %31 in 1 : vector<10x1x16x4xf32>, vector<10x1x16x4xf32> -> vector<10x2x16x4xf32>
    %33 = vector.shape_cast %32 : vector<10x2x16x4xf32> to vector<20x16x4xf32>
    %c2_i32 = arith.constant 2 : i32
    %34 = arith.subi %0, %c2_i32 : i32
    %35 = tpu.iota {dimensions = array<i32: 0>} : vector<20x1x1xi32>
    %36 = vector.broadcast %34 : i32 to vector<20x1x1xi32>
    %37 = arith.addi %36, %35 : vector<20x1x1xi32>
    %c0_i32 = arith.constant 0 : i32
    %38 = vector.broadcast %c0_i32 : i32 to vector<20x1x1xi32>
    %39 = arith.cmpi sge, %37, %38 : vector<20x1x1xi32>
    %c16_i32_15 = arith.constant 16 : i32
    %40 = vector.broadcast %c16_i32_15 : i32 to vector<20x1x1xi32>
    %41 = arith.cmpi slt, %37, %40 : vector<20x1x1xi32>
    %42 = arith.andi %39, %41 : vector<20x1x1xi1>
    %cst_16 = arith.constant 0.000000e+00 : f32
    %43 = vector.broadcast %cst_16 : f32 to vector<20x16x4xf32>
    %44 = vector.shape_cast %42 : vector<20x1x1xi1> to vector<20x1x1xi1>
    %45 = vector.broadcast %44 : vector<20x1x1xi1> to vector<20x16x4xi1>
    %46 = arith.select %45, %33, %43 : vector<20x16x4xi1>, vector<20x16x4xf32>
    %c0_17 = arith.constant 0 : index
    %c0_18 = arith.constant 0 : index
    %c0_19 = arith.constant 0 : index
    %c0_20 = arith.constant 0 : index
    %47 = vector.load %arg5[%c0_17, %c0_18, %c0_19, %c0_20] : memref<1x2x16x4xf32, #tpu.memory_space<vmem>>, vector<1x2x16x4xf32>
    %48 = vector.shape_cast %47 : vector<1x2x16x4xf32> to vector<2x16x4xf32>
    %c0_21 = arith.constant 0 : index
    %c0_22 = arith.constant 0 : index
    %c0_23 = arith.constant 0 : index
    %c0_24 = arith.constant 0 : index
    %49 = vector.load %arg6[%c0_21, %c0_22, %c0_23, %c0_24] : memref<1x16x16x4xf32, #tpu.memory_space<vmem>>, vector<1x16x16x4xf32>
    %50 = vector.shape_cast %49 : vector<1x16x16x4xf32> to vector<16x16x4xf32>
    %c0_25 = arith.constant 0 : index
    %c0_26 = arith.constant 0 : index
    %c0_27 = arith.constant 0 : index
    %c0_28 = arith.constant 0 : index
    %51 = vector.load %arg7[%c0_25, %c0_26, %c0_27, %c0_28] : memref<1x2x16x4xf32, #tpu.memory_space<vmem>>, vector<1x2x16x4xf32>
    %52 = vector.shape_cast %51 : vector<1x2x16x4xf32> to vector<2x16x4xf32>
    %53 = tpu.concatenate %48, %50, %52 in 0 : vector<2x16x4xf32>, vector<16x16x4xf32>, vector<2x16x4xf32> -> vector<20x16x4xf32>
    %cst_29 = arith.constant 0.000000e+00 : f32
    %54 = vector.broadcast %cst_29 : f32 to vector<20x16x4xf32>
    %55 = vector.shape_cast %42 : vector<20x1x1xi1> to vector<20x1x1xi1>
    %56 = vector.broadcast %55 : vector<20x1x1xi1> to vector<20x16x4xi1>
    %57 = arith.select %56, %53, %54 : vector<20x16x4xi1>, vector<20x16x4xf32>
    %cst_30 = arith.constant 0.000000e+00 : f32
    %58 = vector.broadcast %cst_30 : f32 to vector<20x1x4xf32>
    %59 = tpu.concatenate %58, %57, %58 in 1 : vector<20x1x4xf32>, vector<20x16x4xf32>, vector<20x1x4xf32> -> vector<20x18x4xf32>
    %60 = vector.extract_strided_slice %59 {offsets = [0, 0, 0], sizes = [20, 16, 4], strides = [1, 1, 1]} : vector<20x18x4xf32> to vector<20x16x4xf32>
    %61 = vector.extract_strided_slice %59 {offsets = [0, 1, 0], sizes = [20, 16, 4], strides = [1, 1, 1]} : vector<20x18x4xf32> to vector<20x16x4xf32>
    %62 = vector.extract_strided_slice %59 {offsets = [0, 2, 0], sizes = [20, 16, 4], strides = [1, 1, 1]} : vector<20x18x4xf32> to vector<20x16x4xf32>
    %63 = tpu.concatenate %60, %61, %62 in 2 : vector<20x16x4xf32>, vector<20x16x4xf32>, vector<20x16x4xf32> -> vector<20x16x12xf32>
    %cst_31 = arith.constant 0.000000e+00 : f32
    %64 = vector.broadcast %cst_31 : f32 to vector<20x1x4xf32>
    %65 = tpu.concatenate %64, %46, %64 in 1 : vector<20x1x4xf32>, vector<20x16x4xf32>, vector<20x1x4xf32> -> vector<20x18x4xf32>
    %66 = vector.extract_strided_slice %65 {offsets = [0, 0, 0], sizes = [20, 16, 4], strides = [1, 1, 1]} : vector<20x18x4xf32> to vector<20x16x4xf32>
    %67 = vector.extract_strided_slice %65 {offsets = [0, 1, 0], sizes = [20, 16, 4], strides = [1, 1, 1]} : vector<20x18x4xf32> to vector<20x16x4xf32>
    %68 = vector.extract_strided_slice %65 {offsets = [0, 2, 0], sizes = [20, 16, 4], strides = [1, 1, 1]} : vector<20x18x4xf32> to vector<20x16x4xf32>
    %69 = tpu.concatenate %66, %67, %68 in 2 : vector<20x16x4xf32>, vector<20x16x4xf32>, vector<20x16x4xf32> -> vector<20x16x12xf32>
    %cst_32 = arith.constant 0.000000e+00 : f32
    %70 = vector.broadcast %cst_32 : f32 to vector<288x4xf32>
    %71 = vector.extract_strided_slice %63 {offsets = [0, 0, 0], sizes = [18, 16, 12], strides = [1, 1, 1]} : vector<20x16x12xf32> to vector<18x16x12xf32>
    %72 = vector.shape_cast %71 : vector<18x16x12xf32> to vector<288x12xf32>
    %c0_33 = arith.constant 0 : index
    %c0_34 = arith.constant 0 : index
    %c0_35 = arith.constant 0 : index
    %73 = vector.load %arg10[%c0_33, %c0_34, %c0_35] : memref<3x12x4xf32, #tpu.memory_space<vmem>>, vector<1x12x4xf32>
    %74 = vector.shape_cast %73 : vector<1x12x4xf32> to vector<12x4xf32>
    %cst_36 = arith.constant dense<0.000000e+00> : vector<288x4xf32>
    %75 = tpu.matmul %72, %74, %cst_36 {dimension_numbers = #tpu.dot_dimension_numbers<[1], [0], [0], [1], [0, 0, 1, 1], [], []>} : vector<288x12xf32>, vector<12x4xf32>, vector<288x4xf32> -> vector<288x4xf32>
    %76 = arith.addf %70, %75 : vector<288x4xf32>
    %77 = vector.extract_strided_slice %69 {offsets = [0, 0, 0], sizes = [18, 16, 12], strides = [1, 1, 1]} : vector<20x16x12xf32> to vector<18x16x12xf32>
    %78 = vector.shape_cast %77 : vector<18x16x12xf32> to vector<288x12xf32>
    %c0_37 = arith.constant 0 : index
    %c0_38 = arith.constant 0 : index
    %c0_39 = arith.constant 0 : index
    %79 = vector.load %arg11[%c0_37, %c0_38, %c0_39] : memref<3x12x4xf32, #tpu.memory_space<vmem>>, vector<1x12x4xf32>
    %80 = vector.shape_cast %79 : vector<1x12x4xf32> to vector<12x4xf32>
    %cst_40 = arith.constant dense<0.000000e+00> : vector<288x4xf32>
    %81 = tpu.matmul %78, %80, %cst_40 {dimension_numbers = #tpu.dot_dimension_numbers<[1], [0], [0], [1], [0, 0, 1, 1], [], []>} : vector<288x12xf32>, vector<12x4xf32>, vector<288x4xf32> -> vector<288x4xf32>
    %82 = arith.addf %76, %81 : vector<288x4xf32>
    %83 = vector.extract_strided_slice %63 {offsets = [1, 0, 0], sizes = [18, 16, 12], strides = [1, 1, 1]} : vector<20x16x12xf32> to vector<18x16x12xf32>
    %84 = vector.shape_cast %83 : vector<18x16x12xf32> to vector<288x12xf32>
    %c1 = arith.constant 1 : index
    %c0_41 = arith.constant 0 : index
    %c0_42 = arith.constant 0 : index
    %85 = vector.load %arg10[%c1, %c0_41, %c0_42] : memref<3x12x4xf32, #tpu.memory_space<vmem>>, vector<1x12x4xf32>
    %86 = vector.shape_cast %85 : vector<1x12x4xf32> to vector<12x4xf32>
    %cst_43 = arith.constant dense<0.000000e+00> : vector<288x4xf32>
    %87 = tpu.matmul %84, %86, %cst_43 {dimension_numbers = #tpu.dot_dimension_numbers<[1], [0], [0], [1], [0, 0, 1, 1], [], []>} : vector<288x12xf32>, vector<12x4xf32>, vector<288x4xf32> -> vector<288x4xf32>
    %88 = arith.addf %82, %87 : vector<288x4xf32>
    %89 = vector.extract_strided_slice %69 {offsets = [1, 0, 0], sizes = [18, 16, 12], strides = [1, 1, 1]} : vector<20x16x12xf32> to vector<18x16x12xf32>
    %90 = vector.shape_cast %89 : vector<18x16x12xf32> to vector<288x12xf32>
    %c1_44 = arith.constant 1 : index
    %c0_45 = arith.constant 0 : index
    %c0_46 = arith.constant 0 : index
    %91 = vector.load %arg11[%c1_44, %c0_45, %c0_46] : memref<3x12x4xf32, #tpu.memory_space<vmem>>, vector<1x12x4xf32>
    %92 = vector.shape_cast %91 : vector<1x12x4xf32> to vector<12x4xf32>
    %cst_47 = arith.constant dense<0.000000e+00> : vector<288x4xf32>
    %93 = tpu.matmul %90, %92, %cst_47 {dimension_numbers = #tpu.dot_dimension_numbers<[1], [0], [0], [1], [0, 0, 1, 1], [], []>} : vector<288x12xf32>, vector<12x4xf32>, vector<288x4xf32> -> vector<288x4xf32>
    %94 = arith.addf %88, %93 : vector<288x4xf32>
    %95 = vector.extract_strided_slice %63 {offsets = [2, 0, 0], sizes = [18, 16, 12], strides = [1, 1, 1]} : vector<20x16x12xf32> to vector<18x16x12xf32>
    %96 = vector.shape_cast %95 : vector<18x16x12xf32> to vector<288x12xf32>
    %c2 = arith.constant 2 : index
    %c0_48 = arith.constant 0 : index
    %c0_49 = arith.constant 0 : index
    %97 = vector.load %arg10[%c2, %c0_48, %c0_49] : memref<3x12x4xf32, #tpu.memory_space<vmem>>, vector<1x12x4xf32>
    %98 = vector.shape_cast %97 : vector<1x12x4xf32> to vector<12x4xf32>
    %cst_50 = arith.constant dense<0.000000e+00> : vector<288x4xf32>
    %99 = tpu.matmul %96, %98, %cst_50 {dimension_numbers = #tpu.dot_dimension_numbers<[1], [0], [0], [1], [0, 0, 1, 1], [], []>} : vector<288x12xf32>, vector<12x4xf32>, vector<288x4xf32> -> vector<288x4xf32>
    %100 = arith.addf %94, %99 : vector<288x4xf32>
    %101 = vector.extract_strided_slice %69 {offsets = [2, 0, 0], sizes = [18, 16, 12], strides = [1, 1, 1]} : vector<20x16x12xf32> to vector<18x16x12xf32>
    %102 = vector.shape_cast %101 : vector<18x16x12xf32> to vector<288x12xf32>
    %c2_51 = arith.constant 2 : index
    %c0_52 = arith.constant 0 : index
    %c0_53 = arith.constant 0 : index
    %103 = vector.load %arg11[%c2_51, %c0_52, %c0_53] : memref<3x12x4xf32, #tpu.memory_space<vmem>>, vector<1x12x4xf32>
    %104 = vector.shape_cast %103 : vector<1x12x4xf32> to vector<12x4xf32>
    %cst_54 = arith.constant dense<0.000000e+00> : vector<288x4xf32>
    %105 = tpu.matmul %102, %104, %cst_54 {dimension_numbers = #tpu.dot_dimension_numbers<[1], [0], [0], [1], [0, 0, 1, 1], [], []>} : vector<288x12xf32>, vector<12x4xf32>, vector<288x4xf32> -> vector<288x4xf32>
    %106 = arith.addf %100, %105 : vector<288x4xf32>
    %c0_55 = arith.constant 0 : index
    %c0_56 = arith.constant 0 : index
    %107 = vector.load %arg12[%c0_55, %c0_56] : memref<1x4xf32, #tpu.memory_space<vmem>>, vector<1x4xf32>
    %108 = vector.broadcast %107 : vector<1x4xf32> to vector<288x4xf32>
    %109 = arith.addf %106, %108 : vector<288x4xf32>
    %cst_57 = arith.constant 0.000000e+00 : f32
    %110 = vector.broadcast %cst_57 : f32 to vector<288x4xf32>
    %111 = arith.maximumf %109, %110 : vector<288x4xf32>
    %112 = vector.shape_cast %111 : vector<288x4xf32> to vector<18x16x4xf32>
    %c1_i32 = arith.constant 1 : i32
    %113 = arith.subi %0, %c1_i32 : i32
    %114 = tpu.iota {dimensions = array<i32: 0>} : vector<18x1x1xi32>
    %115 = vector.broadcast %113 : i32 to vector<18x1x1xi32>
    %116 = arith.addi %115, %114 : vector<18x1x1xi32>
    %c0_i32_58 = arith.constant 0 : i32
    %117 = vector.broadcast %c0_i32_58 : i32 to vector<18x1x1xi32>
    %118 = arith.cmpi sge, %116, %117 : vector<18x1x1xi32>
    %c16_i32_59 = arith.constant 16 : i32
    %119 = vector.broadcast %c16_i32_59 : i32 to vector<18x1x1xi32>
    %120 = arith.cmpi slt, %116, %119 : vector<18x1x1xi32>
    %121 = arith.andi %118, %120 : vector<18x1x1xi1>
    %cst_60 = arith.constant 0.000000e+00 : f32
    %122 = vector.broadcast %cst_60 : f32 to vector<18x16x4xf32>
    %123 = vector.shape_cast %121 : vector<18x1x1xi1> to vector<18x1x1xi1>
    %124 = vector.broadcast %123 : vector<18x1x1xi1> to vector<18x16x4xi1>
    %125 = arith.select %124, %112, %122 : vector<18x16x4xi1>, vector<18x16x4xf32>
    %cst_61 = arith.constant 0.000000e+00 : f32
    %126 = vector.broadcast %cst_61 : f32 to vector<18x1x4xf32>
    %127 = tpu.concatenate %126, %125, %126 in 1 : vector<18x1x4xf32>, vector<18x16x4xf32>, vector<18x1x4xf32> -> vector<18x18x4xf32>
    %128 = vector.extract_strided_slice %127 {offsets = [0, 0, 0], sizes = [18, 16, 4], strides = [1, 1, 1]} : vector<18x18x4xf32> to vector<18x16x4xf32>
    %129 = vector.extract_strided_slice %127 {offsets = [0, 1, 0], sizes = [18, 16, 4], strides = [1, 1, 1]} : vector<18x18x4xf32> to vector<18x16x4xf32>
    %130 = vector.extract_strided_slice %127 {offsets = [0, 2, 0], sizes = [18, 16, 4], strides = [1, 1, 1]} : vector<18x18x4xf32> to vector<18x16x4xf32>
    %131 = tpu.concatenate %128, %129, %130 in 2 : vector<18x16x4xf32>, vector<18x16x4xf32>, vector<18x16x4xf32> -> vector<18x16x12xf32>
    %cst_62 = arith.constant 0.000000e+00 : f32
    %132 = vector.broadcast %cst_62 : f32 to vector<256x4xf32>
    %133 = vector.extract_strided_slice %131 {offsets = [0, 0, 0], sizes = [16, 16, 12], strides = [1, 1, 1]} : vector<18x16x12xf32> to vector<16x16x12xf32>
    %134 = vector.shape_cast %133 : vector<16x16x12xf32> to vector<256x12xf32>
    %c0_63 = arith.constant 0 : index
    %c0_64 = arith.constant 0 : index
    %c0_65 = arith.constant 0 : index
    %135 = vector.load %arg13[%c0_63, %c0_64, %c0_65] : memref<3x12x4xf32, #tpu.memory_space<vmem>>, vector<1x12x4xf32>
    %136 = vector.shape_cast %135 : vector<1x12x4xf32> to vector<12x4xf32>
    %cst_66 = arith.constant dense<0.000000e+00> : vector<256x4xf32>
    %137 = tpu.matmul %134, %136, %cst_66 {dimension_numbers = #tpu.dot_dimension_numbers<[1], [0], [0], [1], [0, 0, 1, 1], [], []>} : vector<256x12xf32>, vector<12x4xf32>, vector<256x4xf32> -> vector<256x4xf32>
    %138 = arith.addf %132, %137 : vector<256x4xf32>
    %139 = vector.extract_strided_slice %131 {offsets = [1, 0, 0], sizes = [16, 16, 12], strides = [1, 1, 1]} : vector<18x16x12xf32> to vector<16x16x12xf32>
    %140 = vector.shape_cast %139 : vector<16x16x12xf32> to vector<256x12xf32>
    %c1_67 = arith.constant 1 : index
    %c0_68 = arith.constant 0 : index
    %c0_69 = arith.constant 0 : index
    %141 = vector.load %arg13[%c1_67, %c0_68, %c0_69] : memref<3x12x4xf32, #tpu.memory_space<vmem>>, vector<1x12x4xf32>
    %142 = vector.shape_cast %141 : vector<1x12x4xf32> to vector<12x4xf32>
    %cst_70 = arith.constant dense<0.000000e+00> : vector<256x4xf32>
    %143 = tpu.matmul %140, %142, %cst_70 {dimension_numbers = #tpu.dot_dimension_numbers<[1], [0], [0], [1], [0, 0, 1, 1], [], []>} : vector<256x12xf32>, vector<12x4xf32>, vector<256x4xf32> -> vector<256x4xf32>
    %144 = arith.addf %138, %143 : vector<256x4xf32>
    %145 = vector.extract_strided_slice %131 {offsets = [2, 0, 0], sizes = [16, 16, 12], strides = [1, 1, 1]} : vector<18x16x12xf32> to vector<16x16x12xf32>
    %146 = vector.shape_cast %145 : vector<16x16x12xf32> to vector<256x12xf32>
    %c2_71 = arith.constant 2 : index
    %c0_72 = arith.constant 0 : index
    %c0_73 = arith.constant 0 : index
    %147 = vector.load %arg13[%c2_71, %c0_72, %c0_73] : memref<3x12x4xf32, #tpu.memory_space<vmem>>, vector<1x12x4xf32>
    %148 = vector.shape_cast %147 : vector<1x12x4xf32> to vector<12x4xf32>
    %cst_74 = arith.constant dense<0.000000e+00> : vector<256x4xf32>
    %149 = tpu.matmul %146, %148, %cst_74 {dimension_numbers = #tpu.dot_dimension_numbers<[1], [0], [0], [1], [0, 0, 1, 1], [], []>} : vector<256x12xf32>, vector<12x4xf32>, vector<256x4xf32> -> vector<256x4xf32>
    %150 = arith.addf %144, %149 : vector<256x4xf32>
    %c0_75 = arith.constant 0 : index
    %c0_76 = arith.constant 0 : index
    %151 = vector.load %arg14[%c0_75, %c0_76] : memref<1x4xf32, #tpu.memory_space<vmem>>, vector<1x4xf32>
    %152 = vector.broadcast %151 : vector<1x4xf32> to vector<256x4xf32>
    %153 = arith.addf %150, %152 : vector<256x4xf32>
    %cst_77 = arith.constant 0.000000e+00 : f32
    %154 = vector.broadcast %cst_77 : f32 to vector<256x4xf32>
    %155 = arith.maximumf %153, %154 : vector<256x4xf32>
    %156 = vector.shape_cast %155 : vector<256x4xf32> to vector<16x16x4xf32>
    %c0_78 = arith.constant 0 : index
    %c0_79 = arith.constant 0 : index
    %c0_80 = arith.constant 0 : index
    %c0_81 = arith.constant 0 : index
    %157 = vector.load %arg15[%c0_78, %c0_79, %c0_80, %c0_81] : memref<1x16x16x4xf32, #tpu.memory_space<vmem>>, vector<1x16x16x4xf32>
    %158 = vector.shape_cast %157 : vector<1x16x16x4xf32> to vector<16x16x4xf32>
    %159 = vector.shape_cast %156 : vector<16x16x4xf32> to vector<1x16x16x4xf32>
    tpu.vector_store %arg15[%c0_78, %c0_79, %c0_80, %c0_81], %159 {strides = array<i32>} : memref<1x16x16x4xf32, #tpu.memory_space<vmem>>, vector<1x16x16x4xf32>,
    return
  }
  func.func @transform_0(%arg0: i32, %arg1: i32) -> (i32, i32, i32, i32) {
    %c8_i32 = arith.constant 8 : i32
    %0 = arith.muli %arg1, %c8_i32 : i32
    %c1_i32 = arith.constant 1 : i32
    %1 = arith.subi %0, %c1_i32 : i32
    %c0_i32 = arith.constant 0 : i32
    %2 = arith.maxsi %1, %c0_i32 : i32
    %c0_i32_0 = arith.constant 0 : i32
    %c0_i32_1 = arith.constant 0 : i32
    %c0_i32_2 = arith.constant 0 : i32
    return %arg0, %2, %c0_i32_0, %c0_i32_1 : i32, i32, i32, i32
  }
  func.func @transform_1(%arg0: i32, %arg1: i32) -> (i32, i32, i32, i32) {
    %c0_i32 = arith.constant 0 : i32
    %c0_i32_0 = arith.constant 0 : i32
    %c0_i32_1 = arith.constant 0 : i32
    return %arg0, %arg1, %c0_i32, %c0_i32_0 : i32, i32, i32, i32
  }
  func.func @transform_2(%arg0: i32, %arg1: i32) -> (i32, i32, i32, i32) {
    %c1_i32 = arith.constant 1 : i32
    %0 = arith.addi %arg1, %c1_i32 : i32
    %c8_i32 = arith.constant 8 : i32
    %1 = arith.muli %0, %c8_i32 : i32
    %c7_i32 = arith.constant 7 : i32
    %2 = arith.minsi %1, %c7_i32 : i32
    %c0_i32 = arith.constant 0 : i32
    %c0_i32_0 = arith.constant 0 : i32
    %c0_i32_1 = arith.constant 0 : i32
    return %arg0, %2, %c0_i32, %c0_i32_0 : i32, i32, i32, i32
  }
  func.func @transform_3(%arg0: i32, %arg1: i32) -> (i32, i32, i32, i32) {
    %c8_i32 = arith.constant 8 : i32
    %0 = arith.muli %arg1, %c8_i32 : i32
    %c1_i32 = arith.constant 1 : i32
    %1 = arith.subi %0, %c1_i32 : i32
    %c0_i32 = arith.constant 0 : i32
    %2 = arith.maxsi %1, %c0_i32 : i32
    %c0_i32_0 = arith.constant 0 : i32
    %c0_i32_1 = arith.constant 0 : i32
    %c0_i32_2 = arith.constant 0 : i32
    return %arg0, %2, %c0_i32_0, %c0_i32_1 : i32, i32, i32, i32
  }
  func.func @transform_4(%arg0: i32, %arg1: i32) -> (i32, i32, i32, i32) {
    %c0_i32 = arith.constant 0 : i32
    %c0_i32_0 = arith.constant 0 : i32
    %c0_i32_1 = arith.constant 0 : i32
    return %arg0, %arg1, %c0_i32, %c0_i32_0 : i32, i32, i32, i32
  }
  func.func @transform_5(%arg0: i32, %arg1: i32) -> (i32, i32, i32, i32) {
    %c1_i32 = arith.constant 1 : i32
    %0 = arith.addi %arg1, %c1_i32 : i32
    %c8_i32 = arith.constant 8 : i32
    %1 = arith.muli %0, %c8_i32 : i32
    %c7_i32 = arith.constant 7 : i32
    %2 = arith.minsi %1, %c7_i32 : i32
    %c0_i32 = arith.constant 0 : i32
    %c0_i32_0 = arith.constant 0 : i32
    %c0_i32_1 = arith.constant 0 : i32
    return %arg0, %2, %c0_i32, %c0_i32_0 : i32, i32, i32, i32
  }
  func.func @transform_6(%arg0: i32, %arg1: i32) -> (i32, i32) {
    %c0_i32 = arith.constant 0 : i32
    %c0_i32_0 = arith.constant 0 : i32
    %c0_i32_1 = arith.constant 0 : i32
    return %c0_i32, %c0_i32_0 : i32, i32
  }
  func.func @transform_7(%arg0: i32, %arg1: i32) -> (i32, i32) {
    %c0_i32 = arith.constant 0 : i32
    %c0_i32_0 = arith.constant 0 : i32
    %c0_i32_1 = arith.constant 0 : i32
    return %c0_i32, %c0_i32_0 : i32, i32
  }
  func.func @transform_8(%arg0: i32, %arg1: i32) -> (i32, i32, i32) {
    %c0_i32 = arith.constant 0 : i32
    %c0_i32_0 = arith.constant 0 : i32
    %c0_i32_1 = arith.constant 0 : i32
    %c0_i32_2 = arith.constant 0 : i32
    return %c0_i32, %c0_i32_0, %c0_i32_1 : i32, i32, i32
  }
  func.func @transform_9(%arg0: i32, %arg1: i32) -> (i32, i32, i32) {
    %c0_i32 = arith.constant 0 : i32
    %c0_i32_0 = arith.constant 0 : i32
    %c0_i32_1 = arith.constant 0 : i32
    %c0_i32_2 = arith.constant 0 : i32
    return %c0_i32, %c0_i32_0, %c0_i32_1 : i32, i32, i32
  }
  func.func @transform_10(%arg0: i32, %arg1: i32) -> (i32, i32) {
    %c0_i32 = arith.constant 0 : i32
    %c0_i32_0 = arith.constant 0 : i32
    %c0_i32_1 = arith.constant 0 : i32
    return %c0_i32, %c0_i32_0 : i32, i32
  }
  func.func @transform_11(%arg0: i32, %arg1: i32) -> (i32, i32, i32) {
    %c0_i32 = arith.constant 0 : i32
    %c0_i32_0 = arith.constant 0 : i32
    %c0_i32_1 = arith.constant 0 : i32
    %c0_i32_2 = arith.constant 0 : i32
    return %c0_i32, %c0_i32_0, %c0_i32_1 : i32, i32, i32
  }
  func.func @transform_12(%arg0: i32, %arg1: i32) -> (i32, i32) {
    %c0_i32 = arith.constant 0 : i32
    %c0_i32_0 = arith.constant 0 : i32
    %c0_i32_1 = arith.constant 0 : i32
    return %c0_i32, %c0_i32_0 : i32, i32
  }
  func.func @transform_13(%arg0: i32, %arg1: i32) -> (i32, i32, i32, i32) {
    %c0_i32 = arith.constant 0 : i32
    %c0_i32_0 = arith.constant 0 : i32
    %c0_i32_1 = arith.constant 0 : i32
    return %arg0, %arg1, %c0_i32, %c0_i32_0 : i32, i32, i32, i32
  }
}

</mosaic_0001>

<llo_original>
// kernel: tpu_custom_call.1
$region0: #{tpu_custom_call.1}
  #allocation0 [shape = 'u32[]', space=smem, size = 0x4, offset = 0x4, fixed_abs, tag = 'smem constant byte address 0x4 - core index']
  #allocation1 [shape = 'u32[144,128]{1,0:T(1,128)}', space=vmem, size = 0x12000, scoped, tag = 'internal scratch']
  %s0 = inlined_call_operand.vmem [shape: f32[2,8,8,8], index: 0, kind: input, shape index: {}]
  %s1 = inlined_call_operand.vmem [shape: f32[2,8,8,8], index: 1, kind: input, shape index: {}]
  %s2 = inlined_call_operand.vmem [shape: f32[2,8,8,8], index: 2, kind: input, shape index: {}]
  %s3 = inlined_call_operand.vmem [shape: f32[2,16,16,4], index: 3, kind: input, shape index: {}]
  %s4 = inlined_call_operand.vmem [shape: f32[2,16,16,4], index: 4, kind: input, shape index: {}]
  %s5 = inlined_call_operand.vmem [shape: f32[2,16,16,4], index: 5, kind: input, shape index: {}]
  %s6 = inlined_call_operand.vmem [shape: f32[8,16], index: 6, kind: input, shape index: {}]
  %s7 = inlined_call_operand.vmem [shape: f32[1,16], index: 7, kind: input, shape index: {}]
  %s8 = inlined_call_operand.vmem [shape: f32[3,12,4], index: 8, kind: input, shape index: {}]
  %s9 = inlined_call_operand.vmem [shape: f32[3,12,4], index: 9, kind: input, shape index: {}]
  %s10 = inlined_call_operand.vmem [shape: f32[1,4], index: 10, kind: input, shape index: {}]
  %s11 = inlined_call_operand.vmem [shape: f32[3,12,4], index: 11, kind: input, shape index: {}]
  %s12 = inlined_call_operand.vmem [shape: f32[1,4], index: 12, kind: input, shape index: {}]
  %s13 = inlined_call_operand.vmem [shape: f32[2,16,16,4], index: 13, kind: output, shape index: {}]
  %s14 = sld [smem:[#allocation0]]
  $region85: #{tpu_custom_call.1} parent=0
    _
  %s16 = ssub.s32 1, %s14
  %s17 = scalar_select 0, %s16, %s14
  loop: start=0, step=1, limit=4
  $region2: #{tpu_custom_call.1} parent=0 // loop_pre_header
    _
  $region3: #{tpu_custom_call.1} parent=0 // loop_header
    %s19 = sphi 0, %s23
    %p20 = scmp.ge.s32.totalorder %s19, 4
    %s26 = sphi 0, %s38
    %s27 = sphi 0, %s34
    %s28 = sphi 0, %s26
    %s29 = sphi 0, %s27
    %s30 = sphi 0, %s28
    %s31 = sphi 0, %s29
    %s51 = sphi 0, %s53
    %s54 = sphi 0, %s51
    %s55 = sphi 0, %s54
    %s71 = sphi 0, %s55
    %s79 = sphi 0, %s81
    %s82 = sphi 0, %s79
    %s83 = sphi 0, %s82
    %s99 = sphi 0, %s83
    %s115 = sphi 0, %s117
    %s118 = sphi 0, %s115
    %s119 = sphi 0, %s118
    %s135 = sphi 0, %s119
    %s151 = sphi 0, %s153
    %s154 = sphi 0, %s151
    %s155 = sphi 0, %s154
    %s171 = sphi 0, %s155
    %s179 = sphi 0, %s181
    %s182 = sphi 0, %s179
    %s183 = sphi 0, %s182
    %s199 = sphi 0, %s183
    %s215 = sphi 0, %s217
    %s218 = sphi 0, %s215
    %s219 = sphi 0, %s218
    %s235 = sphi 0, %s219
    %s239 = sphi 0, %s239
    %s241 = sphi 0, %s239
    %s242 = sphi 0, %s241
    %s256 = sphi 0, %s242
    %s260 = sphi 0, %s260
    %s262 = sphi 0, %s260
    %s263 = sphi 0, %s262
    %s277 = sphi 0, %s263
    %s281 = sphi 0, %s281
    %s283 = sphi 0, %s281
    %s284 = sphi 0, %s283
    %s298 = sphi 0, %s284
    %s302 = sphi 0, %s302
    %s304 = sphi 0, %s302
    %s305 = sphi 0, %s304
    %s319 = sphi 0, %s305
    %s323 = sphi 0, %s323
    %s325 = sphi 0, %s323
    %s326 = sphi 0, %s325
    %s340 = sphi 0, %s326
    %s344 = sphi 0, %s344
    %s346 = sphi 0, %s344
    %s347 = sphi 0, %s346
    %s361 = sphi 0, %s347
    %s365 = sphi 0, %s365
    %s367 = sphi 0, %s365
    %s368 = sphi 0, %s367
    %s382 = sphi 0, %s368
    %s390 = sphi 0, %s392
    %s393 = sphi 0, %s390
    %s394 = sphi 0, %s393
    %s410 = sphi 0, %s394
  $region4: #{tpu_custom_call.1} parent=0 // loop_header_branch
    %22 = sbr.rel (%p20) target = $region8
  $region5: #{tpu_custom_call.1} parent=0 // loop_body
    %s24 = ssub.s32 %s19, 1
    %s25 = ssub.s32 %s19, 2
    %s32 = sadd.s32 1, %s27
    %p33 = scmp.ge.s32.totalorder %s32, 1
    %s34 = scalar_select %p33, 0, %s32
    %s35 = sadd.s32 1, %s26
    %s36 = scalar_select %p33, %s35, %s26
    %p37 = scmp.ge.s32.totalorder %s36, 2
    %s38 = scalar_select %p37, 0, %s36
    %s39 = smul.u32 %s27, 8
    %s40 = ssub.s32 %s39, 1
    %p41 = scmp.gt.s32.totalorder %s40, 0
    %s42 = scalar_select %p41, %s40, 0
    %s43 = smul.u32 %s34, 8
    %s44 = ssub.s32 %s43, 1
    %p45 = scmp.gt.s32.totalorder %s44, 0
    %s46 = scalar_select %p45, %s44, 0
    %s47 = ssub.s32 %s26, %s38
    %s48 = ssub.s32 %s42, %s46
    %s49 = sor.u32 %s47, %s48
    %p50 = scmp.eq.s32.totalorder %s49, 0
    %s52 = sadd.s32 %s51, 1
    %s53 = scalar_select %p50, %s51, %s52
    %p56 = pneg %p50
    %p57 = scmp.eq.s32.totalorder %s19, 1
    %p58 = por %p56, %p57
    %p59 = scmp.ne.s32.totalorder %s51, %s54
    %p60 = scmp.eq.s32.totalorder %s19, 0
    %p61 = por %p59, %p60
    %p62 = scmp.ne.s32.totalorder %s51, %s54
    %p63 = scmp.eq.s32.totalorder %s24, 1
    %p64 = por %p62, %p63
    %p65 = scmp.ne.s32.totalorder %s54, %s55
    %p66 = scmp.eq.s32.totalorder %s24, 0
    %p67 = por %p65, %p66
    %p68 = scmp.ne.s32.totalorder %s54, %s55
    %p69 = scmp.eq.s32.totalorder %s25, 1
    %p70 = por %p68, %p69
    %p72 = scmp.ne.s32.totalorder %s55, %s71
    %p73 = scmp.eq.s32.totalorder %s25, 0
    %p74 = por %p72, %p73
    %s75 = ssub.s32 %s26, %s38
    %s76 = ssub.s32 %s27, %s34
    %s77 = sor.u32 %s75, %s76
    %p78 = scmp.eq.s32.totalorder %s77, 0
    %s80 = sadd.s32 %s79, 1
    %s81 = scalar_select %p78, %s79, %s80
    %p84 = pneg %p78
    %p85 = scmp.eq.s32.totalorder %s19, 1
    %p86 = por %p84, %p85
    %p87 = scmp.ne.s32.totalorder %s79, %s82
    %p88 = scmp.eq.s32.totalorder %s19, 0
    %p89 = por %p87, %p88
    %p90 = scmp.ne.s32.totalorder %s79, %s82
    %p91 = scmp.eq.s32.totalorder %s24, 1
    %p92 = por %p90, %p91
    %p93 = scmp.ne.s32.totalorder %s82, %s83
    %p94 = scmp.eq.s32.totalorder %s24, 0
    %p95 = por %p93, %p94
    %p96 = scmp.ne.s32.totalorder %s82, %s83
    %p97 = scmp.eq.s32.totalorder %s25, 1
    %p98 = por %p96, %p97
    %p100 = scmp.ne.s32.totalorder %s83, %s99
    %p101 = scmp.eq.s32.totalorder %s25, 0
    %p102 = por %p100, %p101
    %s103 = sadd.s32 %s27, 1
    %s104 = smul.u32 %s103, 8
    %p105 = scmp.lt.s32.totalorder %s104, 7
    %s106 = scalar_select %p105, %s104, 7
    %s107 = sadd.s32 %s34, 1
    %s108 = smul.u32 %s107, 8
    %p109 = scmp.lt.s32.totalorder %s108, 7
    %s110 = scalar_select %p109, %s108, 7
    %s111 = ssub.s32 %s26, %s38
    %s112 = ssub.s32 %s106, %s110
    %s113 = sor.u32 %s111, %s112
    %p114 = scmp.eq.s32.totalorder %s113, 0
    %s116 = sadd.s32 %s115, 1
    %s117 = scalar_select %p114, %s115, %s116
    %p120 = pneg %p114
    %p121 = scmp.eq.s32.totalorder %s19, 1
    %p122 = por %p120, %p121
    %p123 = scmp.ne.s32.totalorder %s115, %s118
    %p124 = scmp.eq.s32.totalorder %s19, 0
    %p125 = por %p123, %p124
    %p126 = scmp.ne.s32.totalorder %s115, %s118
    %p127 = scmp.eq.s32.totalorder %s24, 1
    %p128 = por %p126, %p127
    %p129 = scmp.ne.s32.totalorder %s118, %s119
    %p130 = scmp.eq.s32.totalorder %s24, 0
    %p131 = por %p129, %p130
    %p132 = scmp.ne.s32.totalorder %s118, %s119
    %p133 = scmp.eq.s32.totalorder %s25, 1
    %p134 = por %p132, %p133
    %p136 = scmp.ne.s32.totalorder %s119, %s135
    %p137 = scmp.eq.s32.totalorder %s25, 0
    %p138 = por %p136, %p137
    %s139 = smul.u32 %s27, 8
    %s140 = ssub.s32 %s139, 1
    %p141 = scmp.gt.s32.totalorder %s140, 0
    %s142 = scalar_select %p141, %s140, 0
    %s143 = smul.u32 %s34, 8
    %s144 = ssub.s32 %s143, 1
    %p145 = scmp.gt.s32.totalorder %s144, 0
    %s146 = scalar_select %p145, %s144, 0
    %s147 = ssub.s32 %s26, %s38
    %s148 = ssub.s32 %s142, %s146
    %s149 = sor.u32 %s147, %s148
    %p150 = scmp.eq.s32.totalorder %s149, 0
    %s152 = sadd.s32 %s151, 1
    %s153 = scalar_select %p150, %s151, %s152
    %p156 = pneg %p150
    %p157 = scmp.eq.s32.totalorder %s19, 1
    %p158 = por %p156, %p157
    %p159 = scmp.ne.s32.totalorder %s151, %s154
    %p160 = scmp.eq.s32.totalorder %s19, 0
    %p161 = por %p159, %p160
    %p162 = scmp.ne.s32.totalorder %s151, %s154
    %p163 = scmp.eq.s32.totalorder %s24, 1
    %p164 = por %p162, %p163
    %p165 = scmp.ne.s32.totalorder %s154, %s155
    %p166 = scmp.eq.s32.totalorder %s24, 0
    %p167 = por %p165, %p166
    %p168 = scmp.ne.s32.totalorder %s154, %s155
    %p169 = scmp.eq.s32.totalorder %s25, 1
    %p170 = por %p168, %p169
    %p172 = scmp.ne.s32.totalorder %s155, %s171
    %p173 = scmp.eq.s32.totalorder %s25, 0
    %p174 = por %p172, %p173
    %s175 = ssub.s32 %s26, %s38
    %s176 = ssub.s32 %s27, %s34
    %s177 = sor.u32 %s175, %s176
    %p178 = scmp.eq.s32.totalorder %s177, 0
    %s180 = sadd.s32 %s179, 1
    %s181 = scalar_select %p178, %s179, %s180
    %p184 = pneg %p178
    %p185 = scmp.eq.s32.totalorder %s19, 1
    %p186 = por %p184, %p185
    %p187 = scmp.ne.s32.totalorder %s179, %s182
    %p188 = scmp.eq.s32.totalorder %s19, 0
    %p189 = por %p187, %p188
    %p190 = scmp.ne.s32.totalorder %s179, %s182
    %p191 = scmp.eq.s32.totalorder %s24, 1
    %p192 = por %p190, %p191
    %p193 = scmp.ne.s32.totalorder %s182, %s183
    %p194 = scmp.eq.s32.totalorder %s24, 0
    %p195 = por %p193, %p194
    %p196 = scmp.ne.s32.totalorder %s182, %s183
    %p197 = scmp.eq.s32.totalorder %s25, 1
    %p198 = por %p196, %p197
    %p200 = scmp.ne.s32.totalorder %s183, %s199
    %p201 = scmp.eq.s32.totalorder %s25, 0
    %p202 = por %p200, %p201
    %s203 = sadd.s32 %s27, 1
    %s204 = smul.u32 %s203, 8
    %p205 = scmp.lt.s32.totalorder %s204, 7
    %s206 = scalar_select %p205, %s204, 7
    %s207 = sadd.s32 %s34, 1
    %s208 = smul.u32 %s207, 8
    %p209 = scmp.lt.s32.totalorder %s208, 7
    %s210 = scalar_select %p209, %s208, 7
    %s211 = ssub.s32 %s26, %s38
    %s212 = ssub.s32 %s206, %s210
    %s213 = sor.u32 %s211, %s212
    %p214 = scmp.eq.s32.totalorder %s213, 0
    %s216 = sadd.s32 %s215, 1
    %s217 = scalar_select %p214, %s215, %s216
    %p220 = pneg %p214
    %p221 = scmp.eq.s32.totalorder %s19, 1
    %p222 = por %p220, %p221
    %p223 = scmp.ne.s32.totalorder %s215, %s218
    %p224 = scmp.eq.s32.totalorder %s19, 0
    %p225 = por %p223, %p224
    %p226 = scmp.ne.s32.totalorder %s215, %s218
    %p227 = scmp.eq.s32.totalorder %s24, 1
    %p228 = por %p226, %p227
    %p229 = scmp.ne.s32.totalorder %s218, %s219
    %p230 = scmp.eq.s32.totalorder %s24, 0
    %p231 = por %p229, %p230
    %p232 = scmp.ne.s32.totalorder %s218, %s219
    %p233 = scmp.eq.s32.totalorder %s25, 1
    %p234 = por %p232, %p233
    %p236 = scmp.ne.s32.totalorder %s219, %s235
    %p237 = scmp.eq.s32.totalorder %s25, 0
    %p238 = por %p236, %p237
    %s240 = sadd.s32 %s239, 1
    %p243 = scmp.eq.s32.totalorder %s19, 1
    %p244 = scmp.ne.s32.totalorder %s239, %s241
    %p245 = scmp.eq.s32.totalorder %s19, 0
    %p246 = por %p244, %p245
    %p247 = scmp.ne.s32.totalorder %s239, %s241
    %p248 = scmp.eq.s32.totalorder %s24, 1
    %p249 = por %p247, %p248
    %p250 = scmp.ne.s32.totalorder %s241, %s242
    %p251 = scmp.eq.s32.totalorder %s24, 0
    %p252 = por %p250, %p251
    %p253 = scmp.ne.s32.totalorder %s241, %s242
    %p254 = scmp.eq.s32.totalorder %s25, 1
    %p255 = por %p253, %p254
    %p257 = scmp.ne.s32.totalorder %s242, %s256
    %p258 = scmp.eq.s32.totalorder %s25, 0
    %p259 = por %p257, %p258
    %s261 = sadd.s32 %s260, 1
    %p264 = scmp.eq.s32.totalorder %s19, 1
    %p265 = scmp.ne.s32.totalorder %s260, %s262
    %p266 = scmp.eq.s32.totalorder %s19, 0
    %p267 = por %p265, %p266
    %p268 = scmp.ne.s32.totalorder %s260, %s262
    %p269 = scmp.eq.s32.totalorder %s24, 1
    %p270 = por %p268, %p269
    %p271 = scmp.ne.s32.totalorder %s262, %s263
    %p272 = scmp.eq.s32.totalorder %s24, 0
    %p273 = por %p271, %p272
    %p274 = scmp.ne.s32.totalorder %s262, %s263
    %p275 = scmp.eq.s32.totalorder %s25, 1
    %p276 = por %p274, %p275
    %p278 = scmp.ne.s32.totalorder %s263, %s277
    %p279 = scmp.eq.s32.totalorder %s25, 0
    %p280 = por %p278, %p279
    %s282 = sadd.s32 %s281, 1
    %p285 = scmp.eq.s32.totalorder %s19, 1
    %p286 = scmp.ne.s32.totalorder %s281, %s283
    %p287 = scmp.eq.s32.totalorder %s19, 0
    %p288 = por %p286, %p287
    %p289 = scmp.ne.s32.totalorder %s281, %s283
    %p290 = scmp.eq.s32.totalorder %s24, 1
    %p291 = por %p289, %p290
    %p292 = scmp.ne.s32.totalorder %s283, %s284
    %p293 = scmp.eq.s32.totalorder %s24, 0
    %p294 = por %p292, %p293
    %p295 = scmp.ne.s32.totalorder %s283, %s284
    %p296 = scmp.eq.s32.totalorder %s25, 1
    %p297 = por %p295, %p296
    %p299 = scmp.ne.s32.totalorder %s284, %s298
    %p300 = scmp.eq.s32.totalorder %s25, 0
    %p301 = por %p299, %p300
    %s303 = sadd.s32 %s302, 1
    %p306 = scmp.eq.s32.totalorder %s19, 1
    %p307 = scmp.ne.s32.totalorder %s302, %s304
    %p308 = scmp.eq.s32.totalorder %s19, 0
    %p309 = por %p307, %p308
    %p310 = scmp.ne.s32.totalorder %s302, %s304
    %p311 = scmp.eq.s32.totalorder %s24, 1
    %p312 = por %p310, %p311
    %p313 = scmp.ne.s32.totalorder %s304, %s305
    %p314 = scmp.eq.s32.totalorder %s24, 0
    %p315 = por %p313, %p314
    %p316 = scmp.ne.s32.totalorder %s304, %s305
    %p317 = scmp.eq.s32.totalorder %s25, 1
    %p318 = por %p316, %p317
    %p320 = scmp.ne.s32.totalorder %s305, %s319
    %p321 = scmp.eq.s32.totalorder %s25, 0
    %p322 = por %p320, %p321
    %s324 = sadd.s32 %s323, 1
    %p327 = scmp.eq.s32.totalorder %s19, 1
    %p328 = scmp.ne.s32.totalorder %s323, %s325
    %p329 = scmp.eq.s32.totalorder %s19, 0
    %p330 = por %p328, %p329
    %p331 = scmp.ne.s32.totalorder %s323, %s325
    %p332 = scmp.eq.s32.totalorder %s24, 1
    %p333 = por %p331, %p332
    %p334 = scmp.ne.s32.totalorder %s325, %s326
    %p335 = scmp.eq.s32.totalorder %s24, 0
    %p336 = por %p334, %p335
    %p337 = scmp.ne.s32.totalorder %s325, %s326
    %p338 = scmp.eq.s32.totalorder %s25, 1
    %p339 = por %p337, %p338
    %p341 = scmp.ne.s32.totalorder %s326, %s340
    %p342 = scmp.eq.s32.totalorder %s25, 0
    %p343 = por %p341, %p342
    %s345 = sadd.s32 %s344, 1
    %p348 = scmp.eq.s32.totalorder %s19, 1
    %p349 = scmp.ne.s32.totalorder %s344, %s346
    %p350 = scmp.eq.s32.totalorder %s19, 0
    %p351 = por %p349, %p350
    %p352 = scmp.ne.s32.totalorder %s344, %s346
    %p353 = scmp.eq.s32.totalorder %s24, 1
    %p354 = por %p352, %p353
    %p355 = scmp.ne.s32.totalorder %s346, %s347
    %p356 = scmp.eq.s32.totalorder %s24, 0
    %p357 = por %p355, %p356
    %p358 = scmp.ne.s32.totalorder %s346, %s347
    %p359 = scmp.eq.s32.totalorder %s25, 1
    %p360 = por %p358, %p359
    %p362 = scmp.ne.s32.totalorder %s347, %s361
    %p363 = scmp.eq.s32.totalorder %s25, 0
    %p364 = por %p362, %p363
    %s366 = sadd.s32 %s365, 1
    %p369 = scmp.eq.s32.totalorder %s19, 1
    %p370 = scmp.ne.s32.totalorder %s365, %s367
    %p371 = scmp.eq.s32.totalorder %s19, 0
    %p372 = por %p370, %p371
    %p373 = scmp.ne.s32.totalorder %s365, %s367
    %p374 = scmp.eq.s32.totalorder %s24, 1
    %p375 = por %p373, %p374
    %p376 = scmp.ne.s32.totalorder %s367, %s368
    %p377 = scmp.eq.s32.totalorder %s24, 0
    %p378 = por %p376, %p377
    %p379 = scmp.ne.s32.totalorder %s367, %s368
    %p380 = scmp.eq.s32.totalorder %s25, 1
    %p381 = por %p379, %p380
    %p383 = scmp.ne.s32.totalorder %s368, %s382
    %p384 = scmp.eq.s32.totalorder %s25, 0
    %p385 = por %p383, %p384
    %s386 = ssub.s32 %s26, %s38
    %s387 = ssub.s32 %s27, %s34
    %s388 = sor.u32 %s386, %s387
    %p389 = scmp.eq.s32.totalorder %s388, 0
    %s391 = sadd.s32 %s390, 1
    %s392 = scalar_select %p389, %s390, %s391
    %p395 = pneg %p389
    %p396 = scmp.eq.s32.totalorder %s19, 1
    %p397 = por %p395, %p396
    %p398 = scmp.ne.s32.totalorder %s390, %s393
    %p399 = scmp.eq.s32.totalorder %s19, 0
    %p400 = por %p398, %p399
    %p401 = scmp.ne.s32.totalorder %s390, %s393
    %p402 = scmp.eq.s32.totalorder %s24, 1
    %p403 = por %p401, %p402
    %p404 = scmp.ne.s32.totalorder %s393, %s394
    %p405 = scmp.eq.s32.totalorder %s24, 0
    %p406 = por %p404, %p405
    %p407 = scmp.ne.s32.totalorder %s393, %s394
    %p408 = scmp.eq.s32.totalorder %s25, 1
    %p409 = por %p407, %p408
    %p411 = scmp.ne.s32.totalorder %s394, %s410
    %p412 = scmp.eq.s32.totalorder %s25, 0
    %p413 = por %p411, %p412
    %p414 = scmp.le.s32.totalorder 1, %s19
    %p415 = scmp.lt.s32.totalorder %s19, 3
    %p416 = pnand %p414, %p415
    %p417 = pneg %p416
    // Predicated region
    $region9: #{tpu_custom_call.1} parent=5 // pred_check
      _
    $region10: #{tpu_custom_call.1} parent=5 // pred_check_branch
      %419 = sbr.rel (%p416) target = $region12
    $region11: #{tpu_custom_call.1} parent=5 // pred_region
      %s420 = ssub.s32 %s19, 1
      // Predicated region
      $region13: #{tpu_custom_call.1} parent=11 // pred_check
        %p421 = pneg %p252
      $region14: #{tpu_custom_call.1} parent=11 // pred_check_branch
        %423 = sbr.rel (%p421) target = $region16
      $region15: #{tpu_custom_call.1} parent=11 // pred_region
        _
      $region16: #{tpu_custom_call.1} parent=11 // pred_fallthru
        _
      // Predicated region
      $region17: #{tpu_custom_call.1} parent=11 // pred_check
        %p424 = pneg %p273
      $region18: #{tpu_custom_call.1} parent=11 // pred_check_branch
        %426 = sbr.rel (%p424) target = $region20
      $region19: #{tpu_custom_call.1} parent=11 // pred_region
        _
      $region20: #{tpu_custom_call.1} parent=11 // pred_fallthru
        _
      // Predicated region
      $region21: #{tpu_custom_call.1} parent=11 // pred_check
        %p427 = pneg %p294
      $region22: #{tpu_custom_call.1} parent=11 // pred_check_branch
        %429 = sbr.rel (%p427) target = $region24
      $region23: #{tpu_custom_call.1} parent=11 // pred_region
        _
      $region24: #{tpu_custom_call.1} parent=11 // pred_fallthru
        _
      // Predicated region
      $region25: #{tpu_custom_call.1} parent=11 // pred_check
        %p430 = pneg %p315
      $region26: #{tpu_custom_call.1} parent=11 // pred_check_branch
        %432 = sbr.rel (%p430) target = $region28
      $region27: #{tpu_custom_call.1} parent=11 // pred_region
        _
      $region28: #{tpu_custom_call.1} parent=11 // pred_fallthru
        _
      // Predicated region
      $region29: #{tpu_custom_call.1} parent=11 // pred_check
        %p433 = pneg %p336
      $region30: #{tpu_custom_call.1} parent=11 // pred_check_branch
        %435 = sbr.rel (%p433) target = $region32
      $region31: #{tpu_custom_call.1} parent=11 // pred_region
        _
      $region32: #{tpu_custom_call.1} parent=11 // pred_fallthru
        _
      // Predicated region
      $region33: #{tpu_custom_call.1} parent=11 // pred_check
        %p436 = pneg %p357
      $region34: #{tpu_custom_call.1} parent=11 // pred_check_branch
        %438 = sbr.rel (%p436) target = $region36
      $region35: #{tpu_custom_call.1} parent=11 // pred_region
        _
      $region36: #{tpu_custom_call.1} parent=11 // pred_fallthru
        _
      // Predicated region
      $region37: #{tpu_custom_call.1} parent=11 // pred_check
        %p439 = pneg %p378
      $region38: #{tpu_custom_call.1} parent=11 // pred_check_branch
        %441 = sbr.rel (%p439) target = $region40
      $region39: #{tpu_custom_call.1} parent=11 // pred_region
        _
      $region40: #{tpu_custom_call.1} parent=11 // pred_fallthru
        _
    $region12: #{tpu_custom_call.1} parent=5 // pred_fallthru
      _
    %p442 = scmp.lt.s32.totalorder %s19, 2
    // Predicated region
    $region41: #{tpu_custom_call.1} parent=5 // pred_check
      %p443 = pneg %p442
    $region42: #{tpu_custom_call.1} parent=5 // pred_check_branch
      %445 = sbr.rel (%p443) target = $region44
    $region43: #{tpu_custom_call.1} parent=5 // pred_region
      // Predicated region
      $region45: #{tpu_custom_call.1} parent=43 // pred_check
        %p446 = pneg %p61
      $region46: #{tpu_custom_call.1} parent=43 // pred_check_branch
        %448 = sbr.rel (%p446) target = $region48
      $region47: #{tpu_custom_call.1} parent=43 // pred_region
        %s449 = smul.u32 %s27, 8
        %s450 = ssub.s32 %s449, 1
        %p451 = scmp.gt.s32.totalorder %s450, 0
        %s452 = scalar_select %p451, %s450, 0
        %p453 = scmp.lt.s32.totalorder %s26, 1
        %s454 = scalar_select %p453, %s26, 1
        %p455 = scmp.lt.s32.totalorder %s452, 7
        %s456 = scalar_select %p455, %s452, 7
        %s457 = smul.addr %s454, 8
        %s458 = sadd.s32 %s456, %s457
        %s459 = smul.addr %s458, 8
        %s460 = scalar_lea.vmem %s0, %s459
        %s461 = smul.u32 %s27, 8
        %s462 = ssub.s32 %s461, 1
        %p463 = scmp.gt.s32.totalorder %s462, 0
        %s464 = scalar_select %p463, %s462, 0
      $region48: #{tpu_custom_call.1} parent=43 // pred_fallthru
        _
      // Predicated region
      $region49: #{tpu_custom_call.1} parent=43 // pred_check
        %p465 = pneg %p89
      $region50: #{tpu_custom_call.1} parent=43 // pred_check_branch
        %467 = sbr.rel (%p465) target = $region52
      $region51: #{tpu_custom_call.1} parent=43 // pred_region
        %s468 = smul.u32 8, %s27
        %p469 = scmp.lt.s32.totalorder %s26, 1
        %s470 = scalar_select %p469, %s26, 1
        %p471 = scmp.lt.s32.totalorder %s468, 7
        %s472 = scalar_select %p471, %s468, 7
        %s473 = smul.addr %s470, 8
        %s474 = sadd.s32 %s472, %s473
        %s475 = smul.addr %s474, 8
        %s476 = scalar_lea.vmem %s1, %s475
        %s477 = smul.u32 8, %s27
      $region52: #{tpu_custom_call.1} parent=43 // pred_fallthru
        _
      // Predicated region
      $region53: #{tpu_custom_call.1} parent=43 // pred_check
        %p478 = pneg %p125
      $region54: #{tpu_custom_call.1} parent=43 // pred_check_branch
        %480 = sbr.rel (%p478) target = $region56
      $region55: #{tpu_custom_call.1} parent=43 // pred_region
        %s481 = sadd.s32 %s27, 1
        %s482 = smul.u32 %s481, 8
        %p483 = scmp.lt.s32.totalorder %s482, 7
        %s484 = scalar_select %p483, %s482, 7
        %p485 = scmp.lt.s32.totalorder %s26, 1
        %s486 = scalar_select %p485, %s26, 1
        %p487 = scmp.lt.s32.totalorder %s484, 7
        %s488 = scalar_select %p487, %s484, 7
        %s489 = smul.addr %s486, 8
        %s490 = sadd.s32 %s488, %s489
        %s491 = smul.addr %s490, 8
        %s492 = scalar_lea.vmem %s2, %s491
        %s493 = sadd.s32 %s27, 1
        %s494 = smul.u32 %s493, 8
        %p495 = scmp.lt.s32.totalorder %s494, 7
        %s496 = scalar_select %p495, %s494, 7
      $region56: #{tpu_custom_call.1} parent=43 // pred_fallthru
        _
      // Predicated region
      $region57: #{tpu_custom_call.1} parent=43 // pred_check
        %p497 = pneg %p161
      $region58: #{tpu_custom_call.1} parent=43 // pred_check_branch
        %499 = sbr.rel (%p497) target = $region60
      $region59: #{tpu_custom_call.1} parent=43 // pred_region
        %s500 = smul.u32 %s27, 8
        %s501 = ssub.s32 %s500, 1
        %p502 = scmp.gt.s32.totalorder %s501, 0
        %s503 = scalar_select %p502, %s501, 0
        %s504 = smul.u32 2, %s503
        %p505 = scmp.lt.s32.totalorder %s26, 1
        %s506 = scalar_select %p505, %s26, 1
        %p507 = scmp.lt.s32.totalorder %s504, 15
        %s508 = scalar_select %p507, %s504, 15
        %s509 = smul.addr %s508, 2
        %s510 = smul.addr %s506, 32
        %s511 = sadd.s32 %s509, %s510
        %s512 = smul.addr %s511, 8
        %s513 = scalar_lea.vmem %s3, %s512
        %s514 = smul.u32 %s27, 8
        %s515 = ssub.s32 %s514, 1
        %p516 = scmp.gt.s32.totalorder %s515, 0
        %s517 = scalar_select %p516, %s515, 0
        %s518 = smul.u32 2, %s517
      $region60: #{tpu_custom_call.1} parent=43 // pred_fallthru
        _
      // Predicated region
      $region61: #{tpu_custom_call.1} parent=43 // pred_check
        %p519 = pneg %p189
      $region62: #{tpu_custom_call.1} parent=43 // pred_check_branch
        %521 = sbr.rel (%p519) target = $region64
      $region63: #{tpu_custom_call.1} parent=43 // pred_region
        %s522 = smul.u32 16, %s27
        %p523 = scmp.lt.s32.totalorder %s26, 1
        %s524 = scalar_select %p523, %s26, 1
        %p525 = scmp.lt.s32.totalorder %s522, 15
        %s526 = scalar_select %p525, %s522, 15
        %s527 = smul.addr %s526, 2
        %s528 = smul.addr %s524, 32
        %s529 = sadd.s32 %s527, %s528
        %s530 = smul.addr %s529, 8
        %s531 = scalar_lea.vmem %s4, %s530
        %s532 = smul.u32 16, %s27
      $region64: #{tpu_custom_call.1} parent=43 // pred_fallthru
        _
      // Predicated region
      $region65: #{tpu_custom_call.1} parent=43 // pred_check
        %p533 = pneg %p225
      $region66: #{tpu_custom_call.1} parent=43 // pred_check_branch
        %535 = sbr.rel (%p533) target = $region68
      $region67: #{tpu_custom_call.1} parent=43 // pred_region
        %s536 = sadd.s32 %s27, 1
        %s537 = smul.u32 %s536, 8
        %p538 = scmp.lt.s32.totalorder %s537, 7
        %s539 = scalar_select %p538, %s537, 7
        %s540 = smul.u32 2, %s539
        %p541 = scmp.lt.s32.totalorder %s26, 1
        %s542 = scalar_select %p541, %s26, 1
        %p543 = scmp.lt.s32.totalorder %s540, 15
        %s544 = scalar_select %p543, %s540, 15
        %s545 = smul.addr %s544, 2
        %s546 = smul.addr %s542, 32
        %s547 = sadd.s32 %s545, %s546
        %s548 = smul.addr %s547, 8
        %s549 = scalar_lea.vmem %s5, %s548
        %s550 = sadd.s32 %s27, 1
        %s551 = smul.u32 %s550, 8
        %p552 = scmp.lt.s32.totalorder %s551, 7
        %s553 = scalar_select %p552, %s551, 7
        %s554 = smul.u32 2, %s553
      $region68: #{tpu_custom_call.1} parent=43 // pred_fallthru
        _
    $region44: #{tpu_custom_call.1} parent=5 // pred_fallthru
      _
    %p555 = scmp.le.s32.totalorder 1, %s19
    %p556 = scmp.lt.s32.totalorder %s19, 3
    %p557 = pnand %p555, %p556
    %p558 = pneg %p557
    // Predicated region
    $region69: #{tpu_custom_call.1} parent=5 // pred_check
      _
    $region70: #{tpu_custom_call.1} parent=5 // pred_check_branch
      %560 = sbr.rel (%p557) target = $region72
    $region71: #{tpu_custom_call.1} parent=5 // pred_region
      %s561 = ssub.s32 %s19, 1
      %s562 = smul.u32 %s29, 8
      %s563 = ssub.s32 %s562, 1
      %p564 = scmp.gt.s32.totalorder %s563, 0
      %s565 = scalar_select %p564, %s563, 0
      %p566 = scmp.lt.s32.totalorder %s28, 1
      %s567 = scalar_select %p566, %s28, 1
      %p568 = scmp.lt.s32.totalorder %s565, 7
      %s569 = scalar_select %p568, %s565, 7
      %s570 = smul.addr %s567, 8
      %s571 = sadd.s32 %s569, %s570
      %s572 = smul.addr %s571, 8
      %s573 = scalar_lea.vmem %s0, %s572
      %p574 = pneg %p67
      %p575 = pneg %p64
      %s576 = smul.u32 8, %s29
      %p577 = scmp.lt.s32.totalorder %s28, 1
      %s578 = scalar_select %p577, %s28, 1
      %p579 = scmp.lt.s32.totalorder %s576, 7
      %s580 = scalar_select %p579, %s576, 7
      %s581 = smul.addr %s578, 8
      %s582 = sadd.s32 %s580, %s581
      %s583 = smul.addr %s582, 8
      %s584 = scalar_lea.vmem %s1, %s583
      %p585 = pneg %p95
      %p586 = pneg %p92
      %s587 = sadd.s32 %s29, 1
      %s588 = smul.u32 %s587, 8
      %p589 = scmp.lt.s32.totalorder %s588, 7
      %s590 = scalar_select %p589, %s588, 7
      %p591 = scmp.lt.s32.totalorder %s28, 1
      %s592 = scalar_select %p591, %s28, 1
      %p593 = scmp.lt.s32.totalorder %s590, 7
      %s594 = scalar_select %p593, %s590, 7
      %s595 = smul.addr %s592, 8
      %s596 = sadd.s32 %s594, %s595
      %s597 = smul.addr %s596, 8
      %s598 = scalar_lea.vmem %s2, %s597
      %p599 = pneg %p131
      %p600 = pneg %p128
      %s601 = smul.u32 %s29, 8
      %s602 = ssub.s32 %s601, 1
      %p603 = scmp.gt.s32.totalorder %s602, 0
      %s604 = scalar_select %p603, %s602, 0
      %s605 = smul.u32 2, %s604
      %p606 = scmp.lt.s32.totalorder %s28, 1
      %s607 = scalar_select %p606, %s28, 1
      %p608 = scmp.lt.s32.totalorder %s605, 15
      %s609 = scalar_select %p608, %s605, 15
      %s610 = smul.addr %s609, 2
      %s611 = smul.addr %s607, 32
      %s612 = sadd.s32 %s610, %s611
      %s613 = smul.addr %s612, 8
      %s614 = scalar_lea.vmem %s3, %s613
      %p615 = pneg %p167
      %p616 = pneg %p164
      %s617 = smul.u32 16, %s29
      %p618 = scmp.lt.s32.totalorder %s28, 1
      %s619 = scalar_select %p618, %s28, 1
      %p620 = scmp.lt.s32.totalorder %s617, 15
      %s621 = scalar_select %p620, %s617, 15
      %s622 = smul.addr %s621, 2
      %s623 = smul.addr %s619, 32
      %s624 = sadd.s32 %s622, %s623
      %s625 = smul.addr %s624, 8
      %s626 = scalar_lea.vmem %s4, %s625
      %p627 = pneg %p195
      %p628 = pneg %p192
      %s629 = sadd.s32 %s29, 1
      %s630 = smul.u32 %s629, 8
      %p631 = scmp.lt.s32.totalorder %s630, 7
      %s632 = scalar_select %p631, %s630, 7
      %s633 = smul.u32 2, %s632
      %p634 = scmp.lt.s32.totalorder %s28, 1
      %s635 = scalar_select %p634, %s28, 1
      %p636 = scmp.lt.s32.totalorder %s633, 15
      %s637 = scalar_select %p636, %s633, 15
      %s638 = smul.addr %s637, 2
      %s639 = smul.addr %s635, 32
      %s640 = sadd.s32 %s638, %s639
      %s641 = smul.addr %s640, 8
      %s642 = scalar_lea.vmem %s5, %s641
      %p643 = pneg %p231
      %p644 = pneg %p228
      %p645 = pneg %p252
      %p646 = pneg %p249
      %p647 = pneg %p273
      %p648 = pneg %p270
      %p649 = pneg %p294
      %p650 = pneg %p291
      %p651 = pneg %p315
      %p652 = pneg %p312
      %p653 = pneg %p336
      %p654 = pneg %p333
      %p655 = pneg %p357
      %p656 = pneg %p354
      %p657 = pneg %p378
      %p658 = pneg %p375
      %p659 = pneg %p406
      %p660 = pneg %p403
      %s661 = smul.u32 16, %s29
      %p662 = scmp.lt.s32.totalorder %s28, 1
      %s663 = scalar_select %p662, %s28, 1
      %p664 = scmp.lt.s32.totalorder %s661, 15
      %s665 = scalar_select %p664, %s661, 15
      %s666 = smul.addr %s665, 2
      %s667 = smul.addr %s663, 32
      %s668 = sadd.s32 %s666, %s667
      %s669 = smul.addr %s668, 8
      %s670 = scalar_lea.vmem %s13, %s669
      %s671 = smul.u32 %s29, 8
      %s672 = ssub.s32 %s671, 1
      %p673 = scmp.gt.s32.totalorder %s672, 0
      %s674 = scalar_select %p673, %s672, 0
      %p675 = scmp.lt.s32.totalorder %s28, 1
      %s676 = scalar_select %p675, %s28, 1
      %p677 = scmp.lt.s32.totalorder %s674, 7
      %s678 = scalar_select %p677, %s674, 7
      %s679 = smul.addr %s676, 8
      %s680 = sadd.s32 %s678, %s679
      %s681 = smul.addr %s680, 8
      %s682 = scalar_lea.vmem %s0, %s681
      %s683 = smul.u32 %s29, 8
      %s684 = ssub.s32 %s683, 1
      %p685 = scmp.gt.s32.totalorder %s684, 0
      %s686 = scalar_select %p685, %s684, 0
      %s687 = smul.u32 8, %s29
      %p688 = scmp.lt.s32.totalorder %s28, 1
      %s689 = scalar_select %p688, %s28, 1
      %p690 = scmp.lt.s32.totalorder %s687, 7
      %s691 = scalar_select %p690, %s687, 7
      %s692 = smul.addr %s689, 8
      %s693 = sadd.s32 %s691, %s692
      %s694 = smul.addr %s693, 8
      %s695 = scalar_lea.vmem %s1, %s694
      %s696 = smul.u32 8, %s29
      %s697 = sadd.s32 %s29, 1
      %s698 = smul.u32 %s697, 8
      %p699 = scmp.lt.s32.totalorder %s698, 7
      %s700 = scalar_select %p699, %s698, 7
      %p701 = scmp.lt.s32.totalorder %s28, 1
      %s702 = scalar_select %p701, %s28, 1
      %p703 = scmp.lt.s32.totalorder %s700, 7
      %s704 = scalar_select %p703, %s700, 7
      %s705 = smul.addr %s702, 8
      %s706 = sadd.s32 %s704, %s705
      %s707 = smul.addr %s706, 8
      %s708 = scalar_lea.vmem %s2, %s707
      %s709 = sadd.s32 %s29, 1
      %s710 = smul.u32 %s709, 8
      %p711 = scmp.lt.s32.totalorder %s710, 7
      %s712 = scalar_select %p711, %s710, 7
      %s713 = smul.u32 %s29, 8
      %s714 = ssub.s32 %s713, 1
      %p715 = scmp.gt.s32.totalorder %s714, 0
      %s716 = scalar_select %p715, %s714, 0
      %s717 = smul.u32 2, %s716
      %p718 = scmp.lt.s32.totalorder %s28, 1
      %s719 = scalar_select %p718, %s28, 1
      %p720 = scmp.lt.s32.totalorder %s717, 15
      %s721 = scalar_select %p720, %s717, 15
      %s722 = smul.addr %s721, 2
      %s723 = smul.addr %s719, 32
      %s724 = sadd.s32 %s722, %s723
      %s725 = smul.addr %s724, 8
      %s726 = scalar_lea.vmem %s3, %s725
      %s727 = smul.u32 %s29, 8
      %s728 = ssub.s32 %s727, 1
      %p729 = scmp.gt.s32.totalorder %s728, 0
      %s730 = scalar_select %p729, %s728, 0
      %s731 = smul.u32 2, %s730
      %s732 = smul.u32 16, %s29
      %p733 = scmp.lt.s32.totalorder %s28, 1
      %s734 = scalar_select %p733, %s28, 1
      %p735 = scmp.lt.s32.totalorder %s732, 15
      %s736 = scalar_select %p735, %s732, 15
      %s737 = smul.addr %s736, 2
      %s738 = smul.addr %s734, 32
      %s739 = sadd.s32 %s737, %s738
      %s740 = smul.addr %s739, 8
      %s741 = scalar_lea.vmem %s4, %s740
      %s742 = smul.u32 16, %s29
      %s743 = sadd.s32 %s29, 1
      %s744 = smul.u32 %s743, 8
      %p745 = scmp.lt.s32.totalorder %s744, 7
      %s746 = scalar_select %p745, %s744, 7
      %s747 = smul.u32 2, %s746
      %p748 = scmp.lt.s32.totalorder %s28, 1
      %s749 = scalar_select %p748, %s28, 1
      %p750 = scmp.lt.s32.totalorder %s747, 15
      %s751 = scalar_select %p750, %s747, 15
      %s752 = smul.addr %s751, 2
      %s753 = smul.addr %s749, 32
      %s754 = sadd.s32 %s752, %s753
      %s755 = smul.addr %s754, 8
      %s756 = scalar_lea.vmem %s5, %s755
      %s757 = sadd.s32 %s29, 1
      %s758 = smul.u32 %s757, 8
      %p759 = scmp.lt.s32.totalorder %s758, 7
      %s760 = scalar_select %p759, %s758, 7
      %s761 = smul.u32 2, %s760
      %s762 = smul.u32 16, %s29
      %p763 = scmp.lt.s32.totalorder %s28, 1
      %s764 = scalar_select %p763, %s28, 1
      %p765 = scmp.lt.s32.totalorder %s762, 15
      %s766 = scalar_select %p765, %s762, 15
      %s767 = smul.addr %s766, 2
      %s768 = smul.addr %s764, 32
      %s769 = sadd.s32 %s767, %s768
      %s770 = smul.addr %s769, 8
      %s771 = scalar_lea.vmem %s13, %s770
      %s772 = smul.u32 16, %s29
      %s773 = smul.u32 %s29, 16
      %v774 = vld [vmem:[%s682] sm:$0xff]
      %v775 = vld [vmem:[%s695] sm:$0xff]
      %v776 = vld [vmem:[%s695 + $0x8] sm:$0xff]
      %v777 = vld [vmem:[%s695 + $0x10] sm:$0xff]
      %v778 = vld [vmem:[%s695 + $0x18] sm:$0xff]
      %v779 = vld [vmem:[%s695 + $0x20] sm:$0xff]
      %v780 = vld [vmem:[%s695 + $0x28] sm:$0xff]
      %v781 = vld [vmem:[%s695 + $0x30] sm:$0xff]
      %v782 = vld [vmem:[%s695 + $0x38] sm:$0xff]
      %v783 = vld [vmem:[%s708] sm:$0xff]
      %v784 = vld [vmem:[%s6] sm:$0xff]
      %v785 = vld [vmem:[%s7] sm:$0x1]
      %v787 = vlaneseq
      %v788 = vshrl.u32 %v787, 7
      %v789 = vsub.s32 0, %v788
      %v790 = vrot.slane %v785, %v789
      %vm792 = vcmask 64512
      %v794 = vsel %vm792, %v774, 0
      %v797 = vsel %vm792, %v775, 0
      %v800 = vsel %vm792, %v776, 0
      %v803 = vsel %vm792, %v777, 0
      %v806 = vsel %vm792, %v778, 0
      %v809 = vsel %vm792, %v779, 0
      %v812 = vsel %vm792, %v780, 0
      %v815 = vsel %vm792, %v781, 0
      %v818 = vsel %vm792, %v782, 0
      %v821 = vsel %vm792, %v783, 0
      %823 = vmatprep.subr.mxu0 0.0
      %824 = vmatpush1.msra.mxu0 0.0
      %825 = vmatprep.subr.mxu0 0.0
      %826 = vmatpush1.msra.mxu0 0.0
      %827 = vmatprep.subr.mxu0 0.0
      %828 = vmatpush1.msra.mxu0 0.0
      %829 = vmatprep.subr.mxu0 0.0
      %830 = vmatpush1.msra.mxu0 0.0
      %831 = vmatprep.subr.mxu0 0.0
      %832 = vmatpush1.msra.mxu0 0.0
      %833 = vmatprep.subr.mxu0 0.0
      %834 = vmatpush1.msra.mxu0 0.0
      %835 = vmatprep.subr.mxu0 0.0
      %836 = vmatpush1.msra.mxu0 0.0
      %837 = vmatprep.subr.mxu0 0.0
      %838 = vmatpush1.msra.mxu0 0.0
      %839 = vmatprep.subr.mxu0 0.0
      %840 = vmatpush1.msra.mxu0 0.0
      %841 = vmatprep.subr.mxu0 0.0
      %842 = vmatpush1.msra.mxu0 0.0
      %843 = vmatprep.subr.mxu0 0.0
      %844 = vmatpush1.msra.mxu0 0.0
      %845 = vmatprep.subr.mxu0 0.0
      %846 = vmatpush1.msra.mxu0 0.0
      %847 = vmatprep.subr.mxu0 0.0
      %848 = vmatpush1.msra.mxu0 0.0
      %849 = vmatprep.subr.mxu0 0.0
      %850 = vmatpush1.msra.mxu0 0.0
      %851 = vmatprep.subr.mxu0 0.0
      %852 = vmatpush1.msra.mxu0 0.0
      %853 = vmatprep.subr.mxu0 0.0
      %854 = vmatpush1.msra.mxu0 %v784
      %855 = vmatprep.subr.mxu0 0.0
      %856 = vmatpush2.msra.mxu0 0.0
      %857 = vmatprep.subr.mxu0 0.0
      %858 = vmatpush2.msra.mxu0 0.0
      %859 = vmatprep.subr.mxu0 0.0
      %860 = vmatpush2.msra.mxu0 0.0
      %861 = vmatprep.subr.mxu0 0.0
      %862 = vmatpush2.msra.mxu0 0.0
      %863 = vmatprep.subr.mxu0 0.0
      %864 = vmatpush2.msra.mxu0 0.0
      %865 = vmatprep.subr.mxu0 0.0
      %866 = vmatpush2.msra.mxu0 0.0
      %867 = vmatprep.subr.mxu0 0.0
      %868 = vmatpush2.msra.mxu0 0.0
      %869 = vmatprep.subr.mxu0 0.0
      %870 = vmatpush2.msra.mxu0 0.0
      %871 = vmatprep.subr.mxu0 0.0
      %872 = vmatpush2.msra.mxu0 0.0
      %873 = vmatprep.subr.mxu0 0.0
      %874 = vmatpush2.msra.mxu0 0.0
      %875 = vmatprep.subr.mxu0 0.0
      %876 = vmatpush2.msra.mxu0 0.0
      %877 = vmatprep.subr.mxu0 0.0
      %878 = vmatpush2.msra.mxu0 0.0
      %879 = vmatprep.subr.mxu0 0.0
      %880 = vmatpush2.msra.mxu0 0.0
      %881 = vmatprep.subr.mxu0 0.0
      %882 = vmatpush2.msra.mxu0 0.0
      %883 = vmatprep.subr.mxu0 0.0
      %884 = vmatpush2.msra.mxu0 0.0
      %885 = vmatprep.subr.mxu0 0.0
      %886 = vmatpush2.msra.mxu0 0.0
      %887 = vmatprep.mubr.f32.mxu0 0.0
      %888 = vmatmul.mubr.f32.gmra.mxu0 %v794
      %v889 = vpop.f32.mrf.mxu0
      %v890 = vadd.f32 %v790, %v889
      %v891 = vpop.f32.mrf.mxu0
      %892 = vmatprep.mubr.f32.mxu0 0.0
      %893 = vmatmul.mubr.f32.gmra.mxu0 %v797
      %v894 = vpop.f32.mrf.mxu0
      %v895 = vadd.f32 %v790, %v894
      %v896 = vpop.f32.mrf.mxu0
      %897 = vmatprep.mubr.f32.mxu0 0.0
      %898 = vmatmul.mubr.f32.gmra.mxu0 %v800
      %v899 = vpop.f32.mrf.mxu0
      %v900 = vadd.f32 %v790, %v899
      %v901 = vpop.f32.mrf.mxu0
      %902 = vmatprep.mubr.f32.mxu0 0.0
      %903 = vmatmul.mubr.f32.gmra.mxu0 %v803
      %v904 = vpop.f32.mrf.mxu0
      %v905 = vadd.f32 %v790, %v904
      %v906 = vpop.f32.mrf.mxu0
      %907 = vmatprep.mubr.f32.mxu0 0.0
      %908 = vmatmul.mubr.f32.gmra.mxu0 %v806
      %v909 = vpop.f32.mrf.mxu0
      %v910 = vadd.f32 %v790, %v909
      %v911 = vpop.f32.mrf.mxu0
      %912 = vmatprep.mubr.f32.mxu0 0.0
      %913 = vmatmul.mubr.f32.gmra.mxu0 %v809
      %v914 = vpop.f32.mrf.mxu0
      %v915 = vadd.f32 %v790, %v914
      %v916 = vpop.f32.mrf.mxu0
      %917 = vmatprep.mubr.f32.mxu0 0.0
      %918 = vmatmul.mubr.f32.gmra.mxu0 %v812
      %v919 = vpop.f32.mrf.mxu0
      %v920 = vadd.f32 %v790, %v919
      %v921 = vpop.f32.mrf.mxu0
      %922 = vmatprep.mubr.f32.mxu0 0.0
      %923 = vmatmul.mubr.f32.gmra.mxu0 %v815
      %v924 = vpop.f32.mrf.mxu0
      %v925 = vadd.f32 %v790, %v924
      %v926 = vpop.f32.mrf.mxu0
      %927 = vmatprep.mubr.f32.mxu0 0.0
      %928 = vmatmul.mubr.f32.gmra.mxu0 %v818
      %v929 = vpop.f32.mrf.mxu0
      %v930 = vadd.f32 %v790, %v929
      %v931 = vpop.f32.mrf.mxu0
      %932 = vmatprep.mubr.f32.mxu0 0.0
      %933 = vmatmul.mubr.f32.gmra.mxu0 %v821
      %v934 = vpop.f32.mrf.mxu0
      %v935 = vadd.f32 %v790, %v934
      %v936 = vpop.f32.mrf.mxu0
      %937 = vdwg.mxu0
      %v948 = vcombine.high %v890, %v890
      %v950 = vunpack.c.l.s4 1966171168
      %v951 = vunpack.c.0.s8 %v950
      %v952 = vlaneseq
      %v953 = vshrl.u32 %v952, 7
      %v954 = vsub.s32 %v951, %v953
      %v955 = vrot.slane %v890, %v954
      %v957 = vunpack.c.l.s4 1966171168
      %v958 = vunpack.c.0.s8 %v957
      %v959 = vlaneseq
      %v960 = vshrl.u32 %v959, 7
      %v961 = vsub.s32 %v958, %v960
      %v962 = vrot.slane %v948, %v961
      %v963 = vcombine.high %v955, %v955
      %v964 = vcombine.high %v962, %v962
      %v966 = vunpack.c.l.s4 1966171168
      %v967 = vunpack.c.0.s8 %v966
      %v968 = vlaneseq
      %v969 = vshrl.u32 %v968, 7
      %v970 = vsub.s32 %v967, %v969
      %v971 = vrot.slane %v955, %v970
      %v973 = vunpack.c.l.s4 1966171168
      %v974 = vunpack.c.0.s8 %v973
      %v975 = vlaneseq
      %v976 = vshrl.u32 %v975, 7
      %v977 = vsub.s32 %v974, %v976
      %v978 = vrot.slane %v962, %v977
      %v980 = vunpack.c.l.s4 1966171168
      %v981 = vunpack.c.0.s8 %v980
      %v982 = vlaneseq
      %v983 = vshrl.u32 %v982, 7
      %v984 = vsub.s32 %v981, %v983
      %v985 = vrot.slane %v963, %v984
      %v987 = vunpack.c.l.s4 1966171168
      %v988 = vunpack.c.0.s8 %v987
      %v989 = vlaneseq
      %v990 = vshrl.u32 %v989, 7
      %v991 = vsub.s32 %v988, %v990
      %v992 = vrot.slane %v964, %v991
      %v993 = vcombine.high %v971, %v971
      %v994 = vcombine.high %v978, %v978
      %v995 = vcombine.high %v985, %v985
      %v996 = vcombine.high %v992, %v992
      %v997 = vcombine.high %v895, %v895
      %v999 = vunpack.c.l.s4 1966171168
      %v1000 = vunpack.c.0.s8 %v999
      %v1001 = vlaneseq
      %v1002 = vshrl.u32 %v1001, 7
      %v1003 = vsub.s32 %v1000, %v1002
      %v1004 = vrot.slane %v895, %v1003
      %v1006 = vunpack.c.l.s4 1966171168
      %v1007 = vunpack.c.0.s8 %v1006
      %v1008 = vlaneseq
      %v1009 = vshrl.u32 %v1008, 7
      %v1010 = vsub.s32 %v1007, %v1009
      %v1011 = vrot.slane %v997, %v1010
      %v1012 = vcombine.high %v1004, %v1004
      %v1013 = vcombine.high %v1011, %v1011
      %v1015 = vunpack.c.l.s4 1966171168
      %v1016 = vunpack.c.0.s8 %v1015
      %v1017 = vlaneseq
      %v1018 = vshrl.u32 %v1017, 7
      %v1019 = vsub.s32 %v1016, %v1018
      %v1020 = vrot.slane %v1004, %v1019
      %v1022 = vunpack.c.l.s4 1966171168
      %v1023 = vunpack.c.0.s8 %v1022
      %v1024 = vlaneseq
      %v1025 = vshrl.u32 %v1024, 7
      %v1026 = vsub.s32 %v1023, %v1025
      %v1027 = vrot.slane %v1011, %v1026
      %v1029 = vunpack.c.l.s4 1966171168
      %v1030 = vunpack.c.0.s8 %v1029
      %v1031 = vlaneseq
      %v1032 = vshrl.u32 %v1031, 7
      %v1033 = vsub.s32 %v1030, %v1032
      %v1034 = vrot.slane %v1012, %v1033
      %v1036 = vunpack.c.l.s4 1966171168
      %v1037 = vunpack.c.0.s8 %v1036
      %v1038 = vlaneseq
      %v1039 = vshrl.u32 %v1038, 7
      %v1040 = vsub.s32 %v1037, %v1039
      %v1041 = vrot.slane %v1013, %v1040
      %v1042 = vcombine.high %v1020, %v1020
      %v1043 = vcombine.high %v1027, %v1027
      %v1044 = vcombine.high %v1034, %v1034
      %v1045 = vcombine.high %v1041, %v1041
      %v1046 = vcombine.high %v900, %v900
      %v1048 = vunpack.c.l.s4 1966171168
      %v1049 = vunpack.c.0.s8 %v1048
      %v1050 = vlaneseq
      %v1051 = vshrl.u32 %v1050, 7
      %v1052 = vsub.s32 %v1049, %v1051
      %v1053 = vrot.slane %v900, %v1052
      %v1055 = vunpack.c.l.s4 1966171168
      %v1056 = vunpack.c.0.s8 %v1055
      %v1057 = vlaneseq
      %v1058 = vshrl.u32 %v1057, 7
      %v1059 = vsub.s32 %v1056, %v1058
      %v1060 = vrot.slane %v1046, %v1059
      %v1061 = vcombine.high %v1053, %v1053
      %v1062 = vcombine.high %v1060, %v1060
      %v1064 = vunpack.c.l.s4 1966171168
      %v1065 = vunpack.c.0.s8 %v1064
      %v1066 = vlaneseq
      %v1067 = vshrl.u32 %v1066, 7
      %v1068 = vsub.s32 %v1065, %v1067
      %v1069 = vrot.slane %v1053, %v1068
      %v1071 = vunpack.c.l.s4 1966171168
      %v1072 = vunpack.c.0.s8 %v1071
      %v1073 = vlaneseq
      %v1074 = vshrl.u32 %v1073, 7
      %v1075 = vsub.s32 %v1072, %v1074
      %v1076 = vrot.slane %v1060, %v1075
      %v1078 = vunpack.c.l.s4 1966171168
      %v1079 = vunpack.c.0.s8 %v1078
      %v1080 = vlaneseq
      %v1081 = vshrl.u32 %v1080, 7
      %v1082 = vsub.s32 %v1079, %v1081
      %v1083 = vrot.slane %v1061, %v1082
      %v1085 = vunpack.c.l.s4 1966171168
      %v1086 = vunpack.c.0.s8 %v1085
      %v1087 = vlaneseq
      %v1088 = vshrl.u32 %v1087, 7
      %v1089 = vsub.s32 %v1086, %v1088
      %v1090 = vrot.slane %v1062, %v1089
      %v1091 = vcombine.high %v1069, %v1069
      %v1092 = vcombine.high %v1076, %v1076
      %v1093 = vcombine.high %v1083, %v1083
      %v1094 = vcombine.high %v1090, %v1090
      %v1095 = vcombine.high %v905, %v905
      %v1097 = vunpack.c.l.s4 1966171168
      %v1098 = vunpack.c.0.s8 %v1097
      %v1099 = vlaneseq
      %v1100 = vshrl.u32 %v1099, 7
      %v1101 = vsub.s32 %v1098, %v1100
      %v1102 = vrot.slane %v905, %v1101
      %v1104 = vunpack.c.l.s4 1966171168
      %v1105 = vunpack.c.0.s8 %v1104
      %v1106 = vlaneseq
      %v1107 = vshrl.u32 %v1106, 7
      %v1108 = vsub.s32 %v1105, %v1107
      %v1109 = vrot.slane %v1095, %v1108
      %v1110 = vcombine.high %v1102, %v1102
      %v1111 = vcombine.high %v1109, %v1109
      %v1113 = vunpack.c.l.s4 1966171168
      %v1114 = vunpack.c.0.s8 %v1113
      %v1115 = vlaneseq
      %v1116 = vshrl.u32 %v1115, 7
      %v1117 = vsub.s32 %v1114, %v1116
      %v1118 = vrot.slane %v1102, %v1117
      %v1120 = vunpack.c.l.s4 1966171168
      %v1121 = vunpack.c.0.s8 %v1120
      %v1122 = vlaneseq
      %v1123 = vshrl.u32 %v1122, 7
      %v1124 = vsub.s32 %v1121, %v1123
      %v1125 = vrot.slane %v1109, %v1124
      %v1127 = vunpack.c.l.s4 1966171168
      %v1128 = vunpack.c.0.s8 %v1127
      %v1129 = vlaneseq
      %v1130 = vshrl.u32 %v1129, 7
      %v1131 = vsub.s32 %v1128, %v1130
      %v1132 = vrot.slane %v1110, %v1131
      %v1134 = vunpack.c.l.s4 1966171168
      %v1135 = vunpack.c.0.s8 %v1134
      %v1136 = vlaneseq
      %v1137 = vshrl.u32 %v1136, 7
      %v1138 = vsub.s32 %v1135, %v1137
      %v1139 = vrot.slane %v1111, %v1138
      %v1140 = vcombine.high %v1118, %v1118
      %v1141 = vcombine.high %v1125, %v1125
      %v1142 = vcombine.high %v1132, %v1132
      %v1143 = vcombine.high %v1139, %v1139
      %v1144 = vcombine.high %v910, %v910
      %v1146 = vunpack.c.l.s4 1966171168
      %v1147 = vunpack.c.0.s8 %v1146
      %v1148 = vlaneseq
      %v1149 = vshrl.u32 %v1148, 7
      %v1150 = vsub.s32 %v1147, %v1149
      %v1151 = vrot.slane %v910, %v1150
      %v1153 = vunpack.c.l.s4 1966171168
      %v1154 = vunpack.c.0.s8 %v1153
      %v1155 = vlaneseq
      %v1156 = vshrl.u32 %v1155, 7
      %v1157 = vsub.s32 %v1154, %v1156
      %v1158 = vrot.slane %v1144, %v1157
      %v1159 = vcombine.high %v1151, %v1151
      %v1160 = vcombine.high %v1158, %v1158
      %v1162 = vunpack.c.l.s4 1966171168
      %v1163 = vunpack.c.0.s8 %v1162
      %v1164 = vlaneseq
      %v1165 = vshrl.u32 %v1164, 7
      %v1166 = vsub.s32 %v1163, %v1165
      %v1167 = vrot.slane %v1151, %v1166
      %v1169 = vunpack.c.l.s4 1966171168
      %v1170 = vunpack.c.0.s8 %v1169
      %v1171 = vlaneseq
      %v1172 = vshrl.u32 %v1171, 7
      %v1173 = vsub.s32 %v1170, %v1172
      %v1174 = vrot.slane %v1158, %v1173
      %v1176 = vunpack.c.l.s4 1966171168
      %v1177 = vunpack.c.0.s8 %v1176
      %v1178 = vlaneseq
      %v1179 = vshrl.u32 %v1178, 7
      %v1180 = vsub.s32 %v1177, %v1179
      %v1181 = vrot.slane %v1159, %v1180
      %v1183 = vunpack.c.l.s4 1966171168
      %v1184 = vunpack.c.0.s8 %v1183
      %v1185 = vlaneseq
      %v1186 = vshrl.u32 %v1185, 7
      %v1187 = vsub.s32 %v1184, %v1186
      %v1188 = vrot.slane %v1160, %v1187
      %v1189 = vcombine.high %v1167, %v1167
      %v1190 = vcombine.high %v1174, %v1174
      %v1191 = vcombine.high %v1181, %v1181
      %v1192 = vcombine.high %v1188, %v1188
      %v1193 = vcombine.high %v915, %v915
      %v1195 = vunpack.c.l.s4 1966171168
      %v1196 = vunpack.c.0.s8 %v1195
      %v1197 = vlaneseq
      %v1198 = vshrl.u32 %v1197, 7
      %v1199 = vsub.s32 %v1196, %v1198
      %v1200 = vrot.slane %v915, %v1199
      %v1202 = vunpack.c.l.s4 1966171168
      %v1203 = vunpack.c.0.s8 %v1202
      %v1204 = vlaneseq
      %v1205 = vshrl.u32 %v1204, 7
      %v1206 = vsub.s32 %v1203, %v1205
      %v1207 = vrot.slane %v1193, %v1206
      %v1208 = vcombine.high %v1200, %v1200
      %v1209 = vcombine.high %v1207, %v1207
      %v1211 = vunpack.c.l.s4 1966171168
      %v1212 = vunpack.c.0.s8 %v1211
      %v1213 = vlaneseq
      %v1214 = vshrl.u32 %v1213, 7
      %v1215 = vsub.s32 %v1212, %v1214
      %v1216 = vrot.slane %v1200, %v1215
      %v1218 = vunpack.c.l.s4 1966171168
      %v1219 = vunpack.c.0.s8 %v1218
      %v1220 = vlaneseq
      %v1221 = vshrl.u32 %v1220, 7
      %v1222 = vsub.s32 %v1219, %v1221
      %v1223 = vrot.slane %v1207, %v1222
      %v1225 = vunpack.c.l.s4 1966171168
      %v1226 = vunpack.c.0.s8 %v1225
      %v1227 = vlaneseq
      %v1228 = vshrl.u32 %v1227, 7
      %v1229 = vsub.s32 %v1226, %v1228
      %v1230 = vrot.slane %v1208, %v1229
      %v1232 = vunpack.c.l.s4 1966171168
      %v1233 = vunpack.c.0.s8 %v1232
      %v1234 = vlaneseq
      %v1235 = vshrl.u32 %v1234, 7
      %v1236 = vsub.s32 %v1233, %v1235
      %v1237 = vrot.slane %v1209, %v1236
      %v1238 = vcombine.high %v1216, %v1216
      %v1239 = vcombine.high %v1223, %v1223
      %v1240 = vcombine.high %v1230, %v1230
      %v1241 = vcombine.high %v1237, %v1237
      %v1242 = vcombine.high %v920, %v920
      %v1244 = vunpack.c.l.s4 1966171168
      %v1245 = vunpack.c.0.s8 %v1244
      %v1246 = vlaneseq
      %v1247 = vshrl.u32 %v1246, 7
      %v1248 = vsub.s32 %v1245, %v1247
      %v1249 = vrot.slane %v920, %v1248
      %v1251 = vunpack.c.l.s4 1966171168
      %v1252 = vunpack.c.0.s8 %v1251
      %v1253 = vlaneseq
      %v1254 = vshrl.u32 %v1253, 7
      %v1255 = vsub.s32 %v1252, %v1254
      %v1256 = vrot.slane %v1242, %v1255
      %v1257 = vcombine.high %v1249, %v1249
      %v1258 = vcombine.high %v1256, %v1256
      %v1260 = vunpack.c.l.s4 1966171168
      %v1261 = vunpack.c.0.s8 %v1260
      %v1262 = vlaneseq
      %v1263 = vshrl.u32 %v1262, 7
      %v1264 = vsub.s32 %v1261, %v1263
      %v1265 = vrot.slane %v1249, %v1264
      %v1267 = vunpack.c.l.s4 1966171168
      %v1268 = vunpack.c.0.s8 %v1267
      %v1269 = vlaneseq
      %v1270 = vshrl.u32 %v1269, 7
      %v1271 = vsub.s32 %v1268, %v1270
      %v1272 = vrot.slane %v1256, %v1271
      %v1274 = vunpack.c.l.s4 1966171168
      %v1275 = vunpack.c.0.s8 %v1274
      %v1276 = vlaneseq
      %v1277 = vshrl.u32 %v1276, 7
      %v1278 = vsub.s32 %v1275, %v1277
      %v1279 = vrot.slane %v1257, %v1278
      %v1281 = vunpack.c.l.s4 1966171168
      %v1282 = vunpack.c.0.s8 %v1281
      %v1283 = vlaneseq
      %v1284 = vshrl.u32 %v1283, 7
      %v1285 = vsub.s32 %v1282, %v1284
      %v1286 = vrot.slane %v1258, %v1285
      %v1287 = vcombine.high %v1265, %v1265
      %v1288 = vcombine.high %v1272, %v1272
      %v1289 = vcombine.high %v1279, %v1279
      %v1290 = vcombine.high %v1286, %v1286
      %v1291 = vcombine.high %v925, %v925
      %v1293 = vunpack.c.l.s4 1966171168
      %v1294 = vunpack.c.0.s8 %v1293
      %v1295 = vlaneseq
      %v1296 = vshrl.u32 %v1295, 7
      %v1297 = vsub.s32 %v1294, %v1296
      %v1298 = vrot.slane %v925, %v1297
      %v1300 = vunpack.c.l.s4 1966171168
      %v1301 = vunpack.c.0.s8 %v1300
      %v1302 = vlaneseq
      %v1303 = vshrl.u32 %v1302, 7
      %v1304 = vsub.s32 %v1301, %v1303
      %v1305 = vrot.slane %v1291, %v1304
      %v1306 = vcombine.high %v1298, %v1298
      %v1307 = vcombine.high %v1305, %v1305
      %v1309 = vunpack.c.l.s4 1966171168
      %v1310 = vunpack.c.0.s8 %v1309
      %v1311 = vlaneseq
      %v1312 = vshrl.u32 %v1311, 7
      %v1313 = vsub.s32 %v1310, %v1312
      %v1314 = vrot.slane %v1298, %v1313
      %v1316 = vunpack.c.l.s4 1966171168
      %v1317 = vunpack.c.0.s8 %v1316
      %v1318 = vlaneseq
      %v1319 = vshrl.u32 %v1318, 7
      %v1320 = vsub.s32 %v1317, %v1319
      %v1321 = vrot.slane %v1305, %v1320
      %v1323 = vunpack.c.l.s4 1966171168
      %v1324 = vunpack.c.0.s8 %v1323
      %v1325 = vlaneseq
      %v1326 = vshrl.u32 %v1325, 7
      %v1327 = vsub.s32 %v1324, %v1326
      %v1328 = vrot.slane %v1306, %v1327
      %v1330 = vunpack.c.l.s4 1966171168
      %v1331 = vunpack.c.0.s8 %v1330
      %v1332 = vlaneseq
      %v1333 = vshrl.u32 %v1332, 7
      %v1334 = vsub.s32 %v1331, %v1333
      %v1335 = vrot.slane %v1307, %v1334
      %v1336 = vcombine.high %v1314, %v1314
      %v1337 = vcombine.high %v1321, %v1321
      %v1338 = vcombine.high %v1328, %v1328
      %v1339 = vcombine.high %v1335, %v1335
      %v1340 = vcombine.high %v930, %v930
      %v1342 = vunpack.c.l.s4 1966171168
      %v1343 = vunpack.c.0.s8 %v1342
      %v1344 = vlaneseq
      %v1345 = vshrl.u32 %v1344, 7
      %v1346 = vsub.s32 %v1343, %v1345
      %v1347 = vrot.slane %v930, %v1346
      %v1349 = vunpack.c.l.s4 1966171168
      %v1350 = vunpack.c.0.s8 %v1349
      %v1351 = vlaneseq
      %v1352 = vshrl.u32 %v1351, 7
      %v1353 = vsub.s32 %v1350, %v1352
      %v1354 = vrot.slane %v1340, %v1353
      %v1355 = vcombine.high %v1347, %v1347
      %v1356 = vcombine.high %v1354, %v1354
      %v1358 = vunpack.c.l.s4 1966171168
      %v1359 = vunpack.c.0.s8 %v1358
      %v1360 = vlaneseq
      %v1361 = vshrl.u32 %v1360, 7
      %v1362 = vsub.s32 %v1359, %v1361
      %v1363 = vrot.slane %v1347, %v1362
      %v1365 = vunpack.c.l.s4 1966171168
      %v1366 = vunpack.c.0.s8 %v1365
      %v1367 = vlaneseq
      %v1368 = vshrl.u32 %v1367, 7
      %v1369 = vsub.s32 %v1366, %v1368
      %v1370 = vrot.slane %v1354, %v1369
      %v1372 = vunpack.c.l.s4 1966171168
      %v1373 = vunpack.c.0.s8 %v1372
      %v1374 = vlaneseq
      %v1375 = vshrl.u32 %v1374, 7
      %v1376 = vsub.s32 %v1373, %v1375
      %v1377 = vrot.slane %v1355, %v1376
      %v1379 = vunpack.c.l.s4 1966171168
      %v1380 = vunpack.c.0.s8 %v1379
      %v1381 = vlaneseq
      %v1382 = vshrl.u32 %v1381, 7
      %v1383 = vsub.s32 %v1380, %v1382
      %v1384 = vrot.slane %v1356, %v1383
      %v1385 = vcombine.high %v1363, %v1363
      %v1386 = vcombine.high %v1370, %v1370
      %v1387 = vcombine.high %v1377, %v1377
      %v1388 = vcombine.high %v1384, %v1384
      %v1389 = vcombine.high %v935, %v935
      %v1391 = vunpack.c.l.s4 1966171168
      %v1392 = vunpack.c.0.s8 %v1391
      %v1393 = vlaneseq
      %v1394 = vshrl.u32 %v1393, 7
      %v1395 = vsub.s32 %v1392, %v1394
      %v1396 = vrot.slane %v935, %v1395
      %v1398 = vunpack.c.l.s4 1966171168
      %v1399 = vunpack.c.0.s8 %v1398
      %v1400 = vlaneseq
      %v1401 = vshrl.u32 %v1400, 7
      %v1402 = vsub.s32 %v1399, %v1401
      %v1403 = vrot.slane %v1389, %v1402
      %v1404 = vcombine.high %v1396, %v1396
      %v1405 = vcombine.high %v1403, %v1403
      %v1407 = vunpack.c.l.s4 1966171168
      %v1408 = vunpack.c.0.s8 %v1407
      %v1409 = vlaneseq
      %v1410 = vshrl.u32 %v1409, 7
      %v1411 = vsub.s32 %v1408, %v1410
      %v1412 = vrot.slane %v1396, %v1411
      %v1414 = vunpack.c.l.s4 1966171168
      %v1415 = vunpack.c.0.s8 %v1414
      %v1416 = vlaneseq
      %v1417 = vshrl.u32 %v1416, 7
      %v1418 = vsub.s32 %v1415, %v1417
      %v1419 = vrot.slane %v1403, %v1418
      %v1421 = vunpack.c.l.s4 1966171168
      %v1422 = vunpack.c.0.s8 %v1421
      %v1423 = vlaneseq
      %v1424 = vshrl.u32 %v1423, 7
      %v1425 = vsub.s32 %v1422, %v1424
      %v1426 = vrot.slane %v1404, %v1425
      %v1428 = vunpack.c.l.s4 1966171168
      %v1429 = vunpack.c.0.s8 %v1428
      %v1430 = vlaneseq
      %v1431 = vshrl.u32 %v1430, 7
      %v1432 = vsub.s32 %v1429, %v1431
      %v1433 = vrot.slane %v1405, %v1432
      %v1434 = vcombine.high %v1412, %v1412
      %v1435 = vcombine.high %v1419, %v1419
      %v1436 = vcombine.high %v1426, %v1426
      %v1437 = vcombine.high %v1433, %v1433
      %v1518 = vlaneseq
      %v1519 = vshrl.u32 %v1518, 7
      %v1520 = vsub.s32 0, %v1519
      %v1521 = vrot.slane %v971, %v1520
      %v1522 = vlaneseq
      %v1523 = vshrl.u32 %v1522, 7
      %v1524 = vsub.s32 0, %v1523
      %v1525 = vrot.slane %v985, %v1524
      %v1526 = vlaneseq
      %v1527 = vshrl.u32 %v1526, 7
      %v1528 = vsub.s32 0, %v1527
      %v1529 = vrot.slane %v993, %v1528
      %v1530 = vlaneseq
      %v1531 = vshrl.u32 %v1530, 7
      %v1532 = vsub.s32 0, %v1531
      %v1533 = vrot.slane %v995, %v1532
      %v1534 = vlaneseq
      %v1535 = vshrl.u32 %v1534, 7
      %v1536 = vsub.s32 0, %v1535
      %v1537 = vrot.slane %v978, %v1536
      %v1538 = vlaneseq
      %v1539 = vshrl.u32 %v1538, 7
      %v1540 = vsub.s32 0, %v1539
      %v1541 = vrot.slane %v992, %v1540
      %v1542 = vlaneseq
      %v1543 = vshrl.u32 %v1542, 7
      %v1544 = vsub.s32 0, %v1543
      %v1545 = vrot.slane %v994, %v1544
      %v1546 = vlaneseq
      %v1547 = vshrl.u32 %v1546, 7
      %v1548 = vsub.s32 0, %v1547
      %v1549 = vrot.slane %v996, %v1548
      %v1550 = vlaneseq
      %v1551 = vshrl.u32 %v1550, 7
      %v1552 = vsub.s32 0, %v1551
      %v1553 = vrot.slane %v1020, %v1552
      %v1554 = vlaneseq
      %v1555 = vshrl.u32 %v1554, 7
      %v1556 = vsub.s32 0, %v1555
      %v1557 = vrot.slane %v1034, %v1556
      %v1558 = vlaneseq
      %v1559 = vshrl.u32 %v1558, 7
      %v1560 = vsub.s32 0, %v1559
      %v1561 = vrot.slane %v1042, %v1560
      %v1562 = vlaneseq
      %v1563 = vshrl.u32 %v1562, 7
      %v1564 = vsub.s32 0, %v1563
      %v1565 = vrot.slane %v1044, %v1564
      %v1566 = vlaneseq
      %v1567 = vshrl.u32 %v1566, 7
      %v1568 = vsub.s32 0, %v1567
      %v1569 = vrot.slane %v1027, %v1568
      %v1570 = vlaneseq
      %v1571 = vshrl.u32 %v1570, 7
      %v1572 = vsub.s32 0, %v1571
      %v1573 = vrot.slane %v1041, %v1572
      %v1574 = vlaneseq
      %v1575 = vshrl.u32 %v1574, 7
      %v1576 = vsub.s32 0, %v1575
      %v1577 = vrot.slane %v1043, %v1576
      %v1578 = vlaneseq
      %v1579 = vshrl.u32 %v1578, 7
      %v1580 = vsub.s32 0, %v1579
      %v1581 = vrot.slane %v1045, %v1580
      %v1582 = vlaneseq
      %v1583 = vshrl.u32 %v1582, 7
      %v1584 = vsub.s32 0, %v1583
      %v1585 = vrot.slane %v1069, %v1584
      %v1586 = vlaneseq
      %v1587 = vshrl.u32 %v1586, 7
      %v1588 = vsub.s32 0, %v1587
      %v1589 = vrot.slane %v1083, %v1588
      %v1590 = vlaneseq
      %v1591 = vshrl.u32 %v1590, 7
      %v1592 = vsub.s32 0, %v1591
      %v1593 = vrot.slane %v1091, %v1592
      %v1594 = vlaneseq
      %v1595 = vshrl.u32 %v1594, 7
      %v1596 = vsub.s32 0, %v1595
      %v1597 = vrot.slane %v1093, %v1596
      %v1598 = vlaneseq
      %v1599 = vshrl.u32 %v1598, 7
      %v1600 = vsub.s32 0, %v1599
      %v1601 = vrot.slane %v1076, %v1600
      %v1602 = vlaneseq
      %v1603 = vshrl.u32 %v1602, 7
      %v1604 = vsub.s32 0, %v1603
      %v1605 = vrot.slane %v1090, %v1604
      %v1606 = vlaneseq
      %v1607 = vshrl.u32 %v1606, 7
      %v1608 = vsub.s32 0, %v1607
      %v1609 = vrot.slane %v1092, %v1608
      %v1610 = vlaneseq
      %v1611 = vshrl.u32 %v1610, 7
      %v1612 = vsub.s32 0, %v1611
      %v1613 = vrot.slane %v1094, %v1612
      %v1614 = vlaneseq
      %v1615 = vshrl.u32 %v1614, 7
      %v1616 = vsub.s32 0, %v1615
      %v1617 = vrot.slane %v1118, %v1616
      %v1618 = vlaneseq
      %v1619 = vshrl.u32 %v1618, 7
      %v1620 = vsub.s32 0, %v1619
      %v1621 = vrot.slane %v1132, %v1620
      %v1622 = vlaneseq
      %v1623 = vshrl.u32 %v1622, 7
      %v1624 = vsub.s32 0, %v1623
      %v1625 = vrot.slane %v1140, %v1624
      %v1626 = vlaneseq
      %v1627 = vshrl.u32 %v1626, 7
      %v1628 = vsub.s32 0, %v1627
      %v1629 = vrot.slane %v1142, %v1628
      %v1630 = vlaneseq
      %v1631 = vshrl.u32 %v1630, 7
      %v1632 = vsub.s32 0, %v1631
      %v1633 = vrot.slane %v1125, %v1632
      %v1634 = vlaneseq
      %v1635 = vshrl.u32 %v1634, 7
      %v1636 = vsub.s32 0, %v1635
      %v1637 = vrot.slane %v1139, %v1636
      %v1638 = vlaneseq
      %v1639 = vshrl.u32 %v1638, 7
      %v1640 = vsub.s32 0, %v1639
      %v1641 = vrot.slane %v1141, %v1640
      %v1642 = vlaneseq
      %v1643 = vshrl.u32 %v1642, 7
      %v1644 = vsub.s32 0, %v1643
      %v1645 = vrot.slane %v1143, %v1644
      %v1646 = vlaneseq
      %v1647 = vshrl.u32 %v1646, 7
      %v1648 = vsub.s32 0, %v1647
      %v1649 = vrot.slane %v1167, %v1648
      %v1650 = vlaneseq
      %v1651 = vshrl.u32 %v1650, 7
      %v1652 = vsub.s32 0, %v1651
      %v1653 = vrot.slane %v1181, %v1652
      %v1654 = vlaneseq
      %v1655 = vshrl.u32 %v1654, 7
      %v1656 = vsub.s32 0, %v1655
      %v1657 = vrot.slane %v1189, %v1656
      %v1658 = vlaneseq
      %v1659 = vshrl.u32 %v1658, 7
      %v1660 = vsub.s32 0, %v1659
      %v1661 = vrot.slane %v1191, %v1660
      %v1662 = vlaneseq
      %v1663 = vshrl.u32 %v1662, 7
      %v1664 = vsub.s32 0, %v1663
      %v1665 = vrot.slane %v1174, %v1664
      %v1666 = vlaneseq
      %v1667 = vshrl.u32 %v1666, 7
      %v1668 = vsub.s32 0, %v1667
      %v1669 = vrot.slane %v1188, %v1668
      %v1670 = vlaneseq
      %v1671 = vshrl.u32 %v1670, 7
      %v1672 = vsub.s32 0, %v1671
      %v1673 = vrot.slane %v1190, %v1672
      %v1674 = vlaneseq
      %v1675 = vshrl.u32 %v1674, 7
      %v1676 = vsub.s32 0, %v1675
      %v1677 = vrot.slane %v1192, %v1676
      %v1678 = vlaneseq
      %v1679 = vshrl.u32 %v1678, 7
      %v1680 = vsub.s32 0, %v1679
      %v1681 = vrot.slane %v1216, %v1680
      %v1682 = vlaneseq
      %v1683 = vshrl.u32 %v1682, 7
      %v1684 = vsub.s32 0, %v1683
      %v1685 = vrot.slane %v1230, %v1684
      %v1686 = vlaneseq
      %v1687 = vshrl.u32 %v1686, 7
      %v1688 = vsub.s32 0, %v1687
      %v1689 = vrot.slane %v1238, %v1688
      %v1690 = vlaneseq
      %v1691 = vshrl.u32 %v1690, 7
      %v1692 = vsub.s32 0, %v1691
      %v1693 = vrot.slane %v1240, %v1692
      %v1694 = vlaneseq
      %v1695 = vshrl.u32 %v1694, 7
      %v1696 = vsub.s32 0, %v1695
      %v1697 = vrot.slane %v1223, %v1696
      %v1698 = vlaneseq
      %v1699 = vshrl.u32 %v1698, 7
      %v1700 = vsub.s32 0, %v1699
      %v1701 = vrot.slane %v1237, %v1700
      %v1702 = vlaneseq
      %v1703 = vshrl.u32 %v1702, 7
      %v1704 = vsub.s32 0, %v1703
      %v1705 = vrot.slane %v1239, %v1704
      %v1706 = vlaneseq
      %v1707 = vshrl.u32 %v1706, 7
      %v1708 = vsub.s32 0, %v1707
      %v1709 = vrot.slane %v1241, %v1708
      %v1710 = vlaneseq
      %v1711 = vshrl.u32 %v1710, 7
      %v1712 = vsub.s32 0, %v1711
      %v1713 = vrot.slane %v1265, %v1712
      %v1714 = vlaneseq
      %v1715 = vshrl.u32 %v1714, 7
      %v1716 = vsub.s32 0, %v1715
      %v1717 = vrot.slane %v1279, %v1716
      %v1718 = vlaneseq
      %v1719 = vshrl.u32 %v1718, 7
      %v1720 = vsub.s32 0, %v1719
      %v1721 = vrot.slane %v1287, %v1720
      %v1722 = vlaneseq
      %v1723 = vshrl.u32 %v1722, 7
      %v1724 = vsub.s32 0, %v1723
      %v1725 = vrot.slane %v1289, %v1724
      %v1726 = vlaneseq
      %v1727 = vshrl.u32 %v1726, 7
      %v1728 = vsub.s32 0, %v1727
      %v1729 = vrot.slane %v1272, %v1728
      %v1730 = vlaneseq
      %v1731 = vshrl.u32 %v1730, 7
      %v1732 = vsub.s32 0, %v1731
      %v1733 = vrot.slane %v1286, %v1732
      %v1734 = vlaneseq
      %v1735 = vshrl.u32 %v1734, 7
      %v1736 = vsub.s32 0, %v1735
      %v1737 = vrot.slane %v1288, %v1736
      %v1738 = vlaneseq
      %v1739 = vshrl.u32 %v1738, 7
      %v1740 = vsub.s32 0, %v1739
      %v1741 = vrot.slane %v1290, %v1740
      %v1742 = vlaneseq
      %v1743 = vshrl.u32 %v1742, 7
      %v1744 = vsub.s32 0, %v1743
      %v1745 = vrot.slane %v1314, %v1744
      %v1746 = vlaneseq
      %v1747 = vshrl.u32 %v1746, 7
      %v1748 = vsub.s32 0, %v1747
      %v1749 = vrot.slane %v1328, %v1748
      %v1750 = vlaneseq
      %v1751 = vshrl.u32 %v1750, 7
      %v1752 = vsub.s32 0, %v1751
      %v1753 = vrot.slane %v1336, %v1752
      %v1754 = vlaneseq
      %v1755 = vshrl.u32 %v1754, 7
      %v1756 = vsub.s32 0, %v1755
      %v1757 = vrot.slane %v1338, %v1756
      %v1758 = vlaneseq
      %v1759 = vshrl.u32 %v1758, 7
      %v1760 = vsub.s32 0, %v1759
      %v1761 = vrot.slane %v1321, %v1760
      %v1762 = vlaneseq
      %v1763 = vshrl.u32 %v1762, 7
      %v1764 = vsub.s32 0, %v1763
      %v1765 = vrot.slane %v1335, %v1764
      %v1766 = vlaneseq
      %v1767 = vshrl.u32 %v1766, 7
      %v1768 = vsub.s32 0, %v1767
      %v1769 = vrot.slane %v1337, %v1768
      %v1770 = vlaneseq
      %v1771 = vshrl.u32 %v1770, 7
      %v1772 = vsub.s32 0, %v1771
      %v1773 = vrot.slane %v1339, %v1772
      %v1774 = vlaneseq
      %v1775 = vshrl.u32 %v1774, 7
      %v1776 = vsub.s32 0, %v1775
      %v1777 = vrot.slane %v1363, %v1776
      %v1778 = vlaneseq
      %v1779 = vshrl.u32 %v1778, 7
      %v1780 = vsub.s32 0, %v1779
      %v1781 = vrot.slane %v1377, %v1780
      %v1782 = vlaneseq
      %v1783 = vshrl.u32 %v1782, 7
      %v1784 = vsub.s32 0, %v1783
      %v1785 = vrot.slane %v1385, %v1784
      %v1786 = vlaneseq
      %v1787 = vshrl.u32 %v1786, 7
      %v1788 = vsub.s32 0, %v1787
      %v1789 = vrot.slane %v1387, %v1788
      %v1790 = vlaneseq
      %v1791 = vshrl.u32 %v1790, 7
      %v1792 = vsub.s32 0, %v1791
      %v1793 = vrot.slane %v1370, %v1792
      %v1794 = vlaneseq
      %v1795 = vshrl.u32 %v1794, 7
      %v1796 = vsub.s32 0, %v1795
      %v1797 = vrot.slane %v1384, %v1796
      %v1798 = vlaneseq
      %v1799 = vshrl.u32 %v1798, 7
      %v1800 = vsub.s32 0, %v1799
      %v1801 = vrot.slane %v1386, %v1800
      %v1802 = vlaneseq
      %v1803 = vshrl.u32 %v1802, 7
      %v1804 = vsub.s32 0, %v1803
      %v1805 = vrot.slane %v1388, %v1804
      %v1806 = vlaneseq
      %v1807 = vshrl.u32 %v1806, 7
      %v1808 = vsub.s32 0, %v1807
      %v1809 = vrot.slane %v1412, %v1808
      %v1810 = vlaneseq
      %v1811 = vshrl.u32 %v1810, 7
      %v1812 = vsub.s32 0, %v1811
      %v1813 = vrot.slane %v1426, %v1812
      %v1814 = vlaneseq
      %v1815 = vshrl.u32 %v1814, 7
      %v1816 = vsub.s32 0, %v1815
      %v1817 = vrot.slane %v1434, %v1816
      %v1818 = vlaneseq
      %v1819 = vshrl.u32 %v1818, 7
      %v1820 = vsub.s32 0, %v1819
      %v1821 = vrot.slane %v1436, %v1820
      %v1822 = vlaneseq
      %v1823 = vshrl.u32 %v1822, 7
      %v1824 = vsub.s32 0, %v1823
      %v1825 = vrot.slane %v1419, %v1824
      %v1826 = vlaneseq
      %v1827 = vshrl.u32 %v1826, 7
      %v1828 = vsub.s32 0, %v1827
      %v1829 = vrot.slane %v1433, %v1828
      %v1830 = vlaneseq
      %v1831 = vshrl.u32 %v1830, 7
      %v1832 = vsub.s32 0, %v1831
      %v1833 = vrot.slane %v1435, %v1832
      %v1834 = vlaneseq
      %v1835 = vshrl.u32 %v1834, 7
      %v1836 = vsub.s32 0, %v1835
      %v1837 = vrot.slane %v1437, %v1836
      %1838 = vrot.lane.b32.xlu0 %v1521, 124
      %v1839 = vpop.permute.xlu0 %1838
      %1840 = vrot.lane.b32.xlu0 %v1525, 124
      %v1841 = vpop.permute.xlu0 %1840
      %1842 = vrot.lane.b32.xlu0 %v1529, 124
      %v1843 = vpop.permute.xlu0 %1842
      %1844 = vrot.lane.b32.xlu0 %v1533, 124
      %v1845 = vpop.permute.xlu0 %1844
      %1846 = vrot.lane.b32.xlu0 %v1537, 124
      %v1847 = vpop.permute.xlu0 %1846
      %1848 = vrot.lane.b32.xlu0 %v1541, 124
      %v1849 = vpop.permute.xlu0 %1848
      %1850 = vrot.lane.b32.xlu0 %v1545, 124
      %v1851 = vpop.permute.xlu0 %1850
      %1852 = vrot.lane.b32.xlu0 %v1549, 124
      %v1853 = vpop.permute.xlu0 %1852
      %1854 = vrot.lane.b32.xlu0 %v1553, 124
      %v1855 = vpop.permute.xlu0 %1854
      %1856 = vrot.lane.b32.xlu0 %v1557, 124
      %v1857 = vpop.permute.xlu0 %1856
      %1858 = vrot.lane.b32.xlu0 %v1561, 124
      %v1859 = vpop.permute.xlu0 %1858
      %1860 = vrot.lane.b32.xlu0 %v1565, 124
      %v1861 = vpop.permute.xlu0 %1860
      %1862 = vrot.lane.b32.xlu0 %v1569, 124
      %v1863 = vpop.permute.xlu0 %1862
      %1864 = vrot.lane.b32.xlu0 %v1573, 124
      %v1865 = vpop.permute.xlu0 %1864
      %1866 = vrot.lane.b32.xlu0 %v1577, 124
      %v1867 = vpop.permute.xlu0 %1866
      %1868 = vrot.lane.b32.xlu0 %v1581, 124
      %v1869 = vpop.permute.xlu0 %1868
      %1870 = vrot.lane.b32.xlu0 %v1585, 124
      %v1871 = vpop.permute.xlu0 %1870
      %1872 = vrot.lane.b32.xlu0 %v1589, 124
      %v1873 = vpop.permute.xlu0 %1872
      %1874 = vrot.lane.b32.xlu0 %v1593, 124
      %v1875 = vpop.permute.xlu0 %1874
      %1876 = vrot.lane.b32.xlu0 %v1597, 124
      %v1877 = vpop.permute.xlu0 %1876
      %1878 = vrot.lane.b32.xlu0 %v1601, 124
      %v1879 = vpop.permute.xlu0 %1878
      %1880 = vrot.lane.b32.xlu0 %v1605, 124
      %v1881 = vpop.permute.xlu0 %1880
      %1882 = vrot.lane.b32.xlu0 %v1609, 124
      %v1883 = vpop.permute.xlu0 %1882
      %1884 = vrot.lane.b32.xlu0 %v1613, 124
      %v1885 = vpop.permute.xlu0 %1884
      %1886 = vrot.lane.b32.xlu0 %v1617, 124
      %v1887 = vpop.permute.xlu0 %1886
      %1888 = vrot.lane.b32.xlu0 %v1621, 124
      %v1889 = vpop.permute.xlu0 %1888
      %1890 = vrot.lane.b32.xlu0 %v1625, 124
      %v1891 = vpop.permute.xlu0 %1890
      %1892 = vrot.lane.b32.xlu0 %v1629, 124
      %v1893 = vpop.permute.xlu0 %1892
      %1894 = vrot.lane.b32.xlu0 %v1633, 124
      %v1895 = vpop.permute.xlu0 %1894
      %1896 = vrot.lane.b32.xlu0 %v1637, 124
      %v1897 = vpop.permute.xlu0 %1896
      %1898 = vrot.lane.b32.xlu0 %v1641, 124
      %v1899 = vpop.permute.xlu0 %1898
      %1900 = vrot.lane.b32.xlu0 %v1645, 124
      %v1901 = vpop.permute.xlu0 %1900
      %1902 = vrot.lane.b32.xlu0 %v1649, 124
      %v1903 = vpop.permute.xlu0 %1902
      %1904 = vrot.lane.b32.xlu0 %v1653, 124
      %v1905 = vpop.permute.xlu0 %1904
      %1906 = vrot.lane.b32.xlu0 %v1657, 124
      %v1907 = vpop.permute.xlu0 %1906
      %1908 = vrot.lane.b32.xlu0 %v1661, 124
      %v1909 = vpop.permute.xlu0 %1908
      %1910 = vrot.lane.b32.xlu0 %v1665, 124
      %v1911 = vpop.permute.xlu0 %1910
      %1912 = vrot.lane.b32.xlu0 %v1669, 124
      %v1913 = vpop.permute.xlu0 %1912
      %1914 = vrot.lane.b32.xlu0 %v1673, 124
      %v1915 = vpop.permute.xlu0 %1914
      %1916 = vrot.lane.b32.xlu0 %v1677, 124
      %v1917 = vpop.permute.xlu0 %1916
      %1918 = vrot.lane.b32.xlu0 %v1681, 124
      %v1919 = vpop.permute.xlu0 %1918
      %1920 = vrot.lane.b32.xlu0 %v1685, 124
      %v1921 = vpop.permute.xlu0 %1920
      %1922 = vrot.lane.b32.xlu0 %v1689, 124
      %v1923 = vpop.permute.xlu0 %1922
      %1924 = vrot.lane.b32.xlu0 %v1693, 124
      %v1925 = vpop.permute.xlu0 %1924
      %1926 = vrot.lane.b32.xlu0 %v1697, 124
      %v1927 = vpop.permute.xlu0 %1926
      %1928 = vrot.lane.b32.xlu0 %v1701, 124
      %v1929 = vpop.permute.xlu0 %1928
      %1930 = vrot.lane.b32.xlu0 %v1705, 124
      %v1931 = vpop.permute.xlu0 %1930
      %1932 = vrot.lane.b32.xlu0 %v1709, 124
      %v1933 = vpop.permute.xlu0 %1932
      %1934 = vrot.lane.b32.xlu0 %v1713, 124
      %v1935 = vpop.permute.xlu0 %1934
      %1936 = vrot.lane.b32.xlu0 %v1717, 124
      %v1937 = vpop.permute.xlu0 %1936
      %1938 = vrot.lane.b32.xlu0 %v1721, 124
      %v1939 = vpop.permute.xlu0 %1938
      %1940 = vrot.lane.b32.xlu0 %v1725, 124
      %v1941 = vpop.permute.xlu0 %1940
      %1942 = vrot.lane.b32.xlu0 %v1729, 124
      %v1943 = vpop.permute.xlu0 %1942
      %1944 = vrot.lane.b32.xlu0 %v1733, 124
      %v1945 = vpop.permute.xlu0 %1944
      %1946 = vrot.lane.b32.xlu0 %v1737, 124
      %v1947 = vpop.permute.xlu0 %1946
      %1948 = vrot.lane.b32.xlu0 %v1741, 124
      %v1949 = vpop.permute.xlu0 %1948
      %1950 = vrot.lane.b32.xlu0 %v1745, 124
      %v1951 = vpop.permute.xlu0 %1950
      %1952 = vrot.lane.b32.xlu0 %v1749, 124
      %v1953 = vpop.permute.xlu0 %1952
      %1954 = vrot.lane.b32.xlu0 %v1753, 124
      %v1955 = vpop.permute.xlu0 %1954
      %1956 = vrot.lane.b32.xlu0 %v1757, 124
      %v1957 = vpop.permute.xlu0 %1956
      %1958 = vrot.lane.b32.xlu0 %v1761, 124
      %v1959 = vpop.permute.xlu0 %1958
      %1960 = vrot.lane.b32.xlu0 %v1765, 124
      %v1961 = vpop.permute.xlu0 %1960
      %1962 = vrot.lane.b32.xlu0 %v1769, 124
      %v1963 = vpop.permute.xlu0 %1962
      %1964 = vrot.lane.b32.xlu0 %v1773, 124
      %v1965 = vpop.permute.xlu0 %1964
      %1966 = vrot.lane.b32.xlu0 %v1777, 124
      %v1967 = vpop.permute.xlu0 %1966
      %1968 = vrot.lane.b32.xlu0 %v1781, 124
      %v1969 = vpop.permute.xlu0 %1968
      %1970 = vrot.lane.b32.xlu0 %v1785, 124
      %v1971 = vpop.permute.xlu0 %1970
      %1972 = vrot.lane.b32.xlu0 %v1789, 124
      %v1973 = vpop.permute.xlu0 %1972
      %1974 = vrot.lane.b32.xlu0 %v1793, 124
      %v1975 = vpop.permute.xlu0 %1974
      %1976 = vrot.lane.b32.xlu0 %v1797, 124
      %v1977 = vpop.permute.xlu0 %1976
      %1978 = vrot.lane.b32.xlu0 %v1801, 124
      %v1979 = vpop.permute.xlu0 %1978
      %1980 = vrot.lane.b32.xlu0 %v1805, 124
      %v1981 = vpop.permute.xlu0 %1980
      %1982 = vrot.lane.b32.xlu0 %v1809, 124
      %v1983 = vpop.permute.xlu0 %1982
      %1984 = vrot.lane.b32.xlu0 %v1813, 124
      %v1985 = vpop.permute.xlu0 %1984
      %1986 = vrot.lane.b32.xlu0 %v1817, 124
      %v1987 = vpop.permute.xlu0 %1986
      %1988 = vrot.lane.b32.xlu0 %v1821, 124
      %v1989 = vpop.permute.xlu0 %1988
      %1990 = vrot.lane.b32.xlu0 %v1825, 124
      %v1991 = vpop.permute.xlu0 %1990
      %1992 = vrot.lane.b32.xlu0 %v1829, 124
      %v1993 = vpop.permute.xlu0 %1992
      %1994 = vrot.lane.b32.xlu0 %v1833, 124
      %v1995 = vpop.permute.xlu0 %1994
      %1996 = vrot.lane.b32.xlu0 %v1837, 124
      %v1997 = vpop.permute.xlu0 %1996
      %vm2078 = vcmask 1040384
      %v2079 = vsel %vm2078, %v971, %v1839
      %v2080 = vsel %vm2078, %v985, %v1841
      %v2081 = vsel %vm2078, %v993, %v1843
      %v2082 = vsel %vm2078, %v995, %v1845
      %v2083 = vsel %vm2078, %v978, %v1847
      %v2084 = vsel %vm2078, %v992, %v1849
      %v2085 = vsel %vm2078, %v994, %v1851
      %v2086 = vsel %vm2078, %v996, %v1853
      %v2087 = vsel %vm2078, %v1020, %v1855
      %v2088 = vsel %vm2078, %v1034, %v1857
      %v2089 = vsel %vm2078, %v1042, %v1859
      %v2090 = vsel %vm2078, %v1044, %v1861
      %v2091 = vsel %vm2078, %v1027, %v1863
      %v2092 = vsel %vm2078, %v1041, %v1865
      %v2093 = vsel %vm2078, %v1043, %v1867
      %v2094 = vsel %vm2078, %v1045, %v1869
      %v2095 = vsel %vm2078, %v1069, %v1871
      %v2096 = vsel %vm2078, %v1083, %v1873
      %v2097 = vsel %vm2078, %v1091, %v1875
      %v2098 = vsel %vm2078, %v1093, %v1877
      %v2099 = vsel %vm2078, %v1076, %v1879
      %v2100 = vsel %vm2078, %v1090, %v1881
      %v2101 = vsel %vm2078, %v1092, %v1883
      %v2102 = vsel %vm2078, %v1094, %v1885
      %v2103 = vsel %vm2078, %v1118, %v1887
      %v2104 = vsel %vm2078, %v1132, %v1889
      %v2105 = vsel %vm2078, %v1140, %v1891
      %v2106 = vsel %vm2078, %v1142, %v1893
      %v2107 = vsel %vm2078, %v1125, %v1895
      %v2108 = vsel %vm2078, %v1139, %v1897
      %v2109 = vsel %vm2078, %v1141, %v1899
      %v2110 = vsel %vm2078, %v1143, %v1901
      %v2111 = vsel %vm2078, %v1167, %v1903
      %v2112 = vsel %vm2078, %v1181, %v1905
      %v2113 = vsel %vm2078, %v1189, %v1907
      %v2114 = vsel %vm2078, %v1191, %v1909
      %v2115 = vsel %vm2078, %v1174, %v1911
      %v2116 = vsel %vm2078, %v1188, %v1913
      %v2117 = vsel %vm2078, %v1190, %v1915
      %v2118 = vsel %vm2078, %v1192, %v1917
      %v2119 = vsel %vm2078, %v1216, %v1919
      %v2120 = vsel %vm2078, %v1230, %v1921
      %v2121 = vsel %vm2078, %v1238, %v1923
      %v2122 = vsel %vm2078, %v1240, %v1925
      %v2123 = vsel %vm2078, %v1223, %v1927
      %v2124 = vsel %vm2078, %v1237, %v1929
      %v2125 = vsel %vm2078, %v1239, %v1931
      %v2126 = vsel %vm2078, %v1241, %v1933
      %v2127 = vsel %vm2078, %v1265, %v1935
      %v2128 = vsel %vm2078, %v1279, %v1937
      %v2129 = vsel %vm2078, %v1287, %v1939
      %v2130 = vsel %vm2078, %v1289, %v1941
      %v2131 = vsel %vm2078, %v1272, %v1943
      %v2132 = vsel %vm2078, %v1286, %v1945
      %v2133 = vsel %vm2078, %v1288, %v1947
      %v2134 = vsel %vm2078, %v1290, %v1949
      %v2135 = vsel %vm2078, %v1314, %v1951
      %v2136 = vsel %vm2078, %v1328, %v1953
      %v2137 = vsel %vm2078, %v1336, %v1955
      %v2138 = vsel %vm2078, %v1338, %v1957
      %v2139 = vsel %vm2078, %v1321, %v1959
      %v2140 = vsel %vm2078, %v1335, %v1961
      %v2141 = vsel %vm2078, %v1337, %v1963
      %v2142 = vsel %vm2078, %v1339, %v1965
      %v2143 = vsel %vm2078, %v1363, %v1967
      %v2144 = vsel %vm2078, %v1377, %v1969
      %v2145 = vsel %vm2078, %v1385, %v1971
      %v2146 = vsel %vm2078, %v1387, %v1973
      %v2147 = vsel %vm2078, %v1370, %v1975
      %v2148 = vsel %vm2078, %v1384, %v1977
      %v2149 = vsel %vm2078, %v1386, %v1979
      %v2150 = vsel %vm2078, %v1388, %v1981
      %v2151 = vsel %vm2078, %v1412, %v1983
      %v2152 = vsel %vm2078, %v1426, %v1985
      %v2153 = vsel %vm2078, %v1434, %v1987
      %v2154 = vsel %vm2078, %v1436, %v1989
      %v2155 = vsel %vm2078, %v1419, %v1991
      %v2156 = vsel %vm2078, %v1433, %v1993
      %v2157 = vsel %vm2078, %v1435, %v1995
      %v2158 = vsel %vm2078, %v1437, %v1997
      %2239 = vrot.lane.b32.xlu0 %v2079, 120
      %v2240 = vpop.permute.xlu0 %2239
      %2241 = vrot.lane.b32.xlu0 %v2080, 120
      %v2242 = vpop.permute.xlu0 %2241
      %2243 = vrot.lane.b32.xlu0 %v2081, 120
      %v2244 = vpop.permute.xlu0 %2243
      %2245 = vrot.lane.b32.xlu0 %v2082, 120
      %v2246 = vpop.permute.xlu0 %2245
      %2247 = vrot.lane.b32.xlu0 %v2083, 120
      %v2248 = vpop.permute.xlu0 %2247
      %2249 = vrot.lane.b32.xlu0 %v2084, 120
      %v2250 = vpop.permute.xlu0 %2249
      %2251 = vrot.lane.b32.xlu0 %v2085, 120
      %v2252 = vpop.permute.xlu0 %2251
      %2253 = vrot.lane.b32.xlu0 %v2086, 120
      %v2254 = vpop.permute.xlu0 %2253
      %2255 = vrot.lane.b32.xlu0 %v2087, 120
      %v2256 = vpop.permute.xlu0 %2255
      %2257 = vrot.lane.b32.xlu0 %v2088, 120
      %v2258 = vpop.permute.xlu0 %2257
      %2259 = vrot.lane.b32.xlu0 %v2089, 120
      %v2260 = vpop.permute.xlu0 %2259
      %2261 = vrot.lane.b32.xlu0 %v2090, 120
      %v2262 = vpop.permute.xlu0 %2261
      %2263 = vrot.lane.b32.xlu0 %v2091, 120
      %v2264 = vpop.permute.xlu0 %2263
      %2265 = vrot.lane.b32.xlu0 %v2092, 120
      %v2266 = vpop.permute.xlu0 %2265
      %2267 = vrot.lane.b32.xlu0 %v2093, 120
      %v2268 = vpop.permute.xlu0 %2267
      %2269 = vrot.lane.b32.xlu0 %v2094, 120
      %v2270 = vpop.permute.xlu0 %2269
      %2271 = vrot.lane.b32.xlu0 %v2095, 120
      %v2272 = vpop.permute.xlu0 %2271
      %2273 = vrot.lane.b32.xlu0 %v2096, 120
      %v2274 = vpop.permute.xlu0 %2273
      %2275 = vrot.lane.b32.xlu0 %v2097, 120
      %v2276 = vpop.permute.xlu0 %2275
      %2277 = vrot.lane.b32.xlu0 %v2098, 120
      %v2278 = vpop.permute.xlu0 %2277
      %2279 = vrot.lane.b32.xlu0 %v2099, 120
      %v2280 = vpop.permute.xlu0 %2279
      %2281 = vrot.lane.b32.xlu0 %v2100, 120
      %v2282 = vpop.permute.xlu0 %2281
      %2283 = vrot.lane.b32.xlu0 %v2101, 120
      %v2284 = vpop.permute.xlu0 %2283
      %2285 = vrot.lane.b32.xlu0 %v2102, 120
      %v2286 = vpop.permute.xlu0 %2285
      %2287 = vrot.lane.b32.xlu0 %v2103, 120
      %v2288 = vpop.permute.xlu0 %2287
      %2289 = vrot.lane.b32.xlu0 %v2104, 120
      %v2290 = vpop.permute.xlu0 %2289
      %2291 = vrot.lane.b32.xlu0 %v2105, 120
      %v2292 = vpop.permute.xlu0 %2291
      %2293 = vrot.lane.b32.xlu0 %v2106, 120
      %v2294 = vpop.permute.xlu0 %2293
      %2295 = vrot.lane.b32.xlu0 %v2107, 120
      %v2296 = vpop.permute.xlu0 %2295
      %2297 = vrot.lane.b32.xlu0 %v2108, 120
      %v2298 = vpop.permute.xlu0 %2297
      %2299 = vrot.lane.b32.xlu0 %v2109, 120
      %v2300 = vpop.permute.xlu0 %2299
      %2301 = vrot.lane.b32.xlu0 %v2110, 120
      %v2302 = vpop.permute.xlu0 %2301
      %2303 = vrot.lane.b32.xlu0 %v2111, 120
      %v2304 = vpop.permute.xlu0 %2303
      %2305 = vrot.lane.b32.xlu0 %v2112, 120
      %v2306 = vpop.permute.xlu0 %2305
      %2307 = vrot.lane.b32.xlu0 %v2113, 120
      %v2308 = vpop.permute.xlu0 %2307
      %2309 = vrot.lane.b32.xlu0 %v2114, 120
      %v2310 = vpop.permute.xlu0 %2309
      %2311 = vrot.lane.b32.xlu0 %v2115, 120
      %v2312 = vpop.permute.xlu0 %2311
      %2313 = vrot.lane.b32.xlu0 %v2116, 120
      %v2314 = vpop.permute.xlu0 %2313
      %2315 = vrot.lane.b32.xlu0 %v2117, 120
      %v2316 = vpop.permute.xlu0 %2315
      %2317 = vrot.lane.b32.xlu0 %v2118, 120
      %v2318 = vpop.permute.xlu0 %2317
      %2319 = vrot.lane.b32.xlu0 %v2119, 120
      %v2320 = vpop.permute.xlu0 %2319
      %2321 = vrot.lane.b32.xlu0 %v2120, 120
      %v2322 = vpop.permute.xlu0 %2321
      %2323 = vrot.lane.b32.xlu0 %v2121, 120
      %v2324 = vpop.permute.xlu0 %2323
      %2325 = vrot.lane.b32.xlu0 %v2122, 120
      %v2326 = vpop.permute.xlu0 %2325
      %2327 = vrot.lane.b32.xlu0 %v2123, 120
      %v2328 = vpop.permute.xlu0 %2327
      %2329 = vrot.lane.b32.xlu0 %v2124, 120
      %v2330 = vpop.permute.xlu0 %2329
      %2331 = vrot.lane.b32.xlu0 %v2125, 120
      %v2332 = vpop.permute.xlu0 %2331
      %2333 = vrot.lane.b32.xlu0 %v2126, 120
      %v2334 = vpop.permute.xlu0 %2333
      %2335 = vrot.lane.b32.xlu0 %v2127, 120
      %v2336 = vpop.permute.xlu0 %2335
      %2337 = vrot.lane.b32.xlu0 %v2128, 120
      %v2338 = vpop.permute.xlu0 %2337
      %2339 = vrot.lane.b32.xlu0 %v2129, 120
      %v2340 = vpop.permute.xlu0 %2339
      %2341 = vrot.lane.b32.xlu0 %v2130, 120
      %v2342 = vpop.permute.xlu0 %2341
      %2343 = vrot.lane.b32.xlu0 %v2131, 120
      %v2344 = vpop.permute.xlu0 %2343
      %2345 = vrot.lane.b32.xlu0 %v2132, 120
      %v2346 = vpop.permute.xlu0 %2345
      %2347 = vrot.lane.b32.xlu0 %v2133, 120
      %v2348 = vpop.permute.xlu0 %2347
      %2349 = vrot.lane.b32.xlu0 %v2134, 120
      %v2350 = vpop.permute.xlu0 %2349
      %2351 = vrot.lane.b32.xlu0 %v2135, 120
      %v2352 = vpop.permute.xlu0 %2351
      %2353 = vrot.lane.b32.xlu0 %v2136, 120
      %v2354 = vpop.permute.xlu0 %2353
      %2355 = vrot.lane.b32.xlu0 %v2137, 120
      %v2356 = vpop.permute.xlu0 %2355
      %2357 = vrot.lane.b32.xlu0 %v2138, 120
      %v2358 = vpop.permute.xlu0 %2357
      %2359 = vrot.lane.b32.xlu0 %v2139, 120
      %v2360 = vpop.permute.xlu0 %2359
      %2361 = vrot.lane.b32.xlu0 %v2140, 120
      %v2362 = vpop.permute.xlu0 %2361
      %2363 = vrot.lane.b32.xlu0 %v2141, 120
      %v2364 = vpop.permute.xlu0 %2363
      %2365 = vrot.lane.b32.xlu0 %v2142, 120
      %v2366 = vpop.permute.xlu0 %2365
      %2367 = vrot.lane.b32.xlu0 %v2143, 120
      %v2368 = vpop.permute.xlu0 %2367
      %2369 = vrot.lane.b32.xlu0 %v2144, 120
      %v2370 = vpop.permute.xlu0 %2369
      %2371 = vrot.lane.b32.xlu0 %v2145, 120
      %v2372 = vpop.permute.xlu0 %2371
      %2373 = vrot.lane.b32.xlu0 %v2146, 120
      %v2374 = vpop.permute.xlu0 %2373
      %2375 = vrot.lane.b32.xlu0 %v2147, 120
      %v2376 = vpop.permute.xlu0 %2375
      %2377 = vrot.lane.b32.xlu0 %v2148, 120
      %v2378 = vpop.permute.xlu0 %2377
      %2379 = vrot.lane.b32.xlu0 %v2149, 120
      %v2380 = vpop.permute.xlu0 %2379
      %2381 = vrot.lane.b32.xlu0 %v2150, 120
      %v2382 = vpop.permute.xlu0 %2381
      %2383 = vrot.lane.b32.xlu0 %v2151, 120
      %v2384 = vpop.permute.xlu0 %2383
      %2385 = vrot.lane.b32.xlu0 %v2152, 120
      %v2386 = vpop.permute.xlu0 %2385
      %2387 = vrot.lane.b32.xlu0 %v2153, 120
      %v2388 = vpop.permute.xlu0 %2387
      %2389 = vrot.lane.b32.xlu0 %v2154, 120
      %v2390 = vpop.permute.xlu0 %2389
      %2391 = vrot.lane.b32.xlu0 %v2155, 120
      %v2392 = vpop.permute.xlu0 %2391
      %2393 = vrot.lane.b32.xlu0 %v2156, 120
      %v2394 = vpop.permute.xlu0 %2393
      %2395 = vrot.lane.b32.xlu0 %v2157, 120
      %v2396 = vpop.permute.xlu0 %2395
      %2397 = vrot.lane.b32.xlu0 %v2158, 120
      %v2398 = vpop.permute.xlu0 %2397
      %s2479 = ssub.s32 %s773, 2
      %v2480 = vstv %s2479
      %v2481 = vadd.s32 %v2480, 1
      %v2482 = vadd.s32 %v2480, 2
      %v2483 = vadd.s32 %v2480, 3
      %v2484 = vadd.s32 %v2480, 4
      %v2485 = vadd.s32 %v2480, 5
      %v2486 = vadd.s32 %v2480, 6
      %v2487 = vadd.s32 %v2480, 7
      %v2488 = vadd.s32 %v2480, 8
      %v2489 = vadd.s32 %v2480, 9
      %v2490 = vadd.s32 %v2480, 10
      %v2491 = vadd.s32 %v2480, 11
      %v2492 = vadd.s32 %v2480, 12
      %v2493 = vadd.s32 %v2480, 13
      %v2494 = vadd.s32 %v2480, 14
      %v2495 = vadd.s32 %v2480, 15
      %v2496 = vadd.s32 %v2480, 16
      %v2497 = vadd.s32 %v2480, 17
      %v2498 = vadd.s32 %v2480, 18
      %v2499 = vadd.s32 %v2480, 19
      %vm2500 = vcmp.ge.s32.totalorder %v2480, 0
      %vm2501 = vcmp.ge.s32.totalorder %v2481, 0
      %vm2502 = vcmp.ge.s32.totalorder %v2482, 0
      %vm2503 = vcmp.ge.s32.totalorder %v2483, 0
      %vm2504 = vcmp.ge.s32.totalorder %v2484, 0
      %vm2505 = vcmp.ge.s32.totalorder %v2485, 0
      %vm2506 = vcmp.ge.s32.totalorder %v2486, 0
      %vm2507 = vcmp.ge.s32.totalorder %v2487, 0
      %vm2508 = vcmp.ge.s32.totalorder %v2488, 0
      %vm2509 = vcmp.ge.s32.totalorder %v2489, 0
      %vm2510 = vcmp.ge.s32.totalorder %v2490, 0
      %vm2511 = vcmp.ge.s32.totalorder %v2491, 0
      %vm2512 = vcmp.ge.s32.totalorder %v2492, 0
      %vm2513 = vcmp.ge.s32.totalorder %v2493, 0
      %vm2514 = vcmp.ge.s32.totalorder %v2494, 0
      %vm2515 = vcmp.ge.s32.totalorder %v2495, 0
      %vm2516 = vcmp.ge.s32.totalorder %v2496, 0
      %vm2517 = vcmp.ge.s32.totalorder %v2497, 0
      %vm2518 = vcmp.ge.s32.totalorder %v2498, 0
      %vm2519 = vcmp.ge.s32.totalorder %v2499, 0
      %vm2520 = vcmp.lt.s32.totalorder %v2480, 16
      %vm2521 = vcmp.lt.s32.totalorder %v2481, 16
      %vm2522 = vcmp.lt.s32.totalorder %v2482, 16
      %vm2523 = vcmp.lt.s32.totalorder %v2483, 16
      %vm2524 = vcmp.lt.s32.totalorder %v2484, 16
      %vm2525 = vcmp.lt.s32.totalorder %v2485, 16
      %vm2526 = vcmp.lt.s32.totalorder %v2486, 16
      %vm2527 = vcmp.lt.s32.totalorder %v2487, 16
      %vm2528 = vcmp.lt.s32.totalorder %v2488, 16
      %vm2529 = vcmp.lt.s32.totalorder %v2489, 16
      %vm2530 = vcmp.lt.s32.totalorder %v2490, 16
      %vm2531 = vcmp.lt.s32.totalorder %v2491, 16
      %vm2532 = vcmp.lt.s32.totalorder %v2492, 16
      %vm2533 = vcmp.lt.s32.totalorder %v2493, 16
      %vm2534 = vcmp.lt.s32.totalorder %v2494, 16
      %vm2535 = vcmp.lt.s32.totalorder %v2495, 16
      %vm2536 = vcmp.lt.s32.totalorder %v2496, 16
      %vm2537 = vcmp.lt.s32.totalorder %v2497, 16
      %vm2538 = vcmp.lt.s32.totalorder %v2498, 16
      %vm2539 = vcmp.lt.s32.totalorder %v2499, 16
      %vm2540 = vmand %vm2500, %vm2520
      %vm2541 = vmand %vm2501, %vm2521
      %vm2542 = vmand %vm2502, %vm2522
      %vm2543 = vmand %vm2503, %vm2523
      %vm2544 = vmand %vm2504, %vm2524
      %vm2545 = vmand %vm2505, %vm2525
      %vm2546 = vmand %vm2506, %vm2526
      %vm2547 = vmand %vm2507, %vm2527
      %vm2548 = vmand %vm2508, %vm2528
      %vm2549 = vmand %vm2509, %vm2529
      %vm2550 = vmand %vm2510, %vm2530
      %vm2551 = vmand %vm2511, %vm2531
      %vm2552 = vmand %vm2512, %vm2532
      %vm2553 = vmand %vm2513, %vm2533
      %vm2554 = vmand %vm2514, %vm2534
      %vm2555 = vmand %vm2515, %vm2535
      %vm2556 = vmand %vm2516, %vm2536
      %vm2557 = vmand %vm2517, %vm2537
      %vm2558 = vmand %vm2518, %vm2538
      %vm2559 = vmand %vm2519, %vm2539
      %v2560 = vsel %vm2540, 1, 0
      %v2561 = vsel %vm2541, 1, 0
      %v2562 = vsel %vm2542, 1, 0
      %v2563 = vsel %vm2543, 1, 0
      %v2564 = vsel %vm2544, 1, 0
      %v2565 = vsel %vm2545, 1, 0
      %v2566 = vsel %vm2546, 1, 0
      %v2567 = vsel %vm2547, 1, 0
      %v2568 = vsel %vm2548, 1, 0
      %v2569 = vsel %vm2549, 1, 0
      %v2570 = vsel %vm2550, 1, 0
      %v2571 = vsel %vm2551, 1, 0
      %v2572 = vsel %vm2552, 1, 0
      %v2573 = vsel %vm2553, 1, 0
      %v2574 = vsel %vm2554, 1, 0
      %v2575 = vsel %vm2555, 1, 0
      %v2576 = vsel %vm2556, 1, 0
      %v2577 = vsel %vm2557, 1, 0
      %v2578 = vsel %vm2558, 1, 0
      %v2579 = vsel %vm2559, 1, 0
      %vm2580 = vcmp.eq.s32.totalorder %v2560, 1
      %vm2581 = vcmp.eq.s32.totalorder %v2561, 1
      %vm2582 = vcmp.eq.s32.totalorder %v2562, 1
      %vm2583 = vcmp.eq.s32.totalorder %v2563, 1
      %vm2584 = vcmp.eq.s32.totalorder %v2564, 1
      %vm2585 = vcmp.eq.s32.totalorder %v2565, 1
      %vm2586 = vcmp.eq.s32.totalorder %v2566, 1
      %vm2587 = vcmp.eq.s32.totalorder %v2567, 1
      %vm2588 = vcmp.eq.s32.totalorder %v2568, 1
      %vm2589 = vcmp.eq.s32.totalorder %v2569, 1
      %vm2590 = vcmp.eq.s32.totalorder %v2570, 1
      %vm2591 = vcmp.eq.s32.totalorder %v2571, 1
      %vm2592 = vcmp.eq.s32.totalorder %v2572, 1
      %vm2593 = vcmp.eq.s32.totalorder %v2573, 1
      %vm2594 = vcmp.eq.s32.totalorder %v2574, 1
      %vm2595 = vcmp.eq.s32.totalorder %v2575, 1
      %vm2596 = vcmp.eq.s32.totalorder %v2576, 1
      %vm2597 = vcmp.eq.s32.totalorder %v2577, 1
      %vm2598 = vcmp.eq.s32.totalorder %v2578, 1
      %vm2599 = vcmp.eq.s32.totalorder %v2579, 1
      %v2600 = vsel %vm2580, %v2079, 0.0
      %v2601 = vsel %vm2580, %v2080, 0.0
      %v2602 = vsel %vm2580, %v2081, 0.0
      %v2603 = vsel %vm2580, %v2082, 0.0
      %v2604 = vsel %vm2580, %v2083, 0.0
      %v2605 = vsel %vm2580, %v2084, 0.0
      %v2606 = vsel %vm2580, %v2085, 0.0
      %v2607 = vsel %vm2580, %v2086, 0.0
      %v2608 = vsel %vm2581, %v2240, 0.0
      %v2609 = vsel %vm2581, %v2242, 0.0
      %v2610 = vsel %vm2581, %v2244, 0.0
      %v2611 = vsel %vm2581, %v2246, 0.0
      %v2612 = vsel %vm2581, %v2248, 0.0
      %v2613 = vsel %vm2581, %v2250, 0.0
      %v2614 = vsel %vm2581, %v2252, 0.0
      %v2615 = vsel %vm2581, %v2254, 0.0
      %v2616 = vsel %vm2582, %v2087, 0.0
      %v2617 = vsel %vm2582, %v2088, 0.0
      %v2618 = vsel %vm2582, %v2089, 0.0
      %v2619 = vsel %vm2582, %v2090, 0.0
      %v2620 = vsel %vm2582, %v2091, 0.0
      %v2621 = vsel %vm2582, %v2092, 0.0
      %v2622 = vsel %vm2582, %v2093, 0.0
      %v2623 = vsel %vm2582, %v2094, 0.0
      %v2624 = vsel %vm2583, %v2256, 0.0
      %v2625 = vsel %vm2583, %v2258, 0.0
      %v2626 = vsel %vm2583, %v2260, 0.0
      %v2627 = vsel %vm2583, %v2262, 0.0
      %v2628 = vsel %vm2583, %v2264, 0.0
      %v2629 = vsel %vm2583, %v2266, 0.0
      %v2630 = vsel %vm2583, %v2268, 0.0
      %v2631 = vsel %vm2583, %v2270, 0.0
      %v2632 = vsel %vm2584, %v2095, 0.0
      %v2633 = vsel %vm2584, %v2096, 0.0
      %v2634 = vsel %vm2584, %v2097, 0.0
      %v2635 = vsel %vm2584, %v2098, 0.0
      %v2636 = vsel %vm2584, %v2099, 0.0
      %v2637 = vsel %vm2584, %v2100, 0.0
      %v2638 = vsel %vm2584, %v2101, 0.0
      %v2639 = vsel %vm2584, %v2102, 0.0
      %v2640 = vsel %vm2585, %v2272, 0.0
      %v2641 = vsel %vm2585, %v2274, 0.0
      %v2642 = vsel %vm2585, %v2276, 0.0
      %v2643 = vsel %vm2585, %v2278, 0.0
      %v2644 = vsel %vm2585, %v2280, 0.0
      %v2645 = vsel %vm2585, %v2282, 0.0
      %v2646 = vsel %vm2585, %v2284, 0.0
      %v2647 = vsel %vm2585, %v2286, 0.0
      %v2648 = vsel %vm2586, %v2103, 0.0
      %v2649 = vsel %vm2586, %v2104, 0.0
      %v2650 = vsel %vm2586, %v2105, 0.0
      %v2651 = vsel %vm2586, %v2106, 0.0
      %v2652 = vsel %vm2586, %v2107, 0.0
      %v2653 = vsel %vm2586, %v2108, 0.0
      %v2654 = vsel %vm2586, %v2109, 0.0
      %v2655 = vsel %vm2586, %v2110, 0.0
      %v2656 = vsel %vm2587, %v2288, 0.0
      %v2657 = vsel %vm2587, %v2290, 0.0
      %v2658 = vsel %vm2587, %v2292, 0.0
      %v2659 = vsel %vm2587, %v2294, 0.0
      %v2660 = vsel %vm2587, %v2296, 0.0
      %v2661 = vsel %vm2587, %v2298, 0.0
      %v2662 = vsel %vm2587, %v2300, 0.0
      %v2663 = vsel %vm2587, %v2302, 0.0
      %v2664 = vsel %vm2588, %v2111, 0.0
      %v2665 = vsel %vm2588, %v2112, 0.0
      %v2666 = vsel %vm2588, %v2113, 0.0
      %v2667 = vsel %vm2588, %v2114, 0.0
      %v2668 = vsel %vm2588, %v2115, 0.0
      %v2669 = vsel %vm2588, %v2116, 0.0
      %v2670 = vsel %vm2588, %v2117, 0.0
      %v2671 = vsel %vm2588, %v2118, 0.0
      %v2672 = vsel %vm2589, %v2304, 0.0
      %v2673 = vsel %vm2589, %v2306, 0.0
      %v2674 = vsel %vm2589, %v2308, 0.0
      %v2675 = vsel %vm2589, %v2310, 0.0
      %v2676 = vsel %vm2589, %v2312, 0.0
      %v2677 = vsel %vm2589, %v2314, 0.0
      %v2678 = vsel %vm2589, %v2316, 0.0
      %v2679 = vsel %vm2589, %v2318, 0.0
      %v2680 = vsel %vm2590, %v2119, 0.0
      %v2681 = vsel %vm2590, %v2120, 0.0
      %v2682 = vsel %vm2590, %v2121, 0.0
      %v2683 = vsel %vm2590, %v2122, 0.0
      %v2684 = vsel %vm2590, %v2123, 0.0
      %v2685 = vsel %vm2590, %v2124, 0.0
      %v2686 = vsel %vm2590, %v2125, 0.0
      %v2687 = vsel %vm2590, %v2126, 0.0
      %v2688 = vsel %vm2591, %v2320, 0.0
      %v2689 = vsel %vm2591, %v2322, 0.0
      %v2690 = vsel %vm2591, %v2324, 0.0
      %v2691 = vsel %vm2591, %v2326, 0.0
      %v2692 = vsel %vm2591, %v2328, 0.0
      %v2693 = vsel %vm2591, %v2330, 0.0
      %v2694 = vsel %vm2591, %v2332, 0.0
      %v2695 = vsel %vm2591, %v2334, 0.0
      %v2696 = vsel %vm2592, %v2127, 0.0
      %v2697 = vsel %vm2592, %v2128, 0.0
      %v2698 = vsel %vm2592, %v2129, 0.0
      %v2699 = vsel %vm2592, %v2130, 0.0
      %v2700 = vsel %vm2592, %v2131, 0.0
      %v2701 = vsel %vm2592, %v2132, 0.0
      %v2702 = vsel %vm2592, %v2133, 0.0
      %v2703 = vsel %vm2592, %v2134, 0.0
      %v2704 = vsel %vm2593, %v2336, 0.0
      %v2705 = vsel %vm2593, %v2338, 0.0
      %v2706 = vsel %vm2593, %v2340, 0.0
      %v2707 = vsel %vm2593, %v2342, 0.0
      %v2708 = vsel %vm2593, %v2344, 0.0
      %v2709 = vsel %vm2593, %v2346, 0.0
      %v2710 = vsel %vm2593, %v2348, 0.0
      %v2711 = vsel %vm2593, %v2350, 0.0
      %v2712 = vsel %vm2594, %v2135, 0.0
      %v2713 = vsel %vm2594, %v2136, 0.0
      %v2714 = vsel %vm2594, %v2137, 0.0
      %v2715 = vsel %vm2594, %v2138, 0.0
      %v2716 = vsel %vm2594, %v2139, 0.0
      %v2717 = vsel %vm2594, %v2140, 0.0
      %v2718 = vsel %vm2594, %v2141, 0.0
      %v2719 = vsel %vm2594, %v2142, 0.0
      %v2720 = vsel %vm2595, %v2352, 0.0
      %v2721 = vsel %vm2595, %v2354, 0.0
      %v2722 = vsel %vm2595, %v2356, 0.0
      %v2723 = vsel %vm2595, %v2358, 0.0
      %v2724 = vsel %vm2595, %v2360, 0.0
      %v2725 = vsel %vm2595, %v2362, 0.0
      %v2726 = vsel %vm2595, %v2364, 0.0
      %v2727 = vsel %vm2595, %v2366, 0.0
      %v2728 = vsel %vm2596, %v2143, 0.0
      %v2729 = vsel %vm2596, %v2144, 0.0
      %v2730 = vsel %vm2596, %v2145, 0.0
      %v2731 = vsel %vm2596, %v2146, 0.0
      %v2732 = vsel %vm2596, %v2147, 0.0
      %v2733 = vsel %vm2596, %v2148, 0.0
      %v2734 = vsel %vm2596, %v2149, 0.0
      %v2735 = vsel %vm2596, %v2150, 0.0
      %v2736 = vsel %vm2597, %v2368, 0.0
      %v2737 = vsel %vm2597, %v2370, 0.0
      %v2738 = vsel %vm2597, %v2372, 0.0
      %v2739 = vsel %vm2597, %v2374, 0.0
      %v2740 = vsel %vm2597, %v2376, 0.0
      %v2741 = vsel %vm2597, %v2378, 0.0
      %v2742 = vsel %vm2597, %v2380, 0.0
      %v2743 = vsel %vm2597, %v2382, 0.0
      %v2744 = vsel %vm2598, %v2151, 0.0
      %v2745 = vsel %vm2598, %v2152, 0.0
      %v2746 = vsel %vm2598, %v2153, 0.0
      %v2747 = vsel %vm2598, %v2154, 0.0
      %v2748 = vsel %vm2598, %v2155, 0.0
      %v2749 = vsel %vm2598, %v2156, 0.0
      %v2750 = vsel %vm2598, %v2157, 0.0
      %v2751 = vsel %vm2598, %v2158, 0.0
      %v2752 = vsel %vm2599, %v2384, 0.0
      %v2753 = vsel %vm2599, %v2386, 0.0
      %v2754 = vsel %vm2599, %v2388, 0.0
      %v2755 = vsel %vm2599, %v2390, 0.0
      %v2756 = vsel %vm2599, %v2392, 0.0
      %v2757 = vsel %vm2599, %v2394, 0.0
      %v2758 = vsel %vm2599, %v2396, 0.0
      %v2759 = vsel %vm2599, %v2398, 0.0
      %v2760 = vld [vmem:[%s726] sm:$0xff]
      %v2761 = vld [vmem:[%s726 + $0x8] sm:$0xff]
      %v2762 = vld [vmem:[%s726 + $0x10] sm:$0xff]
      %v2763 = vld [vmem:[%s726 + $0x18] sm:$0xff]
      %v2764 = vld [vmem:[%s741] sm:$0xff]
      %v2765 = vld [vmem:[%s741 + $0x8] sm:$0xff]
      %v2766 = vld [vmem:[%s741 + $0x10] sm:$0xff]
      %v2767 = vld [vmem:[%s741 + $0x18] sm:$0xff]
      %v2768 = vld [vmem:[%s741 + $0x20] sm:$0xff]
      %v2769 = vld [vmem:[%s741 + $0x28] sm:$0xff]
      %v2770 = vld [vmem:[%s741 + $0x30] sm:$0xff]
      %v2771 = vld [vmem:[%s741 + $0x38] sm:$0xff]
      %v2772 = vld [vmem:[%s741 + $0x40] sm:$0xff]
      %v2773 = vld [vmem:[%s741 + $0x48] sm:$0xff]
      %v2774 = vld [vmem:[%s741 + $0x50] sm:$0xff]
      %v2775 = vld [vmem:[%s741 + $0x58] sm:$0xff]
      %v2776 = vld [vmem:[%s741 + $0x60] sm:$0xff]
      %v2777 = vld [vmem:[%s741 + $0x68] sm:$0xff]
      %v2778 = vld [vmem:[%s741 + $0x70] sm:$0xff]
      %v2779 = vld [vmem:[%s741 + $0x78] sm:$0xff]
      %v2780 = vld [vmem:[%s741 + $0x80] sm:$0xff]
      %v2781 = vld [vmem:[%s741 + $0x88] sm:$0xff]
      %v2782 = vld [vmem:[%s741 + $0x90] sm:$0xff]
      %v2783 = vld [vmem:[%s741 + $0x98] sm:$0xff]
      %v2784 = vld [vmem:[%s741 + $0xa0] sm:$0xff]
      %v2785 = vld [vmem:[%s741 + $0xa8] sm:$0xff]
      %v2786 = vld [vmem:[%s741 + $0xb0] sm:$0xff]
      %v2787 = vld [vmem:[%s741 + $0xb8] sm:$0xff]
      %v2788 = vld [vmem:[%s741 + $0xc0] sm:$0xff]
      %v2789 = vld [vmem:[%s741 + $0xc8] sm:$0xff]
      %v2790 = vld [vmem:[%s741 + $0xd0] sm:$0xff]
      %v2791 = vld [vmem:[%s741 + $0xd8] sm:$0xff]
      %v2792 = vld [vmem:[%s741 + $0xe0] sm:$0xff]
      %v2793 = vld [vmem:[%s741 + $0xe8] sm:$0xff]
      %v2794 = vld [vmem:[%s741 + $0xf0] sm:$0xff]
      %v2795 = vld [vmem:[%s741 + $0xf8] sm:$0xff]
      %v2796 = vld [vmem:[%s756] sm:$0xff]
      %v2797 = vld [vmem:[%s756 + $0x8] sm:$0xff]
      %v2798 = vld [vmem:[%s756 + $0x10] sm:$0xff]
      %v2799 = vld [vmem:[%s756 + $0x18] sm:$0xff]
      %v2800 = vsel %vm2580, %v2760, 0.0
      %v2801 = vsel %vm2580, %v2761, 0.0
      %v2802 = vsel %vm2581, %v2762, 0.0
      %v2803 = vsel %vm2581, %v2763, 0.0
      %v2804 = vsel %vm2582, %v2764, 0.0
      %v2805 = vsel %vm2582, %v2765, 0.0
      %v2806 = vsel %vm2583, %v2766, 0.0
      %v2807 = vsel %vm2583, %v2767, 0.0
      %v2808 = vsel %vm2584, %v2768, 0.0
      %v2809 = vsel %vm2584, %v2769, 0.0
      %v2810 = vsel %vm2585, %v2770, 0.0
      %v2811 = vsel %vm2585, %v2771, 0.0
      %v2812 = vsel %vm2586, %v2772, 0.0
      %v2813 = vsel %vm2586, %v2773, 0.0
      %v2814 = vsel %vm2587, %v2774, 0.0
      %v2815 = vsel %vm2587, %v2775, 0.0
      %v2816 = vsel %vm2588, %v2776, 0.0
      %v2817 = vsel %vm2588, %v2777, 0.0
      %v2818 = vsel %vm2589, %v2778, 0.0
      %v2819 = vsel %vm2589, %v2779, 0.0
      %v2820 = vsel %vm2590, %v2780, 0.0
      %v2821 = vsel %vm2590, %v2781, 0.0
      %v2822 = vsel %vm2591, %v2782, 0.0
      %v2823 = vsel %vm2591, %v2783, 0.0
      %v2824 = vsel %vm2592, %v2784, 0.0
      %v2825 = vsel %vm2592, %v2785, 0.0
      %v2826 = vsel %vm2593, %v2786, 0.0
      %v2827 = vsel %vm2593, %v2787, 0.0
      %v2828 = vsel %vm2594, %v2788, 0.0
      %v2829 = vsel %vm2594, %v2789, 0.0
      %v2830 = vsel %vm2595, %v2790, 0.0
      %v2831 = vsel %vm2595, %v2791, 0.0
      %v2832 = vsel %vm2596, %v2792, 0.0
      %v2833 = vsel %vm2596, %v2793, 0.0
      %v2834 = vsel %vm2597, %v2794, 0.0
      %v2835 = vsel %vm2597, %v2795, 0.0
      %v2836 = vsel %vm2598, %v2796, 0.0
      %v2837 = vsel %vm2598, %v2797, 0.0
      %v2838 = vsel %vm2599, %v2798, 0.0
      %v2839 = vsel %vm2599, %v2799, 0.0
      %v2880 = vrot.slane %v2800, 7
      %v2881 = vrot.slane %v2801, 7
      %v2882 = vsel %vm2078, %v2880, %v2881
      %v2883 = vrot.slane %v2802, 7
      %v2884 = vrot.slane %v2803, 7
      %v2885 = vsel %vm2078, %v2883, %v2884
      %v2886 = vrot.slane %v2804, 7
      %v2887 = vrot.slane %v2805, 7
      %v2888 = vsel %vm2078, %v2886, %v2887
      %v2889 = vrot.slane %v2806, 7
      %v2890 = vrot.slane %v2807, 7
      %v2891 = vsel %vm2078, %v2889, %v2890
      %v2892 = vrot.slane %v2808, 7
      %v2893 = vrot.slane %v2809, 7
      %v2894 = vsel %vm2078, %v2892, %v2893
      %v2895 = vrot.slane %v2810, 7
      %v2896 = vrot.slane %v2811, 7
      %v2897 = vsel %vm2078, %v2895, %v2896
      %v2898 = vrot.slane %v2812, 7
      %v2899 = vrot.slane %v2813, 7
      %v2900 = vsel %vm2078, %v2898, %v2899
      %v2901 = vrot.slane %v2814, 7
      %v2902 = vrot.slane %v2815, 7
      %v2903 = vsel %vm2078, %v2901, %v2902
      %v2904 = vrot.slane %v2816, 7
      %v2905 = vrot.slane %v2817, 7
      %v2906 = vsel %vm2078, %v2904, %v2905
      %v2907 = vrot.slane %v2818, 7
      %v2908 = vrot.slane %v2819, 7
      %v2909 = vsel %vm2078, %v2907, %v2908
      %v2910 = vrot.slane %v2820, 7
      %v2911 = vrot.slane %v2821, 7
      %v2912 = vsel %vm2078, %v2910, %v2911
      %v2913 = vrot.slane %v2822, 7
      %v2914 = vrot.slane %v2823, 7
      %v2915 = vsel %vm2078, %v2913, %v2914
      %v2916 = vrot.slane %v2824, 7
      %v2917 = vrot.slane %v2825, 7
      %v2918 = vsel %vm2078, %v2916, %v2917
      %v2919 = vrot.slane %v2826, 7
      %v2920 = vrot.slane %v2827, 7
      %v2921 = vsel %vm2078, %v2919, %v2920
      %v2922 = vrot.slane %v2828, 7
      %v2923 = vrot.slane %v2829, 7
      %v2924 = vsel %vm2078, %v2922, %v2923
      %v2925 = vrot.slane %v2830, 7
      %v2926 = vrot.slane %v2831, 7
      %v2927 = vsel %vm2078, %v2925, %v2926
      %v2928 = vrot.slane %v2832, 7
      %v2929 = vrot.slane %v2833, 7
      %v2930 = vsel %vm2078, %v2928, %v2929
      %v2931 = vrot.slane %v2834, 7
      %v2932 = vrot.slane %v2835, 7
      %v2933 = vsel %vm2078, %v2931, %v2932
      %v2934 = vrot.slane %v2836, 7
      %v2935 = vrot.slane %v2837, 7
      %v2936 = vsel %vm2078, %v2934, %v2935
      %v2937 = vrot.slane %v2838, 7
      %v2938 = vrot.slane %v2839, 7
      %v2939 = vsel %vm2078, %v2937, %v2938
      %v3000 = vsel %vm2078, 0.0, %v2880
      %v3001 = vsel %vm2078, 0.0, %v2883
      %v3002 = vsel %vm2078, 0.0, %v2886
      %v3003 = vsel %vm2078, 0.0, %v2889
      %v3004 = vsel %vm2078, 0.0, %v2892
      %v3005 = vsel %vm2078, 0.0, %v2895
      %v3006 = vsel %vm2078, 0.0, %v2898
      %v3007 = vsel %vm2078, 0.0, %v2901
      %v3008 = vsel %vm2078, 0.0, %v2904
      %v3009 = vsel %vm2078, 0.0, %v2907
      %v3010 = vsel %vm2078, 0.0, %v2910
      %v3011 = vsel %vm2078, 0.0, %v2913
      %v3012 = vsel %vm2078, 0.0, %v2916
      %v3013 = vsel %vm2078, 0.0, %v2919
      %v3014 = vsel %vm2078, 0.0, %v2922
      %v3015 = vsel %vm2078, 0.0, %v2925
      %v3016 = vsel %vm2078, 0.0, %v2928
      %v3017 = vsel %vm2078, 0.0, %v2931
      %v3018 = vsel %vm2078, 0.0, %v2934
      %v3019 = vsel %vm2078, 0.0, %v2937
      %v3020 = vsel %vm2078, %v2881, 0.0
      %v3021 = vsel %vm2078, %v2884, 0.0
      %v3022 = vsel %vm2078, %v2887, 0.0
      %v3023 = vsel %vm2078, %v2890, 0.0
      %v3024 = vsel %vm2078, %v2893, 0.0
      %v3025 = vsel %vm2078, %v2896, 0.0
      %v3026 = vsel %vm2078, %v2899, 0.0
      %v3027 = vsel %vm2078, %v2902, 0.0
      %v3028 = vsel %vm2078, %v2905, 0.0
      %v3029 = vsel %vm2078, %v2908, 0.0
      %v3030 = vsel %vm2078, %v2911, 0.0
      %v3031 = vsel %vm2078, %v2914, 0.0
      %v3032 = vsel %vm2078, %v2917, 0.0
      %v3033 = vsel %vm2078, %v2920, 0.0
      %v3034 = vsel %vm2078, %v2923, 0.0
      %v3035 = vsel %vm2078, %v2926, 0.0
      %v3036 = vsel %vm2078, %v2929, 0.0
      %v3037 = vsel %vm2078, %v2932, 0.0
      %v3038 = vsel %vm2078, %v2935, 0.0
      %v3039 = vsel %vm2078, %v2938, 0.0
      %vm3080 = vcmask 1046528
      %v3081 = vrot.slane %v3000, 1
      %v3082 = vrot.slane %v2882, 1
      %v3083 = vsel %vm3080, %v3081, %v3082
      %v3084 = vrot.slane %v3020, 1
      %v3085 = vsel %vm3080, %v3082, %v3084
      %v3086 = vrot.slane %v3001, 1
      %v3087 = vrot.slane %v2885, 1
      %v3088 = vsel %vm3080, %v3086, %v3087
      %v3089 = vrot.slane %v3021, 1
      %v3090 = vsel %vm3080, %v3087, %v3089
      %v3091 = vrot.slane %v3002, 1
      %v3092 = vrot.slane %v2888, 1
      %v3093 = vsel %vm3080, %v3091, %v3092
      %v3094 = vrot.slane %v3022, 1
      %v3095 = vsel %vm3080, %v3092, %v3094
      %v3096 = vrot.slane %v3003, 1
      %v3097 = vrot.slane %v2891, 1
      %v3098 = vsel %vm3080, %v3096, %v3097
      %v3099 = vrot.slane %v3023, 1
      %v3100 = vsel %vm3080, %v3097, %v3099
      %v3101 = vrot.slane %v3004, 1
      %v3102 = vrot.slane %v2894, 1
      %v3103 = vsel %vm3080, %v3101, %v3102
      %v3104 = vrot.slane %v3024, 1
      %v3105 = vsel %vm3080, %v3102, %v3104
      %v3106 = vrot.slane %v3005, 1
      %v3107 = vrot.slane %v2897, 1
      %v3108 = vsel %vm3080, %v3106, %v3107
      %v3109 = vrot.slane %v3025, 1
      %v3110 = vsel %vm3080, %v3107, %v3109
      %v3111 = vrot.slane %v3006, 1
      %v3112 = vrot.slane %v2900, 1
      %v3113 = vsel %vm3080, %v3111, %v3112
      %v3114 = vrot.slane %v3026, 1
      %v3115 = vsel %vm3080, %v3112, %v3114
      %v3116 = vrot.slane %v3007, 1
      %v3117 = vrot.slane %v2903, 1
      %v3118 = vsel %vm3080, %v3116, %v3117
      %v3119 = vrot.slane %v3027, 1
      %v3120 = vsel %vm3080, %v3117, %v3119
      %v3121 = vrot.slane %v3008, 1
      %v3122 = vrot.slane %v2906, 1
      %v3123 = vsel %vm3080, %v3121, %v3122
      %v3124 = vrot.slane %v3028, 1
      %v3125 = vsel %vm3080, %v3122, %v3124
      %v3126 = vrot.slane %v3009, 1
      %v3127 = vrot.slane %v2909, 1
      %v3128 = vsel %vm3080, %v3126, %v3127
      %v3129 = vrot.slane %v3029, 1
      %v3130 = vsel %vm3080, %v3127, %v3129
      %v3131 = vrot.slane %v3010, 1
      %v3132 = vrot.slane %v2912, 1
      %v3133 = vsel %vm3080, %v3131, %v3132
      %v3134 = vrot.slane %v3030, 1
      %v3135 = vsel %vm3080, %v3132, %v3134
      %v3136 = vrot.slane %v3011, 1
      %v3137 = vrot.slane %v2915, 1
      %v3138 = vsel %vm3080, %v3136, %v3137
      %v3139 = vrot.slane %v3031, 1
      %v3140 = vsel %vm3080, %v3137, %v3139
      %v3141 = vrot.slane %v3012, 1
      %v3142 = vrot.slane %v2918, 1
      %v3143 = vsel %vm3080, %v3141, %v3142
      %v3144 = vrot.slane %v3032, 1
      %v3145 = vsel %vm3080, %v3142, %v3144
      %v3146 = vrot.slane %v3013, 1
      %v3147 = vrot.slane %v2921, 1
      %v3148 = vsel %vm3080, %v3146, %v3147
      %v3149 = vrot.slane %v3033, 1
      %v3150 = vsel %vm3080, %v3147, %v3149
      %v3151 = vrot.slane %v3014, 1
      %v3152 = vrot.slane %v2924, 1
      %v3153 = vsel %vm3080, %v3151, %v3152
      %v3154 = vrot.slane %v3034, 1
      %v3155 = vsel %vm3080, %v3152, %v3154
      %v3156 = vrot.slane %v3015, 1
      %v3157 = vrot.slane %v2927, 1
      %v3158 = vsel %vm3080, %v3156, %v3157
      %v3159 = vrot.slane %v3035, 1
      %v3160 = vsel %vm3080, %v3157, %v3159
      %v3161 = vrot.slane %v3016, 1
      %v3162 = vrot.slane %v2930, 1
      %v3163 = vsel %vm3080, %v3161, %v3162
      %v3164 = vrot.slane %v3036, 1
      %v3165 = vsel %vm3080, %v3162, %v3164
      %v3166 = vrot.slane %v3017, 1
      %v3167 = vrot.slane %v2933, 1
      %v3168 = vsel %vm3080, %v3166, %v3167
      %v3169 = vrot.slane %v3037, 1
      %v3170 = vsel %vm3080, %v3167, %v3169
      %v3171 = vrot.slane %v3018, 1
      %v3172 = vrot.slane %v2936, 1
      %v3173 = vsel %vm3080, %v3171, %v3172
      %v3174 = vrot.slane %v3038, 1
      %v3175 = vsel %vm3080, %v3172, %v3174
      %v3176 = vrot.slane %v3019, 1
      %v3177 = vrot.slane %v2939, 1
      %v3178 = vsel %vm3080, %v3176, %v3177
      %v3179 = vrot.slane %v3039, 1
      %v3180 = vsel %vm3080, %v3177, %v3179
      %3181 = vrot.lane.b32.xlu0 %v3083, 4
      %v3182 = vpop.permute.xlu0 %3181
      %3183 = vrot.lane.b32.xlu0 %v3085, 4
      %v3184 = vpop.permute.xlu0 %3183
      %3185 = vrot.lane.b32.xlu0 %v3088, 4
      %v3186 = vpop.permute.xlu0 %3185
      %3187 = vrot.lane.b32.xlu0 %v3090, 4
      %v3188 = vpop.permute.xlu0 %3187
      %3189 = vrot.lane.b32.xlu0 %v3093, 4
      %v3190 = vpop.permute.xlu0 %3189
      %3191 = vrot.lane.b32.xlu0 %v3095, 4
      %v3192 = vpop.permute.xlu0 %3191
      %3193 = vrot.lane.b32.xlu0 %v3098, 4
      %v3194 = vpop.permute.xlu0 %3193
      %3195 = vrot.lane.b32.xlu0 %v3100, 4
      %v3196 = vpop.permute.xlu0 %3195
      %3197 = vrot.lane.b32.xlu0 %v3103, 4
      %v3198 = vpop.permute.xlu0 %3197
      %3199 = vrot.lane.b32.xlu0 %v3105, 4
      %v3200 = vpop.permute.xlu0 %3199
      %3201 = vrot.lane.b32.xlu0 %v3108, 4
      %v3202 = vpop.permute.xlu0 %3201
      %3203 = vrot.lane.b32.xlu0 %v3110, 4
      %v3204 = vpop.permute.xlu0 %3203
      %3205 = vrot.lane.b32.xlu0 %v3113, 4
      %v3206 = vpop.permute.xlu0 %3205
      %3207 = vrot.lane.b32.xlu0 %v3115, 4
      %v3208 = vpop.permute.xlu0 %3207
      %3209 = vrot.lane.b32.xlu0 %v3118, 4
      %v3210 = vpop.permute.xlu0 %3209
      %3211 = vrot.lane.b32.xlu0 %v3120, 4
      %v3212 = vpop.permute.xlu0 %3211
      %3213 = vrot.lane.b32.xlu0 %v3123, 4
      %v3214 = vpop.permute.xlu0 %3213
      %3215 = vrot.lane.b32.xlu0 %v3125, 4
      %v3216 = vpop.permute.xlu0 %3215
      %3217 = vrot.lane.b32.xlu0 %v3128, 4
      %v3218 = vpop.permute.xlu0 %3217
      %3219 = vrot.lane.b32.xlu0 %v3130, 4
      %v3220 = vpop.permute.xlu0 %3219
      %3221 = vrot.lane.b32.xlu0 %v3133, 4
      %v3222 = vpop.permute.xlu0 %3221
      %3223 = vrot.lane.b32.xlu0 %v3135, 4
      %v3224 = vpop.permute.xlu0 %3223
      %3225 = vrot.lane.b32.xlu0 %v3138, 4
      %v3226 = vpop.permute.xlu0 %3225
      %3227 = vrot.lane.b32.xlu0 %v3140, 4
      %v3228 = vpop.permute.xlu0 %3227
      %3229 = vrot.lane.b32.xlu0 %v3143, 4
      %v3230 = vpop.permute.xlu0 %3229
      %3231 = vrot.lane.b32.xlu0 %v3145, 4
      %v3232 = vpop.permute.xlu0 %3231
      %3233 = vrot.lane.b32.xlu0 %v3148, 4
      %v3234 = vpop.permute.xlu0 %3233
      %3235 = vrot.lane.b32.xlu0 %v3150, 4
      %v3236 = vpop.permute.xlu0 %3235
      %3237 = vrot.lane.b32.xlu0 %v3153, 4
      %v3238 = vpop.permute.xlu0 %3237
      %3239 = vrot.lane.b32.xlu0 %v3155, 4
      %v3240 = vpop.permute.xlu0 %3239
      %3241 = vrot.lane.b32.xlu0 %v3158, 4
      %v3242 = vpop.permute.xlu0 %3241
      %3243 = vrot.lane.b32.xlu0 %v3160, 4
      %v3244 = vpop.permute.xlu0 %3243
      %3245 = vrot.lane.b32.xlu0 %v3163, 4
      %v3246 = vpop.permute.xlu0 %3245
      %3247 = vrot.lane.b32.xlu0 %v3165, 4
      %v3248 = vpop.permute.xlu0 %3247
      %3249 = vrot.lane.b32.xlu0 %v3168, 4
      %v3250 = vpop.permute.xlu0 %3249
      %3251 = vrot.lane.b32.xlu0 %v3170, 4
      %v3252 = vpop.permute.xlu0 %3251
      %3253 = vrot.lane.b32.xlu0 %v3173, 4
      %v3254 = vpop.permute.xlu0 %3253
      %3255 = vrot.lane.b32.xlu0 %v3175, 4
      %v3256 = vpop.permute.xlu0 %3255
      %3257 = vrot.lane.b32.xlu0 %v3178, 4
      %v3258 = vpop.permute.xlu0 %3257
      %3259 = vrot.lane.b32.xlu0 %v3180, 4
      %v3260 = vpop.permute.xlu0 %3259
      %vm3301 = vcmask 1045504
      %v3302 = vrot.slane %v3000, 2
      %v3303 = vrot.slane %v2882, 2
      %v3304 = vsel %vm3301, %v3302, %v3303
      %v3305 = vrot.slane %v3020, 2
      %v3306 = vsel %vm3301, %v3303, %v3305
      %v3307 = vrot.slane %v3001, 2
      %v3308 = vrot.slane %v2885, 2
      %v3309 = vsel %vm3301, %v3307, %v3308
      %v3310 = vrot.slane %v3021, 2
      %v3311 = vsel %vm3301, %v3308, %v3310
      %v3312 = vrot.slane %v3002, 2
      %v3313 = vrot.slane %v2888, 2
      %v3314 = vsel %vm3301, %v3312, %v3313
      %v3315 = vrot.slane %v3022, 2
      %v3316 = vsel %vm3301, %v3313, %v3315
      %v3317 = vrot.slane %v3003, 2
      %v3318 = vrot.slane %v2891, 2
      %v3319 = vsel %vm3301, %v3317, %v3318
      %v3320 = vrot.slane %v3023, 2
      %v3321 = vsel %vm3301, %v3318, %v3320
      %v3322 = vrot.slane %v3004, 2
      %v3323 = vrot.slane %v2894, 2
      %v3324 = vsel %vm3301, %v3322, %v3323
      %v3325 = vrot.slane %v3024, 2
      %v3326 = vsel %vm3301, %v3323, %v3325
      %v3327 = vrot.slane %v3005, 2
      %v3328 = vrot.slane %v2897, 2
      %v3329 = vsel %vm3301, %v3327, %v3328
      %v3330 = vrot.slane %v3025, 2
      %v3331 = vsel %vm3301, %v3328, %v3330
      %v3332 = vrot.slane %v3006, 2
      %v3333 = vrot.slane %v2900, 2
      %v3334 = vsel %vm3301, %v3332, %v3333
      %v3335 = vrot.slane %v3026, 2
      %v3336 = vsel %vm3301, %v3333, %v3335
      %v3337 = vrot.slane %v3007, 2
      %v3338 = vrot.slane %v2903, 2
      %v3339 = vsel %vm3301, %v3337, %v3338
      %v3340 = vrot.slane %v3027, 2
      %v3341 = vsel %vm3301, %v3338, %v3340
      %v3342 = vrot.slane %v3008, 2
      %v3343 = vrot.slane %v2906, 2
      %v3344 = vsel %vm3301, %v3342, %v3343
      %v3345 = vrot.slane %v3028, 2
      %v3346 = vsel %vm3301, %v3343, %v3345
      %v3347 = vrot.slane %v3009, 2
      %v3348 = vrot.slane %v2909, 2
      %v3349 = vsel %vm3301, %v3347, %v3348
      %v3350 = vrot.slane %v3029, 2
      %v3351 = vsel %vm3301, %v3348, %v3350
      %v3352 = vrot.slane %v3010, 2
      %v3353 = vrot.slane %v2912, 2
      %v3354 = vsel %vm3301, %v3352, %v3353
      %v3355 = vrot.slane %v3030, 2
      %v3356 = vsel %vm3301, %v3353, %v3355
      %v3357 = vrot.slane %v3011, 2
      %v3358 = vrot.slane %v2915, 2
      %v3359 = vsel %vm3301, %v3357, %v3358
      %v3360 = vrot.slane %v3031, 2
      %v3361 = vsel %vm3301, %v3358, %v3360
      %v3362 = vrot.slane %v3012, 2
      %v3363 = vrot.slane %v2918, 2
      %v3364 = vsel %vm3301, %v3362, %v3363
      %v3365 = vrot.slane %v3032, 2
      %v3366 = vsel %vm3301, %v3363, %v3365
      %v3367 = vrot.slane %v3013, 2
      %v3368 = vrot.slane %v2921, 2
      %v3369 = vsel %vm3301, %v3367, %v3368
      %v3370 = vrot.slane %v3033, 2
      %v3371 = vsel %vm3301, %v3368, %v3370
      %v3372 = vrot.slane %v3014, 2
      %v3373 = vrot.slane %v2924, 2
      %v3374 = vsel %vm3301, %v3372, %v3373
      %v3375 = vrot.slane %v3034, 2
      %v3376 = vsel %vm3301, %v3373, %v3375
      %v3377 = vrot.slane %v3015, 2
      %v3378 = vrot.slane %v2927, 2
      %v3379 = vsel %vm3301, %v3377, %v3378
      %v3380 = vrot.slane %v3035, 2
      %v3381 = vsel %vm3301, %v3378, %v3380
      %v3382 = vrot.slane %v3016, 2
      %v3383 = vrot.slane %v2930, 2
      %v3384 = vsel %vm3301, %v3382, %v3383
      %v3385 = vrot.slane %v3036, 2
      %v3386 = vsel %vm3301, %v3383, %v3385
      %v3387 = vrot.slane %v3017, 2
      %v3388 = vrot.slane %v2933, 2
      %v3389 = vsel %vm3301, %v3387, %v3388
      %v3390 = vrot.slane %v3037, 2
      %v3391 = vsel %vm3301, %v3388, %v3390
      %v3392 = vrot.slane %v3018, 2
      %v3393 = vrot.slane %v2936, 2
      %v3394 = vsel %vm3301, %v3392, %v3393
      %v3395 = vrot.slane %v3038, 2
      %v3396 = vsel %vm3301, %v3393, %v3395
      %v3397 = vrot.slane %v3019, 2
      %v3398 = vrot.slane %v2939, 2
      %v3399 = vsel %vm3301, %v3397, %v3398
      %v3400 = vrot.slane %v3039, 2
      %v3401 = vsel %vm3301, %v3398, %v3400
      %3402 = vrot.lane.b32.xlu0 %v3304, 8
      %v3403 = vpop.permute.xlu0 %3402
      %3404 = vrot.lane.b32.xlu0 %v3306, 8
      %v3405 = vpop.permute.xlu0 %3404
      %3406 = vrot.lane.b32.xlu0 %v3309, 8
      %v3407 = vpop.permute.xlu0 %3406
      %3408 = vrot.lane.b32.xlu0 %v3311, 8
      %v3409 = vpop.permute.xlu0 %3408
      %3410 = vrot.lane.b32.xlu0 %v3314, 8
      %v3411 = vpop.permute.xlu0 %3410
      %3412 = vrot.lane.b32.xlu0 %v3316, 8
      %v3413 = vpop.permute.xlu0 %3412
      %3414 = vrot.lane.b32.xlu0 %v3319, 8
      %v3415 = vpop.permute.xlu0 %3414
      %3416 = vrot.lane.b32.xlu0 %v3321, 8
      %v3417 = vpop.permute.xlu0 %3416
      %3418 = vrot.lane.b32.xlu0 %v3324, 8
      %v3419 = vpop.permute.xlu0 %3418
      %3420 = vrot.lane.b32.xlu0 %v3326, 8
      %v3421 = vpop.permute.xlu0 %3420
      %3422 = vrot.lane.b32.xlu0 %v3329, 8
      %v3423 = vpop.permute.xlu0 %3422
      %3424 = vrot.lane.b32.xlu0 %v3331, 8
      %v3425 = vpop.permute.xlu0 %3424
      %3426 = vrot.lane.b32.xlu0 %v3334, 8
      %v3427 = vpop.permute.xlu0 %3426
      %3428 = vrot.lane.b32.xlu0 %v3336, 8
      %v3429 = vpop.permute.xlu0 %3428
      %3430 = vrot.lane.b32.xlu0 %v3339, 8
      %v3431 = vpop.permute.xlu0 %3430
      %3432 = vrot.lane.b32.xlu0 %v3341, 8
      %v3433 = vpop.permute.xlu0 %3432
      %3434 = vrot.lane.b32.xlu0 %v3344, 8
      %v3435 = vpop.permute.xlu0 %3434
      %3436 = vrot.lane.b32.xlu0 %v3346, 8
      %v3437 = vpop.permute.xlu0 %3436
      %3438 = vrot.lane.b32.xlu0 %v3349, 8
      %v3439 = vpop.permute.xlu0 %3438
      %3440 = vrot.lane.b32.xlu0 %v3351, 8
      %v3441 = vpop.permute.xlu0 %3440
      %3442 = vrot.lane.b32.xlu0 %v3354, 8
      %v3443 = vpop.permute.xlu0 %3442
      %3444 = vrot.lane.b32.xlu0 %v3356, 8
      %v3445 = vpop.permute.xlu0 %3444
      %3446 = vrot.lane.b32.xlu0 %v3359, 8
      %v3447 = vpop.permute.xlu0 %3446
      %3448 = vrot.lane.b32.xlu0 %v3361, 8
      %v3449 = vpop.permute.xlu0 %3448
      %3450 = vrot.lane.b32.xlu0 %v3364, 8
      %v3451 = vpop.permute.xlu0 %3450
      %3452 = vrot.lane.b32.xlu0 %v3366, 8
      %v3453 = vpop.permute.xlu0 %3452
      %3454 = vrot.lane.b32.xlu0 %v3369, 8
      %v3455 = vpop.permute.xlu0 %3454
      %3456 = vrot.lane.b32.xlu0 %v3371, 8
      %v3457 = vpop.permute.xlu0 %3456
      %3458 = vrot.lane.b32.xlu0 %v3374, 8
      %v3459 = vpop.permute.xlu0 %3458
      %3460 = vrot.lane.b32.xlu0 %v3376, 8
      %v3461 = vpop.permute.xlu0 %3460
      %3462 = vrot.lane.b32.xlu0 %v3379, 8
      %v3463 = vpop.permute.xlu0 %3462
      %3464 = vrot.lane.b32.xlu0 %v3381, 8
      %v3465 = vpop.permute.xlu0 %3464
      %3466 = vrot.lane.b32.xlu0 %v3384, 8
      %v3467 = vpop.permute.xlu0 %3466
      %3468 = vrot.lane.b32.xlu0 %v3386, 8
      %v3469 = vpop.permute.xlu0 %3468
      %3470 = vrot.lane.b32.xlu0 %v3389, 8
      %v3471 = vpop.permute.xlu0 %3470
      %3472 = vrot.lane.b32.xlu0 %v3391, 8
      %v3473 = vpop.permute.xlu0 %3472
      %3474 = vrot.lane.b32.xlu0 %v3394, 8
      %v3475 = vpop.permute.xlu0 %3474
      %3476 = vrot.lane.b32.xlu0 %v3396, 8
      %v3477 = vpop.permute.xlu0 %3476
      %3478 = vrot.lane.b32.xlu0 %v3399, 8
      %v3479 = vpop.permute.xlu0 %3478
      %3480 = vrot.lane.b32.xlu0 %v3401, 8
      %v3481 = vpop.permute.xlu0 %3480
      %vm3522 = vcmask 31744
      %v3523 = vsel %vm3522, %v3000, %v3182
      %v3524 = vsel %vm3522, %v2882, %v3184
      %v3525 = vsel %vm3522, %v3001, %v3186
      %v3526 = vsel %vm3522, %v2885, %v3188
      %v3527 = vsel %vm3522, %v3002, %v3190
      %v3528 = vsel %vm3522, %v2888, %v3192
      %v3529 = vsel %vm3522, %v3003, %v3194
      %v3530 = vsel %vm3522, %v2891, %v3196
      %v3531 = vsel %vm3522, %v3004, %v3198
      %v3532 = vsel %vm3522, %v2894, %v3200
      %v3533 = vsel %vm3522, %v3005, %v3202
      %v3534 = vsel %vm3522, %v2897, %v3204
      %v3535 = vsel %vm3522, %v3006, %v3206
      %v3536 = vsel %vm3522, %v2900, %v3208
      %v3537 = vsel %vm3522, %v3007, %v3210
      %v3538 = vsel %vm3522, %v2903, %v3212
      %v3539 = vsel %vm3522, %v3008, %v3214
      %v3540 = vsel %vm3522, %v2906, %v3216
      %v3541 = vsel %vm3522, %v3009, %v3218
      %v3542 = vsel %vm3522, %v2909, %v3220
      %v3543 = vsel %vm3522, %v3010, %v3222
      %v3544 = vsel %vm3522, %v2912, %v3224
      %v3545 = vsel %vm3522, %v3011, %v3226
      %v3546 = vsel %vm3522, %v2915, %v3228
      %v3547 = vsel %vm3522, %v3012, %v3230
      %v3548 = vsel %vm3522, %v2918, %v3232
      %v3549 = vsel %vm3522, %v3013, %v3234
      %v3550 = vsel %vm3522, %v2921, %v3236
      %v3551 = vsel %vm3522, %v3014, %v3238
      %v3552 = vsel %vm3522, %v2924, %v3240
      %v3553 = vsel %vm3522, %v3015, %v3242
      %v3554 = vsel %vm3522, %v2927, %v3244
      %v3555 = vsel %vm3522, %v3016, %v3246
      %v3556 = vsel %vm3522, %v2930, %v3248
      %v3557 = vsel %vm3522, %v3017, %v3250
      %v3558 = vsel %vm3522, %v2933, %v3252
      %v3559 = vsel %vm3522, %v3018, %v3254
      %v3560 = vsel %vm3522, %v2936, %v3256
      %v3561 = vsel %vm3522, %v3019, %v3258
      %v3562 = vsel %vm3522, %v2939, %v3260
      %v3563 = vsel %vm792, %v3523, %v3403
      %v3564 = vsel %vm792, %v3524, %v3405
      %v3565 = vsel %vm792, %v3525, %v3407
      %v3566 = vsel %vm792, %v3526, %v3409
      %v3567 = vsel %vm792, %v3527, %v3411
      %v3568 = vsel %vm792, %v3528, %v3413
      %v3569 = vsel %vm792, %v3529, %v3415
      %v3570 = vsel %vm792, %v3530, %v3417
      %v3571 = vsel %vm792, %v3531, %v3419
      %v3572 = vsel %vm792, %v3532, %v3421
      %v3573 = vsel %vm792, %v3533, %v3423
      %v3574 = vsel %vm792, %v3534, %v3425
      %v3575 = vsel %vm792, %v3535, %v3427
      %v3576 = vsel %vm792, %v3536, %v3429
      %v3577 = vsel %vm792, %v3537, %v3431
      %v3578 = vsel %vm792, %v3538, %v3433
      %v3579 = vsel %vm792, %v3539, %v3435
      %v3580 = vsel %vm792, %v3540, %v3437
      %v3581 = vsel %vm792, %v3541, %v3439
      %v3582 = vsel %vm792, %v3542, %v3441
      %v3583 = vsel %vm792, %v3543, %v3443
      %v3584 = vsel %vm792, %v3544, %v3445
      %v3585 = vsel %vm792, %v3545, %v3447
      %v3586 = vsel %vm792, %v3546, %v3449
      %v3587 = vsel %vm792, %v3547, %v3451
      %v3588 = vsel %vm792, %v3548, %v3453
      %v3589 = vsel %vm792, %v3549, %v3455
      %v3590 = vsel %vm792, %v3550, %v3457
      %v3591 = vsel %vm792, %v3551, %v3459
      %v3592 = vsel %vm792, %v3552, %v3461
      %v3593 = vsel %vm792, %v3553, %v3463
      %v3594 = vsel %vm792, %v3554, %v3465
      %v3595 = vsel %vm792, %v3555, %v3467
      %v3596 = vsel %vm792, %v3556, %v3469
      %v3597 = vsel %vm792, %v3557, %v3471
      %v3598 = vsel %vm792, %v3558, %v3473
      %v3599 = vsel %vm792, %v3559, %v3475
      %v3600 = vsel %vm792, %v3560, %v3477
      %v3601 = vsel %vm792, %v3561, %v3479
      %v3602 = vsel %vm792, %v3562, %v3481
      %v3763 = vcombine.low %v2600, %v2601
      %v3764 = vcombine.low %v2602, %v2603
      %v3766 = vunpack.c.l.s4 1983009808
      %v3767 = vunpack.c.0.s8 %v3766
      %v3768 = vlaneseq
      %v3769 = vshrl.u32 %v3768, 7
      %v3770 = vsub.s32 %v3767, %v3769
      %v3771 = vrot.slane %v3763, %v3770
      %v3773 = vunpack.c.l.s4 1983009808
      %v3774 = vunpack.c.0.s8 %v3773
      %v3775 = vlaneseq
      %v3776 = vshrl.u32 %v3775, 7
      %v3777 = vsub.s32 %v3774, %v3776
      %v3778 = vrot.slane %v3764, %v3777
      %v3779 = vcombine.low %v3771, %v3778
      %v3780 = vcombine.low %v2604, %v2605
      %v3781 = vcombine.low %v2606, %v2607
      %v3783 = vunpack.c.l.s4 1983009808
      %v3784 = vunpack.c.0.s8 %v3783
      %v3785 = vlaneseq
      %v3786 = vshrl.u32 %v3785, 7
      %v3787 = vsub.s32 %v3784, %v3786
      %v3788 = vrot.slane %v3780, %v3787
      %v3790 = vunpack.c.l.s4 1983009808
      %v3791 = vunpack.c.0.s8 %v3790
      %v3792 = vlaneseq
      %v3793 = vshrl.u32 %v3792, 7
      %v3794 = vsub.s32 %v3791, %v3793
      %v3795 = vrot.slane %v3781, %v3794
      %v3796 = vcombine.low %v3788, %v3795
      %v3797 = vcombine.low %v2608, %v2609
      %v3798 = vcombine.low %v2610, %v2611
      %v3800 = vunpack.c.l.s4 1983009808
      %v3801 = vunpack.c.0.s8 %v3800
      %v3802 = vlaneseq
      %v3803 = vshrl.u32 %v3802, 7
      %v3804 = vsub.s32 %v3801, %v3803
      %v3805 = vrot.slane %v3797, %v3804
      %v3807 = vunpack.c.l.s4 1983009808
      %v3808 = vunpack.c.0.s8 %v3807
      %v3809 = vlaneseq
      %v3810 = vshrl.u32 %v3809, 7
      %v3811 = vsub.s32 %v3808, %v3810
      %v3812 = vrot.slane %v3798, %v3811
      %v3813 = vcombine.low %v3805, %v3812
      %v3814 = vcombine.low %v2612, %v2613
      %v3815 = vcombine.low %v2614, %v2615
      %v3817 = vunpack.c.l.s4 1983009808
      %v3818 = vunpack.c.0.s8 %v3817
      %v3819 = vlaneseq
      %v3820 = vshrl.u32 %v3819, 7
      %v3821 = vsub.s32 %v3818, %v3820
      %v3822 = vrot.slane %v3814, %v3821
      %v3824 = vunpack.c.l.s4 1983009808
      %v3825 = vunpack.c.0.s8 %v3824
      %v3826 = vlaneseq
      %v3827 = vshrl.u32 %v3826, 7
      %v3828 = vsub.s32 %v3825, %v3827
      %v3829 = vrot.slane %v3815, %v3828
      %v3830 = vcombine.low %v3822, %v3829
      %v3831 = vcombine.low %v2616, %v2617
      %v3832 = vcombine.low %v2618, %v2619
      %v3834 = vunpack.c.l.s4 1983009808
      %v3835 = vunpack.c.0.s8 %v3834
      %v3836 = vlaneseq
      %v3837 = vshrl.u32 %v3836, 7
      %v3838 = vsub.s32 %v3835, %v3837
      %v3839 = vrot.slane %v3831, %v3838
      %v3841 = vunpack.c.l.s4 1983009808
      %v3842 = vunpack.c.0.s8 %v3841
      %v3843 = vlaneseq
      %v3844 = vshrl.u32 %v3843, 7
      %v3845 = vsub.s32 %v3842, %v3844
      %v3846 = vrot.slane %v3832, %v3845
      %v3847 = vcombine.low %v3839, %v3846
      %v3848 = vcombine.low %v2620, %v2621
      %v3849 = vcombine.low %v2622, %v2623
      %v3851 = vunpack.c.l.s4 1983009808
      %v3852 = vunpack.c.0.s8 %v3851
      %v3853 = vlaneseq
      %v3854 = vshrl.u32 %v3853, 7
      %v3855 = vsub.s32 %v3852, %v3854
      %v3856 = vrot.slane %v3848, %v3855
      %v3858 = vunpack.c.l.s4 1983009808
      %v3859 = vunpack.c.0.s8 %v3858
      %v3860 = vlaneseq
      %v3861 = vshrl.u32 %v3860, 7
      %v3862 = vsub.s32 %v3859, %v3861
      %v3863 = vrot.slane %v3849, %v3862
      %v3864 = vcombine.low %v3856, %v3863
      %v3865 = vcombine.low %v2624, %v2625
      %v3866 = vcombine.low %v2626, %v2627
      %v3868 = vunpack.c.l.s4 1983009808
      %v3869 = vunpack.c.0.s8 %v3868
      %v3870 = vlaneseq
      %v3871 = vshrl.u32 %v3870, 7
      %v3872 = vsub.s32 %v3869, %v3871
      %v3873 = vrot.slane %v3865, %v3872
      %v3875 = vunpack.c.l.s4 1983009808
      %v3876 = vunpack.c.0.s8 %v3875
      %v3877 = vlaneseq
      %v3878 = vshrl.u32 %v3877, 7
      %v3879 = vsub.s32 %v3876, %v3878
      %v3880 = vrot.slane %v3866, %v3879
      %v3881 = vcombine.low %v3873, %v3880
      %v3882 = vcombine.low %v2628, %v2629
      %v3883 = vcombine.low %v2630, %v2631
      %v3885 = vunpack.c.l.s4 1983009808
      %v3886 = vunpack.c.0.s8 %v3885
      %v3887 = vlaneseq
      %v3888 = vshrl.u32 %v3887, 7
      %v3889 = vsub.s32 %v3886, %v3888
      %v3890 = vrot.slane %v3882, %v3889
      %v3892 = vunpack.c.l.s4 1983009808
      %v3893 = vunpack.c.0.s8 %v3892
      %v3894 = vlaneseq
      %v3895 = vshrl.u32 %v3894, 7
      %v3896 = vsub.s32 %v3893, %v3895
      %v3897 = vrot.slane %v3883, %v3896
      %v3898 = vcombine.low %v3890, %v3897
      %v3899 = vcombine.low %v2632, %v2633
      %v3900 = vcombine.low %v2634, %v2635
      %v3902 = vunpack.c.l.s4 1983009808
      %v3903 = vunpack.c.0.s8 %v3902
      %v3904 = vlaneseq
      %v3905 = vshrl.u32 %v3904, 7
      %v3906 = vsub.s32 %v3903, %v3905
      %v3907 = vrot.slane %v3899, %v3906
      %v3909 = vunpack.c.l.s4 1983009808
      %v3910 = vunpack.c.0.s8 %v3909
      %v3911 = vlaneseq
      %v3912 = vshrl.u32 %v3911, 7
      %v3913 = vsub.s32 %v3910, %v3912
      %v3914 = vrot.slane %v3900, %v3913
      %v3915 = vcombine.low %v3907, %v3914
      %v3916 = vcombine.low %v2636, %v2637
      %v3917 = vcombine.low %v2638, %v2639
      %v3919 = vunpack.c.l.s4 1983009808
      %v3920 = vunpack.c.0.s8 %v3919
      %v3921 = vlaneseq
      %v3922 = vshrl.u32 %v3921, 7
      %v3923 = vsub.s32 %v3920, %v3922
      %v3924 = vrot.slane %v3916, %v3923
      %v3926 = vunpack.c.l.s4 1983009808
      %v3927 = vunpack.c.0.s8 %v3926
      %v3928 = vlaneseq
      %v3929 = vshrl.u32 %v3928, 7
      %v3930 = vsub.s32 %v3927, %v3929
      %v3931 = vrot.slane %v3917, %v3930
      %v3932 = vcombine.low %v3924, %v3931
      %v3933 = vcombine.low %v2640, %v2641
      %v3934 = vcombine.low %v2642, %v2643
      %v3936 = vunpack.c.l.s4 1983009808
      %v3937 = vunpack.c.0.s8 %v3936
      %v3938 = vlaneseq
      %v3939 = vshrl.u32 %v3938, 7
      %v3940 = vsub.s32 %v3937, %v3939
      %v3941 = vrot.slane %v3933, %v3940
      %v3943 = vunpack.c.l.s4 1983009808
      %v3944 = vunpack.c.0.s8 %v3943
      %v3945 = vlaneseq
      %v3946 = vshrl.u32 %v3945, 7
      %v3947 = vsub.s32 %v3944, %v3946
      %v3948 = vrot.slane %v3934, %v3947
      %v3949 = vcombine.low %v3941, %v3948
      %v3950 = vcombine.low %v2644, %v2645
      %v3951 = vcombine.low %v2646, %v2647
      %v3953 = vunpack.c.l.s4 1983009808
      %v3954 = vunpack.c.0.s8 %v3953
      %v3955 = vlaneseq
      %v3956 = vshrl.u32 %v3955, 7
      %v3957 = vsub.s32 %v3954, %v3956
      %v3958 = vrot.slane %v3950, %v3957
      %v3960 = vunpack.c.l.s4 1983009808
      %v3961 = vunpack.c.0.s8 %v3960
      %v3962 = vlaneseq
      %v3963 = vshrl.u32 %v3962, 7
      %v3964 = vsub.s32 %v3961, %v3963
      %v3965 = vrot.slane %v3951, %v3964
      %v3966 = vcombine.low %v3958, %v3965
      %v3967 = vcombine.low %v2648, %v2649
      %v3968 = vcombine.low %v2650, %v2651
      %v3970 = vunpack.c.l.s4 1983009808
      %v3971 = vunpack.c.0.s8 %v3970
      %v3972 = vlaneseq
      %v3973 = vshrl.u32 %v3972, 7
      %v3974 = vsub.s32 %v3971, %v3973
      %v3975 = vrot.slane %v3967, %v3974
      %v3977 = vunpack.c.l.s4 1983009808
      %v3978 = vunpack.c.0.s8 %v3977
      %v3979 = vlaneseq
      %v3980 = vshrl.u32 %v3979, 7
      %v3981 = vsub.s32 %v3978, %v3980
      %v3982 = vrot.slane %v3968, %v3981
      %v3983 = vcombine.low %v3975, %v3982
      %v3984 = vcombine.low %v2652, %v2653
      %v3985 = vcombine.low %v2654, %v2655
      %v3987 = vunpack.c.l.s4 1983009808
      %v3988 = vunpack.c.0.s8 %v3987
      %v3989 = vlaneseq
      %v3990 = vshrl.u32 %v3989, 7
      %v3991 = vsub.s32 %v3988, %v3990
      %v3992 = vrot.slane %v3984, %v3991
      %v3994 = vunpack.c.l.s4 1983009808
      %v3995 = vunpack.c.0.s8 %v3994
      %v3996 = vlaneseq
      %v3997 = vshrl.u32 %v3996, 7
      %v3998 = vsub.s32 %v3995, %v3997
      %v3999 = vrot.slane %v3985, %v3998
      %v4000 = vcombine.low %v3992, %v3999
      %v4001 = vcombine.low %v2656, %v2657
      %v4002 = vcombine.low %v2658, %v2659
      %v4004 = vunpack.c.l.s4 1983009808
      %v4005 = vunpack.c.0.s8 %v4004
      %v4006 = vlaneseq
      %v4007 = vshrl.u32 %v4006, 7
      %v4008 = vsub.s32 %v4005, %v4007
      %v4009 = vrot.slane %v4001, %v4008
      %v4011 = vunpack.c.l.s4 1983009808
      %v4012 = vunpack.c.0.s8 %v4011
      %v4013 = vlaneseq
      %v4014 = vshrl.u32 %v4013, 7
      %v4015 = vsub.s32 %v4012, %v4014
      %v4016 = vrot.slane %v4002, %v4015
      %v4017 = vcombine.low %v4009, %v4016
      %v4018 = vcombine.low %v2660, %v2661
      %v4019 = vcombine.low %v2662, %v2663
      %v4021 = vunpack.c.l.s4 1983009808
      %v4022 = vunpack.c.0.s8 %v4021
      %v4023 = vlaneseq
      %v4024 = vshrl.u32 %v4023, 7
      %v4025 = vsub.s32 %v4022, %v4024
      %v4026 = vrot.slane %v4018, %v4025
      %v4028 = vunpack.c.l.s4 1983009808
      %v4029 = vunpack.c.0.s8 %v4028
      %v4030 = vlaneseq
      %v4031 = vshrl.u32 %v4030, 7
      %v4032 = vsub.s32 %v4029, %v4031
      %v4033 = vrot.slane %v4019, %v4032
      %v4034 = vcombine.low %v4026, %v4033
      %v4035 = vcombine.low %v2664, %v2665
      %v4036 = vcombine.low %v2666, %v2667
      %v4038 = vunpack.c.l.s4 1983009808
      %v4039 = vunpack.c.0.s8 %v4038
      %v4040 = vlaneseq
      %v4041 = vshrl.u32 %v4040, 7
      %v4042 = vsub.s32 %v4039, %v4041
      %v4043 = vrot.slane %v4035, %v4042
      %v4045 = vunpack.c.l.s4 1983009808
      %v4046 = vunpack.c.0.s8 %v4045
      %v4047 = vlaneseq
      %v4048 = vshrl.u32 %v4047, 7
      %v4049 = vsub.s32 %v4046, %v4048
      %v4050 = vrot.slane %v4036, %v4049
      %v4051 = vcombine.low %v4043, %v4050
      %v4052 = vcombine.low %v2668, %v2669
      %v4053 = vcombine.low %v2670, %v2671
      %v4055 = vunpack.c.l.s4 1983009808
      %v4056 = vunpack.c.0.s8 %v4055
      %v4057 = vlaneseq
      %v4058 = vshrl.u32 %v4057, 7
      %v4059 = vsub.s32 %v4056, %v4058
      %v4060 = vrot.slane %v4052, %v4059
      %v4062 = vunpack.c.l.s4 1983009808
      %v4063 = vunpack.c.0.s8 %v4062
      %v4064 = vlaneseq
      %v4065 = vshrl.u32 %v4064, 7
      %v4066 = vsub.s32 %v4063, %v4065
      %v4067 = vrot.slane %v4053, %v4066
      %v4068 = vcombine.low %v4060, %v4067
      %v4069 = vcombine.low %v2672, %v2673
      %v4070 = vcombine.low %v2674, %v2675
      %v4072 = vunpack.c.l.s4 1983009808
      %v4073 = vunpack.c.0.s8 %v4072
      %v4074 = vlaneseq
      %v4075 = vshrl.u32 %v4074, 7
      %v4076 = vsub.s32 %v4073, %v4075
      %v4077 = vrot.slane %v4069, %v4076
      %v4079 = vunpack.c.l.s4 1983009808
      %v4080 = vunpack.c.0.s8 %v4079
      %v4081 = vlaneseq
      %v4082 = vshrl.u32 %v4081, 7
      %v4083 = vsub.s32 %v4080, %v4082
      %v4084 = vrot.slane %v4070, %v4083
      %v4085 = vcombine.low %v4077, %v4084
      %v4086 = vcombine.low %v2676, %v2677
      %v4087 = vcombine.low %v2678, %v2679
      %v4089 = vunpack.c.l.s4 1983009808
      %v4090 = vunpack.c.0.s8 %v4089
      %v4091 = vlaneseq
      %v4092 = vshrl.u32 %v4091, 7
      %v4093 = vsub.s32 %v4090, %v4092
      %v4094 = vrot.slane %v4086, %v4093
      %v4096 = vunpack.c.l.s4 1983009808
      %v4097 = vunpack.c.0.s8 %v4096
      %v4098 = vlaneseq
      %v4099 = vshrl.u32 %v4098, 7
      %v4100 = vsub.s32 %v4097, %v4099
      %v4101 = vrot.slane %v4087, %v4100
      %v4102 = vcombine.low %v4094, %v4101
      %v4103 = vcombine.low %v2680, %v2681
      %v4104 = vcombine.low %v2682, %v2683
      %v4106 = vunpack.c.l.s4 1983009808
      %v4107 = vunpack.c.0.s8 %v4106
      %v4108 = vlaneseq
      %v4109 = vshrl.u32 %v4108, 7
      %v4110 = vsub.s32 %v4107, %v4109
      %v4111 = vrot.slane %v4103, %v4110
      %v4113 = vunpack.c.l.s4 1983009808
      %v4114 = vunpack.c.0.s8 %v4113
      %v4115 = vlaneseq
      %v4116 = vshrl.u32 %v4115, 7
      %v4117 = vsub.s32 %v4114, %v4116
      %v4118 = vrot.slane %v4104, %v4117
      %v4119 = vcombine.low %v4111, %v4118
      %v4120 = vcombine.low %v2684, %v2685
      %v4121 = vcombine.low %v2686, %v2687
      %v4123 = vunpack.c.l.s4 1983009808
      %v4124 = vunpack.c.0.s8 %v4123
      %v4125 = vlaneseq
      %v4126 = vshrl.u32 %v4125, 7
      %v4127 = vsub.s32 %v4124, %v4126
      %v4128 = vrot.slane %v4120, %v4127
      %v4130 = vunpack.c.l.s4 1983009808
      %v4131 = vunpack.c.0.s8 %v4130
      %v4132 = vlaneseq
      %v4133 = vshrl.u32 %v4132, 7
      %v4134 = vsub.s32 %v4131, %v4133
      %v4135 = vrot.slane %v4121, %v4134
      %v4136 = vcombine.low %v4128, %v4135
      %v4137 = vcombine.low %v2688, %v2689
      %v4138 = vcombine.low %v2690, %v2691
      %v4140 = vunpack.c.l.s4 1983009808
      %v4141 = vunpack.c.0.s8 %v4140
      %v4142 = vlaneseq
      %v4143 = vshrl.u32 %v4142, 7
      %v4144 = vsub.s32 %v4141, %v4143
      %v4145 = vrot.slane %v4137, %v4144
      %v4147 = vunpack.c.l.s4 1983009808
      %v4148 = vunpack.c.0.s8 %v4147
      %v4149 = vlaneseq
      %v4150 = vshrl.u32 %v4149, 7
      %v4151 = vsub.s32 %v4148, %v4150
      %v4152 = vrot.slane %v4138, %v4151
      %v4153 = vcombine.low %v4145, %v4152
      %v4154 = vcombine.low %v2692, %v2693
      %v4155 = vcombine.low %v2694, %v2695
      %v4157 = vunpack.c.l.s4 1983009808
      %v4158 = vunpack.c.0.s8 %v4157
      %v4159 = vlaneseq
      %v4160 = vshrl.u32 %v4159, 7
      %v4161 = vsub.s32 %v4158, %v4160
      %v4162 = vrot.slane %v4154, %v4161
      %v4164 = vunpack.c.l.s4 1983009808
      %v4165 = vunpack.c.0.s8 %v4164
      %v4166 = vlaneseq
      %v4167 = vshrl.u32 %v4166, 7
      %v4168 = vsub.s32 %v4165, %v4167
      %v4169 = vrot.slane %v4155, %v4168
      %v4170 = vcombine.low %v4162, %v4169
      %v4171 = vcombine.low %v2696, %v2697
      %v4172 = vcombine.low %v2698, %v2699
      %v4174 = vunpack.c.l.s4 1983009808
      %v4175 = vunpack.c.0.s8 %v4174
      %v4176 = vlaneseq
      %v4177 = vshrl.u32 %v4176, 7
      %v4178 = vsub.s32 %v4175, %v4177
      %v4179 = vrot.slane %v4171, %v4178
      %v4181 = vunpack.c.l.s4 1983009808
      %v4182 = vunpack.c.0.s8 %v4181
      %v4183 = vlaneseq
      %v4184 = vshrl.u32 %v4183, 7
      %v4185 = vsub.s32 %v4182, %v4184
      %v4186 = vrot.slane %v4172, %v4185
      %v4187 = vcombine.low %v4179, %v4186
      %v4188 = vcombine.low %v2700, %v2701
      %v4189 = vcombine.low %v2702, %v2703
      %v4191 = vunpack.c.l.s4 1983009808
      %v4192 = vunpack.c.0.s8 %v4191
      %v4193 = vlaneseq
      %v4194 = vshrl.u32 %v4193, 7
      %v4195 = vsub.s32 %v4192, %v4194
      %v4196 = vrot.slane %v4188, %v4195
      %v4198 = vunpack.c.l.s4 1983009808
      %v4199 = vunpack.c.0.s8 %v4198
      %v4200 = vlaneseq
      %v4201 = vshrl.u32 %v4200, 7
      %v4202 = vsub.s32 %v4199, %v4201
      %v4203 = vrot.slane %v4189, %v4202
      %v4204 = vcombine.low %v4196, %v4203
      %v4205 = vcombine.low %v2704, %v2705
      %v4206 = vcombine.low %v2706, %v2707
      %v4208 = vunpack.c.l.s4 1983009808
      %v4209 = vunpack.c.0.s8 %v4208
      %v4210 = vlaneseq
      %v4211 = vshrl.u32 %v4210, 7
      %v4212 = vsub.s32 %v4209, %v4211
      %v4213 = vrot.slane %v4205, %v4212
      %v4215 = vunpack.c.l.s4 1983009808
      %v4216 = vunpack.c.0.s8 %v4215
      %v4217 = vlaneseq
      %v4218 = vshrl.u32 %v4217, 7
      %v4219 = vsub.s32 %v4216, %v4218
      %v4220 = vrot.slane %v4206, %v4219
      %v4221 = vcombine.low %v4213, %v4220
      %v4222 = vcombine.low %v2708, %v2709
      %v4223 = vcombine.low %v2710, %v2711
      %v4225 = vunpack.c.l.s4 1983009808
      %v4226 = vunpack.c.0.s8 %v4225
      %v4227 = vlaneseq
      %v4228 = vshrl.u32 %v4227, 7
      %v4229 = vsub.s32 %v4226, %v4228
      %v4230 = vrot.slane %v4222, %v4229
      %v4232 = vunpack.c.l.s4 1983009808
      %v4233 = vunpack.c.0.s8 %v4232
      %v4234 = vlaneseq
      %v4235 = vshrl.u32 %v4234, 7
      %v4236 = vsub.s32 %v4233, %v4235
      %v4237 = vrot.slane %v4223, %v4236
      %v4238 = vcombine.low %v4230, %v4237
      %v4239 = vcombine.low %v2712, %v2713
      %v4240 = vcombine.low %v2714, %v2715
      %v4242 = vunpack.c.l.s4 1983009808
      %v4243 = vunpack.c.0.s8 %v4242
      %v4244 = vlaneseq
      %v4245 = vshrl.u32 %v4244, 7
      %v4246 = vsub.s32 %v4243, %v4245
      %v4247 = vrot.slane %v4239, %v4246
      %v4249 = vunpack.c.l.s4 1983009808
      %v4250 = vunpack.c.0.s8 %v4249
      %v4251 = vlaneseq
      %v4252 = vshrl.u32 %v4251, 7
      %v4253 = vsub.s32 %v4250, %v4252
      %v4254 = vrot.slane %v4240, %v4253
      %v4255 = vcombine.low %v4247, %v4254
      %v4256 = vcombine.low %v2716, %v2717
      %v4257 = vcombine.low %v2718, %v2719
      %v4259 = vunpack.c.l.s4 1983009808
      %v4260 = vunpack.c.0.s8 %v4259
      %v4261 = vlaneseq
      %v4262 = vshrl.u32 %v4261, 7
      %v4263 = vsub.s32 %v4260, %v4262
      %v4264 = vrot.slane %v4256, %v4263
      %v4266 = vunpack.c.l.s4 1983009808
      %v4267 = vunpack.c.0.s8 %v4266
      %v4268 = vlaneseq
      %v4269 = vshrl.u32 %v4268, 7
      %v4270 = vsub.s32 %v4267, %v4269
      %v4271 = vrot.slane %v4257, %v4270
      %v4272 = vcombine.low %v4264, %v4271
      %v4273 = vcombine.low %v2720, %v2721
      %v4274 = vcombine.low %v2722, %v2723
      %v4276 = vunpack.c.l.s4 1983009808
      %v4277 = vunpack.c.0.s8 %v4276
      %v4278 = vlaneseq
      %v4279 = vshrl.u32 %v4278, 7
      %v4280 = vsub.s32 %v4277, %v4279
      %v4281 = vrot.slane %v4273, %v4280
      %v4283 = vunpack.c.l.s4 1983009808
      %v4284 = vunpack.c.0.s8 %v4283
      %v4285 = vlaneseq
      %v4286 = vshrl.u32 %v4285, 7
      %v4287 = vsub.s32 %v4284, %v4286
      %v4288 = vrot.slane %v4274, %v4287
      %v4289 = vcombine.low %v4281, %v4288
      %v4290 = vcombine.low %v2724, %v2725
      %v4291 = vcombine.low %v2726, %v2727
      %v4293 = vunpack.c.l.s4 1983009808
      %v4294 = vunpack.c.0.s8 %v4293
      %v4295 = vlaneseq
      %v4296 = vshrl.u32 %v4295, 7
      %v4297 = vsub.s32 %v4294, %v4296
      %v4298 = vrot.slane %v4290, %v4297
      %v4300 = vunpack.c.l.s4 1983009808
      %v4301 = vunpack.c.0.s8 %v4300
      %v4302 = vlaneseq
      %v4303 = vshrl.u32 %v4302, 7
      %v4304 = vsub.s32 %v4301, %v4303
      %v4305 = vrot.slane %v4291, %v4304
      %v4306 = vcombine.low %v4298, %v4305
      %v4307 = vcombine.low %v2728, %v2729
      %v4308 = vcombine.low %v2730, %v2731
      %v4310 = vunpack.c.l.s4 1983009808
      %v4311 = vunpack.c.0.s8 %v4310
      %v4312 = vlaneseq
      %v4313 = vshrl.u32 %v4312, 7
      %v4314 = vsub.s32 %v4311, %v4313
      %v4315 = vrot.slane %v4307, %v4314
      %v4317 = vunpack.c.l.s4 1983009808
      %v4318 = vunpack.c.0.s8 %v4317
      %v4319 = vlaneseq
      %v4320 = vshrl.u32 %v4319, 7
      %v4321 = vsub.s32 %v4318, %v4320
      %v4322 = vrot.slane %v4308, %v4321
      %v4323 = vcombine.low %v4315, %v4322
      %v4324 = vcombine.low %v2732, %v2733
      %v4325 = vcombine.low %v2734, %v2735
      %v4327 = vunpack.c.l.s4 1983009808
      %v4328 = vunpack.c.0.s8 %v4327
      %v4329 = vlaneseq
      %v4330 = vshrl.u32 %v4329, 7
      %v4331 = vsub.s32 %v4328, %v4330
      %v4332 = vrot.slane %v4324, %v4331
      %v4334 = vunpack.c.l.s4 1983009808
      %v4335 = vunpack.c.0.s8 %v4334
      %v4336 = vlaneseq
      %v4337 = vshrl.u32 %v4336, 7
      %v4338 = vsub.s32 %v4335, %v4337
      %v4339 = vrot.slane %v4325, %v4338
      %v4340 = vcombine.low %v4332, %v4339
      %v4341 = vcombine.low %v2736, %v2737
      %v4342 = vcombine.low %v2738, %v2739
      %v4344 = vunpack.c.l.s4 1983009808
      %v4345 = vunpack.c.0.s8 %v4344
      %v4346 = vlaneseq
      %v4347 = vshrl.u32 %v4346, 7
      %v4348 = vsub.s32 %v4345, %v4347
      %v4349 = vrot.slane %v4341, %v4348
      %v4351 = vunpack.c.l.s4 1983009808
      %v4352 = vunpack.c.0.s8 %v4351
      %v4353 = vlaneseq
      %v4354 = vshrl.u32 %v4353, 7
      %v4355 = vsub.s32 %v4352, %v4354
      %v4356 = vrot.slane %v4342, %v4355
      %v4357 = vcombine.low %v4349, %v4356
      %v4358 = vcombine.low %v2740, %v2741
      %v4359 = vcombine.low %v2742, %v2743
      %v4361 = vunpack.c.l.s4 1983009808
      %v4362 = vunpack.c.0.s8 %v4361
      %v4363 = vlaneseq
      %v4364 = vshrl.u32 %v4363, 7
      %v4365 = vsub.s32 %v4362, %v4364
      %v4366 = vrot.slane %v4358, %v4365
      %v4368 = vunpack.c.l.s4 1983009808
      %v4369 = vunpack.c.0.s8 %v4368
      %v4370 = vlaneseq
      %v4371 = vshrl.u32 %v4370, 7
      %v4372 = vsub.s32 %v4369, %v4371
      %v4373 = vrot.slane %v4359, %v4372
      %v4374 = vcombine.low %v4366, %v4373
      %v4375 = vcombine.low %v2744, %v2745
      %v4376 = vcombine.low %v2746, %v2747
      %v4378 = vunpack.c.l.s4 1983009808
      %v4379 = vunpack.c.0.s8 %v4378
      %v4380 = vlaneseq
      %v4381 = vshrl.u32 %v4380, 7
      %v4382 = vsub.s32 %v4379, %v4381
      %v4383 = vrot.slane %v4375, %v4382
      %v4385 = vunpack.c.l.s4 1983009808
      %v4386 = vunpack.c.0.s8 %v4385
      %v4387 = vlaneseq
      %v4388 = vshrl.u32 %v4387, 7
      %v4389 = vsub.s32 %v4386, %v4388
      %v4390 = vrot.slane %v4376, %v4389
      %v4391 = vcombine.low %v4383, %v4390
      %v4392 = vcombine.low %v2748, %v2749
      %v4393 = vcombine.low %v2750, %v2751
      %v4395 = vunpack.c.l.s4 1983009808
      %v4396 = vunpack.c.0.s8 %v4395
      %v4397 = vlaneseq
      %v4398 = vshrl.u32 %v4397, 7
      %v4399 = vsub.s32 %v4396, %v4398
      %v4400 = vrot.slane %v4392, %v4399
      %v4402 = vunpack.c.l.s4 1983009808
      %v4403 = vunpack.c.0.s8 %v4402
      %v4404 = vlaneseq
      %v4405 = vshrl.u32 %v4404, 7
      %v4406 = vsub.s32 %v4403, %v4405
      %v4407 = vrot.slane %v4393, %v4406
      %v4408 = vcombine.low %v4400, %v4407
      %v4409 = vcombine.low %v2752, %v2753
      %v4410 = vcombine.low %v2754, %v2755
      %v4412 = vunpack.c.l.s4 1983009808
      %v4413 = vunpack.c.0.s8 %v4412
      %v4414 = vlaneseq
      %v4415 = vshrl.u32 %v4414, 7
      %v4416 = vsub.s32 %v4413, %v4415
      %v4417 = vrot.slane %v4409, %v4416
      %v4419 = vunpack.c.l.s4 1983009808
      %v4420 = vunpack.c.0.s8 %v4419
      %v4421 = vlaneseq
      %v4422 = vshrl.u32 %v4421, 7
      %v4423 = vsub.s32 %v4420, %v4422
      %v4424 = vrot.slane %v4410, %v4423
      %v4425 = vcombine.low %v4417, %v4424
      %v4426 = vcombine.low %v2756, %v2757
      %v4427 = vcombine.low %v2758, %v2759
      %v4429 = vunpack.c.l.s4 1983009808
      %v4430 = vunpack.c.0.s8 %v4429
      %v4431 = vlaneseq
      %v4432 = vshrl.u32 %v4431, 7
      %v4433 = vsub.s32 %v4430, %v4432
      %v4434 = vrot.slane %v4426, %v4433
      %v4436 = vunpack.c.l.s4 1983009808
      %v4437 = vunpack.c.0.s8 %v4436
      %v4438 = vlaneseq
      %v4439 = vshrl.u32 %v4438, 7
      %v4440 = vsub.s32 %v4437, %v4439
      %v4441 = vrot.slane %v4427, %v4440
      %v4442 = vcombine.low %v4434, %v4441
      %v4443 = vrot.slane %v3779, 7
      %v4444 = vrot.slane %v3796, 7
      %v4445 = vsel %vm2078, %v4443, %v4444
      %v4446 = vrot.slane %v3813, 7
      %v4447 = vrot.slane %v3830, 7
      %v4448 = vsel %vm2078, %v4446, %v4447
      %v4449 = vrot.slane %v3847, 7
      %v4450 = vrot.slane %v3864, 7
      %v4451 = vsel %vm2078, %v4449, %v4450
      %v4452 = vrot.slane %v3881, 7
      %v4453 = vrot.slane %v3898, 7
      %v4454 = vsel %vm2078, %v4452, %v4453
      %v4455 = vrot.slane %v3915, 7
      %v4456 = vrot.slane %v3932, 7
      %v4457 = vsel %vm2078, %v4455, %v4456
      %v4458 = vrot.slane %v3949, 7
      %v4459 = vrot.slane %v3966, 7
      %v4460 = vsel %vm2078, %v4458, %v4459
      %v4461 = vrot.slane %v3983, 7
      %v4462 = vrot.slane %v4000, 7
      %v4463 = vsel %vm2078, %v4461, %v4462
      %v4464 = vrot.slane %v4017, 7
      %v4465 = vrot.slane %v4034, 7
      %v4466 = vsel %vm2078, %v4464, %v4465
      %v4467 = vrot.slane %v4051, 7
      %v4468 = vrot.slane %v4068, 7
      %v4469 = vsel %vm2078, %v4467, %v4468
      %v4470 = vrot.slane %v4085, 7
      %v4471 = vrot.slane %v4102, 7
      %v4472 = vsel %vm2078, %v4470, %v4471
      %v4473 = vrot.slane %v4119, 7
      %v4474 = vrot.slane %v4136, 7
      %v4475 = vsel %vm2078, %v4473, %v4474
      %v4476 = vrot.slane %v4153, 7
      %v4477 = vrot.slane %v4170, 7
      %v4478 = vsel %vm2078, %v4476, %v4477
      %v4479 = vrot.slane %v4187, 7
      %v4480 = vrot.slane %v4204, 7
      %v4481 = vsel %vm2078, %v4479, %v4480
      %v4482 = vrot.slane %v4221, 7
      %v4483 = vrot.slane %v4238, 7
      %v4484 = vsel %vm2078, %v4482, %v4483
      %v4485 = vrot.slane %v4255, 7
      %v4486 = vrot.slane %v4272, 7
      %v4487 = vsel %vm2078, %v4485, %v4486
      %v4488 = vrot.slane %v4289, 7
      %v4489 = vrot.slane %v4306, 7
      %v4490 = vsel %vm2078, %v4488, %v4489
      %v4491 = vrot.slane %v4323, 7
      %v4492 = vrot.slane %v4340, 7
      %v4493 = vsel %vm2078, %v4491, %v4492
      %v4494 = vrot.slane %v4357, 7
      %v4495 = vrot.slane %v4374, 7
      %v4496 = vsel %vm2078, %v4494, %v4495
      %v4497 = vrot.slane %v4391, 7
      %v4498 = vrot.slane %v4408, 7
      %v4499 = vsel %vm2078, %v4497, %v4498
      %v4500 = vrot.slane %v4425, 7
      %v4501 = vrot.slane %v4442, 7
      %v4502 = vsel %vm2078, %v4500, %v4501
      %v4563 = vsel %vm2078, 0.0, %v4443
      %v4564 = vsel %vm2078, 0.0, %v4446
      %v4565 = vsel %vm2078, 0.0, %v4449
      %v4566 = vsel %vm2078, 0.0, %v4452
      %v4567 = vsel %vm2078, 0.0, %v4455
      %v4568 = vsel %vm2078, 0.0, %v4458
      %v4569 = vsel %vm2078, 0.0, %v4461
      %v4570 = vsel %vm2078, 0.0, %v4464
      %v4571 = vsel %vm2078, 0.0, %v4467
      %v4572 = vsel %vm2078, 0.0, %v4470
      %v4573 = vsel %vm2078, 0.0, %v4473
      %v4574 = vsel %vm2078, 0.0, %v4476
      %v4575 = vsel %vm2078, 0.0, %v4479
      %v4576 = vsel %vm2078, 0.0, %v4482
      %v4577 = vsel %vm2078, 0.0, %v4485
      %v4578 = vsel %vm2078, 0.0, %v4488
      %v4579 = vsel %vm2078, 0.0, %v4491
      %v4580 = vsel %vm2078, 0.0, %v4494
      %v4581 = vsel %vm2078, 0.0, %v4497
      %v4582 = vsel %vm2078, 0.0, %v4500
      %v4583 = vsel %vm2078, %v4444, 0.0
      %v4584 = vsel %vm2078, %v4447, 0.0
      %v4585 = vsel %vm2078, %v4450, 0.0
      %v4586 = vsel %vm2078, %v4453, 0.0
      %v4587 = vsel %vm2078, %v4456, 0.0
      %v4588 = vsel %vm2078, %v4459, 0.0
      %v4589 = vsel %vm2078, %v4462, 0.0
      %v4590 = vsel %vm2078, %v4465, 0.0
      %v4591 = vsel %vm2078, %v4468, 0.0
      %v4592 = vsel %vm2078, %v4471, 0.0
      %v4593 = vsel %vm2078, %v4474, 0.0
      %v4594 = vsel %vm2078, %v4477, 0.0
      %v4595 = vsel %vm2078, %v4480, 0.0
      %v4596 = vsel %vm2078, %v4483, 0.0
      %v4597 = vsel %vm2078, %v4486, 0.0
      %v4598 = vsel %vm2078, %v4489, 0.0
      %v4599 = vsel %vm2078, %v4492, 0.0
      %v4600 = vsel %vm2078, %v4495, 0.0
      %v4601 = vsel %vm2078, %v4498, 0.0
      %v4602 = vsel %vm2078, %v4501, 0.0
      %v4643 = vrot.slane %v4563, 1
      %v4644 = vrot.slane %v4445, 1
      %v4645 = vsel %vm3080, %v4643, %v4644
      %v4646 = vrot.slane %v4583, 1
      %v4647 = vsel %vm3080, %v4644, %v4646
      %v4648 = vrot.slane %v4564, 1
      %v4649 = vrot.slane %v4448, 1
      %v4650 = vsel %vm3080, %v4648, %v4649
      %v4651 = vrot.slane %v4584, 1
      %v4652 = vsel %vm3080, %v4649, %v4651
      %v4653 = vrot.slane %v4565, 1
      %v4654 = vrot.slane %v4451, 1
      %v4655 = vsel %vm3080, %v4653, %v4654
      %v4656 = vrot.slane %v4585, 1
      %v4657 = vsel %vm3080, %v4654, %v4656
      %v4658 = vrot.slane %v4566, 1
      %v4659 = vrot.slane %v4454, 1
      %v4660 = vsel %vm3080, %v4658, %v4659
      %v4661 = vrot.slane %v4586, 1
      %v4662 = vsel %vm3080, %v4659, %v4661
      %v4663 = vrot.slane %v4567, 1
      %v4664 = vrot.slane %v4457, 1
      %v4665 = vsel %vm3080, %v4663, %v4664
      %v4666 = vrot.slane %v4587, 1
      %v4667 = vsel %vm3080, %v4664, %v4666
      %v4668 = vrot.slane %v4568, 1
      %v4669 = vrot.slane %v4460, 1
      %v4670 = vsel %vm3080, %v4668, %v4669
      %v4671 = vrot.slane %v4588, 1
      %v4672 = vsel %vm3080, %v4669, %v4671
      %v4673 = vrot.slane %v4569, 1
      %v4674 = vrot.slane %v4463, 1
      %v4675 = vsel %vm3080, %v4673, %v4674
      %v4676 = vrot.slane %v4589, 1
      %v4677 = vsel %vm3080, %v4674, %v4676
      %v4678 = vrot.slane %v4570, 1
      %v4679 = vrot.slane %v4466, 1
      %v4680 = vsel %vm3080, %v4678, %v4679
      %v4681 = vrot.slane %v4590, 1
      %v4682 = vsel %vm3080, %v4679, %v4681
      %v4683 = vrot.slane %v4571, 1
      %v4684 = vrot.slane %v4469, 1
      %v4685 = vsel %vm3080, %v4683, %v4684
      %v4686 = vrot.slane %v4591, 1
      %v4687 = vsel %vm3080, %v4684, %v4686
      %v4688 = vrot.slane %v4572, 1
      %v4689 = vrot.slane %v4472, 1
      %v4690 = vsel %vm3080, %v4688, %v4689
      %v4691 = vrot.slane %v4592, 1
      %v4692 = vsel %vm3080, %v4689, %v4691
      %v4693 = vrot.slane %v4573, 1
      %v4694 = vrot.slane %v4475, 1
      %v4695 = vsel %vm3080, %v4693, %v4694
      %v4696 = vrot.slane %v4593, 1
      %v4697 = vsel %vm3080, %v4694, %v4696
      %v4698 = vrot.slane %v4574, 1
      %v4699 = vrot.slane %v4478, 1
      %v4700 = vsel %vm3080, %v4698, %v4699
      %v4701 = vrot.slane %v4594, 1
      %v4702 = vsel %vm3080, %v4699, %v4701
      %v4703 = vrot.slane %v4575, 1
      %v4704 = vrot.slane %v4481, 1
      %v4705 = vsel %vm3080, %v4703, %v4704
      %v4706 = vrot.slane %v4595, 1
      %v4707 = vsel %vm3080, %v4704, %v4706
      %v4708 = vrot.slane %v4576, 1
      %v4709 = vrot.slane %v4484, 1
      %v4710 = vsel %vm3080, %v4708, %v4709
      %v4711 = vrot.slane %v4596, 1
      %v4712 = vsel %vm3080, %v4709, %v4711
      %v4713 = vrot.slane %v4577, 1
      %v4714 = vrot.slane %v4487, 1
      %v4715 = vsel %vm3080, %v4713, %v4714
      %v4716 = vrot.slane %v4597, 1
      %v4717 = vsel %vm3080, %v4714, %v4716
      %v4718 = vrot.slane %v4578, 1
      %v4719 = vrot.slane %v4490, 1
      %v4720 = vsel %vm3080, %v4718, %v4719
      %v4721 = vrot.slane %v4598, 1
      %v4722 = vsel %vm3080, %v4719, %v4721
      %v4723 = vrot.slane %v4579, 1
      %v4724 = vrot.slane %v4493, 1
      %v4725 = vsel %vm3080, %v4723, %v4724
      %v4726 = vrot.slane %v4599, 1
      %v4727 = vsel %vm3080, %v4724, %v4726
      %v4728 = vrot.slane %v4580, 1
      %v4729 = vrot.slane %v4496, 1
      %v4730 = vsel %vm3080, %v4728, %v4729
      %v4731 = vrot.slane %v4600, 1
      %v4732 = vsel %vm3080, %v4729, %v4731
      %v4733 = vrot.slane %v4581, 1
      %v4734 = vrot.slane %v4499, 1
      %v4735 = vsel %vm3080, %v4733, %v4734
      %v4736 = vrot.slane %v4601, 1
      %v4737 = vsel %vm3080, %v4734, %v4736
      %v4738 = vrot.slane %v4582, 1
      %v4739 = vrot.slane %v4502, 1
      %v4740 = vsel %vm3080, %v4738, %v4739
      %v4741 = vrot.slane %v4602, 1
      %v4742 = vsel %vm3080, %v4739, %v4741
      %4743 = vrot.lane.b32.xlu0 %v4645, 4
      %v4744 = vpop.permute.xlu0 %4743
      %4745 = vrot.lane.b32.xlu0 %v4647, 4
      %v4746 = vpop.permute.xlu0 %4745
      %4747 = vrot.lane.b32.xlu0 %v4650, 4
      %v4748 = vpop.permute.xlu0 %4747
      %4749 = vrot.lane.b32.xlu0 %v4652, 4
      %v4750 = vpop.permute.xlu0 %4749
      %4751 = vrot.lane.b32.xlu0 %v4655, 4
      %v4752 = vpop.permute.xlu0 %4751
      %4753 = vrot.lane.b32.xlu0 %v4657, 4
      %v4754 = vpop.permute.xlu0 %4753
      %4755 = vrot.lane.b32.xlu0 %v4660, 4
      %v4756 = vpop.permute.xlu0 %4755
      %4757 = vrot.lane.b32.xlu0 %v4662, 4
      %v4758 = vpop.permute.xlu0 %4757
      %4759 = vrot.lane.b32.xlu0 %v4665, 4
      %v4760 = vpop.permute.xlu0 %4759
      %4761 = vrot.lane.b32.xlu0 %v4667, 4
      %v4762 = vpop.permute.xlu0 %4761
      %4763 = vrot.lane.b32.xlu0 %v4670, 4
      %v4764 = vpop.permute.xlu0 %4763
      %4765 = vrot.lane.b32.xlu0 %v4672, 4
      %v4766 = vpop.permute.xlu0 %4765
      %4767 = vrot.lane.b32.xlu0 %v4675, 4
      %v4768 = vpop.permute.xlu0 %4767
      %4769 = vrot.lane.b32.xlu0 %v4677, 4
      %v4770 = vpop.permute.xlu0 %4769
      %4771 = vrot.lane.b32.xlu0 %v4680, 4
      %v4772 = vpop.permute.xlu0 %4771
      %4773 = vrot.lane.b32.xlu0 %v4682, 4
      %v4774 = vpop.permute.xlu0 %4773
      %4775 = vrot.lane.b32.xlu0 %v4685, 4
      %v4776 = vpop.permute.xlu0 %4775
      %4777 = vrot.lane.b32.xlu0 %v4687, 4
      %v4778 = vpop.permute.xlu0 %4777
      %4779 = vrot.lane.b32.xlu0 %v4690, 4
      %v4780 = vpop.permute.xlu0 %4779
      %4781 = vrot.lane.b32.xlu0 %v4692, 4
      %v4782 = vpop.permute.xlu0 %4781
      %4783 = vrot.lane.b32.xlu0 %v4695, 4
      %v4784 = vpop.permute.xlu0 %4783
      %4785 = vrot.lane.b32.xlu0 %v4697, 4
      %v4786 = vpop.permute.xlu0 %4785
      %4787 = vrot.lane.b32.xlu0 %v4700, 4
      %v4788 = vpop.permute.xlu0 %4787
      %4789 = vrot.lane.b32.xlu0 %v4702, 4
      %v4790 = vpop.permute.xlu0 %4789
      %4791 = vrot.lane.b32.xlu0 %v4705, 4
      %v4792 = vpop.permute.xlu0 %4791
      %4793 = vrot.lane.b32.xlu0 %v4707, 4
      %v4794 = vpop.permute.xlu0 %4793
      %4795 = vrot.lane.b32.xlu0 %v4710, 4
      %v4796 = vpop.permute.xlu0 %4795
      %4797 = vrot.lane.b32.xlu0 %v4712, 4
      %v4798 = vpop.permute.xlu0 %4797
      %4799 = vrot.lane.b32.xlu0 %v4715, 4
      %v4800 = vpop.permute.xlu0 %4799
      %4801 = vrot.lane.b32.xlu0 %v4717, 4
      %v4802 = vpop.permute.xlu0 %4801
      %4803 = vrot.lane.b32.xlu0 %v4720, 4
      %v4804 = vpop.permute.xlu0 %4803
      %4805 = vrot.lane.b32.xlu0 %v4722, 4
      %v4806 = vpop.permute.xlu0 %4805
      %4807 = vrot.lane.b32.xlu0 %v4725, 4
      %v4808 = vpop.permute.xlu0 %4807
      %4809 = vrot.lane.b32.xlu0 %v4727, 4
      %v4810 = vpop.permute.xlu0 %4809
      %4811 = vrot.lane.b32.xlu0 %v4730, 4
      %v4812 = vpop.permute.xlu0 %4811
      %4813 = vrot.lane.b32.xlu0 %v4732, 4
      %v4814 = vpop.permute.xlu0 %4813
      %4815 = vrot.lane.b32.xlu0 %v4735, 4
      %v4816 = vpop.permute.xlu0 %4815
      %4817 = vrot.lane.b32.xlu0 %v4737, 4
      %v4818 = vpop.permute.xlu0 %4817
      %4819 = vrot.lane.b32.xlu0 %v4740, 4
      %v4820 = vpop.permute.xlu0 %4819
      %4821 = vrot.lane.b32.xlu0 %v4742, 4
      %v4822 = vpop.permute.xlu0 %4821
      %v4863 = vrot.slane %v4563, 2
      %v4864 = vrot.slane %v4445, 2
      %v4865 = vsel %vm3301, %v4863, %v4864
      %v4866 = vrot.slane %v4583, 2
      %v4867 = vsel %vm3301, %v4864, %v4866
      %v4868 = vrot.slane %v4564, 2
      %v4869 = vrot.slane %v4448, 2
      %v4870 = vsel %vm3301, %v4868, %v4869
      %v4871 = vrot.slane %v4584, 2
      %v4872 = vsel %vm3301, %v4869, %v4871
      %v4873 = vrot.slane %v4565, 2
      %v4874 = vrot.slane %v4451, 2
      %v4875 = vsel %vm3301, %v4873, %v4874
      %v4876 = vrot.slane %v4585, 2
      %v4877 = vsel %vm3301, %v4874, %v4876
      %v4878 = vrot.slane %v4566, 2
      %v4879 = vrot.slane %v4454, 2
      %v4880 = vsel %vm3301, %v4878, %v4879
      %v4881 = vrot.slane %v4586, 2
      %v4882 = vsel %vm3301, %v4879, %v4881
      %v4883 = vrot.slane %v4567, 2
      %v4884 = vrot.slane %v4457, 2
      %v4885 = vsel %vm3301, %v4883, %v4884
      %v4886 = vrot.slane %v4587, 2
      %v4887 = vsel %vm3301, %v4884, %v4886
      %v4888 = vrot.slane %v4568, 2
      %v4889 = vrot.slane %v4460, 2
      %v4890 = vsel %vm3301, %v4888, %v4889
      %v4891 = vrot.slane %v4588, 2
      %v4892 = vsel %vm3301, %v4889, %v4891
      %v4893 = vrot.slane %v4569, 2
      %v4894 = vrot.slane %v4463, 2
      %v4895 = vsel %vm3301, %v4893, %v4894
      %v4896 = vrot.slane %v4589, 2
      %v4897 = vsel %vm3301, %v4894, %v4896
      %v4898 = vrot.slane %v4570, 2
      %v4899 = vrot.slane %v4466, 2
      %v4900 = vsel %vm3301, %v4898, %v4899
      %v4901 = vrot.slane %v4590, 2
      %v4902 = vsel %vm3301, %v4899, %v4901
      %v4903 = vrot.slane %v4571, 2
      %v4904 = vrot.slane %v4469, 2
      %v4905 = vsel %vm3301, %v4903, %v4904
      %v4906 = vrot.slane %v4591, 2
      %v4907 = vsel %vm3301, %v4904, %v4906
      %v4908 = vrot.slane %v4572, 2
      %v4909 = vrot.slane %v4472, 2
      %v4910 = vsel %vm3301, %v4908, %v4909
      %v4911 = vrot.slane %v4592, 2
      %v4912 = vsel %vm3301, %v4909, %v4911
      %v4913 = vrot.slane %v4573, 2
      %v4914 = vrot.slane %v4475, 2
      %v4915 = vsel %vm3301, %v4913, %v4914
      %v4916 = vrot.slane %v4593, 2
      %v4917 = vsel %vm3301, %v4914, %v4916
      %v4918 = vrot.slane %v4574, 2
      %v4919 = vrot.slane %v4478, 2
      %v4920 = vsel %vm3301, %v4918, %v4919
      %v4921 = vrot.slane %v4594, 2
      %v4922 = vsel %vm3301, %v4919, %v4921
      %v4923 = vrot.slane %v4575, 2
      %v4924 = vrot.slane %v4481, 2
      %v4925 = vsel %vm3301, %v4923, %v4924
      %v4926 = vrot.slane %v4595, 2
      %v4927 = vsel %vm3301, %v4924, %v4926
      %v4928 = vrot.slane %v4576, 2
      %v4929 = vrot.slane %v4484, 2
      %v4930 = vsel %vm3301, %v4928, %v4929
      %v4931 = vrot.slane %v4596, 2
      %v4932 = vsel %vm3301, %v4929, %v4931
      %v4933 = vrot.slane %v4577, 2
      %v4934 = vrot.slane %v4487, 2
      %v4935 = vsel %vm3301, %v4933, %v4934
      %v4936 = vrot.slane %v4597, 2
      %v4937 = vsel %vm3301, %v4934, %v4936
      %v4938 = vrot.slane %v4578, 2
      %v4939 = vrot.slane %v4490, 2
      %v4940 = vsel %vm3301, %v4938, %v4939
      %v4941 = vrot.slane %v4598, 2
      %v4942 = vsel %vm3301, %v4939, %v4941
      %v4943 = vrot.slane %v4579, 2
      %v4944 = vrot.slane %v4493, 2
      %v4945 = vsel %vm3301, %v4943, %v4944
      %v4946 = vrot.slane %v4599, 2
      %v4947 = vsel %vm3301, %v4944, %v4946
      %v4948 = vrot.slane %v4580, 2
      %v4949 = vrot.slane %v4496, 2
      %v4950 = vsel %vm3301, %v4948, %v4949
      %v4951 = vrot.slane %v4600, 2
      %v4952 = vsel %vm3301, %v4949, %v4951
      %v4953 = vrot.slane %v4581, 2
      %v4954 = vrot.slane %v4499, 2
      %v4955 = vsel %vm3301, %v4953, %v4954
      %v4956 = vrot.slane %v4601, 2
      %v4957 = vsel %vm3301, %v4954, %v4956
      %v4958 = vrot.slane %v4582, 2
      %v4959 = vrot.slane %v4502, 2
      %v4960 = vsel %vm3301, %v4958, %v4959
      %v4961 = vrot.slane %v4602, 2
      %v4962 = vsel %vm3301, %v4959, %v4961
      %4963 = vrot.lane.b32.xlu0 %v4865, 8
      %v4964 = vpop.permute.xlu0 %4963
      %4965 = vrot.lane.b32.xlu0 %v4867, 8
      %v4966 = vpop.permute.xlu0 %4965
      %4967 = vrot.lane.b32.xlu0 %v4870, 8
      %v4968 = vpop.permute.xlu0 %4967
      %4969 = vrot.lane.b32.xlu0 %v4872, 8
      %v4970 = vpop.permute.xlu0 %4969
      %4971 = vrot.lane.b32.xlu0 %v4875, 8
      %v4972 = vpop.permute.xlu0 %4971
      %4973 = vrot.lane.b32.xlu0 %v4877, 8
      %v4974 = vpop.permute.xlu0 %4973
      %4975 = vrot.lane.b32.xlu0 %v4880, 8
      %v4976 = vpop.permute.xlu0 %4975
      %4977 = vrot.lane.b32.xlu0 %v4882, 8
      %v4978 = vpop.permute.xlu0 %4977
      %4979 = vrot.lane.b32.xlu0 %v4885, 8
      %v4980 = vpop.permute.xlu0 %4979
      %4981 = vrot.lane.b32.xlu0 %v4887, 8
      %v4982 = vpop.permute.xlu0 %4981
      %4983 = vrot.lane.b32.xlu0 %v4890, 8
      %v4984 = vpop.permute.xlu0 %4983
      %4985 = vrot.lane.b32.xlu0 %v4892, 8
      %v4986 = vpop.permute.xlu0 %4985
      %4987 = vrot.lane.b32.xlu0 %v4895, 8
      %v4988 = vpop.permute.xlu0 %4987
      %4989 = vrot.lane.b32.xlu0 %v4897, 8
      %v4990 = vpop.permute.xlu0 %4989
      %4991 = vrot.lane.b32.xlu0 %v4900, 8
      %v4992 = vpop.permute.xlu0 %4991
      %4993 = vrot.lane.b32.xlu0 %v4902, 8
      %v4994 = vpop.permute.xlu0 %4993
      %4995 = vrot.lane.b32.xlu0 %v4905, 8
      %v4996 = vpop.permute.xlu0 %4995
      %4997 = vrot.lane.b32.xlu0 %v4907, 8
      %v4998 = vpop.permute.xlu0 %4997
      %4999 = vrot.lane.b32.xlu0 %v4910, 8
      %v5000 = vpop.permute.xlu0 %4999
      %5001 = vrot.lane.b32.xlu0 %v4912, 8
      %v5002 = vpop.permute.xlu0 %5001
      %5003 = vrot.lane.b32.xlu0 %v4915, 8
      %v5004 = vpop.permute.xlu0 %5003
      %5005 = vrot.lane.b32.xlu0 %v4917, 8
      %v5006 = vpop.permute.xlu0 %5005
      %5007 = vrot.lane.b32.xlu0 %v4920, 8
      %v5008 = vpop.permute.xlu0 %5007
      %5009 = vrot.lane.b32.xlu0 %v4922, 8
      %v5010 = vpop.permute.xlu0 %5009
      %5011 = vrot.lane.b32.xlu0 %v4925, 8
      %v5012 = vpop.permute.xlu0 %5011
      %5013 = vrot.lane.b32.xlu0 %v4927, 8
      %v5014 = vpop.permute.xlu0 %5013
      %5015 = vrot.lane.b32.xlu0 %v4930, 8
      %v5016 = vpop.permute.xlu0 %5015
      %5017 = vrot.lane.b32.xlu0 %v4932, 8
      %v5018 = vpop.permute.xlu0 %5017
      %5019 = vrot.lane.b32.xlu0 %v4935, 8
      %v5020 = vpop.permute.xlu0 %5019
      %5021 = vrot.lane.b32.xlu0 %v4937, 8
      %v5022 = vpop.permute.xlu0 %5021
      %5023 = vrot.lane.b32.xlu0 %v4940, 8
      %v5024 = vpop.permute.xlu0 %5023
      %5025 = vrot.lane.b32.xlu0 %v4942, 8
      %v5026 = vpop.permute.xlu0 %5025
      %5027 = vrot.lane.b32.xlu0 %v4945, 8
      %v5028 = vpop.permute.xlu0 %5027
      %5029 = vrot.lane.b32.xlu0 %v4947, 8
      %v5030 = vpop.permute.xlu0 %5029
      %5031 = vrot.lane.b32.xlu0 %v4950, 8
      %v5032 = vpop.permute.xlu0 %5031
      %5033 = vrot.lane.b32.xlu0 %v4952, 8
      %v5034 = vpop.permute.xlu0 %5033
      %5035 = vrot.lane.b32.xlu0 %v4955, 8
      %v5036 = vpop.permute.xlu0 %5035
      %5037 = vrot.lane.b32.xlu0 %v4957, 8
      %v5038 = vpop.permute.xlu0 %5037
      %5039 = vrot.lane.b32.xlu0 %v4960, 8
      %v5040 = vpop.permute.xlu0 %5039
      %5041 = vrot.lane.b32.xlu0 %v4962, 8
      %v5042 = vpop.permute.xlu0 %5041
      %v5083 = vsel %vm3522, %v4563, %v4744
      %v5084 = vsel %vm3522, %v4445, %v4746
      %v5085 = vsel %vm3522, %v4564, %v4748
      %v5086 = vsel %vm3522, %v4448, %v4750
      %v5087 = vsel %vm3522, %v4565, %v4752
      %v5088 = vsel %vm3522, %v4451, %v4754
      %v5089 = vsel %vm3522, %v4566, %v4756
      %v5090 = vsel %vm3522, %v4454, %v4758
      %v5091 = vsel %vm3522, %v4567, %v4760
      %v5092 = vsel %vm3522, %v4457, %v4762
      %v5093 = vsel %vm3522, %v4568, %v4764
      %v5094 = vsel %vm3522, %v4460, %v4766
      %v5095 = vsel %vm3522, %v4569, %v4768
      %v5096 = vsel %vm3522, %v4463, %v4770
      %v5097 = vsel %vm3522, %v4570, %v4772
      %v5098 = vsel %vm3522, %v4466, %v4774
      %v5099 = vsel %vm3522, %v4571, %v4776
      %v5100 = vsel %vm3522, %v4469, %v4778
      %v5101 = vsel %vm3522, %v4572, %v4780
      %v5102 = vsel %vm3522, %v4472, %v4782
      %v5103 = vsel %vm3522, %v4573, %v4784
      %v5104 = vsel %vm3522, %v4475, %v4786
      %v5105 = vsel %vm3522, %v4574, %v4788
      %v5106 = vsel %vm3522, %v4478, %v4790
      %v5107 = vsel %vm3522, %v4575, %v4792
      %v5108 = vsel %vm3522, %v4481, %v4794
      %v5109 = vsel %vm3522, %v4576, %v4796
      %v5110 = vsel %vm3522, %v4484, %v4798
      %v5111 = vsel %vm3522, %v4577, %v4800
      %v5112 = vsel %vm3522, %v4487, %v4802
      %v5113 = vsel %vm3522, %v4578, %v4804
      %v5114 = vsel %vm3522, %v4490, %v4806
      %v5115 = vsel %vm3522, %v4579, %v4808
      %v5116 = vsel %vm3522, %v4493, %v4810
      %v5117 = vsel %vm3522, %v4580, %v4812
      %v5118 = vsel %vm3522, %v4496, %v4814
      %v5119 = vsel %vm3522, %v4581, %v4816
      %v5120 = vsel %vm3522, %v4499, %v4818
      %v5121 = vsel %vm3522, %v4582, %v4820
      %v5122 = vsel %vm3522, %v4502, %v4822
      %v5123 = vsel %vm792, %v5083, %v4964
      %v5124 = vsel %vm792, %v5084, %v4966
      %v5125 = vsel %vm792, %v5085, %v4968
      %v5126 = vsel %vm792, %v5086, %v4970
      %v5127 = vsel %vm792, %v5087, %v4972
      %v5128 = vsel %vm792, %v5088, %v4974
      %v5129 = vsel %vm792, %v5089, %v4976
      %v5130 = vsel %vm792, %v5090, %v4978
      %v5131 = vsel %vm792, %v5091, %v4980
      %v5132 = vsel %vm792, %v5092, %v4982
      %v5133 = vsel %vm792, %v5093, %v4984
      %v5134 = vsel %vm792, %v5094, %v4986
      %v5135 = vsel %vm792, %v5095, %v4988
      %v5136 = vsel %vm792, %v5096, %v4990
      %v5137 = vsel %vm792, %v5097, %v4992
      %v5138 = vsel %vm792, %v5098, %v4994
      %v5139 = vsel %vm792, %v5099, %v4996
      %v5140 = vsel %vm792, %v5100, %v4998
      %v5141 = vsel %vm792, %v5101, %v5000
      %v5142 = vsel %vm792, %v5102, %v5002
      %v5143 = vsel %vm792, %v5103, %v5004
      %v5144 = vsel %vm792, %v5104, %v5006
      %v5145 = vsel %vm792, %v5105, %v5008
      %v5146 = vsel %vm792, %v5106, %v5010
      %v5147 = vsel %vm792, %v5107, %v5012
      %v5148 = vsel %vm792, %v5108, %v5014
      %v5149 = vsel %vm792, %v5109, %v5016
      %v5150 = vsel %vm792, %v5110, %v5018
      %v5151 = vsel %vm792, %v5111, %v5020
      %v5152 = vsel %vm792, %v5112, %v5022
      %v5153 = vsel %vm792, %v5113, %v5024
      %v5154 = vsel %vm792, %v5114, %v5026
      %v5155 = vsel %vm792, %v5115, %v5028
      %v5156 = vsel %vm792, %v5116, %v5030
      %v5157 = vsel %vm792, %v5117, %v5032
      %v5158 = vsel %vm792, %v5118, %v5034
      %v5159 = vsel %vm792, %v5119, %v5036
      %v5160 = vsel %vm792, %v5120, %v5038
      %v5161 = vsel %vm792, %v5121, %v5040
      %v5162 = vsel %vm792, %v5122, %v5042
      %v5163 = vld [vmem:[%s8] sm:$0xff]
      %v5164 = vld [vmem:[%s8 + $0x8] sm:$0xf]
      %v5165 = vld [vmem:[%s9] sm:$0xff]
      %v5166 = vld [vmem:[%s9 + $0x8] sm:$0xf]
      %vm5167 = vcmask 97280
      %v5169 = vsel %vm5167, %v5123, 0
      %v5172 = vsel %vm5167, %v5124, 0
      %v5175 = vsel %vm5167, %v5125, 0
      %v5178 = vsel %vm5167, %v5126, 0
      %v5181 = vsel %vm5167, %v5127, 0
      %v5184 = vsel %vm5167, %v5128, 0
      %v5187 = vsel %vm5167, %v5129, 0
      %v5190 = vsel %vm5167, %v5130, 0
      %v5193 = vsel %vm5167, %v5131, 0
      %v5196 = vsel %vm5167, %v5132, 0
      %v5199 = vsel %vm5167, %v5133, 0
      %v5202 = vsel %vm5167, %v5134, 0
      %v5205 = vsel %vm5167, %v5135, 0
      %v5208 = vsel %vm5167, %v5136, 0
      %v5211 = vsel %vm5167, %v5137, 0
      %v5214 = vsel %vm5167, %v5138, 0
      %v5217 = vsel %vm5167, %v5139, 0
      %v5220 = vsel %vm5167, %v5140, 0
      %v5223 = vsel %vm5167, %v5141, 0
      %v5226 = vsel %vm5167, %v5142, 0
      %v5229 = vsel %vm5167, %v5143, 0
      %v5232 = vsel %vm5167, %v5144, 0
      %v5235 = vsel %vm5167, %v5145, 0
      %v5238 = vsel %vm5167, %v5146, 0
      %v5241 = vsel %vm5167, %v5147, 0
      %v5244 = vsel %vm5167, %v5148, 0
      %v5247 = vsel %vm5167, %v5149, 0
      %v5250 = vsel %vm5167, %v5150, 0
      %v5253 = vsel %vm5167, %v5151, 0
      %v5256 = vsel %vm5167, %v5152, 0
      %v5259 = vsel %vm5167, %v5153, 0
      %v5262 = vsel %vm5167, %v5154, 0
      %v5265 = vsel %vm5167, %v5155, 0
      %v5268 = vsel %vm5167, %v5156, 0
      %v5271 = vsel %vm5167, %v5157, 0
      %v5274 = vsel %vm5167, %v5158, 0
      %vm5276 = vcmask 1043456
      %v5278 = vsel %vm5276, %v5166, 0
      %5280 = vmatprep.subr.mxu0 0.0
      %5281 = vmatpush1.msra.mxu0 0.0
      %5282 = vmatprep.subr.mxu0 0.0
      %5283 = vmatpush1.msra.mxu0 0.0
      %5284 = vmatprep.subr.mxu0 0.0
      %5285 = vmatpush1.msra.mxu0 0.0
      %5286 = vmatprep.subr.mxu0 0.0
      %5287 = vmatpush1.msra.mxu0 0.0
      %5288 = vmatprep.subr.mxu0 0.0
      %5289 = vmatpush1.msra.mxu0 0.0
      %5290 = vmatprep.subr.mxu0 0.0
      %5291 = vmatpush1.msra.mxu0 0.0
      %5292 = vmatprep.subr.mxu0 0.0
      %5293 = vmatpush1.msra.mxu0 0.0
      %5294 = vmatprep.subr.mxu0 0.0
      %5295 = vmatpush1.msra.mxu0 0.0
      %5296 = vmatprep.subr.mxu0 0.0
      %5297 = vmatpush1.msra.mxu0 0.0
      %5298 = vmatprep.subr.mxu0 0.0
      %5299 = vmatpush1.msra.mxu0 0.0
      %5300 = vmatprep.subr.mxu0 0.0
      %5301 = vmatpush1.msra.mxu0 0.0
      %5302 = vmatprep.subr.mxu0 0.0
      %5303 = vmatpush1.msra.mxu0 0.0
      %5304 = vmatprep.subr.mxu0 0.0
      %5305 = vmatpush1.msra.mxu0 0.0
      %5306 = vmatprep.subr.mxu0 0.0
      %5307 = vmatpush1.msra.mxu0 0.0
      %5308 = vmatprep.subr.mxu0 0.0
      %5309 = vmatpush1.msra.mxu0 %v5278
      %5310 = vmatprep.subr.mxu0 0.0
      %5311 = vmatpush1.msra.mxu0 %v5165
      %5312 = vmatprep.subr.mxu0 0.0
      %5313 = vmatpush2.msra.mxu0 0.0
      %5314 = vmatprep.subr.mxu0 0.0
      %5315 = vmatpush2.msra.mxu0 0.0
      %5316 = vmatprep.subr.mxu0 0.0
      %5317 = vmatpush2.msra.mxu0 0.0
      %5318 = vmatprep.subr.mxu0 0.0
      %5319 = vmatpush2.msra.mxu0 0.0
      %5320 = vmatprep.subr.mxu0 0.0
      %5321 = vmatpush2.msra.mxu0 0.0
      %5322 = vmatprep.subr.mxu0 0.0
      %5323 = vmatpush2.msra.mxu0 0.0
      %5324 = vmatprep.subr.mxu0 0.0
      %5325 = vmatpush2.msra.mxu0 0.0
      %5326 = vmatprep.subr.mxu0 0.0
      %5327 = vmatpush2.msra.mxu0 0.0
      %5328 = vmatprep.subr.mxu0 0.0
      %5329 = vmatpush2.msra.mxu0 0.0
      %5330 = vmatprep.subr.mxu0 0.0
      %5331 = vmatpush2.msra.mxu0 0.0
      %5332 = vmatprep.subr.mxu0 0.0
      %5333 = vmatpush2.msra.mxu0 0.0
      %5334 = vmatprep.subr.mxu0 0.0
      %5335 = vmatpush2.msra.mxu0 0.0
      %5336 = vmatprep.subr.mxu0 0.0
      %5337 = vmatpush2.msra.mxu0 0.0
      %5338 = vmatprep.subr.mxu0 0.0
      %5339 = vmatpush2.msra.mxu0 0.0
      %5340 = vmatprep.subr.mxu0 0.0
      %5341 = vmatpush2.msra.mxu0 0.0
      %5342 = vmatprep.subr.mxu0 0.0
      %5343 = vmatpush2.msra.mxu0 0.0
      %5344 = vmatprep.mubr.f32.mxu0 0.0
      %5345 = vmatmul.mubr.f32.gmra.mxu0 %v5169
      %v5346 = vpop.f32.mrf.mxu0
      %v5347 = vadd.f32 0.0, %v5346
      %v5348 = vpop.f32.mrf.mxu0
      %5349 = vmatprep.mubr.f32.mxu0 0.0
      %5350 = vmatmul.mubr.f32.gmra.mxu0 %v5172
      %v5351 = vpop.f32.mrf.mxu0
      %v5352 = vadd.f32 0.0, %v5351
      %v5353 = vpop.f32.mrf.mxu0
      %5354 = vmatprep.mubr.f32.mxu0 0.0
      %5355 = vmatmul.mubr.f32.gmra.mxu0 %v5175
      %v5356 = vpop.f32.mrf.mxu0
      %v5357 = vadd.f32 0.0, %v5356
      %v5358 = vpop.f32.mrf.mxu0
      %5359 = vmatprep.mubr.f32.mxu0 0.0
      %5360 = vmatmul.mubr.f32.gmra.mxu0 %v5178
      %v5361 = vpop.f32.mrf.mxu0
      %v5362 = vadd.f32 0.0, %v5361
      %v5363 = vpop.f32.mrf.mxu0
      %5364 = vmatprep.mubr.f32.mxu0 0.0
      %5365 = vmatmul.mubr.f32.gmra.mxu0 %v5181
      %v5366 = vpop.f32.mrf.mxu0
      %v5367 = vadd.f32 0.0, %v5366
      %v5368 = vpop.f32.mrf.mxu0
      %5369 = vmatprep.mubr.f32.mxu0 0.0
      %5370 = vmatmul.mubr.f32.gmra.mxu0 %v5184
      %v5371 = vpop.f32.mrf.mxu0
      %v5372 = vadd.f32 0.0, %v5371
      %v5373 = vpop.f32.mrf.mxu0
      %5374 = vmatprep.mubr.f32.mxu0 0.0
      %5375 = vmatmul.mubr.f32.gmra.mxu0 %v5187
      %v5376 = vpop.f32.mrf.mxu0
      %v5377 = vadd.f32 0.0, %v5376
      %v5378 = vpop.f32.mrf.mxu0
      %5379 = vmatprep.mubr.f32.mxu0 0.0
      %5380 = vmatmul.mubr.f32.gmra.mxu0 %v5190
      %v5381 = vpop.f32.mrf.mxu0
      %v5382 = vadd.f32 0.0, %v5381
      %v5383 = vpop.f32.mrf.mxu0
      %5384 = vmatprep.mubr.f32.mxu0 0.0
      %5385 = vmatmul.mubr.f32.gmra.mxu0 %v5193
      %v5386 = vpop.f32.mrf.mxu0
      %v5387 = vadd.f32 0.0, %v5386
      %v5388 = vpop.f32.mrf.mxu0
      %5389 = vmatprep.mubr.f32.mxu0 0.0
      %5390 = vmatmul.mubr.f32.gmra.mxu0 %v5196
      %v5391 = vpop.f32.mrf.mxu0
      %v5392 = vadd.f32 0.0, %v5391
      %v5393 = vpop.f32.mrf.mxu0
      %5394 = vmatprep.mubr.f32.mxu0 0.0
      %5395 = vmatmul.mubr.f32.gmra.mxu0 %v5199
      %v5396 = vpop.f32.mrf.mxu0
      %v5397 = vadd.f32 0.0, %v5396
      %v5398 = vpop.f32.mrf.mxu0
      %5399 = vmatprep.mubr.f32.mxu0 0.0
      %5400 = vmatmul.mubr.f32.gmra.mxu0 %v5202
      %v5401 = vpop.f32.mrf.mxu0
      %v5402 = vadd.f32 0.0, %v5401
      %v5403 = vpop.f32.mrf.mxu0
      %5404 = vmatprep.mubr.f32.mxu0 0.0
      %5405 = vmatmul.mubr.f32.gmra.mxu0 %v5205
      %v5406 = vpop.f32.mrf.mxu0
      %v5407 = vadd.f32 0.0, %v5406
      %v5408 = vpop.f32.mrf.mxu0
      %5409 = vmatprep.mubr.f32.mxu0 0.0
      %5410 = vmatmul.mubr.f32.gmra.mxu0 %v5208
      %v5411 = vpop.f32.mrf.mxu0
      %v5412 = vadd.f32 0.0, %v5411
      %v5413 = vpop.f32.mrf.mxu0
      %5414 = vmatprep.mubr.f32.mxu0 0.0
      %5415 = vmatmul.mubr.f32.gmra.mxu0 %v5211
      %v5416 = vpop.f32.mrf.mxu0
      %v5417 = vadd.f32 0.0, %v5416
      %v5418 = vpop.f32.mrf.mxu0
      %5419 = vmatprep.mubr.f32.mxu0 0.0
      %5420 = vmatmul.mubr.f32.gmra.mxu0 %v5214
      %v5421 = vpop.f32.mrf.mxu0
      %v5422 = vadd.f32 0.0, %v5421
      %v5423 = vpop.f32.mrf.mxu0
      %5424 = vmatprep.mubr.f32.mxu0 0.0
      %5425 = vmatmul.mubr.f32.gmra.mxu0 %v5217
      %v5426 = vpop.f32.mrf.mxu0
      %v5427 = vadd.f32 0.0, %v5426
      %v5428 = vpop.f32.mrf.mxu0
      %5429 = vmatprep.mubr.f32.mxu0 0.0
      %5430 = vmatmul.mubr.f32.gmra.mxu0 %v5220
      %v5431 = vpop.f32.mrf.mxu0
      %v5432 = vadd.f32 0.0, %v5431
      %v5433 = vpop.f32.mrf.mxu0
      %5434 = vmatprep.mubr.f32.mxu0 0.0
      %5435 = vmatmul.mubr.f32.gmra.mxu0 %v5223
      %v5436 = vpop.f32.mrf.mxu0
      %v5437 = vadd.f32 0.0, %v5436
      %v5438 = vpop.f32.mrf.mxu0
      %5439 = vmatprep.mubr.f32.mxu0 0.0
      %5440 = vmatmul.mubr.f32.gmra.mxu0 %v5226
      %v5441 = vpop.f32.mrf.mxu0
      %v5442 = vadd.f32 0.0, %v5441
      %v5443 = vpop.f32.mrf.mxu0
      %5444 = vmatprep.mubr.f32.mxu0 0.0
      %5445 = vmatmul.mubr.f32.gmra.mxu0 %v5229
      %v5446 = vpop.f32.mrf.mxu0
      %v5447 = vadd.f32 0.0, %v5446
      %v5448 = vpop.f32.mrf.mxu0
      %5449 = vmatprep.mubr.f32.mxu0 0.0
      %5450 = vmatmul.mubr.f32.gmra.mxu0 %v5232
      %v5451 = vpop.f32.mrf.mxu0
      %v5452 = vadd.f32 0.0, %v5451
      %v5453 = vpop.f32.mrf.mxu0
      %5454 = vmatprep.mubr.f32.mxu0 0.0
      %5455 = vmatmul.mubr.f32.gmra.mxu0 %v5235
      %v5456 = vpop.f32.mrf.mxu0
      %v5457 = vadd.f32 0.0, %v5456
      %v5458 = vpop.f32.mrf.mxu0
      %5459 = vmatprep.mubr.f32.mxu0 0.0
      %5460 = vmatmul.mubr.f32.gmra.mxu0 %v5238
      %v5461 = vpop.f32.mrf.mxu0
      %v5462 = vadd.f32 0.0, %v5461
      %v5463 = vpop.f32.mrf.mxu0
      %5464 = vmatprep.mubr.f32.mxu0 0.0
      %5465 = vmatmul.mubr.f32.gmra.mxu0 %v5241
      %v5466 = vpop.f32.mrf.mxu0
      %v5467 = vadd.f32 0.0, %v5466
      %v5468 = vpop.f32.mrf.mxu0
      %5469 = vmatprep.mubr.f32.mxu0 0.0
      %5470 = vmatmul.mubr.f32.gmra.mxu0 %v5244
      %v5471 = vpop.f32.mrf.mxu0
      %v5472 = vadd.f32 0.0, %v5471
      %v5473 = vpop.f32.mrf.mxu0
      %5474 = vmatprep.mubr.f32.mxu0 0.0
      %5475 = vmatmul.mubr.f32.gmra.mxu0 %v5247
      %v5476 = vpop.f32.mrf.mxu0
      %v5477 = vadd.f32 0.0, %v5476
      %v5478 = vpop.f32.mrf.mxu0
      %5479 = vmatprep.mubr.f32.mxu0 0.0
      %5480 = vmatmul.mubr.f32.gmra.mxu0 %v5250
      %v5481 = vpop.f32.mrf.mxu0
      %v5482 = vadd.f32 0.0, %v5481
      %v5483 = vpop.f32.mrf.mxu0
      %5484 = vmatprep.mubr.f32.mxu0 0.0
      %5485 = vmatmul.mubr.f32.gmra.mxu0 %v5253
      %v5486 = vpop.f32.mrf.mxu0
      %v5487 = vadd.f32 0.0, %v5486
      %v5488 = vpop.f32.mrf.mxu0
      %5489 = vmatprep.mubr.f32.mxu0 0.0
      %5490 = vmatmul.mubr.f32.gmra.mxu0 %v5256
      %v5491 = vpop.f32.mrf.mxu0
      %v5492 = vadd.f32 0.0, %v5491
      %v5493 = vpop.f32.mrf.mxu0
      %5494 = vmatprep.mubr.f32.mxu0 0.0
      %5495 = vmatmul.mubr.f32.gmra.mxu0 %v5259
      %v5496 = vpop.f32.mrf.mxu0
      %v5497 = vadd.f32 0.0, %v5496
      %v5498 = vpop.f32.mrf.mxu0
      %5499 = vmatprep.mubr.f32.mxu0 0.0
      %5500 = vmatmul.mubr.f32.gmra.mxu0 %v5262
      %v5501 = vpop.f32.mrf.mxu0
      %v5502 = vadd.f32 0.0, %v5501
      %v5503 = vpop.f32.mrf.mxu0
      %5504 = vmatprep.mubr.f32.mxu0 0.0
      %5505 = vmatmul.mubr.f32.gmra.mxu0 %v5265
      %v5506 = vpop.f32.mrf.mxu0
      %v5507 = vadd.f32 0.0, %v5506
      %v5508 = vpop.f32.mrf.mxu0
      %5509 = vmatprep.mubr.f32.mxu0 0.0
      %5510 = vmatmul.mubr.f32.gmra.mxu0 %v5268
      %v5511 = vpop.f32.mrf.mxu0
      %v5512 = vadd.f32 0.0, %v5511
      %v5513 = vpop.f32.mrf.mxu0
      %5514 = vmatprep.mubr.f32.mxu0 0.0
      %5515 = vmatmul.mubr.f32.gmra.mxu0 %v5271
      %v5516 = vpop.f32.mrf.mxu0
      %v5517 = vadd.f32 0.0, %v5516
      %v5518 = vpop.f32.mrf.mxu0
      %5519 = vmatprep.mubr.f32.mxu0 0.0
      %5520 = vmatmul.mubr.f32.gmra.mxu0 %v5274
      %v5521 = vpop.f32.mrf.mxu0
      %v5522 = vadd.f32 0.0, %v5521
      %v5523 = vpop.f32.mrf.mxu0
      %5524 = vdwg.mxu0
      %v5526 = vsel %vm5167, %v3563, 0
      %v5529 = vsel %vm5167, %v3564, 0
      %v5532 = vsel %vm5167, %v3565, 0
      %v5535 = vsel %vm5167, %v3566, 0
      %v5538 = vsel %vm5167, %v3567, 0
      %v5541 = vsel %vm5167, %v3568, 0
      %v5544 = vsel %vm5167, %v3569, 0
      %v5547 = vsel %vm5167, %v3570, 0
      %v5550 = vsel %vm5167, %v3571, 0
      %v5553 = vsel %vm5167, %v3572, 0
      %v5556 = vsel %vm5167, %v3573, 0
      %v5559 = vsel %vm5167, %v3574, 0
      %v5562 = vsel %vm5167, %v3575, 0
      %v5565 = vsel %vm5167, %v3576, 0
      %v5568 = vsel %vm5167, %v3577, 0
      %v5571 = vsel %vm5167, %v3578, 0
      %v5574 = vsel %vm5167, %v3579, 0
      %v5577 = vsel %vm5167, %v3580, 0
      %v5580 = vsel %vm5167, %v3581, 0
      %v5583 = vsel %vm5167, %v3582, 0
      %v5586 = vsel %vm5167, %v3583, 0
      %v5589 = vsel %vm5167, %v3584, 0
      %v5592 = vsel %vm5167, %v3585, 0
      %v5595 = vsel %vm5167, %v3586, 0
      %v5598 = vsel %vm5167, %v3587, 0
      %v5601 = vsel %vm5167, %v3588, 0
      %v5604 = vsel %vm5167, %v3589, 0
      %v5607 = vsel %vm5167, %v3590, 0
      %v5610 = vsel %vm5167, %v3591, 0
      %v5613 = vsel %vm5167, %v3592, 0
      %v5616 = vsel %vm5167, %v3593, 0
      %v5619 = vsel %vm5167, %v3594, 0
      %v5622 = vsel %vm5167, %v3595, 0
      %v5625 = vsel %vm5167, %v3596, 0
      %v5628 = vsel %vm5167, %v3597, 0
      %v5631 = vsel %vm5167, %v3598, 0
      %v5634 = vsel %vm5276, %v5164, 0
      %5636 = vmatprep.subr.mxu0 0.0
      %5637 = vmatpush1.msra.mxu0 0.0
      %5638 = vmatprep.subr.mxu0 0.0
      %5639 = vmatpush1.msra.mxu0 0.0
      %5640 = vmatprep.subr.mxu0 0.0
      %5641 = vmatpush1.msra.mxu0 0.0
      %5642 = vmatprep.subr.mxu0 0.0
      %5643 = vmatpush1.msra.mxu0 0.0
      %5644 = vmatprep.subr.mxu0 0.0
      %5645 = vmatpush1.msra.mxu0 0.0
      %5646 = vmatprep.subr.mxu0 0.0
      %5647 = vmatpush1.msra.mxu0 0.0
      %5648 = vmatprep.subr.mxu0 0.0
      %5649 = vmatpush1.msra.mxu0 0.0
      %5650 = vmatprep.subr.mxu0 0.0
      %5651 = vmatpush1.msra.mxu0 0.0
      %5652 = vmatprep.subr.mxu0 0.0
      %5653 = vmatpush1.msra.mxu0 0.0
      %5654 = vmatprep.subr.mxu0 0.0
      %5655 = vmatpush1.msra.mxu0 0.0
      %5656 = vmatprep.subr.mxu0 0.0
      %5657 = vmatpush1.msra.mxu0 0.0
      %5658 = vmatprep.subr.mxu0 0.0
      %5659 = vmatpush1.msra.mxu0 0.0
      %5660 = vmatprep.subr.mxu0 0.0
      %5661 = vmatpush1.msra.mxu0 0.0
      %5662 = vmatprep.subr.mxu0 0.0
      %5663 = vmatpush1.msra.mxu0 0.0
      %5664 = vmatprep.subr.mxu0 0.0
      %5665 = vmatpush1.msra.mxu0 %v5634
      %5666 = vmatprep.subr.mxu0 0.0
      %5667 = vmatpush1.msra.mxu0 %v5163
      %5668 = vmatprep.subr.mxu0 0.0
      %5669 = vmatpush2.msra.mxu0 0.0
      %5670 = vmatprep.subr.mxu0 0.0
      %5671 = vmatpush2.msra.mxu0 0.0
      %5672 = vmatprep.subr.mxu0 0.0
      %5673 = vmatpush2.msra.mxu0 0.0
      %5674 = vmatprep.subr.mxu0 0.0
      %5675 = vmatpush2.msra.mxu0 0.0
      %5676 = vmatprep.subr.mxu0 0.0
      %5677 = vmatpush2.msra.mxu0 0.0
      %5678 = vmatprep.subr.mxu0 0.0
      %5679 = vmatpush2.msra.mxu0 0.0
      %5680 = vmatprep.subr.mxu0 0.0
      %5681 = vmatpush2.msra.mxu0 0.0
      %5682 = vmatprep.subr.mxu0 0.0
      %5683 = vmatpush2.msra.mxu0 0.0
      %5684 = vmatprep.subr.mxu0 0.0
      %5685 = vmatpush2.msra.mxu0 0.0
      %5686 = vmatprep.subr.mxu0 0.0
      %5687 = vmatpush2.msra.mxu0 0.0
      %5688 = vmatprep.subr.mxu0 0.0
      %5689 = vmatpush2.msra.mxu0 0.0
      %5690 = vmatprep.subr.mxu0 0.0
      %5691 = vmatpush2.msra.mxu0 0.0
      %5692 = vmatprep.subr.mxu0 0.0
      %5693 = vmatpush2.msra.mxu0 0.0
      %5694 = vmatprep.subr.mxu0 0.0
      %5695 = vmatpush2.msra.mxu0 0.0
      %5696 = vmatprep.subr.mxu0 0.0
      %5697 = vmatpush2.msra.mxu0 0.0
      %5698 = vmatprep.subr.mxu0 0.0
      %5699 = vmatpush2.msra.mxu0 0.0
      %5700 = vmatprep.mubr.f32.mxu0 0.0
      %5701 = vmatmul.mubr.f32.gmra.mxu0 %v5526
      %v5702 = vpop.f32.mrf.mxu0
      %v5703 = vadd.f32 %v5347, %v5702
      %v5704 = vpop.f32.mrf.mxu0
      %5705 = vmatprep.mubr.f32.mxu0 0.0
      %5706 = vmatmul.mubr.f32.gmra.mxu0 %v5529
      %v5707 = vpop.f32.mrf.mxu0
      %v5708 = vadd.f32 %v5352, %v5707
      %v5709 = vpop.f32.mrf.mxu0
      %5710 = vmatprep.mubr.f32.mxu0 0.0
      %5711 = vmatmul.mubr.f32.gmra.mxu0 %v5532
      %v5712 = vpop.f32.mrf.mxu0
      %v5713 = vadd.f32 %v5357, %v5712
      %v5714 = vpop.f32.mrf.mxu0
      %5715 = vmatprep.mubr.f32.mxu0 0.0
      %5716 = vmatmul.mubr.f32.gmra.mxu0 %v5535
      %v5717 = vpop.f32.mrf.mxu0
      %v5718 = vadd.f32 %v5362, %v5717
      %v5719 = vpop.f32.mrf.mxu0
      %5720 = vmatprep.mubr.f32.mxu0 0.0
      %5721 = vmatmul.mubr.f32.gmra.mxu0 %v5538
      %v5722 = vpop.f32.mrf.mxu0
      %v5723 = vadd.f32 %v5367, %v5722
      %v5724 = vpop.f32.mrf.mxu0
      %5725 = vmatprep.mubr.f32.mxu0 0.0
      %5726 = vmatmul.mubr.f32.gmra.mxu0 %v5541
      %v5727 = vpop.f32.mrf.mxu0
      %v5728 = vadd.f32 %v5372, %v5727
      %v5729 = vpop.f32.mrf.mxu0
      %5730 = vmatprep.mubr.f32.mxu0 0.0
      %5731 = vmatmul.mubr.f32.gmra.mxu0 %v5544
      %v5732 = vpop.f32.mrf.mxu0
      %v5733 = vadd.f32 %v5377, %v5732
      %v5734 = vpop.f32.mrf.mxu0
      %5735 = vmatprep.mubr.f32.mxu0 0.0
      %5736 = vmatmul.mubr.f32.gmra.mxu0 %v5547
      %v5737 = vpop.f32.mrf.mxu0
      %v5738 = vadd.f32 %v5382, %v5737
      %v5739 = vpop.f32.mrf.mxu0
      %5740 = vmatprep.mubr.f32.mxu0 0.0
      %5741 = vmatmul.mubr.f32.gmra.mxu0 %v5550
      %v5742 = vpop.f32.mrf.mxu0
      %v5743 = vadd.f32 %v5387, %v5742
      %v5744 = vpop.f32.mrf.mxu0
      %5745 = vmatprep.mubr.f32.mxu0 0.0
      %5746 = vmatmul.mubr.f32.gmra.mxu0 %v5553
      %v5747 = vpop.f32.mrf.mxu0
      %v5748 = vadd.f32 %v5392, %v5747
      %v5749 = vpop.f32.mrf.mxu0
      %5750 = vmatprep.mubr.f32.mxu0 0.0
      %5751 = vmatmul.mubr.f32.gmra.mxu0 %v5556
      %v5752 = vpop.f32.mrf.mxu0
      %v5753 = vadd.f32 %v5397, %v5752
      %v5754 = vpop.f32.mrf.mxu0
      %5755 = vmatprep.mubr.f32.mxu0 0.0
      %5756 = vmatmul.mubr.f32.gmra.mxu0 %v5559
      %v5757 = vpop.f32.mrf.mxu0
      %v5758 = vadd.f32 %v5402, %v5757
      %v5759 = vpop.f32.mrf.mxu0
      %5760 = vmatprep.mubr.f32.mxu0 0.0
      %5761 = vmatmul.mubr.f32.gmra.mxu0 %v5562
      %v5762 = vpop.f32.mrf.mxu0
      %v5763 = vadd.f32 %v5407, %v5762
      %v5764 = vpop.f32.mrf.mxu0
      %5765 = vmatprep.mubr.f32.mxu0 0.0
      %5766 = vmatmul.mubr.f32.gmra.mxu0 %v5565
      %v5767 = vpop.f32.mrf.mxu0
      %v5768 = vadd.f32 %v5412, %v5767
      %v5769 = vpop.f32.mrf.mxu0
      %5770 = vmatprep.mubr.f32.mxu0 0.0
      %5771 = vmatmul.mubr.f32.gmra.mxu0 %v5568
      %v5772 = vpop.f32.mrf.mxu0
      %v5773 = vadd.f32 %v5417, %v5772
      %v5774 = vpop.f32.mrf.mxu0
      %5775 = vmatprep.mubr.f32.mxu0 0.0
      %5776 = vmatmul.mubr.f32.gmra.mxu0 %v5571
      %v5777 = vpop.f32.mrf.mxu0
      %v5778 = vadd.f32 %v5422, %v5777
      %v5779 = vpop.f32.mrf.mxu0
      %5780 = vmatprep.mubr.f32.mxu0 0.0
      %5781 = vmatmul.mubr.f32.gmra.mxu0 %v5574
      %v5782 = vpop.f32.mrf.mxu0
      %v5783 = vadd.f32 %v5427, %v5782
      %v5784 = vpop.f32.mrf.mxu0
      %5785 = vmatprep.mubr.f32.mxu0 0.0
      %5786 = vmatmul.mubr.f32.gmra.mxu0 %v5577
      %v5787 = vpop.f32.mrf.mxu0
      %v5788 = vadd.f32 %v5432, %v5787
      %v5789 = vpop.f32.mrf.mxu0
      %5790 = vmatprep.mubr.f32.mxu0 0.0
      %5791 = vmatmul.mubr.f32.gmra.mxu0 %v5580
      %v5792 = vpop.f32.mrf.mxu0
      %v5793 = vadd.f32 %v5437, %v5792
      %v5794 = vpop.f32.mrf.mxu0
      %5795 = vmatprep.mubr.f32.mxu0 0.0
      %5796 = vmatmul.mubr.f32.gmra.mxu0 %v5583
      %v5797 = vpop.f32.mrf.mxu0
      %v5798 = vadd.f32 %v5442, %v5797
      %v5799 = vpop.f32.mrf.mxu0
      %5800 = vmatprep.mubr.f32.mxu0 0.0
      %5801 = vmatmul.mubr.f32.gmra.mxu0 %v5586
      %v5802 = vpop.f32.mrf.mxu0
      %v5803 = vadd.f32 %v5447, %v5802
      %v5804 = vpop.f32.mrf.mxu0
      %5805 = vmatprep.mubr.f32.mxu0 0.0
      %5806 = vmatmul.mubr.f32.gmra.mxu0 %v5589
      %v5807 = vpop.f32.mrf.mxu0
      %v5808 = vadd.f32 %v5452, %v5807
      %v5809 = vpop.f32.mrf.mxu0
      %5810 = vmatprep.mubr.f32.mxu0 0.0
      %5811 = vmatmul.mubr.f32.gmra.mxu0 %v5592
      %v5812 = vpop.f32.mrf.mxu0
      %v5813 = vadd.f32 %v5457, %v5812
      %v5814 = vpop.f32.mrf.mxu0
      %5815 = vmatprep.mubr.f32.mxu0 0.0
      %5816 = vmatmul.mubr.f32.gmra.mxu0 %v5595
      %v5817 = vpop.f32.mrf.mxu0
      %v5818 = vadd.f32 %v5462, %v5817
      %v5819 = vpop.f32.mrf.mxu0
      %5820 = vmatprep.mubr.f32.mxu0 0.0
      %5821 = vmatmul.mubr.f32.gmra.mxu0 %v5598
      %v5822 = vpop.f32.mrf.mxu0
      %v5823 = vadd.f32 %v5467, %v5822
      %v5824 = vpop.f32.mrf.mxu0
      %5825 = vmatprep.mubr.f32.mxu0 0.0
      %5826 = vmatmul.mubr.f32.gmra.mxu0 %v5601
      %v5827 = vpop.f32.mrf.mxu0
      %v5828 = vadd.f32 %v5472, %v5827
      %v5829 = vpop.f32.mrf.mxu0
      %5830 = vmatprep.mubr.f32.mxu0 0.0
      %5831 = vmatmul.mubr.f32.gmra.mxu0 %v5604
      %v5832 = vpop.f32.mrf.mxu0
      %v5833 = vadd.f32 %v5477, %v5832
      %v5834 = vpop.f32.mrf.mxu0
      %5835 = vmatprep.mubr.f32.mxu0 0.0
      %5836 = vmatmul.mubr.f32.gmra.mxu0 %v5607
      %v5837 = vpop.f32.mrf.mxu0
      %v5838 = vadd.f32 %v5482, %v5837
      %v5839 = vpop.f32.mrf.mxu0
      %5840 = vmatprep.mubr.f32.mxu0 0.0
      %5841 = vmatmul.mubr.f32.gmra.mxu0 %v5610
      %v5842 = vpop.f32.mrf.mxu0
      %v5843 = vadd.f32 %v5487, %v5842
      %v5844 = vpop.f32.mrf.mxu0
      %5845 = vmatprep.mubr.f32.mxu0 0.0
      %5846 = vmatmul.mubr.f32.gmra.mxu0 %v5613
      %v5847 = vpop.f32.mrf.mxu0
      %v5848 = vadd.f32 %v5492, %v5847
      %v5849 = vpop.f32.mrf.mxu0
      %5850 = vmatprep.mubr.f32.mxu0 0.0
      %5851 = vmatmul.mubr.f32.gmra.mxu0 %v5616
      %v5852 = vpop.f32.mrf.mxu0
      %v5853 = vadd.f32 %v5497, %v5852
      %v5854 = vpop.f32.mrf.mxu0
      %5855 = vmatprep.mubr.f32.mxu0 0.0
      %5856 = vmatmul.mubr.f32.gmra.mxu0 %v5619
      %v5857 = vpop.f32.mrf.mxu0
      %v5858 = vadd.f32 %v5502, %v5857
      %v5859 = vpop.f32.mrf.mxu0
      %5860 = vmatprep.mubr.f32.mxu0 0.0
      %5861 = vmatmul.mubr.f32.gmra.mxu0 %v5622
      %v5862 = vpop.f32.mrf.mxu0
      %v5863 = vadd.f32 %v5507, %v5862
      %v5864 = vpop.f32.mrf.mxu0
      %5865 = vmatprep.mubr.f32.mxu0 0.0
      %5866 = vmatmul.mubr.f32.gmra.mxu0 %v5625
      %v5867 = vpop.f32.mrf.mxu0
      %v5868 = vadd.f32 %v5512, %v5867
      %v5869 = vpop.f32.mrf.mxu0
      %5870 = vmatprep.mubr.f32.mxu0 0.0
      %5871 = vmatmul.mubr.f32.gmra.mxu0 %v5628
      %v5872 = vpop.f32.mrf.mxu0
      %v5873 = vadd.f32 %v5517, %v5872
      %v5874 = vpop.f32.mrf.mxu0
      %5875 = vmatprep.mubr.f32.mxu0 0.0
      %5876 = vmatmul.mubr.f32.gmra.mxu0 %v5631
      %v5877 = vpop.f32.mrf.mxu0
      %v5878 = vadd.f32 %v5522, %v5877
      %v5879 = vpop.f32.mrf.mxu0
      %5880 = vdwg.mxu0
      %s5881 = scalar_lea.vmem %s8, 16
      %v5882 = vld [vmem:[%s5881] sm:$0xff]
      %v5883 = vld [vmem:[%s5881 + $0x8] sm:$0xf]
      %v5885 = vsel %vm5167, %v3599, 0
      %v5888 = vsel %vm5167, %v3600, 0
      %v5891 = vsel %vm5276, %v5883, 0
      %5893 = vmatprep.subr.mxu0 0.0
      %5894 = vmatpush1.msra.mxu0 0.0
      %5895 = vmatprep.subr.mxu0 0.0
      %5896 = vmatpush1.msra.mxu0 0.0
      %5897 = vmatprep.subr.mxu0 0.0
      %5898 = vmatpush1.msra.mxu0 0.0
      %5899 = vmatprep.subr.mxu0 0.0
      %5900 = vmatpush1.msra.mxu0 0.0
      %5901 = vmatprep.subr.mxu0 0.0
      %5902 = vmatpush1.msra.mxu0 0.0
      %5903 = vmatprep.subr.mxu0 0.0
      %5904 = vmatpush1.msra.mxu0 0.0
      %5905 = vmatprep.subr.mxu0 0.0
      %5906 = vmatpush1.msra.mxu0 0.0
      %5907 = vmatprep.subr.mxu0 0.0
      %5908 = vmatpush1.msra.mxu0 0.0
      %5909 = vmatprep.subr.mxu0 0.0
      %5910 = vmatpush1.msra.mxu0 0.0
      %5911 = vmatprep.subr.mxu0 0.0
      %5912 = vmatpush1.msra.mxu0 0.0
      %5913 = vmatprep.subr.mxu0 0.0
      %5914 = vmatpush1.msra.mxu0 0.0
      %5915 = vmatprep.subr.mxu0 0.0
      %5916 = vmatpush1.msra.mxu0 0.0
      %5917 = vmatprep.subr.mxu0 0.0
      %5918 = vmatpush1.msra.mxu0 0.0
      %5919 = vmatprep.subr.mxu0 0.0
      %5920 = vmatpush1.msra.mxu0 0.0
      %5921 = vmatprep.subr.mxu0 0.0
      %5922 = vmatpush1.msra.mxu0 %v5891
      %5923 = vmatprep.subr.mxu0 0.0
      %5924 = vmatpush1.msra.mxu0 %v5882
      %5925 = vmatprep.subr.mxu0 0.0
      %5926 = vmatpush2.msra.mxu0 0.0
      %5927 = vmatprep.subr.mxu0 0.0
      %5928 = vmatpush2.msra.mxu0 0.0
      %5929 = vmatprep.subr.mxu0 0.0
      %5930 = vmatpush2.msra.mxu0 0.0
      %5931 = vmatprep.subr.mxu0 0.0
      %5932 = vmatpush2.msra.mxu0 0.0
      %5933 = vmatprep.subr.mxu0 0.0
      %5934 = vmatpush2.msra.mxu0 0.0
      %5935 = vmatprep.subr.mxu0 0.0
      %5936 = vmatpush2.msra.mxu0 0.0
      %5937 = vmatprep.subr.mxu0 0.0
      %5938 = vmatpush2.msra.mxu0 0.0
      %5939 = vmatprep.subr.mxu0 0.0
      %5940 = vmatpush2.msra.mxu0 0.0
      %5941 = vmatprep.subr.mxu0 0.0
      %5942 = vmatpush2.msra.mxu0 0.0
      %5943 = vmatprep.subr.mxu0 0.0
      %5944 = vmatpush2.msra.mxu0 0.0
      %5945 = vmatprep.subr.mxu0 0.0
      %5946 = vmatpush2.msra.mxu0 0.0
      %5947 = vmatprep.subr.mxu0 0.0
      %5948 = vmatpush2.msra.mxu0 0.0
      %5949 = vmatprep.subr.mxu0 0.0
      %5950 = vmatpush2.msra.mxu0 0.0
      %5951 = vmatprep.subr.mxu0 0.0
      %5952 = vmatpush2.msra.mxu0 0.0
      %5953 = vmatprep.subr.mxu0 0.0
      %5954 = vmatpush2.msra.mxu0 0.0
      %5955 = vmatprep.subr.mxu0 0.0
      %5956 = vmatpush2.msra.mxu0 0.0
      %5957 = vmatprep.mubr.f32.mxu0 0.0
      %5958 = vmatmul.mubr.f32.gmra.mxu0 %v5532
      %v5959 = vpop.f32.mrf.mxu0
      %v5960 = vadd.f32 0.0, %v5959
      %v5961 = vpop.f32.mrf.mxu0
      %5962 = vmatprep.mubr.f32.mxu0 0.0
      %5963 = vmatmul.mubr.f32.gmra.mxu0 %v5535
      %v5964 = vpop.f32.mrf.mxu0
      %v5965 = vadd.f32 0.0, %v5964
      %v5966 = vpop.f32.mrf.mxu0
      %5967 = vmatprep.mubr.f32.mxu0 0.0
      %5968 = vmatmul.mubr.f32.gmra.mxu0 %v5538
      %v5969 = vpop.f32.mrf.mxu0
      %v5970 = vadd.f32 0.0, %v5969
      %v5971 = vpop.f32.mrf.mxu0
      %5972 = vmatprep.mubr.f32.mxu0 0.0
      %5973 = vmatmul.mubr.f32.gmra.mxu0 %v5541
      %v5974 = vpop.f32.mrf.mxu0
      %v5975 = vadd.f32 0.0, %v5974
      %v5976 = vpop.f32.mrf.mxu0
      %5977 = vmatprep.mubr.f32.mxu0 0.0
      %5978 = vmatmul.mubr.f32.gmra.mxu0 %v5544
      %v5979 = vpop.f32.mrf.mxu0
      %v5980 = vadd.f32 0.0, %v5979
      %v5981 = vpop.f32.mrf.mxu0
      %5982 = vmatprep.mubr.f32.mxu0 0.0
      %5983 = vmatmul.mubr.f32.gmra.mxu0 %v5547
      %v5984 = vpop.f32.mrf.mxu0
      %v5985 = vadd.f32 0.0, %v5984
      %v5986 = vpop.f32.mrf.mxu0
      %5987 = vmatprep.mubr.f32.mxu0 0.0
      %5988 = vmatmul.mubr.f32.gmra.mxu0 %v5550
      %v5989 = vpop.f32.mrf.mxu0
      %v5990 = vadd.f32 0.0, %v5989
      %v5991 = vpop.f32.mrf.mxu0
      %5992 = vmatprep.mubr.f32.mxu0 0.0
      %5993 = vmatmul.mubr.f32.gmra.mxu0 %v5553
      %v5994 = vpop.f32.mrf.mxu0
      %v5995 = vadd.f32 0.0, %v5994
      %v5996 = vpop.f32.mrf.mxu0
      %5997 = vmatprep.mubr.f32.mxu0 0.0
      %5998 = vmatmul.mubr.f32.gmra.mxu0 %v5556
      %v5999 = vpop.f32.mrf.mxu0
      %v6000 = vadd.f32 0.0, %v5999
      %v6001 = vpop.f32.mrf.mxu0
      %6002 = vmatprep.mubr.f32.mxu0 0.0
      %6003 = vmatmul.mubr.f32.gmra.mxu0 %v5559
      %v6004 = vpop.f32.mrf.mxu0
      %v6005 = vadd.f32 0.0, %v6004
      %v6006 = vpop.f32.mrf.mxu0
      %6007 = vmatprep.mubr.f32.mxu0 0.0
      %6008 = vmatmul.mubr.f32.gmra.mxu0 %v5562
      %v6009 = vpop.f32.mrf.mxu0
      %v6010 = vadd.f32 0.0, %v6009
      %v6011 = vpop.f32.mrf.mxu0
      %6012 = vmatprep.mubr.f32.mxu0 0.0
      %6013 = vmatmul.mubr.f32.gmra.mxu0 %v5565
      %v6014 = vpop.f32.mrf.mxu0
      %v6015 = vadd.f32 0.0, %v6014
      %v6016 = vpop.f32.mrf.mxu0
      %6017 = vmatprep.mubr.f32.mxu0 0.0
      %6018 = vmatmul.mubr.f32.gmra.mxu0 %v5568
      %v6019 = vpop.f32.mrf.mxu0
      %v6020 = vadd.f32 0.0, %v6019
      %v6021 = vpop.f32.mrf.mxu0
      %6022 = vmatprep.mubr.f32.mxu0 0.0
      %6023 = vmatmul.mubr.f32.gmra.mxu0 %v5571
      %v6024 = vpop.f32.mrf.mxu0
      %v6025 = vadd.f32 0.0, %v6024
      %v6026 = vpop.f32.mrf.mxu0
      %6027 = vmatprep.mubr.f32.mxu0 0.0
      %6028 = vmatmul.mubr.f32.gmra.mxu0 %v5574
      %v6029 = vpop.f32.mrf.mxu0
      %v6030 = vadd.f32 0.0, %v6029
      %v6031 = vpop.f32.mrf.mxu0
      %6032 = vmatprep.mubr.f32.mxu0 0.0
      %6033 = vmatmul.mubr.f32.gmra.mxu0 %v5577
      %v6034 = vpop.f32.mrf.mxu0
      %v6035 = vadd.f32 0.0, %v6034
      %v6036 = vpop.f32.mrf.mxu0
      %6037 = vmatprep.mubr.f32.mxu0 0.0
      %6038 = vmatmul.mubr.f32.gmra.mxu0 %v5580
      %v6039 = vpop.f32.mrf.mxu0
      %v6040 = vadd.f32 0.0, %v6039
      %v6041 = vpop.f32.mrf.mxu0
      %6042 = vmatprep.mubr.f32.mxu0 0.0
      %6043 = vmatmul.mubr.f32.gmra.mxu0 %v5583
      %v6044 = vpop.f32.mrf.mxu0
      %v6045 = vadd.f32 0.0, %v6044
      %v6046 = vpop.f32.mrf.mxu0
      %6047 = vmatprep.mubr.f32.mxu0 0.0
      %6048 = vmatmul.mubr.f32.gmra.mxu0 %v5586
      %v6049 = vpop.f32.mrf.mxu0
      %v6050 = vadd.f32 0.0, %v6049
      %v6051 = vpop.f32.mrf.mxu0
      %6052 = vmatprep.mubr.f32.mxu0 0.0
      %6053 = vmatmul.mubr.f32.gmra.mxu0 %v5589
      %v6054 = vpop.f32.mrf.mxu0
      %v6055 = vadd.f32 0.0, %v6054
      %v6056 = vpop.f32.mrf.mxu0
      %6057 = vmatprep.mubr.f32.mxu0 0.0
      %6058 = vmatmul.mubr.f32.gmra.mxu0 %v5592
      %v6059 = vpop.f32.mrf.mxu0
      %v6060 = vadd.f32 0.0, %v6059
      %v6061 = vpop.f32.mrf.mxu0
      %6062 = vmatprep.mubr.f32.mxu0 0.0
      %6063 = vmatmul.mubr.f32.gmra.mxu0 %v5595
      %v6064 = vpop.f32.mrf.mxu0
      %v6065 = vadd.f32 0.0, %v6064
      %v6066 = vpop.f32.mrf.mxu0
      %6067 = vmatprep.mubr.f32.mxu0 0.0
      %6068 = vmatmul.mubr.f32.gmra.mxu0 %v5598
      %v6069 = vpop.f32.mrf.mxu0
      %v6070 = vadd.f32 0.0, %v6069
      %v6071 = vpop.f32.mrf.mxu0
      %6072 = vmatprep.mubr.f32.mxu0 0.0
      %6073 = vmatmul.mubr.f32.gmra.mxu0 %v5601
      %v6074 = vpop.f32.mrf.mxu0
      %v6075 = vadd.f32 0.0, %v6074
      %v6076 = vpop.f32.mrf.mxu0
      %6077 = vmatprep.mubr.f32.mxu0 0.0
      %6078 = vmatmul.mubr.f32.gmra.mxu0 %v5604
      %v6079 = vpop.f32.mrf.mxu0
      %v6080 = vadd.f32 0.0, %v6079
      %v6081 = vpop.f32.mrf.mxu0
      %6082 = vmatprep.mubr.f32.mxu0 0.0
      %6083 = vmatmul.mubr.f32.gmra.mxu0 %v5607
      %v6084 = vpop.f32.mrf.mxu0
      %v6085 = vadd.f32 0.0, %v6084
      %v6086 = vpop.f32.mrf.mxu0
      %6087 = vmatprep.mubr.f32.mxu0 0.0
      %6088 = vmatmul.mubr.f32.gmra.mxu0 %v5610
      %v6089 = vpop.f32.mrf.mxu0
      %v6090 = vadd.f32 0.0, %v6089
      %v6091 = vpop.f32.mrf.mxu0
      %6092 = vmatprep.mubr.f32.mxu0 0.0
      %6093 = vmatmul.mubr.f32.gmra.mxu0 %v5613
      %v6094 = vpop.f32.mrf.mxu0
      %v6095 = vadd.f32 0.0, %v6094
      %v6096 = vpop.f32.mrf.mxu0
      %6097 = vmatprep.mubr.f32.mxu0 0.0
      %6098 = vmatmul.mubr.f32.gmra.mxu0 %v5616
      %v6099 = vpop.f32.mrf.mxu0
      %v6100 = vadd.f32 0.0, %v6099
      %v6101 = vpop.f32.mrf.mxu0
      %6102 = vmatprep.mubr.f32.mxu0 0.0
      %6103 = vmatmul.mubr.f32.gmra.mxu0 %v5619
      %v6104 = vpop.f32.mrf.mxu0
      %v6105 = vadd.f32 0.0, %v6104
      %v6106 = vpop.f32.mrf.mxu0
      %6107 = vmatprep.mubr.f32.mxu0 0.0
      %6108 = vmatmul.mubr.f32.gmra.mxu0 %v5622
      %v6109 = vpop.f32.mrf.mxu0
      %v6110 = vadd.f32 0.0, %v6109
      %v6111 = vpop.f32.mrf.mxu0
      %6112 = vmatprep.mubr.f32.mxu0 0.0
      %6113 = vmatmul.mubr.f32.gmra.mxu0 %v5625
      %v6114 = vpop.f32.mrf.mxu0
      %v6115 = vadd.f32 0.0, %v6114
      %v6116 = vpop.f32.mrf.mxu0
      %6117 = vmatprep.mubr.f32.mxu0 0.0
      %6118 = vmatmul.mubr.f32.gmra.mxu0 %v5628
      %v6119 = vpop.f32.mrf.mxu0
      %v6120 = vadd.f32 0.0, %v6119
      %v6121 = vpop.f32.mrf.mxu0
      %6122 = vmatprep.mubr.f32.mxu0 0.0
      %6123 = vmatmul.mubr.f32.gmra.mxu0 %v5631
      %v6124 = vpop.f32.mrf.mxu0
      %v6125 = vadd.f32 0.0, %v6124
      %v6126 = vpop.f32.mrf.mxu0
      %6127 = vmatprep.mubr.f32.mxu0 0.0
      %6128 = vmatmul.mubr.f32.gmra.mxu0 %v5885
      %v6129 = vpop.f32.mrf.mxu0
      %v6130 = vadd.f32 0.0, %v6129
      %v6131 = vpop.f32.mrf.mxu0
      %6132 = vmatprep.mubr.f32.mxu0 0.0
      %6133 = vmatmul.mubr.f32.gmra.mxu0 %v5888
      %v6134 = vpop.f32.mrf.mxu0
      %v6135 = vadd.f32 0.0, %v6134
      %v6136 = vpop.f32.mrf.mxu0
      %6137 = vdwg.mxu0
      %v6138 = vadd.f32 %v5703, %v5960
      %v6139 = vadd.f32 %v5708, %v5965
      %v6140 = vadd.f32 %v5713, %v5970
      %v6141 = vadd.f32 %v5718, %v5975
      %v6142 = vadd.f32 %v5723, %v5980
      %v6143 = vadd.f32 %v5728, %v5985
      %v6144 = vadd.f32 %v5733, %v5990
      %v6145 = vadd.f32 %v5738, %v5995
      %v6146 = vadd.f32 %v5743, %v6000
      %v6147 = vadd.f32 %v5748, %v6005
      %v6148 = vadd.f32 %v5753, %v6010
      %v6149 = vadd.f32 %v5758, %v6015
      %v6150 = vadd.f32 %v5763, %v6020
      %v6151 = vadd.f32 %v5768, %v6025
      %v6152 = vadd.f32 %v5773, %v6030
      %v6153 = vadd.f32 %v5778, %v6035
      %v6154 = vadd.f32 %v5783, %v6040
      %v6155 = vadd.f32 %v5788, %v6045
      %v6156 = vadd.f32 %v5793, %v6050
      %v6157 = vadd.f32 %v5798, %v6055
      %v6158 = vadd.f32 %v5803, %v6060
      %v6159 = vadd.f32 %v5808, %v6065
      %v6160 = vadd.f32 %v5813, %v6070
      %v6161 = vadd.f32 %v5818, %v6075
      %v6162 = vadd.f32 %v5823, %v6080
      %v6163 = vadd.f32 %v5828, %v6085
      %v6164 = vadd.f32 %v5833, %v6090
      %v6165 = vadd.f32 %v5838, %v6095
      %v6166 = vadd.f32 %v5843, %v6100
      %v6167 = vadd.f32 %v5848, %v6105
      %v6168 = vadd.f32 %v5853, %v6110
      %v6169 = vadd.f32 %v5858, %v6115
      %v6170 = vadd.f32 %v5863, %v6120
      %v6171 = vadd.f32 %v5868, %v6125
      %v6172 = vadd.f32 %v5873, %v6130
      %v6173 = vadd.f32 %v5878, %v6135
      %s6174 = scalar_lea.vmem %s9, 16
      %v6175 = vld [vmem:[%s6174] sm:$0xff]
      %v6176 = vld [vmem:[%s6174 + $0x8] sm:$0xf]
      %v6178 = vsel %vm5167, %v5159, 0
      %v6181 = vsel %vm5167, %v5160, 0
      %v6184 = vsel %vm5276, %v6176, 0
      %6186 = vmatprep.subr.mxu0 0.0
      %6187 = vmatpush1.msra.mxu0 0.0
      %6188 = vmatprep.subr.mxu0 0.0
      %6189 = vmatpush1.msra.mxu0 0.0
      %6190 = vmatprep.subr.mxu0 0.0
      %6191 = vmatpush1.msra.mxu0 0.0
      %6192 = vmatprep.subr.mxu0 0.0
      %6193 = vmatpush1.msra.mxu0 0.0
      %6194 = vmatprep.subr.mxu0 0.0
      %6195 = vmatpush1.msra.mxu0 0.0
      %6196 = vmatprep.subr.mxu0 0.0
      %6197 = vmatpush1.msra.mxu0 0.0
      %6198 = vmatprep.subr.mxu0 0.0
      %6199 = vmatpush1.msra.mxu0 0.0
      %6200 = vmatprep.subr.mxu0 0.0
      %6201 = vmatpush1.msra.mxu0 0.0
      %6202 = vmatprep.subr.mxu0 0.0
      %6203 = vmatpush1.msra.mxu0 0.0
      %6204 = vmatprep.subr.mxu0 0.0
      %6205 = vmatpush1.msra.mxu0 0.0
      %6206 = vmatprep.subr.mxu0 0.0
      %6207 = vmatpush1.msra.mxu0 0.0
      %6208 = vmatprep.subr.mxu0 0.0
      %6209 = vmatpush1.msra.mxu0 0.0
      %6210 = vmatprep.subr.mxu0 0.0
      %6211 = vmatpush1.msra.mxu0 0.0
      %6212 = vmatprep.subr.mxu0 0.0
      %6213 = vmatpush1.msra.mxu0 0.0
      %6214 = vmatprep.subr.mxu0 0.0
      %6215 = vmatpush1.msra.mxu0 %v6184
      %6216 = vmatprep.subr.mxu0 0.0
      %6217 = vmatpush1.msra.mxu0 %v6175
      %6218 = vmatprep.subr.mxu0 0.0
      %6219 = vmatpush2.msra.mxu0 0.0
      %6220 = vmatprep.subr.mxu0 0.0
      %6221 = vmatpush2.msra.mxu0 0.0
      %6222 = vmatprep.subr.mxu0 0.0
      %6223 = vmatpush2.msra.mxu0 0.0
      %6224 = vmatprep.subr.mxu0 0.0
      %6225 = vmatpush2.msra.mxu0 0.0
      %6226 = vmatprep.subr.mxu0 0.0
      %6227 = vmatpush2.msra.mxu0 0.0
      %6228 = vmatprep.subr.mxu0 0.0
      %6229 = vmatpush2.msra.mxu0 0.0
      %6230 = vmatprep.subr.mxu0 0.0
      %6231 = vmatpush2.msra.mxu0 0.0
      %6232 = vmatprep.subr.mxu0 0.0
      %6233 = vmatpush2.msra.mxu0 0.0
      %6234 = vmatprep.subr.mxu0 0.0
      %6235 = vmatpush2.msra.mxu0 0.0
      %6236 = vmatprep.subr.mxu0 0.0
      %6237 = vmatpush2.msra.mxu0 0.0
      %6238 = vmatprep.subr.mxu0 0.0
      %6239 = vmatpush2.msra.mxu0 0.0
      %6240 = vmatprep.subr.mxu0 0.0
      %6241 = vmatpush2.msra.mxu0 0.0
      %6242 = vmatprep.subr.mxu0 0.0
      %6243 = vmatpush2.msra.mxu0 0.0
      %6244 = vmatprep.subr.mxu0 0.0
      %6245 = vmatpush2.msra.mxu0 0.0
      %6246 = vmatprep.subr.mxu0 0.0
      %6247 = vmatpush2.msra.mxu0 0.0
      %6248 = vmatprep.subr.mxu0 0.0
      %6249 = vmatpush2.msra.mxu0 0.0
      %6250 = vmatprep.mubr.f32.mxu0 0.0
      %6251 = vmatmul.mubr.f32.gmra.mxu0 %v5175
      %v6252 = vpop.f32.mrf.mxu0
      %v6253 = vadd.f32 0.0, %v6252
      %v6254 = vpop.f32.mrf.mxu0
      %6255 = vmatprep.mubr.f32.mxu0 0.0
      %6256 = vmatmul.mubr.f32.gmra.mxu0 %v5178
      %v6257 = vpop.f32.mrf.mxu0
      %v6258 = vadd.f32 0.0, %v6257
      %v6259 = vpop.f32.mrf.mxu0
      %6260 = vmatprep.mubr.f32.mxu0 0.0
      %6261 = vmatmul.mubr.f32.gmra.mxu0 %v5181
      %v6262 = vpop.f32.mrf.mxu0
      %v6263 = vadd.f32 0.0, %v6262
      %v6264 = vpop.f32.mrf.mxu0
      %6265 = vmatprep.mubr.f32.mxu0 0.0
      %6266 = vmatmul.mubr.f32.gmra.mxu0 %v5184
      %v6267 = vpop.f32.mrf.mxu0
      %v6268 = vadd.f32 0.0, %v6267
      %v6269 = vpop.f32.mrf.mxu0
      %6270 = vmatprep.mubr.f32.mxu0 0.0
      %6271 = vmatmul.mubr.f32.gmra.mxu0 %v5187
      %v6272 = vpop.f32.mrf.mxu0
      %v6273 = vadd.f32 0.0, %v6272
      %v6274 = vpop.f32.mrf.mxu0
      %6275 = vmatprep.mubr.f32.mxu0 0.0
      %6276 = vmatmul.mubr.f32.gmra.mxu0 %v5190
      %v6277 = vpop.f32.mrf.mxu0
      %v6278 = vadd.f32 0.0, %v6277
      %v6279 = vpop.f32.mrf.mxu0
      %6280 = vmatprep.mubr.f32.mxu0 0.0
      %6281 = vmatmul.mubr.f32.gmra.mxu0 %v5193
      %v6282 = vpop.f32.mrf.mxu0
      %v6283 = vadd.f32 0.0, %v6282
      %v6284 = vpop.f32.mrf.mxu0
      %6285 = vmatprep.mubr.f32.mxu0 0.0
      %6286 = vmatmul.mubr.f32.gmra.mxu0 %v5196
      %v6287 = vpop.f32.mrf.mxu0
      %v6288 = vadd.f32 0.0, %v6287
      %v6289 = vpop.f32.mrf.mxu0
      %6290 = vmatprep.mubr.f32.mxu0 0.0
      %6291 = vmatmul.mubr.f32.gmra.mxu0 %v5199
      %v6292 = vpop.f32.mrf.mxu0
      %v6293 = vadd.f32 0.0, %v6292
      %v6294 = vpop.f32.mrf.mxu0
      %6295 = vmatprep.mubr.f32.mxu0 0.0
      %6296 = vmatmul.mubr.f32.gmra.mxu0 %v5202
      %v6297 = vpop.f32.mrf.mxu0
      %v6298 = vadd.f32 0.0, %v6297
      %v6299 = vpop.f32.mrf.mxu0
      %6300 = vmatprep.mubr.f32.mxu0 0.0
      %6301 = vmatmul.mubr.f32.gmra.mxu0 %v5205
      %v6302 = vpop.f32.mrf.mxu0
      %v6303 = vadd.f32 0.0, %v6302
      %v6304 = vpop.f32.mrf.mxu0
      %6305 = vmatprep.mubr.f32.mxu0 0.0
      %6306 = vmatmul.mubr.f32.gmra.mxu0 %v5208
      %v6307 = vpop.f32.mrf.mxu0
      %v6308 = vadd.f32 0.0, %v6307
      %v6309 = vpop.f32.mrf.mxu0
      %6310 = vmatprep.mubr.f32.mxu0 0.0
      %6311 = vmatmul.mubr.f32.gmra.mxu0 %v5211
      %v6312 = vpop.f32.mrf.mxu0
      %v6313 = vadd.f32 0.0, %v6312
      %v6314 = vpop.f32.mrf.mxu0
      %6315 = vmatprep.mubr.f32.mxu0 0.0
      %6316 = vmatmul.mubr.f32.gmra.mxu0 %v5214
      %v6317 = vpop.f32.mrf.mxu0
      %v6318 = vadd.f32 0.0, %v6317
      %v6319 = vpop.f32.mrf.mxu0
      %6320 = vmatprep.mubr.f32.mxu0 0.0
      %6321 = vmatmul.mubr.f32.gmra.mxu0 %v5217
      %v6322 = vpop.f32.mrf.mxu0
      %v6323 = vadd.f32 0.0, %v6322
      %v6324 = vpop.f32.mrf.mxu0
      %6325 = vmatprep.mubr.f32.mxu0 0.0
      %6326 = vmatmul.mubr.f32.gmra.mxu0 %v5220
      %v6327 = vpop.f32.mrf.mxu0
      %v6328 = vadd.f32 0.0, %v6327
      %v6329 = vpop.f32.mrf.mxu0
      %6330 = vmatprep.mubr.f32.mxu0 0.0
      %6331 = vmatmul.mubr.f32.gmra.mxu0 %v5223
      %v6332 = vpop.f32.mrf.mxu0
      %v6333 = vadd.f32 0.0, %v6332
      %v6334 = vpop.f32.mrf.mxu0
      %6335 = vmatprep.mubr.f32.mxu0 0.0
      %6336 = vmatmul.mubr.f32.gmra.mxu0 %v5226
      %v6337 = vpop.f32.mrf.mxu0
      %v6338 = vadd.f32 0.0, %v6337
      %v6339 = vpop.f32.mrf.mxu0
      %6340 = vmatprep.mubr.f32.mxu0 0.0
      %6341 = vmatmul.mubr.f32.gmra.mxu0 %v5229
      %v6342 = vpop.f32.mrf.mxu0
      %v6343 = vadd.f32 0.0, %v6342
      %v6344 = vpop.f32.mrf.mxu0
      %6345 = vmatprep.mubr.f32.mxu0 0.0
      %6346 = vmatmul.mubr.f32.gmra.mxu0 %v5232
      %v6347 = vpop.f32.mrf.mxu0
      %v6348 = vadd.f32 0.0, %v6347
      %v6349 = vpop.f32.mrf.mxu0
      %6350 = vmatprep.mubr.f32.mxu0 0.0
      %6351 = vmatmul.mubr.f32.gmra.mxu0 %v5235
      %v6352 = vpop.f32.mrf.mxu0
      %v6353 = vadd.f32 0.0, %v6352
      %v6354 = vpop.f32.mrf.mxu0
      %6355 = vmatprep.mubr.f32.mxu0 0.0
      %6356 = vmatmul.mubr.f32.gmra.mxu0 %v5238
      %v6357 = vpop.f32.mrf.mxu0
      %v6358 = vadd.f32 0.0, %v6357
      %v6359 = vpop.f32.mrf.mxu0
      %6360 = vmatprep.mubr.f32.mxu0 0.0
      %6361 = vmatmul.mubr.f32.gmra.mxu0 %v5241
      %v6362 = vpop.f32.mrf.mxu0
      %v6363 = vadd.f32 0.0, %v6362
      %v6364 = vpop.f32.mrf.mxu0
      %6365 = vmatprep.mubr.f32.mxu0 0.0
      %6366 = vmatmul.mubr.f32.gmra.mxu0 %v5244
      %v6367 = vpop.f32.mrf.mxu0
      %v6368 = vadd.f32 0.0, %v6367
      %v6369 = vpop.f32.mrf.mxu0
      %6370 = vmatprep.mubr.f32.mxu0 0.0
      %6371 = vmatmul.mubr.f32.gmra.mxu0 %v5247
      %v6372 = vpop.f32.mrf.mxu0
      %v6373 = vadd.f32 0.0, %v6372
      %v6374 = vpop.f32.mrf.mxu0
      %6375 = vmatprep.mubr.f32.mxu0 0.0
      %6376 = vmatmul.mubr.f32.gmra.mxu0 %v5250
      %v6377 = vpop.f32.mrf.mxu0
      %v6378 = vadd.f32 0.0, %v6377
      %v6379 = vpop.f32.mrf.mxu0
      %6380 = vmatprep.mubr.f32.mxu0 0.0
      %6381 = vmatmul.mubr.f32.gmra.mxu0 %v5253
      %v6382 = vpop.f32.mrf.mxu0
      %v6383 = vadd.f32 0.0, %v6382
      %v6384 = vpop.f32.mrf.mxu0
      %6385 = vmatprep.mubr.f32.mxu0 0.0
      %6386 = vmatmul.mubr.f32.gmra.mxu0 %v5256
      %v6387 = vpop.f32.mrf.mxu0
      %v6388 = vadd.f32 0.0, %v6387
      %v6389 = vpop.f32.mrf.mxu0
      %6390 = vmatprep.mubr.f32.mxu0 0.0
      %6391 = vmatmul.mubr.f32.gmra.mxu0 %v5259
      %v6392 = vpop.f32.mrf.mxu0
      %v6393 = vadd.f32 0.0, %v6392
      %v6394 = vpop.f32.mrf.mxu0
      %6395 = vmatprep.mubr.f32.mxu0 0.0
      %6396 = vmatmul.mubr.f32.gmra.mxu0 %v5262
      %v6397 = vpop.f32.mrf.mxu0
      %v6398 = vadd.f32 0.0, %v6397
      %v6399 = vpop.f32.mrf.mxu0
      %6400 = vmatprep.mubr.f32.mxu0 0.0
      %6401 = vmatmul.mubr.f32.gmra.mxu0 %v5265
      %v6402 = vpop.f32.mrf.mxu0
      %v6403 = vadd.f32 0.0, %v6402
      %v6404 = vpop.f32.mrf.mxu0
      %6405 = vmatprep.mubr.f32.mxu0 0.0
      %6406 = vmatmul.mubr.f32.gmra.mxu0 %v5268
      %v6407 = vpop.f32.mrf.mxu0
      %v6408 = vadd.f32 0.0, %v6407
      %v6409 = vpop.f32.mrf.mxu0
      %6410 = vmatprep.mubr.f32.mxu0 0.0
      %6411 = vmatmul.mubr.f32.gmra.mxu0 %v5271
      %v6412 = vpop.f32.mrf.mxu0
      %v6413 = vadd.f32 0.0, %v6412
      %v6414 = vpop.f32.mrf.mxu0
      %6415 = vmatprep.mubr.f32.mxu0 0.0
      %6416 = vmatmul.mubr.f32.gmra.mxu0 %v5274
      %v6417 = vpop.f32.mrf.mxu0
      %v6418 = vadd.f32 0.0, %v6417
      %v6419 = vpop.f32.mrf.mxu0
      %6420 = vmatprep.mubr.f32.mxu0 0.0
      %6421 = vmatmul.mubr.f32.gmra.mxu0 %v6178
      %v6422 = vpop.f32.mrf.mxu0
      %v6423 = vadd.f32 0.0, %v6422
      %v6424 = vpop.f32.mrf.mxu0
      %6425 = vmatprep.mubr.f32.mxu0 0.0
      %6426 = vmatmul.mubr.f32.gmra.mxu0 %v6181
      %v6427 = vpop.f32.mrf.mxu0
      %v6428 = vadd.f32 0.0, %v6427
      %v6429 = vpop.f32.mrf.mxu0
      %6430 = vdwg.mxu0
      %v6431 = vadd.f32 %v6138, %v6253
      %v6432 = vadd.f32 %v6139, %v6258
      %v6433 = vadd.f32 %v6140, %v6263
      %v6434 = vadd.f32 %v6141, %v6268
      %v6435 = vadd.f32 %v6142, %v6273
      %v6436 = vadd.f32 %v6143, %v6278
      %v6437 = vadd.f32 %v6144, %v6283
      %v6438 = vadd.f32 %v6145, %v6288
      %v6439 = vadd.f32 %v6146, %v6293
      %v6440 = vadd.f32 %v6147, %v6298
      %v6441 = vadd.f32 %v6148, %v6303
      %v6442 = vadd.f32 %v6149, %v6308
      %v6443 = vadd.f32 %v6150, %v6313
      %v6444 = vadd.f32 %v6151, %v6318
      %v6445 = vadd.f32 %v6152, %v6323
      %v6446 = vadd.f32 %v6153, %v6328
      %v6447 = vadd.f32 %v6154, %v6333
      %v6448 = vadd.f32 %v6155, %v6338
      %v6449 = vadd.f32 %v6156, %v6343
      %v6450 = vadd.f32 %v6157, %v6348
      %v6451 = vadd.f32 %v6158, %v6353
      %v6452 = vadd.f32 %v6159, %v6358
      %v6453 = vadd.f32 %v6160, %v6363
      %v6454 = vadd.f32 %v6161, %v6368
      %v6455 = vadd.f32 %v6162, %v6373
      %v6456 = vadd.f32 %v6163, %v6378
      %v6457 = vadd.f32 %v6164, %v6383
      %v6458 = vadd.f32 %v6165, %v6388
      %v6459 = vadd.f32 %v6166, %v6393
      %v6460 = vadd.f32 %v6167, %v6398
      %v6461 = vadd.f32 %v6168, %v6403
      %v6462 = vadd.f32 %v6169, %v6408
      %v6463 = vadd.f32 %v6170, %v6413
      %v6464 = vadd.f32 %v6171, %v6418
      %v6465 = vadd.f32 %v6172, %v6423
      %v6466 = vadd.f32 %v6173, %v6428
      %s6467 = scalar_lea.vmem %s8, 32
      %v6468 = vld [vmem:[%s6467] sm:$0xff]
      %v6469 = vld [vmem:[%s6467 + $0x8] sm:$0xf]
      %v6471 = vsel %vm5167, %v3601, 0
      %v6474 = vsel %vm5167, %v3602, 0
      %v6477 = vsel %vm5276, %v6469, 0
      %6479 = vmatprep.subr.mxu0 0.0
      %6480 = vmatpush1.msra.mxu0 0.0
      %6481 = vmatprep.subr.mxu0 0.0
      %6482 = vmatpush1.msra.mxu0 0.0
      %6483 = vmatprep.subr.mxu0 0.0
      %6484 = vmatpush1.msra.mxu0 0.0
      %6485 = vmatprep.subr.mxu0 0.0
      %6486 = vmatpush1.msra.mxu0 0.0
      %6487 = vmatprep.subr.mxu0 0.0
      %6488 = vmatpush1.msra.mxu0 0.0
      %6489 = vmatprep.subr.mxu0 0.0
      %6490 = vmatpush1.msra.mxu0 0.0
      %6491 = vmatprep.subr.mxu0 0.0
      %6492 = vmatpush1.msra.mxu0 0.0
      %6493 = vmatprep.subr.mxu0 0.0
      %6494 = vmatpush1.msra.mxu0 0.0
      %6495 = vmatprep.subr.mxu0 0.0
      %6496 = vmatpush1.msra.mxu0 0.0
      %6497 = vmatprep.subr.mxu0 0.0
      %6498 = vmatpush1.msra.mxu0 0.0
      %6499 = vmatprep.subr.mxu0 0.0
      %6500 = vmatpush1.msra.mxu0 0.0
      %6501 = vmatprep.subr.mxu0 0.0
      %6502 = vmatpush1.msra.mxu0 0.0
      %6503 = vmatprep.subr.mxu0 0.0
      %6504 = vmatpush1.msra.mxu0 0.0
      %6505 = vmatprep.subr.mxu0 0.0
      %6506 = vmatpush1.msra.mxu0 0.0
      %6507 = vmatprep.subr.mxu0 0.0
      %6508 = vmatpush1.msra.mxu0 %v6477
      %6509 = vmatprep.subr.mxu0 0.0
      %6510 = vmatpush1.msra.mxu0 %v6468
      %6511 = vmatprep.subr.mxu0 0.0
      %6512 = vmatpush2.msra.mxu0 0.0
      %6513 = vmatprep.subr.mxu0 0.0
      %6514 = vmatpush2.msra.mxu0 0.0
      %6515 = vmatprep.subr.mxu0 0.0
      %6516 = vmatpush2.msra.mxu0 0.0
      %6517 = vmatprep.subr.mxu0 0.0
      %6518 = vmatpush2.msra.mxu0 0.0
      %6519 = vmatprep.subr.mxu0 0.0
      %6520 = vmatpush2.msra.mxu0 0.0
      %6521 = vmatprep.subr.mxu0 0.0
      %6522 = vmatpush2.msra.mxu0 0.0
      %6523 = vmatprep.subr.mxu0 0.0
      %6524 = vmatpush2.msra.mxu0 0.0
      %6525 = vmatprep.subr.mxu0 0.0
      %6526 = vmatpush2.msra.mxu0 0.0
      %6527 = vmatprep.subr.mxu0 0.0
      %6528 = vmatpush2.msra.mxu0 0.0
      %6529 = vmatprep.subr.mxu0 0.0
      %6530 = vmatpush2.msra.mxu0 0.0
      %6531 = vmatprep.subr.mxu0 0.0
      %6532 = vmatpush2.msra.mxu0 0.0
      %6533 = vmatprep.subr.mxu0 0.0
      %6534 = vmatpush2.msra.mxu0 0.0
      %6535 = vmatprep.subr.mxu0 0.0
      %6536 = vmatpush2.msra.mxu0 0.0
      %6537 = vmatprep.subr.mxu0 0.0
      %6538 = vmatpush2.msra.mxu0 0.0
      %6539 = vmatprep.subr.mxu0 0.0
      %6540 = vmatpush2.msra.mxu0 0.0
      %6541 = vmatprep.subr.mxu0 0.0
      %6542 = vmatpush2.msra.mxu0 0.0
      %6543 = vmatprep.mubr.f32.mxu0 0.0
      %6544 = vmatmul.mubr.f32.gmra.mxu0 %v5538
      %v6545 = vpop.f32.mrf.mxu0
      %v6546 = vadd.f32 0.0, %v6545
      %v6547 = vpop.f32.mrf.mxu0
      %6548 = vmatprep.mubr.f32.mxu0 0.0
      %6549 = vmatmul.mubr.f32.gmra.mxu0 %v5541
      %v6550 = vpop.f32.mrf.mxu0
      %v6551 = vadd.f32 0.0, %v6550
      %v6552 = vpop.f32.mrf.mxu0
      %6553 = vmatprep.mubr.f32.mxu0 0.0
      %6554 = vmatmul.mubr.f32.gmra.mxu0 %v5544
      %v6555 = vpop.f32.mrf.mxu0
      %v6556 = vadd.f32 0.0, %v6555
      %v6557 = vpop.f32.mrf.mxu0
      %6558 = vmatprep.mubr.f32.mxu0 0.0
      %6559 = vmatmul.mubr.f32.gmra.mxu0 %v5547
      %v6560 = vpop.f32.mrf.mxu0
      %v6561 = vadd.f32 0.0, %v6560
      %v6562 = vpop.f32.mrf.mxu0
      %6563 = vmatprep.mubr.f32.mxu0 0.0
      %6564 = vmatmul.mubr.f32.gmra.mxu0 %v5550
      %v6565 = vpop.f32.mrf.mxu0
      %v6566 = vadd.f32 0.0, %v6565
      %v6567 = vpop.f32.mrf.mxu0
      %6568 = vmatprep.mubr.f32.mxu0 0.0
      %6569 = vmatmul.mubr.f32.gmra.mxu0 %v5553
      %v6570 = vpop.f32.mrf.mxu0
      %v6571 = vadd.f32 0.0, %v6570
      %v6572 = vpop.f32.mrf.mxu0
      %6573 = vmatprep.mubr.f32.mxu0 0.0
      %6574 = vmatmul.mubr.f32.gmra.mxu0 %v5556
      %v6575 = vpop.f32.mrf.mxu0
      %v6576 = vadd.f32 0.0, %v6575
      %v6577 = vpop.f32.mrf.mxu0
      %6578 = vmatprep.mubr.f32.mxu0 0.0
      %6579 = vmatmul.mubr.f32.gmra.mxu0 %v5559
      %v6580 = vpop.f32.mrf.mxu0
      %v6581 = vadd.f32 0.0, %v6580
      %v6582 = vpop.f32.mrf.mxu0
      %6583 = vmatprep.mubr.f32.mxu0 0.0
      %6584 = vmatmul.mubr.f32.gmra.mxu0 %v5562
      %v6585 = vpop.f32.mrf.mxu0
      %v6586 = vadd.f32 0.0, %v6585
      %v6587 = vpop.f32.mrf.mxu0
      %6588 = vmatprep.mubr.f32.mxu0 0.0
      %6589 = vmatmul.mubr.f32.gmra.mxu0 %v5565
      %v6590 = vpop.f32.mrf.mxu0
      %v6591 = vadd.f32 0.0, %v6590
      %v6592 = vpop.f32.mrf.mxu0
      %6593 = vmatprep.mubr.f32.mxu0 0.0
      %6594 = vmatmul.mubr.f32.gmra.mxu0 %v5568
      %v6595 = vpop.f32.mrf.mxu0
      %v6596 = vadd.f32 0.0, %v6595
      %v6597 = vpop.f32.mrf.mxu0
      %6598 = vmatprep.mubr.f32.mxu0 0.0
      %6599 = vmatmul.mubr.f32.gmra.mxu0 %v5571
      %v6600 = vpop.f32.mrf.mxu0
      %v6601 = vadd.f32 0.0, %v6600
      %v6602 = vpop.f32.mrf.mxu0
      %6603 = vmatprep.mubr.f32.mxu0 0.0
      %6604 = vmatmul.mubr.f32.gmra.mxu0 %v5574
      %v6605 = vpop.f32.mrf.mxu0
      %v6606 = vadd.f32 0.0, %v6605
      %v6607 = vpop.f32.mrf.mxu0
      %6608 = vmatprep.mubr.f32.mxu0 0.0
      %6609 = vmatmul.mubr.f32.gmra.mxu0 %v5577
      %v6610 = vpop.f32.mrf.mxu0
      %v6611 = vadd.f32 0.0, %v6610
      %v6612 = vpop.f32.mrf.mxu0
      %6613 = vmatprep.mubr.f32.mxu0 0.0
      %6614 = vmatmul.mubr.f32.gmra.mxu0 %v5580
      %v6615 = vpop.f32.mrf.mxu0
      %v6616 = vadd.f32 0.0, %v6615
      %v6617 = vpop.f32.mrf.mxu0
      %6618 = vmatprep.mubr.f32.mxu0 0.0
      %6619 = vmatmul.mubr.f32.gmra.mxu0 %v5583
      %v6620 = vpop.f32.mrf.mxu0
      %v6621 = vadd.f32 0.0, %v6620
      %v6622 = vpop.f32.mrf.mxu0
      %6623 = vmatprep.mubr.f32.mxu0 0.0
      %6624 = vmatmul.mubr.f32.gmra.mxu0 %v5586
      %v6625 = vpop.f32.mrf.mxu0
      %v6626 = vadd.f32 0.0, %v6625
      %v6627 = vpop.f32.mrf.mxu0
      %6628 = vmatprep.mubr.f32.mxu0 0.0
      %6629 = vmatmul.mubr.f32.gmra.mxu0 %v5589
      %v6630 = vpop.f32.mrf.mxu0
      %v6631 = vadd.f32 0.0, %v6630
      %v6632 = vpop.f32.mrf.mxu0
      %6633 = vmatprep.mubr.f32.mxu0 0.0
      %6634 = vmatmul.mubr.f32.gmra.mxu0 %v5592
      %v6635 = vpop.f32.mrf.mxu0
      %v6636 = vadd.f32 0.0, %v6635
      %v6637 = vpop.f32.mrf.mxu0
      %6638 = vmatprep.mubr.f32.mxu0 0.0
      %6639 = vmatmul.mubr.f32.gmra.mxu0 %v5595
      %v6640 = vpop.f32.mrf.mxu0
      %v6641 = vadd.f32 0.0, %v6640
      %v6642 = vpop.f32.mrf.mxu0
      %6643 = vmatprep.mubr.f32.mxu0 0.0
      %6644 = vmatmul.mubr.f32.gmra.mxu0 %v5598
      %v6645 = vpop.f32.mrf.mxu0
      %v6646 = vadd.f32 0.0, %v6645
      %v6647 = vpop.f32.mrf.mxu0
      %6648 = vmatprep.mubr.f32.mxu0 0.0
      %6649 = vmatmul.mubr.f32.gmra.mxu0 %v5601
      %v6650 = vpop.f32.mrf.mxu0
      %v6651 = vadd.f32 0.0, %v6650
      %v6652 = vpop.f32.mrf.mxu0
      %6653 = vmatprep.mubr.f32.mxu0 0.0
      %6654 = vmatmul.mubr.f32.gmra.mxu0 %v5604
      %v6655 = vpop.f32.mrf.mxu0
      %v6656 = vadd.f32 0.0, %v6655
      %v6657 = vpop.f32.mrf.mxu0
      %6658 = vmatprep.mubr.f32.mxu0 0.0
      %6659 = vmatmul.mubr.f32.gmra.mxu0 %v5607
      %v6660 = vpop.f32.mrf.mxu0
      %v6661 = vadd.f32 0.0, %v6660
      %v6662 = vpop.f32.mrf.mxu0
      %6663 = vmatprep.mubr.f32.mxu0 0.0
      %6664 = vmatmul.mubr.f32.gmra.mxu0 %v5610
      %v6665 = vpop.f32.mrf.mxu0
      %v6666 = vadd.f32 0.0, %v6665
      %v6667 = vpop.f32.mrf.mxu0
      %6668 = vmatprep.mubr.f32.mxu0 0.0
      %6669 = vmatmul.mubr.f32.gmra.mxu0 %v5613
      %v6670 = vpop.f32.mrf.mxu0
      %v6671 = vadd.f32 0.0, %v6670
      %v6672 = vpop.f32.mrf.mxu0
      %6673 = vmatprep.mubr.f32.mxu0 0.0
      %6674 = vmatmul.mubr.f32.gmra.mxu0 %v5616
      %v6675 = vpop.f32.mrf.mxu0
      %v6676 = vadd.f32 0.0, %v6675
      %v6677 = vpop.f32.mrf.mxu0
      %6678 = vmatprep.mubr.f32.mxu0 0.0
      %6679 = vmatmul.mubr.f32.gmra.mxu0 %v5619
      %v6680 = vpop.f32.mrf.mxu0
      %v6681 = vadd.f32 0.0, %v6680
      %v6682 = vpop.f32.mrf.mxu0
      %6683 = vmatprep.mubr.f32.mxu0 0.0
      %6684 = vmatmul.mubr.f32.gmra.mxu0 %v5622
      %v6685 = vpop.f32.mrf.mxu0
      %v6686 = vadd.f32 0.0, %v6685
      %v6687 = vpop.f32.mrf.mxu0
      %6688 = vmatprep.mubr.f32.mxu0 0.0
      %6689 = vmatmul.mubr.f32.gmra.mxu0 %v5625
      %v6690 = vpop.f32.mrf.mxu0
      %v6691 = vadd.f32 0.0, %v6690
      %v6692 = vpop.f32.mrf.mxu0
      %6693 = vmatprep.mubr.f32.mxu0 0.0
      %6694 = vmatmul.mubr.f32.gmra.mxu0 %v5628
      %v6695 = vpop.f32.mrf.mxu0
      %v6696 = vadd.f32 0.0, %v6695
      %v6697 = vpop.f32.mrf.mxu0
      %6698 = vmatprep.mubr.f32.mxu0 0.0
      %6699 = vmatmul.mubr.f32.gmra.mxu0 %v5631
      %v6700 = vpop.f32.mrf.mxu0
      %v6701 = vadd.f32 0.0, %v6700
      %v6702 = vpop.f32.mrf.mxu0
      %6703 = vmatprep.mubr.f32.mxu0 0.0
      %6704 = vmatmul.mubr.f32.gmra.mxu0 %v5885
      %v6705 = vpop.f32.mrf.mxu0
      %v6706 = vadd.f32 0.0, %v6705
      %v6707 = vpop.f32.mrf.mxu0
      %6708 = vmatprep.mubr.f32.mxu0 0.0
      %6709 = vmatmul.mubr.f32.gmra.mxu0 %v5888
      %v6710 = vpop.f32.mrf.mxu0
      %v6711 = vadd.f32 0.0, %v6710
      %v6712 = vpop.f32.mrf.mxu0
      %6713 = vmatprep.mubr.f32.mxu0 0.0
      %6714 = vmatmul.mubr.f32.gmra.mxu0 %v6471
      %v6715 = vpop.f32.mrf.mxu0
      %v6716 = vadd.f32 0.0, %v6715
      %v6717 = vpop.f32.mrf.mxu0
      %6718 = vmatprep.mubr.f32.mxu0 0.0
      %6719 = vmatmul.mubr.f32.gmra.mxu0 %v6474
      %v6720 = vpop.f32.mrf.mxu0
      %v6721 = vadd.f32 0.0, %v6720
      %v6722 = vpop.f32.mrf.mxu0
      %6723 = vdwg.mxu0
      %v6724 = vadd.f32 %v6431, %v6546
      %v6725 = vadd.f32 %v6432, %v6551
      %v6726 = vadd.f32 %v6433, %v6556
      %v6727 = vadd.f32 %v6434, %v6561
      %v6728 = vadd.f32 %v6435, %v6566
      %v6729 = vadd.f32 %v6436, %v6571
      %v6730 = vadd.f32 %v6437, %v6576
      %v6731 = vadd.f32 %v6438, %v6581
      %v6732 = vadd.f32 %v6439, %v6586
      %v6733 = vadd.f32 %v6440, %v6591
      %v6734 = vadd.f32 %v6441, %v6596
      %v6735 = vadd.f32 %v6442, %v6601
      %v6736 = vadd.f32 %v6443, %v6606
      %v6737 = vadd.f32 %v6444, %v6611
      %v6738 = vadd.f32 %v6445, %v6616
      %v6739 = vadd.f32 %v6446, %v6621
      %v6740 = vadd.f32 %v6447, %v6626
      %v6741 = vadd.f32 %v6448, %v6631
      %v6742 = vadd.f32 %v6449, %v6636
      %v6743 = vadd.f32 %v6450, %v6641
      %v6744 = vadd.f32 %v6451, %v6646
      %v6745 = vadd.f32 %v6452, %v6651
      %v6746 = vadd.f32 %v6453, %v6656
      %v6747 = vadd.f32 %v6454, %v6661
      %v6748 = vadd.f32 %v6455, %v6666
      %v6749 = vadd.f32 %v6456, %v6671
      %v6750 = vadd.f32 %v6457, %v6676
      %v6751 = vadd.f32 %v6458, %v6681
      %v6752 = vadd.f32 %v6459, %v6686
      %v6753 = vadd.f32 %v6460, %v6691
      %v6754 = vadd.f32 %v6461, %v6696
      %v6755 = vadd.f32 %v6462, %v6701
      %v6756 = vadd.f32 %v6463, %v6706
      %v6757 = vadd.f32 %v6464, %v6711
      %v6758 = vadd.f32 %v6465, %v6716
      %v6759 = vadd.f32 %v6466, %v6721
      %s6760 = scalar_lea.vmem %s9, 32
      %v6761 = vld [vmem:[%s6760] sm:$0xff]
      %v6762 = vld [vmem:[%s6760 + $0x8] sm:$0xf]
      %v6764 = vsel %vm5167, %v5161, 0
      %v6767 = vsel %vm5167, %v5162, 0
      %v6770 = vsel %vm5276, %v6762, 0
      %6772 = vmatprep.subr.mxu0 0.0
      %6773 = vmatpush1.msra.mxu0 0.0
      %6774 = vmatprep.subr.mxu0 0.0
      %6775 = vmatpush1.msra.mxu0 0.0
      %6776 = vmatprep.subr.mxu0 0.0
      %6777 = vmatpush1.msra.mxu0 0.0
      %6778 = vmatprep.subr.mxu0 0.0
      %6779 = vmatpush1.msra.mxu0 0.0
      %6780 = vmatprep.subr.mxu0 0.0
      %6781 = vmatpush1.msra.mxu0 0.0
      %6782 = vmatprep.subr.mxu0 0.0
      %6783 = vmatpush1.msra.mxu0 0.0
      %6784 = vmatprep.subr.mxu0 0.0
      %6785 = vmatpush1.msra.mxu0 0.0
      %6786 = vmatprep.subr.mxu0 0.0
      %6787 = vmatpush1.msra.mxu0 0.0
      %6788 = vmatprep.subr.mxu0 0.0
      %6789 = vmatpush1.msra.mxu0 0.0
      %6790 = vmatprep.subr.mxu0 0.0
      %6791 = vmatpush1.msra.mxu0 0.0
      %6792 = vmatprep.subr.mxu0 0.0
      %6793 = vmatpush1.msra.mxu0 0.0
      %6794 = vmatprep.subr.mxu0 0.0
      %6795 = vmatpush1.msra.mxu0 0.0
      %6796 = vmatprep.subr.mxu0 0.0
      %6797 = vmatpush1.msra.mxu0 0.0
      %6798 = vmatprep.subr.mxu0 0.0
      %6799 = vmatpush1.msra.mxu0 0.0
      %6800 = vmatprep.subr.mxu0 0.0
      %6801 = vmatpush1.msra.mxu0 %v6770
      %6802 = vmatprep.subr.mxu0 0.0
      %6803 = vmatpush1.msra.mxu0 %v6761
      %6804 = vmatprep.subr.mxu0 0.0
      %6805 = vmatpush2.msra.mxu0 0.0
      %6806 = vmatprep.subr.mxu0 0.0
      %6807 = vmatpush2.msra.mxu0 0.0
      %6808 = vmatprep.subr.mxu0 0.0
      %6809 = vmatpush2.msra.mxu0 0.0
      %6810 = vmatprep.subr.mxu0 0.0
      %6811 = vmatpush2.msra.mxu0 0.0
      %6812 = vmatprep.subr.mxu0 0.0
      %6813 = vmatpush2.msra.mxu0 0.0
      %6814 = vmatprep.subr.mxu0 0.0
      %6815 = vmatpush2.msra.mxu0 0.0
      %6816 = vmatprep.subr.mxu0 0.0
      %6817 = vmatpush2.msra.mxu0 0.0
      %6818 = vmatprep.subr.mxu0 0.0
      %6819 = vmatpush2.msra.mxu0 0.0
      %6820 = vmatprep.subr.mxu0 0.0
      %6821 = vmatpush2.msra.mxu0 0.0
      %6822 = vmatprep.subr.mxu0 0.0
      %6823 = vmatpush2.msra.mxu0 0.0
      %6824 = vmatprep.subr.mxu0 0.0
      %6825 = vmatpush2.msra.mxu0 0.0
      %6826 = vmatprep.subr.mxu0 0.0
      %6827 = vmatpush2.msra.mxu0 0.0
      %6828 = vmatprep.subr.mxu0 0.0
      %6829 = vmatpush2.msra.mxu0 0.0
      %6830 = vmatprep.subr.mxu0 0.0
      %6831 = vmatpush2.msra.mxu0 0.0
      %6832 = vmatprep.subr.mxu0 0.0
      %6833 = vmatpush2.msra.mxu0 0.0
      %6834 = vmatprep.subr.mxu0 0.0
      %6835 = vmatpush2.msra.mxu0 0.0
      %6836 = vmatprep.mubr.f32.mxu0 0.0
      %6837 = vmatmul.mubr.f32.gmra.mxu0 %v5181
      %v6838 = vpop.f32.mrf.mxu0
      %v6839 = vadd.f32 0.0, %v6838
      %v6840 = vpop.f32.mrf.mxu0
      %6841 = vmatprep.mubr.f32.mxu0 0.0
      %6842 = vmatmul.mubr.f32.gmra.mxu0 %v5184
      %v6843 = vpop.f32.mrf.mxu0
      %v6844 = vadd.f32 0.0, %v6843
      %v6845 = vpop.f32.mrf.mxu0
      %6846 = vmatprep.mubr.f32.mxu0 0.0
      %6847 = vmatmul.mubr.f32.gmra.mxu0 %v5187
      %v6848 = vpop.f32.mrf.mxu0
      %v6849 = vadd.f32 0.0, %v6848
      %v6850 = vpop.f32.mrf.mxu0
      %6851 = vmatprep.mubr.f32.mxu0 0.0
      %6852 = vmatmul.mubr.f32.gmra.mxu0 %v5190
      %v6853 = vpop.f32.mrf.mxu0
      %v6854 = vadd.f32 0.0, %v6853
      %v6855 = vpop.f32.mrf.mxu0
      %6856 = vmatprep.mubr.f32.mxu0 0.0
      %6857 = vmatmul.mubr.f32.gmra.mxu0 %v5193
      %v6858 = vpop.f32.mrf.mxu0
      %v6859 = vadd.f32 0.0, %v6858
      %v6860 = vpop.f32.mrf.mxu0
      %6861 = vmatprep.mubr.f32.mxu0 0.0
      %6862 = vmatmul.mubr.f32.gmra.mxu0 %v5196
      %v6863 = vpop.f32.mrf.mxu0
      %v6864 = vadd.f32 0.0, %v6863
      %v6865 = vpop.f32.mrf.mxu0
      %6866 = vmatprep.mubr.f32.mxu0 0.0
      %6867 = vmatmul.mubr.f32.gmra.mxu0 %v5199
      %v6868 = vpop.f32.mrf.mxu0
      %v6869 = vadd.f32 0.0, %v6868
      %v6870 = vpop.f32.mrf.mxu0
      %6871 = vmatprep.mubr.f32.mxu0 0.0
      %6872 = vmatmul.mubr.f32.gmra.mxu0 %v5202
      %v6873 = vpop.f32.mrf.mxu0
      %v6874 = vadd.f32 0.0, %v6873
      %v6875 = vpop.f32.mrf.mxu0
      %6876 = vmatprep.mubr.f32.mxu0 0.0
      %6877 = vmatmul.mubr.f32.gmra.mxu0 %v5205
      %v6878 = vpop.f32.mrf.mxu0
      %v6879 = vadd.f32 0.0, %v6878
      %v6880 = vpop.f32.mrf.mxu0
      %6881 = vmatprep.mubr.f32.mxu0 0.0
      %6882 = vmatmul.mubr.f32.gmra.mxu0 %v5208
      %v6883 = vpop.f32.mrf.mxu0
      %v6884 = vadd.f32 0.0, %v6883
      %v6885 = vpop.f32.mrf.mxu0
      %6886 = vmatprep.mubr.f32.mxu0 0.0
      %6887 = vmatmul.mubr.f32.gmra.mxu0 %v5211
      %v6888 = vpop.f32.mrf.mxu0
      %v6889 = vadd.f32 0.0, %v6888
      %v6890 = vpop.f32.mrf.mxu0
      %6891 = vmatprep.mubr.f32.mxu0 0.0
      %6892 = vmatmul.mubr.f32.gmra.mxu0 %v5214
      %v6893 = vpop.f32.mrf.mxu0
      %v6894 = vadd.f32 0.0, %v6893
      %v6895 = vpop.f32.mrf.mxu0
      %6896 = vmatprep.mubr.f32.mxu0 0.0
      %6897 = vmatmul.mubr.f32.gmra.mxu0 %v5217
      %v6898 = vpop.f32.mrf.mxu0
      %v6899 = vadd.f32 0.0, %v6898
      %v6900 = vpop.f32.mrf.mxu0
      %6901 = vmatprep.mubr.f32.mxu0 0.0
      %6902 = vmatmul.mubr.f32.gmra.mxu0 %v5220
      %v6903 = vpop.f32.mrf.mxu0
      %v6904 = vadd.f32 0.0, %v6903
      %v6905 = vpop.f32.mrf.mxu0
      %6906 = vmatprep.mubr.f32.mxu0 0.0
      %6907 = vmatmul.mubr.f32.gmra.mxu0 %v5223
      %v6908 = vpop.f32.mrf.mxu0
      %v6909 = vadd.f32 0.0, %v6908
      %v6910 = vpop.f32.mrf.mxu0
      %6911 = vmatprep.mubr.f32.mxu0 0.0
      %6912 = vmatmul.mubr.f32.gmra.mxu0 %v5226
      %v6913 = vpop.f32.mrf.mxu0
      %v6914 = vadd.f32 0.0, %v6913
      %v6915 = vpop.f32.mrf.mxu0
      %6916 = vmatprep.mubr.f32.mxu0 0.0
      %6917 = vmatmul.mubr.f32.gmra.mxu0 %v5229
      %v6918 = vpop.f32.mrf.mxu0
      %v6919 = vadd.f32 0.0, %v6918
      %v6920 = vpop.f32.mrf.mxu0
      %6921 = vmatprep.mubr.f32.mxu0 0.0
      %6922 = vmatmul.mubr.f32.gmra.mxu0 %v5232
      %v6923 = vpop.f32.mrf.mxu0
      %v6924 = vadd.f32 0.0, %v6923
      %v6925 = vpop.f32.mrf.mxu0
      %6926 = vmatprep.mubr.f32.mxu0 0.0
      %6927 = vmatmul.mubr.f32.gmra.mxu0 %v5235
      %v6928 = vpop.f32.mrf.mxu0
      %v6929 = vadd.f32 0.0, %v6928
      %v6930 = vpop.f32.mrf.mxu0
      %6931 = vmatprep.mubr.f32.mxu0 0.0
      %6932 = vmatmul.mubr.f32.gmra.mxu0 %v5238
      %v6933 = vpop.f32.mrf.mxu0
      %v6934 = vadd.f32 0.0, %v6933
      %v6935 = vpop.f32.mrf.mxu0
      %6936 = vmatprep.mubr.f32.mxu0 0.0
      %6937 = vmatmul.mubr.f32.gmra.mxu0 %v5241
      %v6938 = vpop.f32.mrf.mxu0
      %v6939 = vadd.f32 0.0, %v6938
      %v6940 = vpop.f32.mrf.mxu0
      %6941 = vmatprep.mubr.f32.mxu0 0.0
      %6942 = vmatmul.mubr.f32.gmra.mxu0 %v5244
      %v6943 = vpop.f32.mrf.mxu0
      %v6944 = vadd.f32 0.0, %v6943
      %v6945 = vpop.f32.mrf.mxu0
      %6946 = vmatprep.mubr.f32.mxu0 0.0
      %6947 = vmatmul.mubr.f32.gmra.mxu0 %v5247
      %v6948 = vpop.f32.mrf.mxu0
      %v6949 = vadd.f32 0.0, %v6948
      %v6950 = vpop.f32.mrf.mxu0
      %6951 = vmatprep.mubr.f32.mxu0 0.0
      %6952 = vmatmul.mubr.f32.gmra.mxu0 %v5250
      %v6953 = vpop.f32.mrf.mxu0
      %v6954 = vadd.f32 0.0, %v6953
      %v6955 = vpop.f32.mrf.mxu0
      %6956 = vmatprep.mubr.f32.mxu0 0.0
      %6957 = vmatmul.mubr.f32.gmra.mxu0 %v5253
      %v6958 = vpop.f32.mrf.mxu0
      %v6959 = vadd.f32 0.0, %v6958
      %v6960 = vpop.f32.mrf.mxu0
      %6961 = vmatprep.mubr.f32.mxu0 0.0
      %6962 = vmatmul.mubr.f32.gmra.mxu0 %v5256
      %v6963 = vpop.f32.mrf.mxu0
      %v6964 = vadd.f32 0.0, %v6963
      %v6965 = vpop.f32.mrf.mxu0
      %6966 = vmatprep.mubr.f32.mxu0 0.0
      %6967 = vmatmul.mubr.f32.gmra.mxu0 %v5259
      %v6968 = vpop.f32.mrf.mxu0
      %v6969 = vadd.f32 0.0, %v6968
      %v6970 = vpop.f32.mrf.mxu0
      %6971 = vmatprep.mubr.f32.mxu0 0.0
      %6972 = vmatmul.mubr.f32.gmra.mxu0 %v5262
      %v6973 = vpop.f32.mrf.mxu0
      %v6974 = vadd.f32 0.0, %v6973
      %v6975 = vpop.f32.mrf.mxu0
      %6976 = vmatprep.mubr.f32.mxu0 0.0
      %6977 = vmatmul.mubr.f32.gmra.mxu0 %v5265
      %v6978 = vpop.f32.mrf.mxu0
      %v6979 = vadd.f32 0.0, %v6978
      %v6980 = vpop.f32.mrf.mxu0
      %6981 = vmatprep.mubr.f32.mxu0 0.0
      %6982 = vmatmul.mubr.f32.gmra.mxu0 %v5268
      %v6983 = vpop.f32.mrf.mxu0
      %v6984 = vadd.f32 0.0, %v6983
      %v6985 = vpop.f32.mrf.mxu0
      %6986 = vmatprep.mubr.f32.mxu0 0.0
      %6987 = vmatmul.mubr.f32.gmra.mxu0 %v5271
      %v6988 = vpop.f32.mrf.mxu0
      %v6989 = vadd.f32 0.0, %v6988
      %v6990 = vpop.f32.mrf.mxu0
      %6991 = vmatprep.mubr.f32.mxu0 0.0
      %6992 = vmatmul.mubr.f32.gmra.mxu0 %v5274
      %v6993 = vpop.f32.mrf.mxu0
      %v6994 = vadd.f32 0.0, %v6993
      %v6995 = vpop.f32.mrf.mxu0
      %6996 = vmatprep.mubr.f32.mxu0 0.0
      %6997 = vmatmul.mubr.f32.gmra.mxu0 %v6178
      %v6998 = vpop.f32.mrf.mxu0
      %v6999 = vadd.f32 0.0, %v6998
      %v7000 = vpop.f32.mrf.mxu0
      %7001 = vmatprep.mubr.f32.mxu0 0.0
      %7002 = vmatmul.mubr.f32.gmra.mxu0 %v6181
      %v7003 = vpop.f32.mrf.mxu0
      %v7004 = vadd.f32 0.0, %v7003
      %v7005 = vpop.f32.mrf.mxu0
      %7006 = vmatprep.mubr.f32.mxu0 0.0
      %7007 = vmatmul.mubr.f32.gmra.mxu0 %v6764
      %v7008 = vpop.f32.mrf.mxu0
      %v7009 = vadd.f32 0.0, %v7008
      %v7010 = vpop.f32.mrf.mxu0
      %7011 = vmatprep.mubr.f32.mxu0 0.0
      %7012 = vmatmul.mubr.f32.gmra.mxu0 %v6767
      %v7013 = vpop.f32.mrf.mxu0
      %v7014 = vadd.f32 0.0, %v7013
      %v7015 = vpop.f32.mrf.mxu0
      %7016 = vdwg.mxu0
      %v7017 = vadd.f32 %v6724, %v6839
      %v7018 = vadd.f32 %v6725, %v6844
      %v7019 = vadd.f32 %v6726, %v6849
      %v7020 = vadd.f32 %v6727, %v6854
      %v7021 = vadd.f32 %v6728, %v6859
      %v7022 = vadd.f32 %v6729, %v6864
      %v7023 = vadd.f32 %v6730, %v6869
      %v7024 = vadd.f32 %v6731, %v6874
      %v7025 = vadd.f32 %v6732, %v6879
      %v7026 = vadd.f32 %v6733, %v6884
      %v7027 = vadd.f32 %v6734, %v6889
      %v7028 = vadd.f32 %v6735, %v6894
      %v7029 = vadd.f32 %v6736, %v6899
      %v7030 = vadd.f32 %v6737, %v6904
      %v7031 = vadd.f32 %v6738, %v6909
      %v7032 = vadd.f32 %v6739, %v6914
      %v7033 = vadd.f32 %v6740, %v6919
      %v7034 = vadd.f32 %v6741, %v6924
      %v7035 = vadd.f32 %v6742, %v6929
      %v7036 = vadd.f32 %v6743, %v6934
      %v7037 = vadd.f32 %v6744, %v6939
      %v7038 = vadd.f32 %v6745, %v6944
      %v7039 = vadd.f32 %v6746, %v6949
      %v7040 = vadd.f32 %v6747, %v6954
      %v7041 = vadd.f32 %v6748, %v6959
      %v7042 = vadd.f32 %v6749, %v6964
      %v7043 = vadd.f32 %v6750, %v6969
      %v7044 = vadd.f32 %v6751, %v6974
      %v7045 = vadd.f32 %v6752, %v6979
      %v7046 = vadd.f32 %v6753, %v6984
      %v7047 = vadd.f32 %v6754, %v6989
      %v7048 = vadd.f32 %v6755, %v6994
      %v7049 = vadd.f32 %v6756, %v6999
      %v7050 = vadd.f32 %v6757, %v7004
      %v7051 = vadd.f32 %v6758, %v7009
      %v7052 = vadd.f32 %v6759, %v7014
      %v7053 = vld [vmem:[%s10] sm:$0x1]
      %v7055 = vlaneseq
      %v7056 = vshrl.u32 %v7055, 7
      %v7057 = vsub.s32 0, %v7056
      %v7058 = vrot.slane %v7053, %v7057
      %v7060 = vadd.f32 %v7017, %v7058
      %v7061 = vadd.f32 %v7018, %v7058
      %v7062 = vadd.f32 %v7019, %v7058
      %v7063 = vadd.f32 %v7020, %v7058
      %v7064 = vadd.f32 %v7021, %v7058
      %v7065 = vadd.f32 %v7022, %v7058
      %v7066 = vadd.f32 %v7023, %v7058
      %v7067 = vadd.f32 %v7024, %v7058
      %v7068 = vadd.f32 %v7025, %v7058
      %v7069 = vadd.f32 %v7026, %v7058
      %v7070 = vadd.f32 %v7027, %v7058
      %v7071 = vadd.f32 %v7028, %v7058
      %v7072 = vadd.f32 %v7029, %v7058
      %v7073 = vadd.f32 %v7030, %v7058
      %v7074 = vadd.f32 %v7031, %v7058
      %v7075 = vadd.f32 %v7032, %v7058
      %v7076 = vadd.f32 %v7033, %v7058
      %v7077 = vadd.f32 %v7034, %v7058
      %v7078 = vadd.f32 %v7035, %v7058
      %v7079 = vadd.f32 %v7036, %v7058
      %v7080 = vadd.f32 %v7037, %v7058
      %v7081 = vadd.f32 %v7038, %v7058
      %v7082 = vadd.f32 %v7039, %v7058
      %v7083 = vadd.f32 %v7040, %v7058
      %v7084 = vadd.f32 %v7041, %v7058
      %v7085 = vadd.f32 %v7042, %v7058
      %v7086 = vadd.f32 %v7043, %v7058
      %v7087 = vadd.f32 %v7044, %v7058
      %v7088 = vadd.f32 %v7045, %v7058
      %v7089 = vadd.f32 %v7046, %v7058
      %v7090 = vadd.f32 %v7047, %v7058
      %v7091 = vadd.f32 %v7048, %v7058
      %v7092 = vadd.f32 %v7049, %v7058
      %v7093 = vadd.f32 %v7050, %v7058
      %v7094 = vadd.f32 %v7051, %v7058
      %v7095 = vadd.f32 %v7052, %v7058
      %v7096 = vmax.f32 %v7060, 0.0
      %v7097 = vmax.f32 %v7061, 0.0
      %v7098 = vmax.f32 %v7062, 0.0
      %v7099 = vmax.f32 %v7063, 0.0
      %v7100 = vmax.f32 %v7064, 0.0
      %v7101 = vmax.f32 %v7065, 0.0
      %v7102 = vmax.f32 %v7066, 0.0
      %v7103 = vmax.f32 %v7067, 0.0
      %v7104 = vmax.f32 %v7068, 0.0
      %v7105 = vmax.f32 %v7069, 0.0
      %v7106 = vmax.f32 %v7070, 0.0
      %v7107 = vmax.f32 %v7071, 0.0
      %v7108 = vmax.f32 %v7072, 0.0
      %v7109 = vmax.f32 %v7073, 0.0
      %v7110 = vmax.f32 %v7074, 0.0
      %v7111 = vmax.f32 %v7075, 0.0
      %v7112 = vmax.f32 %v7076, 0.0
      %v7113 = vmax.f32 %v7077, 0.0
      %v7114 = vmax.f32 %v7078, 0.0
      %v7115 = vmax.f32 %v7079, 0.0
      %v7116 = vmax.f32 %v7080, 0.0
      %v7117 = vmax.f32 %v7081, 0.0
      %v7118 = vmax.f32 %v7082, 0.0
      %v7119 = vmax.f32 %v7083, 0.0
      %v7120 = vmax.f32 %v7084, 0.0
      %v7121 = vmax.f32 %v7085, 0.0
      %v7122 = vmax.f32 %v7086, 0.0
      %v7123 = vmax.f32 %v7087, 0.0
      %v7124 = vmax.f32 %v7088, 0.0
      %v7125 = vmax.f32 %v7089, 0.0
      %v7126 = vmax.f32 %v7090, 0.0
      %v7127 = vmax.f32 %v7091, 0.0
      %v7128 = vmax.f32 %v7092, 0.0
      %v7129 = vmax.f32 %v7093, 0.0
      %v7130 = vmax.f32 %v7094, 0.0
      %v7131 = vmax.f32 %v7095, 0.0
      %s7132 = ssub.s32 %s773, 1
      %v7133 = vstv %s7132
      %v7134 = vadd.s32 %v7133, 1
      %v7135 = vadd.s32 %v7133, 2
      %v7136 = vadd.s32 %v7133, 3
      %v7137 = vadd.s32 %v7133, 4
      %v7138 = vadd.s32 %v7133, 5
      %v7139 = vadd.s32 %v7133, 6
      %v7140 = vadd.s32 %v7133, 7
      %v7141 = vadd.s32 %v7133, 8
      %v7142 = vadd.s32 %v7133, 9
      %v7143 = vadd.s32 %v7133, 10
      %v7144 = vadd.s32 %v7133, 11
      %v7145 = vadd.s32 %v7133, 12
      %v7146 = vadd.s32 %v7133, 13
      %v7147 = vadd.s32 %v7133, 14
      %v7148 = vadd.s32 %v7133, 15
      %v7149 = vadd.s32 %v7133, 16
      %v7150 = vadd.s32 %v7133, 17
      %vm7151 = vcmp.ge.s32.totalorder %v7133, 0
      %vm7152 = vcmp.ge.s32.totalorder %v7134, 0
      %vm7153 = vcmp.ge.s32.totalorder %v7135, 0
      %vm7154 = vcmp.ge.s32.totalorder %v7136, 0
      %vm7155 = vcmp.ge.s32.totalorder %v7137, 0
      %vm7156 = vcmp.ge.s32.totalorder %v7138, 0
      %vm7157 = vcmp.ge.s32.totalorder %v7139, 0
      %vm7158 = vcmp.ge.s32.totalorder %v7140, 0
      %vm7159 = vcmp.ge.s32.totalorder %v7141, 0
      %vm7160 = vcmp.ge.s32.totalorder %v7142, 0
      %vm7161 = vcmp.ge.s32.totalorder %v7143, 0
      %vm7162 = vcmp.ge.s32.totalorder %v7144, 0
      %vm7163 = vcmp.ge.s32.totalorder %v7145, 0
      %vm7164 = vcmp.ge.s32.totalorder %v7146, 0
      %vm7165 = vcmp.ge.s32.totalorder %v7147, 0
      %vm7166 = vcmp.ge.s32.totalorder %v7148, 0
      %vm7167 = vcmp.ge.s32.totalorder %v7149, 0
      %vm7168 = vcmp.ge.s32.totalorder %v7150, 0
      %vm7169 = vcmp.lt.s32.totalorder %v7133, 16
      %vm7170 = vcmp.lt.s32.totalorder %v7134, 16
      %vm7171 = vcmp.lt.s32.totalorder %v7135, 16
      %vm7172 = vcmp.lt.s32.totalorder %v7136, 16
      %vm7173 = vcmp.lt.s32.totalorder %v7137, 16
      %vm7174 = vcmp.lt.s32.totalorder %v7138, 16
      %vm7175 = vcmp.lt.s32.totalorder %v7139, 16
      %vm7176 = vcmp.lt.s32.totalorder %v7140, 16
      %vm7177 = vcmp.lt.s32.totalorder %v7141, 16
      %vm7178 = vcmp.lt.s32.totalorder %v7142, 16
      %vm7179 = vcmp.lt.s32.totalorder %v7143, 16
      %vm7180 = vcmp.lt.s32.totalorder %v7144, 16
      %vm7181 = vcmp.lt.s32.totalorder %v7145, 16
      %vm7182 = vcmp.lt.s32.totalorder %v7146, 16
      %vm7183 = vcmp.lt.s32.totalorder %v7147, 16
      %vm7184 = vcmp.lt.s32.totalorder %v7148, 16
      %vm7185 = vcmp.lt.s32.totalorder %v7149, 16
      %vm7186 = vcmp.lt.s32.totalorder %v7150, 16
      %vm7187 = vmand %vm7151, %vm7169
      %vm7188 = vmand %vm7152, %vm7170
      %vm7189 = vmand %vm7153, %vm7171
      %vm7190 = vmand %vm7154, %vm7172
      %vm7191 = vmand %vm7155, %vm7173
      %vm7192 = vmand %vm7156, %vm7174
      %vm7193 = vmand %vm7157, %vm7175
      %vm7194 = vmand %vm7158, %vm7176
      %vm7195 = vmand %vm7159, %vm7177
      %vm7196 = vmand %vm7160, %vm7178
      %vm7197 = vmand %vm7161, %vm7179
      %vm7198 = vmand %vm7162, %vm7180
      %vm7199 = vmand %vm7163, %vm7181
      %vm7200 = vmand %vm7164, %vm7182
      %vm7201 = vmand %vm7165, %vm7183
      %vm7202 = vmand %vm7166, %vm7184
      %vm7203 = vmand %vm7167, %vm7185
      %vm7204 = vmand %vm7168, %vm7186
      %v7205 = vsel %vm7187, 1, 0
      %v7206 = vsel %vm7188, 1, 0
      %v7207 = vsel %vm7189, 1, 0
      %v7208 = vsel %vm7190, 1, 0
      %v7209 = vsel %vm7191, 1, 0
      %v7210 = vsel %vm7192, 1, 0
      %v7211 = vsel %vm7193, 1, 0
      %v7212 = vsel %vm7194, 1, 0
      %v7213 = vsel %vm7195, 1, 0
      %v7214 = vsel %vm7196, 1, 0
      %v7215 = vsel %vm7197, 1, 0
      %v7216 = vsel %vm7198, 1, 0
      %v7217 = vsel %vm7199, 1, 0
      %v7218 = vsel %vm7200, 1, 0
      %v7219 = vsel %vm7201, 1, 0
      %v7220 = vsel %vm7202, 1, 0
      %v7221 = vsel %vm7203, 1, 0
      %v7222 = vsel %vm7204, 1, 0
      %vm7223 = vcmp.eq.s32.totalorder %v7205, 1
      %vm7224 = vcmp.eq.s32.totalorder %v7206, 1
      %vm7225 = vcmp.eq.s32.totalorder %v7207, 1
      %vm7226 = vcmp.eq.s32.totalorder %v7208, 1
      %vm7227 = vcmp.eq.s32.totalorder %v7209, 1
      %vm7228 = vcmp.eq.s32.totalorder %v7210, 1
      %vm7229 = vcmp.eq.s32.totalorder %v7211, 1
      %vm7230 = vcmp.eq.s32.totalorder %v7212, 1
      %vm7231 = vcmp.eq.s32.totalorder %v7213, 1
      %vm7232 = vcmp.eq.s32.totalorder %v7214, 1
      %vm7233 = vcmp.eq.s32.totalorder %v7215, 1
      %vm7234 = vcmp.eq.s32.totalorder %v7216, 1
      %vm7235 = vcmp.eq.s32.totalorder %v7217, 1
      %vm7236 = vcmp.eq.s32.totalorder %v7218, 1
      %vm7237 = vcmp.eq.s32.totalorder %v7219, 1
      %vm7238 = vcmp.eq.s32.totalorder %v7220, 1
      %vm7239 = vcmp.eq.s32.totalorder %v7221, 1
      %vm7240 = vcmp.eq.s32.totalorder %v7222, 1
      %v7241 = vsel %vm7223, %v7096, 0.0
      %v7242 = vsel %vm7223, %v7097, 0.0
      %v7243 = vsel %vm7224, %v7098, 0.0
      %v7244 = vsel %vm7224, %v7099, 0.0
      %v7245 = vsel %vm7225, %v7100, 0.0
      %v7246 = vsel %vm7225, %v7101, 0.0
      %v7247 = vsel %vm7226, %v7102, 0.0
      %v7248 = vsel %vm7226, %v7103, 0.0
      %v7249 = vsel %vm7227, %v7104, 0.0
      %v7250 = vsel %vm7227, %v7105, 0.0
      %v7251 = vsel %vm7228, %v7106, 0.0
      %v7252 = vsel %vm7228, %v7107, 0.0
      %v7253 = vsel %vm7229, %v7108, 0.0
      %v7254 = vsel %vm7229, %v7109, 0.0
      %v7255 = vsel %vm7230, %v7110, 0.0
      %v7256 = vsel %vm7230, %v7111, 0.0
      %v7257 = vsel %vm7231, %v7112, 0.0
      %v7258 = vsel %vm7231, %v7113, 0.0
      %v7259 = vsel %vm7232, %v7114, 0.0
      %v7260 = vsel %vm7232, %v7115, 0.0
      %v7261 = vsel %vm7233, %v7116, 0.0
      %v7262 = vsel %vm7233, %v7117, 0.0
      %v7263 = vsel %vm7234, %v7118, 0.0
      %v7264 = vsel %vm7234, %v7119, 0.0
      %v7265 = vsel %vm7235, %v7120, 0.0
      %v7266 = vsel %vm7235, %v7121, 0.0
      %v7267 = vsel %vm7236, %v7122, 0.0
      %v7268 = vsel %vm7236, %v7123, 0.0
      %v7269 = vsel %vm7237, %v7124, 0.0
      %v7270 = vsel %vm7237, %v7125, 0.0
      %v7271 = vsel %vm7238, %v7126, 0.0
      %v7272 = vsel %vm7238, %v7127, 0.0
      %v7273 = vsel %vm7239, %v7128, 0.0
      %v7274 = vsel %vm7239, %v7129, 0.0
      %v7275 = vsel %vm7240, %v7130, 0.0
      %v7276 = vsel %vm7240, %v7131, 0.0
      %v7313 = vrot.slane %v7241, 7
      %v7314 = vrot.slane %v7242, 7
      %v7315 = vsel %vm2078, %v7313, %v7314
      %v7316 = vrot.slane %v7243, 7
      %v7317 = vrot.slane %v7244, 7
      %v7318 = vsel %vm2078, %v7316, %v7317
      %v7319 = vrot.slane %v7245, 7
      %v7320 = vrot.slane %v7246, 7
      %v7321 = vsel %vm2078, %v7319, %v7320
      %v7322 = vrot.slane %v7247, 7
      %v7323 = vrot.slane %v7248, 7
      %v7324 = vsel %vm2078, %v7322, %v7323
      %v7325 = vrot.slane %v7249, 7
      %v7326 = vrot.slane %v7250, 7
      %v7327 = vsel %vm2078, %v7325, %v7326
      %v7328 = vrot.slane %v7251, 7
      %v7329 = vrot.slane %v7252, 7
      %v7330 = vsel %vm2078, %v7328, %v7329
      %v7331 = vrot.slane %v7253, 7
      %v7332 = vrot.slane %v7254, 7
      %v7333 = vsel %vm2078, %v7331, %v7332
      %v7334 = vrot.slane %v7255, 7
      %v7335 = vrot.slane %v7256, 7
      %v7336 = vsel %vm2078, %v7334, %v7335
      %v7337 = vrot.slane %v7257, 7
      %v7338 = vrot.slane %v7258, 7
      %v7339 = vsel %vm2078, %v7337, %v7338
      %v7340 = vrot.slane %v7259, 7
      %v7341 = vrot.slane %v7260, 7
      %v7342 = vsel %vm2078, %v7340, %v7341
      %v7343 = vrot.slane %v7261, 7
      %v7344 = vrot.slane %v7262, 7
      %v7345 = vsel %vm2078, %v7343, %v7344
      %v7346 = vrot.slane %v7263, 7
      %v7347 = vrot.slane %v7264, 7
      %v7348 = vsel %vm2078, %v7346, %v7347
      %v7349 = vrot.slane %v7265, 7
      %v7350 = vrot.slane %v7266, 7
      %v7351 = vsel %vm2078, %v7349, %v7350
      %v7352 = vrot.slane %v7267, 7
      %v7353 = vrot.slane %v7268, 7
      %v7354 = vsel %vm2078, %v7352, %v7353
      %v7355 = vrot.slane %v7269, 7
      %v7356 = vrot.slane %v7270, 7
      %v7357 = vsel %vm2078, %v7355, %v7356
      %v7358 = vrot.slane %v7271, 7
      %v7359 = vrot.slane %v7272, 7
      %v7360 = vsel %vm2078, %v7358, %v7359
      %v7361 = vrot.slane %v7273, 7
      %v7362 = vrot.slane %v7274, 7
      %v7363 = vsel %vm2078, %v7361, %v7362
      %v7364 = vrot.slane %v7275, 7
      %v7365 = vrot.slane %v7276, 7
      %v7366 = vsel %vm2078, %v7364, %v7365
      %v7421 = vsel %vm2078, 0.0, %v7313
      %v7422 = vsel %vm2078, 0.0, %v7316
      %v7423 = vsel %vm2078, 0.0, %v7319
      %v7424 = vsel %vm2078, 0.0, %v7322
      %v7425 = vsel %vm2078, 0.0, %v7325
      %v7426 = vsel %vm2078, 0.0, %v7328
      %v7427 = vsel %vm2078, 0.0, %v7331
      %v7428 = vsel %vm2078, 0.0, %v7334
      %v7429 = vsel %vm2078, 0.0, %v7337
      %v7430 = vsel %vm2078, 0.0, %v7340
      %v7431 = vsel %vm2078, 0.0, %v7343
      %v7432 = vsel %vm2078, 0.0, %v7346
      %v7433 = vsel %vm2078, 0.0, %v7349
      %v7434 = vsel %vm2078, 0.0, %v7352
      %v7435 = vsel %vm2078, 0.0, %v7355
      %v7436 = vsel %vm2078, 0.0, %v7358
      %v7437 = vsel %vm2078, 0.0, %v7361
      %v7438 = vsel %vm2078, 0.0, %v7364
      %v7439 = vsel %vm2078, %v7314, 0.0
      %v7440 = vsel %vm2078, %v7317, 0.0
      %v7441 = vsel %vm2078, %v7320, 0.0
      %v7442 = vsel %vm2078, %v7323, 0.0
      %v7443 = vsel %vm2078, %v7326, 0.0
      %v7444 = vsel %vm2078, %v7329, 0.0
      %v7445 = vsel %vm2078, %v7332, 0.0
      %v7446 = vsel %vm2078, %v7335, 0.0
      %v7447 = vsel %vm2078, %v7338, 0.0
      %v7448 = vsel %vm2078, %v7341, 0.0
      %v7449 = vsel %vm2078, %v7344, 0.0
      %v7450 = vsel %vm2078, %v7347, 0.0
      %v7451 = vsel %vm2078, %v7350, 0.0
      %v7452 = vsel %vm2078, %v7353, 0.0
      %v7453 = vsel %vm2078, %v7356, 0.0
      %v7454 = vsel %vm2078, %v7359, 0.0
      %v7455 = vsel %vm2078, %v7362, 0.0
      %v7456 = vsel %vm2078, %v7365, 0.0
      %v7493 = vrot.slane %v7421, 1
      %v7494 = vrot.slane %v7315, 1
      %v7495 = vsel %vm3080, %v7493, %v7494
      %v7496 = vrot.slane %v7439, 1
      %v7497 = vsel %vm3080, %v7494, %v7496
      %v7498 = vrot.slane %v7422, 1
      %v7499 = vrot.slane %v7318, 1
      %v7500 = vsel %vm3080, %v7498, %v7499
      %v7501 = vrot.slane %v7440, 1
      %v7502 = vsel %vm3080, %v7499, %v7501
      %v7503 = vrot.slane %v7423, 1
      %v7504 = vrot.slane %v7321, 1
      %v7505 = vsel %vm3080, %v7503, %v7504
      %v7506 = vrot.slane %v7441, 1
      %v7507 = vsel %vm3080, %v7504, %v7506
      %v7508 = vrot.slane %v7424, 1
      %v7509 = vrot.slane %v7324, 1
      %v7510 = vsel %vm3080, %v7508, %v7509
      %v7511 = vrot.slane %v7442, 1
      %v7512 = vsel %vm3080, %v7509, %v7511
      %v7513 = vrot.slane %v7425, 1
      %v7514 = vrot.slane %v7327, 1
      %v7515 = vsel %vm3080, %v7513, %v7514
      %v7516 = vrot.slane %v7443, 1
      %v7517 = vsel %vm3080, %v7514, %v7516
      %v7518 = vrot.slane %v7426, 1
      %v7519 = vrot.slane %v7330, 1
      %v7520 = vsel %vm3080, %v7518, %v7519
      %v7521 = vrot.slane %v7444, 1
      %v7522 = vsel %vm3080, %v7519, %v7521
      %v7523 = vrot.slane %v7427, 1
      %v7524 = vrot.slane %v7333, 1
      %v7525 = vsel %vm3080, %v7523, %v7524
      %v7526 = vrot.slane %v7445, 1
      %v7527 = vsel %vm3080, %v7524, %v7526
      %v7528 = vrot.slane %v7428, 1
      %v7529 = vrot.slane %v7336, 1
      %v7530 = vsel %vm3080, %v7528, %v7529
      %v7531 = vrot.slane %v7446, 1
      %v7532 = vsel %vm3080, %v7529, %v7531
      %v7533 = vrot.slane %v7429, 1
      %v7534 = vrot.slane %v7339, 1
      %v7535 = vsel %vm3080, %v7533, %v7534
      %v7536 = vrot.slane %v7447, 1
      %v7537 = vsel %vm3080, %v7534, %v7536
      %v7538 = vrot.slane %v7430, 1
      %v7539 = vrot.slane %v7342, 1
      %v7540 = vsel %vm3080, %v7538, %v7539
      %v7541 = vrot.slane %v7448, 1
      %v7542 = vsel %vm3080, %v7539, %v7541
      %v7543 = vrot.slane %v7431, 1
      %v7544 = vrot.slane %v7345, 1
      %v7545 = vsel %vm3080, %v7543, %v7544
      %v7546 = vrot.slane %v7449, 1
      %v7547 = vsel %vm3080, %v7544, %v7546
      %v7548 = vrot.slane %v7432, 1
      %v7549 = vrot.slane %v7348, 1
      %v7550 = vsel %vm3080, %v7548, %v7549
      %v7551 = vrot.slane %v7450, 1
      %v7552 = vsel %vm3080, %v7549, %v7551
      %v7553 = vrot.slane %v7433, 1
      %v7554 = vrot.slane %v7351, 1
      %v7555 = vsel %vm3080, %v7553, %v7554
      %v7556 = vrot.slane %v7451, 1
      %v7557 = vsel %vm3080, %v7554, %v7556
      %v7558 = vrot.slane %v7434, 1
      %v7559 = vrot.slane %v7354, 1
      %v7560 = vsel %vm3080, %v7558, %v7559
      %v7561 = vrot.slane %v7452, 1
      %v7562 = vsel %vm3080, %v7559, %v7561
      %v7563 = vrot.slane %v7435, 1
      %v7564 = vrot.slane %v7357, 1
      %v7565 = vsel %vm3080, %v7563, %v7564
      %v7566 = vrot.slane %v7453, 1
      %v7567 = vsel %vm3080, %v7564, %v7566
      %v7568 = vrot.slane %v7436, 1
      %v7569 = vrot.slane %v7360, 1
      %v7570 = vsel %vm3080, %v7568, %v7569
      %v7571 = vrot.slane %v7454, 1
      %v7572 = vsel %vm3080, %v7569, %v7571
      %v7573 = vrot.slane %v7437, 1
      %v7574 = vrot.slane %v7363, 1
      %v7575 = vsel %vm3080, %v7573, %v7574
      %v7576 = vrot.slane %v7455, 1
      %v7577 = vsel %vm3080, %v7574, %v7576
      %v7578 = vrot.slane %v7438, 1
      %v7579 = vrot.slane %v7366, 1
      %v7580 = vsel %vm3080, %v7578, %v7579
      %v7581 = vrot.slane %v7456, 1
      %v7582 = vsel %vm3080, %v7579, %v7581
      %7583 = vrot.lane.b32.xlu0 %v7495, 4
      %v7584 = vpop.permute.xlu0 %7583
      %7585 = vrot.lane.b32.xlu0 %v7497, 4
      %v7586 = vpop.permute.xlu0 %7585
      %7587 = vrot.lane.b32.xlu0 %v7500, 4
      %v7588 = vpop.permute.xlu0 %7587
      %7589 = vrot.lane.b32.xlu0 %v7502, 4
      %v7590 = vpop.permute.xlu0 %7589
      %7591 = vrot.lane.b32.xlu0 %v7505, 4
      %v7592 = vpop.permute.xlu0 %7591
      %7593 = vrot.lane.b32.xlu0 %v7507, 4
      %v7594 = vpop.permute.xlu0 %7593
      %7595 = vrot.lane.b32.xlu0 %v7510, 4
      %v7596 = vpop.permute.xlu0 %7595
      %7597 = vrot.lane.b32.xlu0 %v7512, 4
      %v7598 = vpop.permute.xlu0 %7597
      %7599 = vrot.lane.b32.xlu0 %v7515, 4
      %v7600 = vpop.permute.xlu0 %7599
      %7601 = vrot.lane.b32.xlu0 %v7517, 4
      %v7602 = vpop.permute.xlu0 %7601
      %7603 = vrot.lane.b32.xlu0 %v7520, 4
      %v7604 = vpop.permute.xlu0 %7603
      %7605 = vrot.lane.b32.xlu0 %v7522, 4
      %v7606 = vpop.permute.xlu0 %7605
      %7607 = vrot.lane.b32.xlu0 %v7525, 4
      %v7608 = vpop.permute.xlu0 %7607
      %7609 = vrot.lane.b32.xlu0 %v7527, 4
      %v7610 = vpop.permute.xlu0 %7609
      %7611 = vrot.lane.b32.xlu0 %v7530, 4
      %v7612 = vpop.permute.xlu0 %7611
      %7613 = vrot.lane.b32.xlu0 %v7532, 4
      %v7614 = vpop.permute.xlu0 %7613
      %7615 = vrot.lane.b32.xlu0 %v7535, 4
      %v7616 = vpop.permute.xlu0 %7615
      %7617 = vrot.lane.b32.xlu0 %v7537, 4
      %v7618 = vpop.permute.xlu0 %7617
      %7619 = vrot.lane.b32.xlu0 %v7540, 4
      %v7620 = vpop.permute.xlu0 %7619
      %7621 = vrot.lane.b32.xlu0 %v7542, 4
      %v7622 = vpop.permute.xlu0 %7621
      %7623 = vrot.lane.b32.xlu0 %v7545, 4
      %v7624 = vpop.permute.xlu0 %7623
      %7625 = vrot.lane.b32.xlu0 %v7547, 4
      %v7626 = vpop.permute.xlu0 %7625
      %7627 = vrot.lane.b32.xlu0 %v7550, 4
      %v7628 = vpop.permute.xlu0 %7627
      %7629 = vrot.lane.b32.xlu0 %v7552, 4
      %v7630 = vpop.permute.xlu0 %7629
      %7631 = vrot.lane.b32.xlu0 %v7555, 4
      %v7632 = vpop.permute.xlu0 %7631
      %7633 = vrot.lane.b32.xlu0 %v7557, 4
      %v7634 = vpop.permute.xlu0 %7633
      %7635 = vrot.lane.b32.xlu0 %v7560, 4
      %v7636 = vpop.permute.xlu0 %7635
      %7637 = vrot.lane.b32.xlu0 %v7562, 4
      %v7638 = vpop.permute.xlu0 %7637
      %7639 = vrot.lane.b32.xlu0 %v7565, 4
      %v7640 = vpop.permute.xlu0 %7639
      %7641 = vrot.lane.b32.xlu0 %v7567, 4
      %v7642 = vpop.permute.xlu0 %7641
      %7643 = vrot.lane.b32.xlu0 %v7570, 4
      %v7644 = vpop.permute.xlu0 %7643
      %7645 = vrot.lane.b32.xlu0 %v7572, 4
      %v7646 = vpop.permute.xlu0 %7645
      %7647 = vrot.lane.b32.xlu0 %v7575, 4
      %v7648 = vpop.permute.xlu0 %7647
      %7649 = vrot.lane.b32.xlu0 %v7577, 4
      %v7650 = vpop.permute.xlu0 %7649
      %7651 = vrot.lane.b32.xlu0 %v7580, 4
      %v7652 = vpop.permute.xlu0 %7651
      %7653 = vrot.lane.b32.xlu0 %v7582, 4
      %v7654 = vpop.permute.xlu0 %7653
      %v7691 = vrot.slane %v7421, 2
      %v7692 = vrot.slane %v7315, 2
      %v7693 = vsel %vm3301, %v7691, %v7692
      %v7694 = vrot.slane %v7439, 2
      %v7695 = vsel %vm3301, %v7692, %v7694
      %v7696 = vrot.slane %v7422, 2
      %v7697 = vrot.slane %v7318, 2
      %v7698 = vsel %vm3301, %v7696, %v7697
      %v7699 = vrot.slane %v7440, 2
      %v7700 = vsel %vm3301, %v7697, %v7699
      %v7701 = vrot.slane %v7423, 2
      %v7702 = vrot.slane %v7321, 2
      %v7703 = vsel %vm3301, %v7701, %v7702
      %v7704 = vrot.slane %v7441, 2
      %v7705 = vsel %vm3301, %v7702, %v7704
      %v7706 = vrot.slane %v7424, 2
      %v7707 = vrot.slane %v7324, 2
      %v7708 = vsel %vm3301, %v7706, %v7707
      %v7709 = vrot.slane %v7442, 2
      %v7710 = vsel %vm3301, %v7707, %v7709
      %v7711 = vrot.slane %v7425, 2
      %v7712 = vrot.slane %v7327, 2
      %v7713 = vsel %vm3301, %v7711, %v7712
      %v7714 = vrot.slane %v7443, 2
      %v7715 = vsel %vm3301, %v7712, %v7714
      %v7716 = vrot.slane %v7426, 2
      %v7717 = vrot.slane %v7330, 2
      %v7718 = vsel %vm3301, %v7716, %v7717
      %v7719 = vrot.slane %v7444, 2
      %v7720 = vsel %vm3301, %v7717, %v7719
      %v7721 = vrot.slane %v7427, 2
      %v7722 = vrot.slane %v7333, 2
      %v7723 = vsel %vm3301, %v7721, %v7722
      %v7724 = vrot.slane %v7445, 2
      %v7725 = vsel %vm3301, %v7722, %v7724
      %v7726 = vrot.slane %v7428, 2
      %v7727 = vrot.slane %v7336, 2
      %v7728 = vsel %vm3301, %v7726, %v7727
      %v7729 = vrot.slane %v7446, 2
      %v7730 = vsel %vm3301, %v7727, %v7729
      %v7731 = vrot.slane %v7429, 2
      %v7732 = vrot.slane %v7339, 2
      %v7733 = vsel %vm3301, %v7731, %v7732
      %v7734 = vrot.slane %v7447, 2
      %v7735 = vsel %vm3301, %v7732, %v7734
      %v7736 = vrot.slane %v7430, 2
      %v7737 = vrot.slane %v7342, 2
      %v7738 = vsel %vm3301, %v7736, %v7737
      %v7739 = vrot.slane %v7448, 2
      %v7740 = vsel %vm3301, %v7737, %v7739
      %v7741 = vrot.slane %v7431, 2
      %v7742 = vrot.slane %v7345, 2
      %v7743 = vsel %vm3301, %v7741, %v7742
      %v7744 = vrot.slane %v7449, 2
      %v7745 = vsel %vm3301, %v7742, %v7744
      %v7746 = vrot.slane %v7432, 2
      %v7747 = vrot.slane %v7348, 2
      %v7748 = vsel %vm3301, %v7746, %v7747
      %v7749 = vrot.slane %v7450, 2
      %v7750 = vsel %vm3301, %v7747, %v7749
      %v7751 = vrot.slane %v7433, 2
      %v7752 = vrot.slane %v7351, 2
      %v7753 = vsel %vm3301, %v7751, %v7752
      %v7754 = vrot.slane %v7451, 2
      %v7755 = vsel %vm3301, %v7752, %v7754
      %v7756 = vrot.slane %v7434, 2
      %v7757 = vrot.slane %v7354, 2
      %v7758 = vsel %vm3301, %v7756, %v7757
      %v7759 = vrot.slane %v7452, 2
      %v7760 = vsel %vm3301, %v7757, %v7759
      %v7761 = vrot.slane %v7435, 2
      %v7762 = vrot.slane %v7357, 2
      %v7763 = vsel %vm3301, %v7761, %v7762
      %v7764 = vrot.slane %v7453, 2
      %v7765 = vsel %vm3301, %v7762, %v7764
      %v7766 = vrot.slane %v7436, 2
      %v7767 = vrot.slane %v7360, 2
      %v7768 = vsel %vm3301, %v7766, %v7767
      %v7769 = vrot.slane %v7454, 2
      %v7770 = vsel %vm3301, %v7767, %v7769
      %v7771 = vrot.slane %v7437, 2
      %v7772 = vrot.slane %v7363, 2
      %v7773 = vsel %vm3301, %v7771, %v7772
      %v7774 = vrot.slane %v7455, 2
      %v7775 = vsel %vm3301, %v7772, %v7774
      %v7776 = vrot.slane %v7438, 2
      %v7777 = vrot.slane %v7366, 2
      %v7778 = vsel %vm3301, %v7776, %v7777
      %v7779 = vrot.slane %v7456, 2
      %v7780 = vsel %vm3301, %v7777, %v7779
      %7781 = vrot.lane.b32.xlu0 %v7693, 8
      %v7782 = vpop.permute.xlu0 %7781
      %7783 = vrot.lane.b32.xlu0 %v7695, 8
      %v7784 = vpop.permute.xlu0 %7783
      %7785 = vrot.lane.b32.xlu0 %v7698, 8
      %v7786 = vpop.permute.xlu0 %7785
      %7787 = vrot.lane.b32.xlu0 %v7700, 8
      %v7788 = vpop.permute.xlu0 %7787
      %7789 = vrot.lane.b32.xlu0 %v7703, 8
      %v7790 = vpop.permute.xlu0 %7789
      %7791 = vrot.lane.b32.xlu0 %v7705, 8
      %v7792 = vpop.permute.xlu0 %7791
      %7793 = vrot.lane.b32.xlu0 %v7708, 8
      %v7794 = vpop.permute.xlu0 %7793
      %7795 = vrot.lane.b32.xlu0 %v7710, 8
      %v7796 = vpop.permute.xlu0 %7795
      %7797 = vrot.lane.b32.xlu0 %v7713, 8
      %v7798 = vpop.permute.xlu0 %7797
      %7799 = vrot.lane.b32.xlu0 %v7715, 8
      %v7800 = vpop.permute.xlu0 %7799
      %7801 = vrot.lane.b32.xlu0 %v7718, 8
      %v7802 = vpop.permute.xlu0 %7801
      %7803 = vrot.lane.b32.xlu0 %v7720, 8
      %v7804 = vpop.permute.xlu0 %7803
      %7805 = vrot.lane.b32.xlu0 %v7723, 8
      %v7806 = vpop.permute.xlu0 %7805
      %7807 = vrot.lane.b32.xlu0 %v7725, 8
      %v7808 = vpop.permute.xlu0 %7807
      %7809 = vrot.lane.b32.xlu0 %v7728, 8
      %v7810 = vpop.permute.xlu0 %7809
      %7811 = vrot.lane.b32.xlu0 %v7730, 8
      %v7812 = vpop.permute.xlu0 %7811
      %7813 = vrot.lane.b32.xlu0 %v7733, 8
      %v7814 = vpop.permute.xlu0 %7813
      %7815 = vrot.lane.b32.xlu0 %v7735, 8
      %v7816 = vpop.permute.xlu0 %7815
      %7817 = vrot.lane.b32.xlu0 %v7738, 8
      %v7818 = vpop.permute.xlu0 %7817
      %7819 = vrot.lane.b32.xlu0 %v7740, 8
      %v7820 = vpop.permute.xlu0 %7819
      %7821 = vrot.lane.b32.xlu0 %v7743, 8
      %v7822 = vpop.permute.xlu0 %7821
      %7823 = vrot.lane.b32.xlu0 %v7745, 8
      %v7824 = vpop.permute.xlu0 %7823
      %7825 = vrot.lane.b32.xlu0 %v7748, 8
      %v7826 = vpop.permute.xlu0 %7825
      %7827 = vrot.lane.b32.xlu0 %v7750, 8
      %v7828 = vpop.permute.xlu0 %7827
      %7829 = vrot.lane.b32.xlu0 %v7753, 8
      %v7830 = vpop.permute.xlu0 %7829
      %7831 = vrot.lane.b32.xlu0 %v7755, 8
      %v7832 = vpop.permute.xlu0 %7831
      %7833 = vrot.lane.b32.xlu0 %v7758, 8
      %v7834 = vpop.permute.xlu0 %7833
      %7835 = vrot.lane.b32.xlu0 %v7760, 8
      %v7836 = vpop.permute.xlu0 %7835
      %7837 = vrot.lane.b32.xlu0 %v7763, 8
      %v7838 = vpop.permute.xlu0 %7837
      %7839 = vrot.lane.b32.xlu0 %v7765, 8
      %v7840 = vpop.permute.xlu0 %7839
      %7841 = vrot.lane.b32.xlu0 %v7768, 8
      %v7842 = vpop.permute.xlu0 %7841
      %7843 = vrot.lane.b32.xlu0 %v7770, 8
      %v7844 = vpop.permute.xlu0 %7843
      %7845 = vrot.lane.b32.xlu0 %v7773, 8
      %v7846 = vpop.permute.xlu0 %7845
      %7847 = vrot.lane.b32.xlu0 %v7775, 8
      %v7848 = vpop.permute.xlu0 %7847
      %7849 = vrot.lane.b32.xlu0 %v7778, 8
      %v7850 = vpop.permute.xlu0 %7849
      %7851 = vrot.lane.b32.xlu0 %v7780, 8
      %v7852 = vpop.permute.xlu0 %7851
      %v7889 = vsel %vm3522, %v7421, %v7584
      %v7890 = vsel %vm3522, %v7315, %v7586
      %v7891 = vsel %vm3522, %v7422, %v7588
      %v7892 = vsel %vm3522, %v7318, %v7590
      %v7893 = vsel %vm3522, %v7423, %v7592
      %v7894 = vsel %vm3522, %v7321, %v7594
      %v7895 = vsel %vm3522, %v7424, %v7596
      %v7896 = vsel %vm3522, %v7324, %v7598
      %v7897 = vsel %vm3522, %v7425, %v7600
      %v7898 = vsel %vm3522, %v7327, %v7602
      %v7899 = vsel %vm3522, %v7426, %v7604
      %v7900 = vsel %vm3522, %v7330, %v7606
      %v7901 = vsel %vm3522, %v7427, %v7608
      %v7902 = vsel %vm3522, %v7333, %v7610
      %v7903 = vsel %vm3522, %v7428, %v7612
      %v7904 = vsel %vm3522, %v7336, %v7614
      %v7905 = vsel %vm3522, %v7429, %v7616
      %v7906 = vsel %vm3522, %v7339, %v7618
      %v7907 = vsel %vm3522, %v7430, %v7620
      %v7908 = vsel %vm3522, %v7342, %v7622
      %v7909 = vsel %vm3522, %v7431, %v7624
      %v7910 = vsel %vm3522, %v7345, %v7626
      %v7911 = vsel %vm3522, %v7432, %v7628
      %v7912 = vsel %vm3522, %v7348, %v7630
      %v7913 = vsel %vm3522, %v7433, %v7632
      %v7914 = vsel %vm3522, %v7351, %v7634
      %v7915 = vsel %vm3522, %v7434, %v7636
      %v7916 = vsel %vm3522, %v7354, %v7638
      %v7917 = vsel %vm3522, %v7435, %v7640
      %v7918 = vsel %vm3522, %v7357, %v7642
      %v7919 = vsel %vm3522, %v7436, %v7644
      %v7920 = vsel %vm3522, %v7360, %v7646
      %v7921 = vsel %vm3522, %v7437, %v7648
      %v7922 = vsel %vm3522, %v7363, %v7650
      %v7923 = vsel %vm3522, %v7438, %v7652
      %v7924 = vsel %vm3522, %v7366, %v7654
      %v7925 = vsel %vm792, %v7889, %v7782
      %v7926 = vsel %vm792, %v7890, %v7784
      %v7927 = vsel %vm792, %v7891, %v7786
      %v7928 = vsel %vm792, %v7892, %v7788
      %v7929 = vsel %vm792, %v7893, %v7790
      %v7930 = vsel %vm792, %v7894, %v7792
      %v7931 = vsel %vm792, %v7895, %v7794
      %v7932 = vsel %vm792, %v7896, %v7796
      %v7933 = vsel %vm792, %v7897, %v7798
      %v7934 = vsel %vm792, %v7898, %v7800
      %v7935 = vsel %vm792, %v7899, %v7802
      %v7936 = vsel %vm792, %v7900, %v7804
      %v7937 = vsel %vm792, %v7901, %v7806
      %v7938 = vsel %vm792, %v7902, %v7808
      %v7939 = vsel %vm792, %v7903, %v7810
      %v7940 = vsel %vm792, %v7904, %v7812
      %v7941 = vsel %vm792, %v7905, %v7814
      %v7942 = vsel %vm792, %v7906, %v7816
      %v7943 = vsel %vm792, %v7907, %v7818
      %v7944 = vsel %vm792, %v7908, %v7820
      %v7945 = vsel %vm792, %v7909, %v7822
      %v7946 = vsel %vm792, %v7910, %v7824
      %v7947 = vsel %vm792, %v7911, %v7826
      %v7948 = vsel %vm792, %v7912, %v7828
      %v7949 = vsel %vm792, %v7913, %v7830
      %v7950 = vsel %vm792, %v7914, %v7832
      %v7951 = vsel %vm792, %v7915, %v7834
      %v7952 = vsel %vm792, %v7916, %v7836
      %v7953 = vsel %vm792, %v7917, %v7838
      %v7954 = vsel %vm792, %v7918, %v7840
      %v7955 = vsel %vm792, %v7919, %v7842
      %v7956 = vsel %vm792, %v7920, %v7844
      %v7957 = vsel %vm792, %v7921, %v7846
      %v7958 = vsel %vm792, %v7922, %v7848
      %v7959 = vsel %vm792, %v7923, %v7850
      %v7960 = vsel %vm792, %v7924, %v7852
      %v7961 = vld [vmem:[%s11] sm:$0xff]
      %v7962 = vld [vmem:[%s11 + $0x8] sm:$0xf]
      %s7963 = scalar_lea.vmem %s11, 16
      %v7964 = vld [vmem:[%s7963] sm:$0xff]
      %v7965 = vld [vmem:[%s7963 + $0x8] sm:$0xf]
      %v7967 = vsel %vm5167, %v7927, 0
      %v7970 = vsel %vm5167, %v7928, 0
      %v7973 = vsel %vm5167, %v7929, 0
      %v7976 = vsel %vm5167, %v7930, 0
      %v7979 = vsel %vm5167, %v7931, 0
      %v7982 = vsel %vm5167, %v7932, 0
      %v7985 = vsel %vm5167, %v7933, 0
      %v7988 = vsel %vm5167, %v7934, 0
      %v7991 = vsel %vm5167, %v7935, 0
      %v7994 = vsel %vm5167, %v7936, 0
      %v7997 = vsel %vm5167, %v7937, 0
      %v8000 = vsel %vm5167, %v7938, 0
      %v8003 = vsel %vm5167, %v7939, 0
      %v8006 = vsel %vm5167, %v7940, 0
      %v8009 = vsel %vm5167, %v7941, 0
      %v8012 = vsel %vm5167, %v7942, 0
      %v8015 = vsel %vm5167, %v7943, 0
      %v8018 = vsel %vm5167, %v7944, 0
      %v8021 = vsel %vm5167, %v7945, 0
      %v8024 = vsel %vm5167, %v7946, 0
      %v8027 = vsel %vm5167, %v7947, 0
      %v8030 = vsel %vm5167, %v7948, 0
      %v8033 = vsel %vm5167, %v7949, 0
      %v8036 = vsel %vm5167, %v7950, 0
      %v8039 = vsel %vm5167, %v7951, 0
      %v8042 = vsel %vm5167, %v7952, 0
      %v8045 = vsel %vm5167, %v7953, 0
      %v8048 = vsel %vm5167, %v7954, 0
      %v8051 = vsel %vm5167, %v7955, 0
      %v8054 = vsel %vm5167, %v7956, 0
      %v8057 = vsel %vm5167, %v7957, 0
      %v8060 = vsel %vm5167, %v7958, 0
      %v8063 = vsel %vm5276, %v7965, 0
      %8065 = vmatprep.subr.mxu0 0.0
      %8066 = vmatpush1.msra.mxu0 0.0
      %8067 = vmatprep.subr.mxu0 0.0
      %8068 = vmatpush1.msra.mxu0 0.0
      %8069 = vmatprep.subr.mxu0 0.0
      %8070 = vmatpush1.msra.mxu0 0.0
      %8071 = vmatprep.subr.mxu0 0.0
      %8072 = vmatpush1.msra.mxu0 0.0
      %8073 = vmatprep.subr.mxu0 0.0
      %8074 = vmatpush1.msra.mxu0 0.0
      %8075 = vmatprep.subr.mxu0 0.0
      %8076 = vmatpush1.msra.mxu0 0.0
      %8077 = vmatprep.subr.mxu0 0.0
      %8078 = vmatpush1.msra.mxu0 0.0
      %8079 = vmatprep.subr.mxu0 0.0
      %8080 = vmatpush1.msra.mxu0 0.0
      %8081 = vmatprep.subr.mxu0 0.0
      %8082 = vmatpush1.msra.mxu0 0.0
      %8083 = vmatprep.subr.mxu0 0.0
      %8084 = vmatpush1.msra.mxu0 0.0
      %8085 = vmatprep.subr.mxu0 0.0
      %8086 = vmatpush1.msra.mxu0 0.0
      %8087 = vmatprep.subr.mxu0 0.0
      %8088 = vmatpush1.msra.mxu0 0.0
      %8089 = vmatprep.subr.mxu0 0.0
      %8090 = vmatpush1.msra.mxu0 0.0
      %8091 = vmatprep.subr.mxu0 0.0
      %8092 = vmatpush1.msra.mxu0 0.0
      %8093 = vmatprep.subr.mxu0 0.0
      %8094 = vmatpush1.msra.mxu0 %v8063
      %8095 = vmatprep.subr.mxu0 0.0
      %8096 = vmatpush1.msra.mxu0 %v7964
      %8097 = vmatprep.subr.mxu0 0.0
      %8098 = vmatpush2.msra.mxu0 0.0
      %8099 = vmatprep.subr.mxu0 0.0
      %8100 = vmatpush2.msra.mxu0 0.0
      %8101 = vmatprep.subr.mxu0 0.0
      %8102 = vmatpush2.msra.mxu0 0.0
      %8103 = vmatprep.subr.mxu0 0.0
      %8104 = vmatpush2.msra.mxu0 0.0
      %8105 = vmatprep.subr.mxu0 0.0
      %8106 = vmatpush2.msra.mxu0 0.0
      %8107 = vmatprep.subr.mxu0 0.0
      %8108 = vmatpush2.msra.mxu0 0.0
      %8109 = vmatprep.subr.mxu0 0.0
      %8110 = vmatpush2.msra.mxu0 0.0
      %8111 = vmatprep.subr.mxu0 0.0
      %8112 = vmatpush2.msra.mxu0 0.0
      %8113 = vmatprep.subr.mxu0 0.0
      %8114 = vmatpush2.msra.mxu0 0.0
      %8115 = vmatprep.subr.mxu0 0.0
      %8116 = vmatpush2.msra.mxu0 0.0
      %8117 = vmatprep.subr.mxu0 0.0
      %8118 = vmatpush2.msra.mxu0 0.0
      %8119 = vmatprep.subr.mxu0 0.0
      %8120 = vmatpush2.msra.mxu0 0.0
      %8121 = vmatprep.subr.mxu0 0.0
      %8122 = vmatpush2.msra.mxu0 0.0
      %8123 = vmatprep.subr.mxu0 0.0
      %8124 = vmatpush2.msra.mxu0 0.0
      %8125 = vmatprep.subr.mxu0 0.0
      %8126 = vmatpush2.msra.mxu0 0.0
      %8127 = vmatprep.subr.mxu0 0.0
      %8128 = vmatpush2.msra.mxu0 0.0
      %8129 = vmatprep.mubr.f32.mxu0 0.0
      %8130 = vmatmul.mubr.f32.gmra.mxu0 %v7967
      %v8131 = vpop.f32.mrf.mxu0
      %v8132 = vadd.f32 0.0, %v8131
      %v8133 = vpop.f32.mrf.mxu0
      %8134 = vmatprep.mubr.f32.mxu0 0.0
      %8135 = vmatmul.mubr.f32.gmra.mxu0 %v7970
      %v8136 = vpop.f32.mrf.mxu0
      %v8137 = vadd.f32 0.0, %v8136
      %v8138 = vpop.f32.mrf.mxu0
      %8139 = vmatprep.mubr.f32.mxu0 0.0
      %8140 = vmatmul.mubr.f32.gmra.mxu0 %v7973
      %v8141 = vpop.f32.mrf.mxu0
      %v8142 = vadd.f32 0.0, %v8141
      %v8143 = vpop.f32.mrf.mxu0
      %8144 = vmatprep.mubr.f32.mxu0 0.0
      %8145 = vmatmul.mubr.f32.gmra.mxu0 %v7976
      %v8146 = vpop.f32.mrf.mxu0
      %v8147 = vadd.f32 0.0, %v8146
      %v8148 = vpop.f32.mrf.mxu0
      %8149 = vmatprep.mubr.f32.mxu0 0.0
      %8150 = vmatmul.mubr.f32.gmra.mxu0 %v7979
      %v8151 = vpop.f32.mrf.mxu0
      %v8152 = vadd.f32 0.0, %v8151
      %v8153 = vpop.f32.mrf.mxu0
      %8154 = vmatprep.mubr.f32.mxu0 0.0
      %8155 = vmatmul.mubr.f32.gmra.mxu0 %v7982
      %v8156 = vpop.f32.mrf.mxu0
      %v8157 = vadd.f32 0.0, %v8156
      %v8158 = vpop.f32.mrf.mxu0
      %8159 = vmatprep.mubr.f32.mxu0 0.0
      %8160 = vmatmul.mubr.f32.gmra.mxu0 %v7985
      %v8161 = vpop.f32.mrf.mxu0
      %v8162 = vadd.f32 0.0, %v8161
      %v8163 = vpop.f32.mrf.mxu0
      %8164 = vmatprep.mubr.f32.mxu0 0.0
      %8165 = vmatmul.mubr.f32.gmra.mxu0 %v7988
      %v8166 = vpop.f32.mrf.mxu0
      %v8167 = vadd.f32 0.0, %v8166
      %v8168 = vpop.f32.mrf.mxu0
      %8169 = vmatprep.mubr.f32.mxu0 0.0
      %8170 = vmatmul.mubr.f32.gmra.mxu0 %v7991
      %v8171 = vpop.f32.mrf.mxu0
      %v8172 = vadd.f32 0.0, %v8171
      %v8173 = vpop.f32.mrf.mxu0
      %8174 = vmatprep.mubr.f32.mxu0 0.0
      %8175 = vmatmul.mubr.f32.gmra.mxu0 %v7994
      %v8176 = vpop.f32.mrf.mxu0
      %v8177 = vadd.f32 0.0, %v8176
      %v8178 = vpop.f32.mrf.mxu0
      %8179 = vmatprep.mubr.f32.mxu0 0.0
      %8180 = vmatmul.mubr.f32.gmra.mxu0 %v7997
      %v8181 = vpop.f32.mrf.mxu0
      %v8182 = vadd.f32 0.0, %v8181
      %v8183 = vpop.f32.mrf.mxu0
      %8184 = vmatprep.mubr.f32.mxu0 0.0
      %8185 = vmatmul.mubr.f32.gmra.mxu0 %v8000
      %v8186 = vpop.f32.mrf.mxu0
      %v8187 = vadd.f32 0.0, %v8186
      %v8188 = vpop.f32.mrf.mxu0
      %8189 = vmatprep.mubr.f32.mxu0 0.0
      %8190 = vmatmul.mubr.f32.gmra.mxu0 %v8003
      %v8191 = vpop.f32.mrf.mxu0
      %v8192 = vadd.f32 0.0, %v8191
      %v8193 = vpop.f32.mrf.mxu0
      %8194 = vmatprep.mubr.f32.mxu0 0.0
      %8195 = vmatmul.mubr.f32.gmra.mxu0 %v8006
      %v8196 = vpop.f32.mrf.mxu0
      %v8197 = vadd.f32 0.0, %v8196
      %v8198 = vpop.f32.mrf.mxu0
      %8199 = vmatprep.mubr.f32.mxu0 0.0
      %8200 = vmatmul.mubr.f32.gmra.mxu0 %v8009
      %v8201 = vpop.f32.mrf.mxu0
      %v8202 = vadd.f32 0.0, %v8201
      %v8203 = vpop.f32.mrf.mxu0
      %8204 = vmatprep.mubr.f32.mxu0 0.0
      %8205 = vmatmul.mubr.f32.gmra.mxu0 %v8012
      %v8206 = vpop.f32.mrf.mxu0
      %v8207 = vadd.f32 0.0, %v8206
      %v8208 = vpop.f32.mrf.mxu0
      %8209 = vmatprep.mubr.f32.mxu0 0.0
      %8210 = vmatmul.mubr.f32.gmra.mxu0 %v8015
      %v8211 = vpop.f32.mrf.mxu0
      %v8212 = vadd.f32 0.0, %v8211
      %v8213 = vpop.f32.mrf.mxu0
      %8214 = vmatprep.mubr.f32.mxu0 0.0
      %8215 = vmatmul.mubr.f32.gmra.mxu0 %v8018
      %v8216 = vpop.f32.mrf.mxu0
      %v8217 = vadd.f32 0.0, %v8216
      %v8218 = vpop.f32.mrf.mxu0
      %8219 = vmatprep.mubr.f32.mxu0 0.0
      %8220 = vmatmul.mubr.f32.gmra.mxu0 %v8021
      %v8221 = vpop.f32.mrf.mxu0
      %v8222 = vadd.f32 0.0, %v8221
      %v8223 = vpop.f32.mrf.mxu0
      %8224 = vmatprep.mubr.f32.mxu0 0.0
      %8225 = vmatmul.mubr.f32.gmra.mxu0 %v8024
      %v8226 = vpop.f32.mrf.mxu0
      %v8227 = vadd.f32 0.0, %v8226
      %v8228 = vpop.f32.mrf.mxu0
      %8229 = vmatprep.mubr.f32.mxu0 0.0
      %8230 = vmatmul.mubr.f32.gmra.mxu0 %v8027
      %v8231 = vpop.f32.mrf.mxu0
      %v8232 = vadd.f32 0.0, %v8231
      %v8233 = vpop.f32.mrf.mxu0
      %8234 = vmatprep.mubr.f32.mxu0 0.0
      %8235 = vmatmul.mubr.f32.gmra.mxu0 %v8030
      %v8236 = vpop.f32.mrf.mxu0
      %v8237 = vadd.f32 0.0, %v8236
      %v8238 = vpop.f32.mrf.mxu0
      %8239 = vmatprep.mubr.f32.mxu0 0.0
      %8240 = vmatmul.mubr.f32.gmra.mxu0 %v8033
      %v8241 = vpop.f32.mrf.mxu0
      %v8242 = vadd.f32 0.0, %v8241
      %v8243 = vpop.f32.mrf.mxu0
      %8244 = vmatprep.mubr.f32.mxu0 0.0
      %8245 = vmatmul.mubr.f32.gmra.mxu0 %v8036
      %v8246 = vpop.f32.mrf.mxu0
      %v8247 = vadd.f32 0.0, %v8246
      %v8248 = vpop.f32.mrf.mxu0
      %8249 = vmatprep.mubr.f32.mxu0 0.0
      %8250 = vmatmul.mubr.f32.gmra.mxu0 %v8039
      %v8251 = vpop.f32.mrf.mxu0
      %v8252 = vadd.f32 0.0, %v8251
      %v8253 = vpop.f32.mrf.mxu0
      %8254 = vmatprep.mubr.f32.mxu0 0.0
      %8255 = vmatmul.mubr.f32.gmra.mxu0 %v8042
      %v8256 = vpop.f32.mrf.mxu0
      %v8257 = vadd.f32 0.0, %v8256
      %v8258 = vpop.f32.mrf.mxu0
      %8259 = vmatprep.mubr.f32.mxu0 0.0
      %8260 = vmatmul.mubr.f32.gmra.mxu0 %v8045
      %v8261 = vpop.f32.mrf.mxu0
      %v8262 = vadd.f32 0.0, %v8261
      %v8263 = vpop.f32.mrf.mxu0
      %8264 = vmatprep.mubr.f32.mxu0 0.0
      %8265 = vmatmul.mubr.f32.gmra.mxu0 %v8048
      %v8266 = vpop.f32.mrf.mxu0
      %v8267 = vadd.f32 0.0, %v8266
      %v8268 = vpop.f32.mrf.mxu0
      %8269 = vmatprep.mubr.f32.mxu0 0.0
      %8270 = vmatmul.mubr.f32.gmra.mxu0 %v8051
      %v8271 = vpop.f32.mrf.mxu0
      %v8272 = vadd.f32 0.0, %v8271
      %v8273 = vpop.f32.mrf.mxu0
      %8274 = vmatprep.mubr.f32.mxu0 0.0
      %8275 = vmatmul.mubr.f32.gmra.mxu0 %v8054
      %v8276 = vpop.f32.mrf.mxu0
      %v8277 = vadd.f32 0.0, %v8276
      %v8278 = vpop.f32.mrf.mxu0
      %8279 = vmatprep.mubr.f32.mxu0 0.0
      %8280 = vmatmul.mubr.f32.gmra.mxu0 %v8057
      %v8281 = vpop.f32.mrf.mxu0
      %v8282 = vadd.f32 0.0, %v8281
      %v8283 = vpop.f32.mrf.mxu0
      %8284 = vmatprep.mubr.f32.mxu0 0.0
      %8285 = vmatmul.mubr.f32.gmra.mxu0 %v8060
      %v8286 = vpop.f32.mrf.mxu0
      %v8287 = vadd.f32 0.0, %v8286
      %v8288 = vpop.f32.mrf.mxu0
      %8289 = vdwg.mxu0
      %v8291 = vsel %vm5167, %v7925, 0
      %v8294 = vsel %vm5167, %v7926, 0
      %v8297 = vsel %vm5276, %v7962, 0
      %8299 = vmatprep.subr.mxu0 0.0
      %8300 = vmatpush1.msra.mxu0 0.0
      %8301 = vmatprep.subr.mxu0 0.0
      %8302 = vmatpush1.msra.mxu0 0.0
      %8303 = vmatprep.subr.mxu0 0.0
      %8304 = vmatpush1.msra.mxu0 0.0
      %8305 = vmatprep.subr.mxu0 0.0
      %8306 = vmatpush1.msra.mxu0 0.0
      %8307 = vmatprep.subr.mxu0 0.0
      %8308 = vmatpush1.msra.mxu0 0.0
      %8309 = vmatprep.subr.mxu0 0.0
      %8310 = vmatpush1.msra.mxu0 0.0
      %8311 = vmatprep.subr.mxu0 0.0
      %8312 = vmatpush1.msra.mxu0 0.0
      %8313 = vmatprep.subr.mxu0 0.0
      %8314 = vmatpush1.msra.mxu0 0.0
      %8315 = vmatprep.subr.mxu0 0.0
      %8316 = vmatpush1.msra.mxu0 0.0
      %8317 = vmatprep.subr.mxu0 0.0
      %8318 = vmatpush1.msra.mxu0 0.0
      %8319 = vmatprep.subr.mxu0 0.0
      %8320 = vmatpush1.msra.mxu0 0.0
      %8321 = vmatprep.subr.mxu0 0.0
      %8322 = vmatpush1.msra.mxu0 0.0
      %8323 = vmatprep.subr.mxu0 0.0
      %8324 = vmatpush1.msra.mxu0 0.0
      %8325 = vmatprep.subr.mxu0 0.0
      %8326 = vmatpush1.msra.mxu0 0.0
      %8327 = vmatprep.subr.mxu0 0.0
      %8328 = vmatpush1.msra.mxu0 %v8297
      %8329 = vmatprep.subr.mxu0 0.0
      %8330 = vmatpush1.msra.mxu0 %v7961
      %8331 = vmatprep.subr.mxu0 0.0
      %8332 = vmatpush2.msra.mxu0 0.0
      %8333 = vmatprep.subr.mxu0 0.0
      %8334 = vmatpush2.msra.mxu0 0.0
      %8335 = vmatprep.subr.mxu0 0.0
      %8336 = vmatpush2.msra.mxu0 0.0
      %8337 = vmatprep.subr.mxu0 0.0
      %8338 = vmatpush2.msra.mxu0 0.0
      %8339 = vmatprep.subr.mxu0 0.0
      %8340 = vmatpush2.msra.mxu0 0.0
      %8341 = vmatprep.subr.mxu0 0.0
      %8342 = vmatpush2.msra.mxu0 0.0
      %8343 = vmatprep.subr.mxu0 0.0
      %8344 = vmatpush2.msra.mxu0 0.0
      %8345 = vmatprep.subr.mxu0 0.0
      %8346 = vmatpush2.msra.mxu0 0.0
      %8347 = vmatprep.subr.mxu0 0.0
      %8348 = vmatpush2.msra.mxu0 0.0
      %8349 = vmatprep.subr.mxu0 0.0
      %8350 = vmatpush2.msra.mxu0 0.0
      %8351 = vmatprep.subr.mxu0 0.0
      %8352 = vmatpush2.msra.mxu0 0.0
      %8353 = vmatprep.subr.mxu0 0.0
      %8354 = vmatpush2.msra.mxu0 0.0
      %8355 = vmatprep.subr.mxu0 0.0
      %8356 = vmatpush2.msra.mxu0 0.0
      %8357 = vmatprep.subr.mxu0 0.0
      %8358 = vmatpush2.msra.mxu0 0.0
      %8359 = vmatprep.subr.mxu0 0.0
      %8360 = vmatpush2.msra.mxu0 0.0
      %8361 = vmatprep.subr.mxu0 0.0
      %8362 = vmatpush2.msra.mxu0 0.0
      %8363 = vmatprep.mubr.f32.mxu0 0.0
      %8364 = vmatmul.mubr.f32.gmra.mxu0 %v8291
      %v8365 = vpop.f32.mrf.mxu0
      %v8366 = vadd.f32 %v8132, %v8365
      %v8367 = vpop.f32.mrf.mxu0
      %8368 = vmatprep.mubr.f32.mxu0 0.0
      %8369 = vmatmul.mubr.f32.gmra.mxu0 %v8294
      %v8370 = vpop.f32.mrf.mxu0
      %v8371 = vadd.f32 %v8137, %v8370
      %v8372 = vpop.f32.mrf.mxu0
      %8373 = vmatprep.mubr.f32.mxu0 0.0
      %8374 = vmatmul.mubr.f32.gmra.mxu0 %v7967
      %v8375 = vpop.f32.mrf.mxu0
      %v8376 = vadd.f32 %v8142, %v8375
      %v8377 = vpop.f32.mrf.mxu0
      %8378 = vmatprep.mubr.f32.mxu0 0.0
      %8379 = vmatmul.mubr.f32.gmra.mxu0 %v7970
      %v8380 = vpop.f32.mrf.mxu0
      %v8381 = vadd.f32 %v8147, %v8380
      %v8382 = vpop.f32.mrf.mxu0
      %8383 = vmatprep.mubr.f32.mxu0 0.0
      %8384 = vmatmul.mubr.f32.gmra.mxu0 %v7973
      %v8385 = vpop.f32.mrf.mxu0
      %v8386 = vadd.f32 %v8152, %v8385
      %v8387 = vpop.f32.mrf.mxu0
      %8388 = vmatprep.mubr.f32.mxu0 0.0
      %8389 = vmatmul.mubr.f32.gmra.mxu0 %v7976
      %v8390 = vpop.f32.mrf.mxu0
      %v8391 = vadd.f32 %v8157, %v8390
      %v8392 = vpop.f32.mrf.mxu0
      %8393 = vmatprep.mubr.f32.mxu0 0.0
      %8394 = vmatmul.mubr.f32.gmra.mxu0 %v7979
      %v8395 = vpop.f32.mrf.mxu0
      %v8396 = vadd.f32 %v8162, %v8395
      %v8397 = vpop.f32.mrf.mxu0
      %8398 = vmatprep.mubr.f32.mxu0 0.0
      %8399 = vmatmul.mubr.f32.gmra.mxu0 %v7982
      %v8400 = vpop.f32.mrf.mxu0
      %v8401 = vadd.f32 %v8167, %v8400
      %v8402 = vpop.f32.mrf.mxu0
      %8403 = vmatprep.mubr.f32.mxu0 0.0
      %8404 = vmatmul.mubr.f32.gmra.mxu0 %v7985
      %v8405 = vpop.f32.mrf.mxu0
      %v8406 = vadd.f32 %v8172, %v8405
      %v8407 = vpop.f32.mrf.mxu0
      %8408 = vmatprep.mubr.f32.mxu0 0.0
      %8409 = vmatmul.mubr.f32.gmra.mxu0 %v7988
      %v8410 = vpop.f32.mrf.mxu0
      %v8411 = vadd.f32 %v8177, %v8410
      %v8412 = vpop.f32.mrf.mxu0
      %8413 = vmatprep.mubr.f32.mxu0 0.0
      %8414 = vmatmul.mubr.f32.gmra.mxu0 %v7991
      %v8415 = vpop.f32.mrf.mxu0
      %v8416 = vadd.f32 %v8182, %v8415
      %v8417 = vpop.f32.mrf.mxu0
      %8418 = vmatprep.mubr.f32.mxu0 0.0
      %8419 = vmatmul.mubr.f32.gmra.mxu0 %v7994
      %v8420 = vpop.f32.mrf.mxu0
      %v8421 = vadd.f32 %v8187, %v8420
      %v8422 = vpop.f32.mrf.mxu0
      %8423 = vmatprep.mubr.f32.mxu0 0.0
      %8424 = vmatmul.mubr.f32.gmra.mxu0 %v7997
      %v8425 = vpop.f32.mrf.mxu0
      %v8426 = vadd.f32 %v8192, %v8425
      %v8427 = vpop.f32.mrf.mxu0
      %8428 = vmatprep.mubr.f32.mxu0 0.0
      %8429 = vmatmul.mubr.f32.gmra.mxu0 %v8000
      %v8430 = vpop.f32.mrf.mxu0
      %v8431 = vadd.f32 %v8197, %v8430
      %v8432 = vpop.f32.mrf.mxu0
      %8433 = vmatprep.mubr.f32.mxu0 0.0
      %8434 = vmatmul.mubr.f32.gmra.mxu0 %v8003
      %v8435 = vpop.f32.mrf.mxu0
      %v8436 = vadd.f32 %v8202, %v8435
      %v8437 = vpop.f32.mrf.mxu0
      %8438 = vmatprep.mubr.f32.mxu0 0.0
      %8439 = vmatmul.mubr.f32.gmra.mxu0 %v8006
      %v8440 = vpop.f32.mrf.mxu0
      %v8441 = vadd.f32 %v8207, %v8440
      %v8442 = vpop.f32.mrf.mxu0
      %8443 = vmatprep.mubr.f32.mxu0 0.0
      %8444 = vmatmul.mubr.f32.gmra.mxu0 %v8009
      %v8445 = vpop.f32.mrf.mxu0
      %v8446 = vadd.f32 %v8212, %v8445
      %v8447 = vpop.f32.mrf.mxu0
      %8448 = vmatprep.mubr.f32.mxu0 0.0
      %8449 = vmatmul.mubr.f32.gmra.mxu0 %v8012
      %v8450 = vpop.f32.mrf.mxu0
      %v8451 = vadd.f32 %v8217, %v8450
      %v8452 = vpop.f32.mrf.mxu0
      %8453 = vmatprep.mubr.f32.mxu0 0.0
      %8454 = vmatmul.mubr.f32.gmra.mxu0 %v8015
      %v8455 = vpop.f32.mrf.mxu0
      %v8456 = vadd.f32 %v8222, %v8455
      %v8457 = vpop.f32.mrf.mxu0
      %8458 = vmatprep.mubr.f32.mxu0 0.0
      %8459 = vmatmul.mubr.f32.gmra.mxu0 %v8018
      %v8460 = vpop.f32.mrf.mxu0
      %v8461 = vadd.f32 %v8227, %v8460
      %v8462 = vpop.f32.mrf.mxu0
      %8463 = vmatprep.mubr.f32.mxu0 0.0
      %8464 = vmatmul.mubr.f32.gmra.mxu0 %v8021
      %v8465 = vpop.f32.mrf.mxu0
      %v8466 = vadd.f32 %v8232, %v8465
      %v8467 = vpop.f32.mrf.mxu0
      %8468 = vmatprep.mubr.f32.mxu0 0.0
      %8469 = vmatmul.mubr.f32.gmra.mxu0 %v8024
      %v8470 = vpop.f32.mrf.mxu0
      %v8471 = vadd.f32 %v8237, %v8470
      %v8472 = vpop.f32.mrf.mxu0
      %8473 = vmatprep.mubr.f32.mxu0 0.0
      %8474 = vmatmul.mubr.f32.gmra.mxu0 %v8027
      %v8475 = vpop.f32.mrf.mxu0
      %v8476 = vadd.f32 %v8242, %v8475
      %v8477 = vpop.f32.mrf.mxu0
      %8478 = vmatprep.mubr.f32.mxu0 0.0
      %8479 = vmatmul.mubr.f32.gmra.mxu0 %v8030
      %v8480 = vpop.f32.mrf.mxu0
      %v8481 = vadd.f32 %v8247, %v8480
      %v8482 = vpop.f32.mrf.mxu0
      %8483 = vmatprep.mubr.f32.mxu0 0.0
      %8484 = vmatmul.mubr.f32.gmra.mxu0 %v8033
      %v8485 = vpop.f32.mrf.mxu0
      %v8486 = vadd.f32 %v8252, %v8485
      %v8487 = vpop.f32.mrf.mxu0
      %8488 = vmatprep.mubr.f32.mxu0 0.0
      %8489 = vmatmul.mubr.f32.gmra.mxu0 %v8036
      %v8490 = vpop.f32.mrf.mxu0
      %v8491 = vadd.f32 %v8257, %v8490
      %v8492 = vpop.f32.mrf.mxu0
      %8493 = vmatprep.mubr.f32.mxu0 0.0
      %8494 = vmatmul.mubr.f32.gmra.mxu0 %v8039
      %v8495 = vpop.f32.mrf.mxu0
      %v8496 = vadd.f32 %v8262, %v8495
      %v8497 = vpop.f32.mrf.mxu0
      %8498 = vmatprep.mubr.f32.mxu0 0.0
      %8499 = vmatmul.mubr.f32.gmra.mxu0 %v8042
      %v8500 = vpop.f32.mrf.mxu0
      %v8501 = vadd.f32 %v8267, %v8500
      %v8502 = vpop.f32.mrf.mxu0
      %8503 = vmatprep.mubr.f32.mxu0 0.0
      %8504 = vmatmul.mubr.f32.gmra.mxu0 %v8045
      %v8505 = vpop.f32.mrf.mxu0
      %v8506 = vadd.f32 %v8272, %v8505
      %v8507 = vpop.f32.mrf.mxu0
      %8508 = vmatprep.mubr.f32.mxu0 0.0
      %8509 = vmatmul.mubr.f32.gmra.mxu0 %v8048
      %v8510 = vpop.f32.mrf.mxu0
      %v8511 = vadd.f32 %v8277, %v8510
      %v8512 = vpop.f32.mrf.mxu0
      %8513 = vmatprep.mubr.f32.mxu0 0.0
      %8514 = vmatmul.mubr.f32.gmra.mxu0 %v8051
      %v8515 = vpop.f32.mrf.mxu0
      %v8516 = vadd.f32 %v8282, %v8515
      %v8517 = vpop.f32.mrf.mxu0
      %8518 = vmatprep.mubr.f32.mxu0 0.0
      %8519 = vmatmul.mubr.f32.gmra.mxu0 %v8054
      %v8520 = vpop.f32.mrf.mxu0
      %v8521 = vadd.f32 %v8287, %v8520
      %v8522 = vpop.f32.mrf.mxu0
      %8523 = vdwg.mxu0
      %s8524 = scalar_lea.vmem %s11, 32
      %v8525 = vld [vmem:[%s8524] sm:$0xff]
      %v8526 = vld [vmem:[%s8524 + $0x8] sm:$0xf]
      %v8528 = vsel %vm5167, %v7959, 0
      %v8531 = vsel %vm5167, %v7960, 0
      %v8534 = vsel %vm5276, %v8526, 0
      %8536 = vmatprep.subr.mxu0 0.0
      %8537 = vmatpush1.msra.mxu0 0.0
      %8538 = vmatprep.subr.mxu0 0.0
      %8539 = vmatpush1.msra.mxu0 0.0
      %8540 = vmatprep.subr.mxu0 0.0
      %8541 = vmatpush1.msra.mxu0 0.0
      %8542 = vmatprep.subr.mxu0 0.0
      %8543 = vmatpush1.msra.mxu0 0.0
      %8544 = vmatprep.subr.mxu0 0.0
      %8545 = vmatpush1.msra.mxu0 0.0
      %8546 = vmatprep.subr.mxu0 0.0
      %8547 = vmatpush1.msra.mxu0 0.0
      %8548 = vmatprep.subr.mxu0 0.0
      %8549 = vmatpush1.msra.mxu0 0.0
      %8550 = vmatprep.subr.mxu0 0.0
      %8551 = vmatpush1.msra.mxu0 0.0
      %8552 = vmatprep.subr.mxu0 0.0
      %8553 = vmatpush1.msra.mxu0 0.0
      %8554 = vmatprep.subr.mxu0 0.0
      %8555 = vmatpush1.msra.mxu0 0.0
      %8556 = vmatprep.subr.mxu0 0.0
      %8557 = vmatpush1.msra.mxu0 0.0
      %8558 = vmatprep.subr.mxu0 0.0
      %8559 = vmatpush1.msra.mxu0 0.0
      %8560 = vmatprep.subr.mxu0 0.0
      %8561 = vmatpush1.msra.mxu0 0.0
      %8562 = vmatprep.subr.mxu0 0.0
      %8563 = vmatpush1.msra.mxu0 0.0
      %8564 = vmatprep.subr.mxu0 0.0
      %8565 = vmatpush1.msra.mxu0 %v8534
      %8566 = vmatprep.subr.mxu0 0.0
      %8567 = vmatpush1.msra.mxu0 %v8525
      %8568 = vmatprep.subr.mxu0 0.0
      %8569 = vmatpush2.msra.mxu0 0.0
      %8570 = vmatprep.subr.mxu0 0.0
      %8571 = vmatpush2.msra.mxu0 0.0
      %8572 = vmatprep.subr.mxu0 0.0
      %8573 = vmatpush2.msra.mxu0 0.0
      %8574 = vmatprep.subr.mxu0 0.0
      %8575 = vmatpush2.msra.mxu0 0.0
      %8576 = vmatprep.subr.mxu0 0.0
      %8577 = vmatpush2.msra.mxu0 0.0
      %8578 = vmatprep.subr.mxu0 0.0
      %8579 = vmatpush2.msra.mxu0 0.0
      %8580 = vmatprep.subr.mxu0 0.0
      %8581 = vmatpush2.msra.mxu0 0.0
      %8582 = vmatprep.subr.mxu0 0.0
      %8583 = vmatpush2.msra.mxu0 0.0
      %8584 = vmatprep.subr.mxu0 0.0
      %8585 = vmatpush2.msra.mxu0 0.0
      %8586 = vmatprep.subr.mxu0 0.0
      %8587 = vmatpush2.msra.mxu0 0.0
      %8588 = vmatprep.subr.mxu0 0.0
      %8589 = vmatpush2.msra.mxu0 0.0
      %8590 = vmatprep.subr.mxu0 0.0
      %8591 = vmatpush2.msra.mxu0 0.0
      %8592 = vmatprep.subr.mxu0 0.0
      %8593 = vmatpush2.msra.mxu0 0.0
      %8594 = vmatprep.subr.mxu0 0.0
      %8595 = vmatpush2.msra.mxu0 0.0
      %8596 = vmatprep.subr.mxu0 0.0
      %8597 = vmatpush2.msra.mxu0 0.0
      %8598 = vmatprep.subr.mxu0 0.0
      %8599 = vmatpush2.msra.mxu0 0.0
      %8600 = vmatprep.mubr.f32.mxu0 0.0
      %8601 = vmatmul.mubr.f32.gmra.mxu0 %v7973
      %v8602 = vpop.f32.mrf.mxu0
      %v8603 = vadd.f32 0.0, %v8602
      %v8604 = vpop.f32.mrf.mxu0
      %8605 = vmatprep.mubr.f32.mxu0 0.0
      %8606 = vmatmul.mubr.f32.gmra.mxu0 %v7976
      %v8607 = vpop.f32.mrf.mxu0
      %v8608 = vadd.f32 0.0, %v8607
      %v8609 = vpop.f32.mrf.mxu0
      %8610 = vmatprep.mubr.f32.mxu0 0.0
      %8611 = vmatmul.mubr.f32.gmra.mxu0 %v7979
      %v8612 = vpop.f32.mrf.mxu0
      %v8613 = vadd.f32 0.0, %v8612
      %v8614 = vpop.f32.mrf.mxu0
      %8615 = vmatprep.mubr.f32.mxu0 0.0
      %8616 = vmatmul.mubr.f32.gmra.mxu0 %v7982
      %v8617 = vpop.f32.mrf.mxu0
      %v8618 = vadd.f32 0.0, %v8617
      %v8619 = vpop.f32.mrf.mxu0
      %8620 = vmatprep.mubr.f32.mxu0 0.0
      %8621 = vmatmul.mubr.f32.gmra.mxu0 %v7985
      %v8622 = vpop.f32.mrf.mxu0
      %v8623 = vadd.f32 0.0, %v8622
      %v8624 = vpop.f32.mrf.mxu0
      %8625 = vmatprep.mubr.f32.mxu0 0.0
      %8626 = vmatmul.mubr.f32.gmra.mxu0 %v7988
      %v8627 = vpop.f32.mrf.mxu0
      %v8628 = vadd.f32 0.0, %v8627
      %v8629 = vpop.f32.mrf.mxu0
      %8630 = vmatprep.mubr.f32.mxu0 0.0
      %8631 = vmatmul.mubr.f32.gmra.mxu0 %v7991
      %v8632 = vpop.f32.mrf.mxu0
      %v8633 = vadd.f32 0.0, %v8632
      %v8634 = vpop.f32.mrf.mxu0
      %8635 = vmatprep.mubr.f32.mxu0 0.0
      %8636 = vmatmul.mubr.f32.gmra.mxu0 %v7994
      %v8637 = vpop.f32.mrf.mxu0
      %v8638 = vadd.f32 0.0, %v8637
      %v8639 = vpop.f32.mrf.mxu0
      %8640 = vmatprep.mubr.f32.mxu0 0.0
      %8641 = vmatmul.mubr.f32.gmra.mxu0 %v7997
      %v8642 = vpop.f32.mrf.mxu0
      %v8643 = vadd.f32 0.0, %v8642
      %v8644 = vpop.f32.mrf.mxu0
      %8645 = vmatprep.mubr.f32.mxu0 0.0
      %8646 = vmatmul.mubr.f32.gmra.mxu0 %v8000
      %v8647 = vpop.f32.mrf.mxu0
      %v8648 = vadd.f32 0.0, %v8647
      %v8649 = vpop.f32.mrf.mxu0
      %8650 = vmatprep.mubr.f32.mxu0 0.0
      %8651 = vmatmul.mubr.f32.gmra.mxu0 %v8003
      %v8652 = vpop.f32.mrf.mxu0
      %v8653 = vadd.f32 0.0, %v8652
      %v8654 = vpop.f32.mrf.mxu0
      %8655 = vmatprep.mubr.f32.mxu0 0.0
      %8656 = vmatmul.mubr.f32.gmra.mxu0 %v8006
      %v8657 = vpop.f32.mrf.mxu0
      %v8658 = vadd.f32 0.0, %v8657
      %v8659 = vpop.f32.mrf.mxu0
      %8660 = vmatprep.mubr.f32.mxu0 0.0
      %8661 = vmatmul.mubr.f32.gmra.mxu0 %v8009
      %v8662 = vpop.f32.mrf.mxu0
      %v8663 = vadd.f32 0.0, %v8662
      %v8664 = vpop.f32.mrf.mxu0
      %8665 = vmatprep.mubr.f32.mxu0 0.0
      %8666 = vmatmul.mubr.f32.gmra.mxu0 %v8012
      %v8667 = vpop.f32.mrf.mxu0
      %v8668 = vadd.f32 0.0, %v8667
      %v8669 = vpop.f32.mrf.mxu0
      %8670 = vmatprep.mubr.f32.mxu0 0.0
      %8671 = vmatmul.mubr.f32.gmra.mxu0 %v8015
      %v8672 = vpop.f32.mrf.mxu0
      %v8673 = vadd.f32 0.0, %v8672
      %v8674 = vpop.f32.mrf.mxu0
      %8675 = vmatprep.mubr.f32.mxu0 0.0
      %8676 = vmatmul.mubr.f32.gmra.mxu0 %v8018
      %v8677 = vpop.f32.mrf.mxu0
      %v8678 = vadd.f32 0.0, %v8677
      %v8679 = vpop.f32.mrf.mxu0
      %8680 = vmatprep.mubr.f32.mxu0 0.0
      %8681 = vmatmul.mubr.f32.gmra.mxu0 %v8021
      %v8682 = vpop.f32.mrf.mxu0
      %v8683 = vadd.f32 0.0, %v8682
      %v8684 = vpop.f32.mrf.mxu0
      %8685 = vmatprep.mubr.f32.mxu0 0.0
      %8686 = vmatmul.mubr.f32.gmra.mxu0 %v8024
      %v8687 = vpop.f32.mrf.mxu0
      %v8688 = vadd.f32 0.0, %v8687
      %v8689 = vpop.f32.mrf.mxu0
      %8690 = vmatprep.mubr.f32.mxu0 0.0
      %8691 = vmatmul.mubr.f32.gmra.mxu0 %v8027
      %v8692 = vpop.f32.mrf.mxu0
      %v8693 = vadd.f32 0.0, %v8692
      %v8694 = vpop.f32.mrf.mxu0
      %8695 = vmatprep.mubr.f32.mxu0 0.0
      %8696 = vmatmul.mubr.f32.gmra.mxu0 %v8030
      %v8697 = vpop.f32.mrf.mxu0
      %v8698 = vadd.f32 0.0, %v8697
      %v8699 = vpop.f32.mrf.mxu0
      %8700 = vmatprep.mubr.f32.mxu0 0.0
      %8701 = vmatmul.mubr.f32.gmra.mxu0 %v8033
      %v8702 = vpop.f32.mrf.mxu0
      %v8703 = vadd.f32 0.0, %v8702
      %v8704 = vpop.f32.mrf.mxu0
      %8705 = vmatprep.mubr.f32.mxu0 0.0
      %8706 = vmatmul.mubr.f32.gmra.mxu0 %v8036
      %v8707 = vpop.f32.mrf.mxu0
      %v8708 = vadd.f32 0.0, %v8707
      %v8709 = vpop.f32.mrf.mxu0
      %8710 = vmatprep.mubr.f32.mxu0 0.0
      %8711 = vmatmul.mubr.f32.gmra.mxu0 %v8039
      %v8712 = vpop.f32.mrf.mxu0
      %v8713 = vadd.f32 0.0, %v8712
      %v8714 = vpop.f32.mrf.mxu0
      %8715 = vmatprep.mubr.f32.mxu0 0.0
      %8716 = vmatmul.mubr.f32.gmra.mxu0 %v8042
      %v8717 = vpop.f32.mrf.mxu0
      %v8718 = vadd.f32 0.0, %v8717
      %v8719 = vpop.f32.mrf.mxu0
      %8720 = vmatprep.mubr.f32.mxu0 0.0
      %8721 = vmatmul.mubr.f32.gmra.mxu0 %v8045
      %v8722 = vpop.f32.mrf.mxu0
      %v8723 = vadd.f32 0.0, %v8722
      %v8724 = vpop.f32.mrf.mxu0
      %8725 = vmatprep.mubr.f32.mxu0 0.0
      %8726 = vmatmul.mubr.f32.gmra.mxu0 %v8048
      %v8727 = vpop.f32.mrf.mxu0
      %v8728 = vadd.f32 0.0, %v8727
      %v8729 = vpop.f32.mrf.mxu0
      %8730 = vmatprep.mubr.f32.mxu0 0.0
      %8731 = vmatmul.mubr.f32.gmra.mxu0 %v8051
      %v8732 = vpop.f32.mrf.mxu0
      %v8733 = vadd.f32 0.0, %v8732
      %v8734 = vpop.f32.mrf.mxu0
      %8735 = vmatprep.mubr.f32.mxu0 0.0
      %8736 = vmatmul.mubr.f32.gmra.mxu0 %v8054
      %v8737 = vpop.f32.mrf.mxu0
      %v8738 = vadd.f32 0.0, %v8737
      %v8739 = vpop.f32.mrf.mxu0
      %8740 = vmatprep.mubr.f32.mxu0 0.0
      %8741 = vmatmul.mubr.f32.gmra.mxu0 %v8057
      %v8742 = vpop.f32.mrf.mxu0
      %v8743 = vadd.f32 0.0, %v8742
      %v8744 = vpop.f32.mrf.mxu0
      %8745 = vmatprep.mubr.f32.mxu0 0.0
      %8746 = vmatmul.mubr.f32.gmra.mxu0 %v8060
      %v8747 = vpop.f32.mrf.mxu0
      %v8748 = vadd.f32 0.0, %v8747
      %v8749 = vpop.f32.mrf.mxu0
      %8750 = vmatprep.mubr.f32.mxu0 0.0
      %8751 = vmatmul.mubr.f32.gmra.mxu0 %v8528
      %v8752 = vpop.f32.mrf.mxu0
      %v8753 = vadd.f32 0.0, %v8752
      %v8754 = vpop.f32.mrf.mxu0
      %8755 = vmatprep.mubr.f32.mxu0 0.0
      %8756 = vmatmul.mubr.f32.gmra.mxu0 %v8531
      %v8757 = vpop.f32.mrf.mxu0
      %v8758 = vadd.f32 0.0, %v8757
      %v8759 = vpop.f32.mrf.mxu0
      %8760 = vdwg.mxu0
      %v8761 = vadd.f32 %v8366, %v8603
      %v8762 = vadd.f32 %v8371, %v8608
      %v8763 = vadd.f32 %v8376, %v8613
      %v8764 = vadd.f32 %v8381, %v8618
      %v8765 = vadd.f32 %v8386, %v8623
      %v8766 = vadd.f32 %v8391, %v8628
      %v8767 = vadd.f32 %v8396, %v8633
      %v8768 = vadd.f32 %v8401, %v8638
      %v8769 = vadd.f32 %v8406, %v8643
      %v8770 = vadd.f32 %v8411, %v8648
      %v8771 = vadd.f32 %v8416, %v8653
      %v8772 = vadd.f32 %v8421, %v8658
      %v8773 = vadd.f32 %v8426, %v8663
      %v8774 = vadd.f32 %v8431, %v8668
      %v8775 = vadd.f32 %v8436, %v8673
      %v8776 = vadd.f32 %v8441, %v8678
      %v8777 = vadd.f32 %v8446, %v8683
      %v8778 = vadd.f32 %v8451, %v8688
      %v8779 = vadd.f32 %v8456, %v8693
      %v8780 = vadd.f32 %v8461, %v8698
      %v8781 = vadd.f32 %v8466, %v8703
      %v8782 = vadd.f32 %v8471, %v8708
      %v8783 = vadd.f32 %v8476, %v8713
      %v8784 = vadd.f32 %v8481, %v8718
      %v8785 = vadd.f32 %v8486, %v8723
      %v8786 = vadd.f32 %v8491, %v8728
      %v8787 = vadd.f32 %v8496, %v8733
      %v8788 = vadd.f32 %v8501, %v8738
      %v8789 = vadd.f32 %v8506, %v8743
      %v8790 = vadd.f32 %v8511, %v8748
      %v8791 = vadd.f32 %v8516, %v8753
      %v8792 = vadd.f32 %v8521, %v8758
      %v8793 = vld [vmem:[%s12] sm:$0x1]
      %v8795 = vlaneseq
      %v8796 = vshrl.u32 %v8795, 7
      %v8797 = vsub.s32 0, %v8796
      %v8798 = vrot.slane %v8793, %v8797
      %v8800 = vadd.f32 %v8761, %v8798
      %v8801 = vadd.f32 %v8762, %v8798
      %v8802 = vadd.f32 %v8763, %v8798
      %v8803 = vadd.f32 %v8764, %v8798
      %v8804 = vadd.f32 %v8765, %v8798
      %v8805 = vadd.f32 %v8766, %v8798
      %v8806 = vadd.f32 %v8767, %v8798
      %v8807 = vadd.f32 %v8768, %v8798
      %v8808 = vadd.f32 %v8769, %v8798
      %v8809 = vadd.f32 %v8770, %v8798
      %v8810 = vadd.f32 %v8771, %v8798
      %v8811 = vadd.f32 %v8772, %v8798
      %v8812 = vadd.f32 %v8773, %v8798
      %v8813 = vadd.f32 %v8774, %v8798
      %v8814 = vadd.f32 %v8775, %v8798
      %v8815 = vadd.f32 %v8776, %v8798
      %v8816 = vadd.f32 %v8777, %v8798
      %v8817 = vadd.f32 %v8778, %v8798
      %v8818 = vadd.f32 %v8779, %v8798
      %v8819 = vadd.f32 %v8780, %v8798
      %v8820 = vadd.f32 %v8781, %v8798
      %v8821 = vadd.f32 %v8782, %v8798
      %v8822 = vadd.f32 %v8783, %v8798
      %v8823 = vadd.f32 %v8784, %v8798
      %v8824 = vadd.f32 %v8785, %v8798
      %v8825 = vadd.f32 %v8786, %v8798
      %v8826 = vadd.f32 %v8787, %v8798
      %v8827 = vadd.f32 %v8788, %v8798
      %v8828 = vadd.f32 %v8789, %v8798
      %v8829 = vadd.f32 %v8790, %v8798
      %v8830 = vadd.f32 %v8791, %v8798
      %v8831 = vadd.f32 %v8792, %v8798
      %v8832 = vmax.f32 %v8800, 0.0
      %v8833 = vmax.f32 %v8801, 0.0
      %v8834 = vmax.f32 %v8802, 0.0
      %v8835 = vmax.f32 %v8803, 0.0
      %v8836 = vmax.f32 %v8804, 0.0
      %v8837 = vmax.f32 %v8805, 0.0
      %v8838 = vmax.f32 %v8806, 0.0
      %v8839 = vmax.f32 %v8807, 0.0
      %v8840 = vmax.f32 %v8808, 0.0
      %v8841 = vmax.f32 %v8809, 0.0
      %v8842 = vmax.f32 %v8810, 0.0
      %v8843 = vmax.f32 %v8811, 0.0
      %v8844 = vmax.f32 %v8812, 0.0
      %v8845 = vmax.f32 %v8813, 0.0
      %v8846 = vmax.f32 %v8814, 0.0
      %v8847 = vmax.f32 %v8815, 0.0
      %v8848 = vmax.f32 %v8816, 0.0
      %v8849 = vmax.f32 %v8817, 0.0
      %v8850 = vmax.f32 %v8818, 0.0
      %v8851 = vmax.f32 %v8819, 0.0
      %v8852 = vmax.f32 %v8820, 0.0
      %v8853 = vmax.f32 %v8821, 0.0
      %v8854 = vmax.f32 %v8822, 0.0
      %v8855 = vmax.f32 %v8823, 0.0
      %v8856 = vmax.f32 %v8824, 0.0
      %v8857 = vmax.f32 %v8825, 0.0
      %v8858 = vmax.f32 %v8826, 0.0
      %v8859 = vmax.f32 %v8827, 0.0
      %v8860 = vmax.f32 %v8828, 0.0
      %v8861 = vmax.f32 %v8829, 0.0
      %v8862 = vmax.f32 %v8830, 0.0
      %v8863 = vmax.f32 %v8831, 0.0
      %8864 = vst.msk [vmem:[%s771] sm:$0xff] %vm3522, %v8832
      %8865 = vst.msk [vmem:[%s771 + $0x8] sm:$0xff] %vm3522, %v8833
      %8866 = vst.msk [vmem:[%s771 + $0x10] sm:$0xff] %vm3522, %v8834
      %8867 = vst.msk [vmem:[%s771 + $0x18] sm:$0xff] %vm3522, %v8835
      %8868 = vst.msk [vmem:[%s771 + $0x20] sm:$0xff] %vm3522, %v8836
      %8869 = vst.msk [vmem:[%s771 + $0x28] sm:$0xff] %vm3522, %v8837
      %8870 = vst.msk [vmem:[%s771 + $0x30] sm:$0xff] %vm3522, %v8838
      %8871 = vst.msk [vmem:[%s771 + $0x38] sm:$0xff] %vm3522, %v8839
      %8872 = vst.msk [vmem:[%s771 + $0x40] sm:$0xff] %vm3522, %v8840
      %8873 = vst.msk [vmem:[%s771 + $0x48] sm:$0xff] %vm3522, %v8841
      %8874 = vst.msk [vmem:[%s771 + $0x50] sm:$0xff] %vm3522, %v8842
      %8875 = vst.msk [vmem:[%s771 + $0x58] sm:$0xff] %vm3522, %v8843
      %8876 = vst.msk [vmem:[%s771 + $0x60] sm:$0xff] %vm3522, %v8844
      %8877 = vst.msk [vmem:[%s771 + $0x68] sm:$0xff] %vm3522, %v8845
      %8878 = vst.msk [vmem:[%s771 + $0x70] sm:$0xff] %vm3522, %v8846
      %8879 = vst.msk [vmem:[%s771 + $0x78] sm:$0xff] %vm3522, %v8847
      %8880 = vst.msk [vmem:[%s771 + $0x80] sm:$0xff] %vm3522, %v8848
      %8881 = vst.msk [vmem:[%s771 + $0x88] sm:$0xff] %vm3522, %v8849
      %8882 = vst.msk [vmem:[%s771 + $0x90] sm:$0xff] %vm3522, %v8850
      %8883 = vst.msk [vmem:[%s771 + $0x98] sm:$0xff] %vm3522, %v8851
      %8884 = vst.msk [vmem:[%s771 + $0xa0] sm:$0xff] %vm3522, %v8852
      %8885 = vst.msk [vmem:[%s771 + $0xa8] sm:$0xff] %vm3522, %v8853
      %8886 = vst.msk [vmem:[%s771 + $0xb0] sm:$0xff] %vm3522, %v8854
      %8887 = vst.msk [vmem:[%s771 + $0xb8] sm:$0xff] %vm3522, %v8855
      %8888 = vst.msk [vmem:[%s771 + $0xc0] sm:$0xff] %vm3522, %v8856
      %8889 = vst.msk [vmem:[%s771 + $0xc8] sm:$0xff] %vm3522, %v8857
      %8890 = vst.msk [vmem:[%s771 + $0xd0] sm:$0xff] %vm3522, %v8858
      %8891 = vst.msk [vmem:[%s771 + $0xd8] sm:$0xff] %vm3522, %v8859
      %8892 = vst.msk [vmem:[%s771 + $0xe0] sm:$0xff] %vm3522, %v8860
      %8893 = vst.msk [vmem:[%s771 + $0xe8] sm:$0xff] %vm3522, %v8861
      %8894 = vst.msk [vmem:[%s771 + $0xf0] sm:$0xff] %vm3522, %v8862
      %8895 = vst.msk [vmem:[%s771 + $0xf8] sm:$0xff] %vm3522, %v8863
      %s8896 = smul.u32 16, %s29
      %p8897 = scmp.lt.s32.totalorder %s28, 1
      %s8898 = scalar_select %p8897, %s28, 1
      %p8899 = scmp.lt.s32.totalorder %s8896, 15
      %s8900 = scalar_select %p8899, %s8896, 15
      %s8901 = smul.addr %s8900, 2
      %s8902 = smul.addr %s8898, 32
      %s8903 = sadd.s32 %s8901, %s8902
      %s8904 = smul.addr %s8903, 8
      %s8905 = scalar_lea.vmem %s13, %s8904
      // Predicated region
      $region73: #{tpu_custom_call.1} parent=71 // pred_check
        %p8906 = pneg %p403
      $region74: #{tpu_custom_call.1} parent=71 // pred_check_branch
        %8908 = sbr.rel (%p8906) target = $region76
      $region75: #{tpu_custom_call.1} parent=71 // pred_region
        %s8909 = smul.u32 16, %s29
      $region76: #{tpu_custom_call.1} parent=71 // pred_fallthru
        _
    $region72: #{tpu_custom_call.1} parent=5 // pred_fallthru
      _
    %p8910 = scmp.le.s32.totalorder 2, %s19
    // Predicated region
    $region77: #{tpu_custom_call.1} parent=5 // pred_check
      %p8911 = pneg %p8910
    $region78: #{tpu_custom_call.1} parent=5 // pred_check_branch
      %8913 = sbr.rel (%p8911) target = $region80
    $region79: #{tpu_custom_call.1} parent=5 // pred_region
      %s8914 = ssub.s32 %s19, 2
      // Predicated region
      $region81: #{tpu_custom_call.1} parent=79 // pred_check
        %p8915 = pneg %p409
      $region82: #{tpu_custom_call.1} parent=79 // pred_check_branch
        %8917 = sbr.rel (%p8915) target = $region84
      $region83: #{tpu_custom_call.1} parent=79 // pred_region
        %s8918 = smul.u32 16, %s31
        %p8919 = scmp.lt.s32.totalorder %s30, 1
        %s8920 = scalar_select %p8919, %s30, 1
        %p8921 = scmp.lt.s32.totalorder %s8918, 15
        %s8922 = scalar_select %p8921, %s8918, 15
        %s8923 = smul.addr %s8922, 2
        %s8924 = smul.addr %s8920, 32
        %s8925 = sadd.s32 %s8923, %s8924
        %s8926 = smul.addr %s8925, 8
        %s8927 = scalar_lea.vmem %s13, %s8926
      $region84: #{tpu_custom_call.1} parent=79 // pred_fallthru
        _
    $region80: #{tpu_custom_call.1} parent=5 // pred_fallthru
      _
  $region6: #{tpu_custom_call.1} parent=0 // loop_footer
    %s23 = sadd.s32 1, %s19
  $region7: #{tpu_custom_call.1} parent=0 // loop_footer_branch
    %18 = sbr.rel target = $region3
  $region8: #{tpu_custom_call.1} parent=0 // loop_exit
    _

</llo_original>
